<compile_context>
chip_gen: v7x
topology: tpu7x:2x2x1
jax: 0.10.0
libtpu: 0.0.40
codegen_flags: <defaults>
</compile_context>

<pallas_src>
import functools
import numpy as np

import jax
import jax.numpy as jnp
from jax.experimental import pallas as pl
from jax.experimental.pallas import tpu as pltpu

NEG_SLOPE = 0.01   # nn.LeakyReLU default
BN_EPS = 1e-5      # nn.BatchNorm3d default
LANE = 128
CPAD = 128         # padded channel width used for every conv layer

_VMEM = pl.BlockSpec(memory_space=pltpu.MemorySpace.VMEM)


def _leaky(x):
    return jnp.where(x > 0, x, NEG_SLOPE * x)


# ----------------------------------------------------------------------------
# Pallas kernel 1: conv1 as matmul with fused shift (+ folded BN) + LeakyReLU
# ----------------------------------------------------------------------------
def _conv1_kernel(p_ref, w_ref, shift_ref, o_ref):
    acc = jnp.dot(p_ref[...], w_ref[...], preferred_element_type=jnp.float32)
    acc = _leaky(acc + shift_ref[...])          # BN scale folded into weights
    o_ref[...] = acc.astype(o_ref.dtype)        # bf16 activations out


def conv1_matmul(patches, w, shift):
    """patches [M, K] bf16, w [K, 128] bf16 (scale folded), shift [1,128] f32."""
    m, k = patches.shape
    n = w.shape[1]
    tm = m // 2 if (m % 2 == 0 and (m // 2) % 8 == 0) else m
    return pl.pallas_call(
        _conv1_kernel,
        out_shape=jax.ShapeDtypeStruct((m, n), jnp.bfloat16),
        grid=(m // tm,),
        in_specs=[
            pl.BlockSpec((tm, k), lambda i: (i, 0)),   # patch rows (pipelined)
            pl.BlockSpec((k, n), lambda i: (0, 0)),    # weight resident
            pl.BlockSpec((1, n), lambda i: (0, 0)),    # shift (bias+BN folded)
        ],
        out_specs=pl.BlockSpec((tm, n), lambda i: (i, 0)),
        compiler_params=pltpu.CompilerParams(
            dimension_semantics=("parallel",)),
    )(patches, w, shift)


# ----------------------------------------------------------------------------
# Pallas kernel 2: fused conv2 + conv3 + conv4 + FC heads (+ dueling combine)
# ----------------------------------------------------------------------------
def _conv_tail(p2_ref, w2_ref, s2_ref, w3_ref, s3_ref, w4_ref, s4_ref, batch):
    # conv2: [64B, 27*128] @ [27*128, 128] -> rows ordered (parity j, voxel v, b)
    y2 = jnp.dot(p2_ref[...], w2_ref[...], preferred_element_type=jnp.float32)
    y2 = _leaky(y2 + s2_ref[...]).astype(jnp.bfloat16)

    g = 8 * batch                                    # rows per parity group
    # conv3 (k=s=2): sum of 8 per-offset matmuls over contiguous row blocks
    acc3 = jnp.zeros((g, CPAD), jnp.float32)
    for j in range(8):
        acc3 = acc3 + jnp.dot(y2[j * g:(j + 1) * g, :], w3_ref[j],
                              preferred_element_type=jnp.float32)
    y3 = _leaky(acc3 + s3_ref[...])                  # [8B, 128] f32, rows (v, b)

    # conv4 (k=s=2, output 1^3): sum over the 8 conv3 voxels, no BN/activation
    acc4 = jnp.zeros((batch, CPAD), jnp.float32)
    for v in range(8):
        blk = y3[v * batch:(v + 1) * batch, :].astype(jnp.bfloat16)
        acc4 = acc4 + jnp.dot(blk, w4_ref[v], preferred_element_type=jnp.float32)
    return acc4 + s4_ref[...]                        # [B, 128] f32 features


def _lin(x, w_ref, b_ref, act):
    y = jnp.dot(x, w_ref[...], preferred_element_type=jnp.float32) + b_ref[...]
    if act:
        return _leaky(y).astype(jnp.bfloat16)        # bf16 operand for next matmul
    return y                                         # final layer stays f32


def _tail_dueling_kernel(p2_ref, w2_ref, s2_ref, w3_ref, s3_ref, w4_ref, s4_ref,
                         ws1, bs1, ws2, bs2, ws3, bs3,
                         wa1, ba1, wa2, ba2, wa3, ba3,
                         o_ref, *, num_actions, batch):
    h = _conv_tail(p2_ref, w2_ref, s2_ref, w3_ref, s3_ref, w4_ref, s4_ref, batch)
    hb = h.astype(jnp.bfloat16)
    v = _lin(_lin(_lin(hb, ws1, bs1, True), ws2, bs2, True), ws3, bs3, False)
    a = _lin(_lin(_lin(hb, wa1, ba1, True), wa2, ba2, True), wa3, ba3, False)
    lane = jax.lax.broadcasted_iota(jnp.int32, (1, v.shape[1]), 1)
    v_col = jnp.sum(jnp.where(lane < 1, v, 0.0), axis=1, keepdims=True)
    a_sum = jnp.sum(jnp.where(lane < num_actions, a, 0.0), axis=1, keepdims=True)
    o_ref[...] = v_col + a - a_sum * (1.0 / num_actions)


def _tail_plain_kernel(p2_ref, w2_ref, s2_ref, w3_ref, s3_ref, w4_ref, s4_ref,
                       wb1, bb1, wb2, bb2, wb3, bb3, o_ref, *, batch):
    h = _conv_tail(p2_ref, w2_ref, s2_ref, w3_ref, s3_ref, w4_ref, s4_ref, batch)
    hb = h.astype(jnp.bfloat16)
    o_ref[...] = _lin(_lin(_lin(hb, wb1, bb1, True), wb2, bb2, True),
                      wb3, bb3, False)


def tail_forward(p2, params, num_actions, batch, dueling):
    c = params["conv"]
    args = [p2, c["w2"], c["s2"], c["w3"], c["s3"], c["w4"], c["s4"]]
    if dueling:
        for w, b in params["state_fc"] + params["advan_fc"]:
            args += [w, b]
        kernel = functools.partial(_tail_dueling_kernel,
                                   num_actions=num_actions, batch=batch)
    else:
        for w, b in params["base_fc"]:
            args += [w, b]
        kernel = functools.partial(_tail_plain_kernel, batch=batch)
    return pl.pallas_call(
        kernel,
        out_shape=jax.ShapeDtypeStruct((batch, LANE), jnp.float32),
        in_specs=[_VMEM] * len(args),
        out_specs=_VMEM,
    )(*args)


# ----------------------------------------------------------------------------
# XLA-side patch construction (cheap glue on <1 MB arrays)
# ----------------------------------------------------------------------------
def _conv1_patches(x_ndhwc):
    """x [B,16,16,16,Cin] bf16 -> patches [B*512, 64*Cin], rows (b, d, h, w)."""
    b, _, _, _, c = x_ndhwc.shape
    xp = jnp.pad(x_ndhwc, ((0, 0), (1, 1), (1, 1), (1, 1), (0, 0)))
    cols = []
    for kd in range(4):
        for kh in range(4):
            for kw in range(4):
                cols.append(xp[:, kd:kd + 16:2, kh:kh + 16:2, kw:kw + 16:2, :])
    p = jnp.concatenate(cols, axis=-1)               # [B,8,8,8, 64*Cin]
    return p.reshape(b * 512, 64 * c)


def _conv2_patches(y1, b):
    """y1 [B*512, 128] bf16 (rows (b,d,h,w)) -> patches [64B, 27*128] whose rows
       are ordered (parity pd,ph,pw | voxel D,H,W | b) so the fused kernel's
       conv3 row blocks are contiguous slices."""
    x = y1.reshape(b, 8, 8, 8, CPAD)
    xp = jnp.pad(x, ((0, 0), (1, 1), (1, 1), (1, 1), (0, 0)))   # [B,10,10,10,128]
    cols = []
    for kd in range(3):
        for kh in range(3):
            for kw in range(3):
                cols.append(xp[:, kd:kd + 8:2, kh:kh + 8:2, kw:kw + 8:2, :])
    p = jnp.concatenate(cols, axis=-1)               # [B,4,4,4, 27*128]
    p = p.reshape(b, 2, 2, 2, 2, 2, 2, 27 * CPAD)    # (b, D,pd, H,ph, W,pw, K)
    p = jnp.transpose(p, (2, 4, 6, 1, 3, 5, 0, 7))   # (pd,ph,pw, D,H,W, b, K)
    return p.reshape(64 * b, 27 * CPAD)


# ----------------------------------------------------------------------------
# Parameter packing (done once at init; BN scale folded into f32 weights)
# ----------------------------------------------------------------------------
def _fold_bn(bias, bn):
    if bn is None:
        return jnp.ones_like(bias), bias
    gamma, beta, mean, var = bn
    scale = gamma / jnp.sqrt(var + BN_EPS)
    shift = (bias - mean) * scale + beta             # conv bias folded in
    return scale, shift


def _pack_conv1(w, bias, bn):
    cout, cin, k = w.shape[0], w.shape[1], w.shape[2]
    scale, shift = _fold_bn(bias, bn)
    w2 = jnp.transpose(w, (2, 3, 4, 1, 0)).reshape(k * k * k * cin, cout)
    w2 = w2 * scale[None, :]
    wp = jnp.zeros((w2.shape[0], CPAD), jnp.float32).at[:, :cout].set(w2)
    sp = jnp.zeros((1, CPAD), jnp.float32).at[0, :cout].set(shift)
    return wp.astype(jnp.bfloat16), sp


def _pack_conv2(w, bias, bn):
    """Rows ordered (kd,kh,kw) major, conv1's *padded* 128-channel axis minor."""
    cout, cin = w.shape[0], w.shape[1]
    scale, shift = _fold_bn(bias, bn)
    wt = jnp.transpose(w, (2, 3, 4, 1, 0)) * scale[None, None, None, None, :]
    wp = jnp.zeros((3, 3, 3, CPAD, CPAD), jnp.float32)
    wp = wp.at[:, :, :, :cin, :cout].set(wt)
    wp = wp.reshape(27 * CPAD, CPAD)
    sp = jnp.zeros((1, CPAD), jnp.float32).at[0, :cout].set(shift)
    return wp.astype(jnp.bfloat16), sp


def _pack_conv_blocks(w, bias, bn):
    """k=2,s=2 conv -> 8 per-offset [128,128] blocks (offset index kd*4+kh*2+kw)."""
    cout, cin = w.shape[0], w.shape[1]
    scale, shift = _fold_bn(bias, bn)
    blocks = []
    for kd in range(2):
        for kh in range(2):
            for kw in range(2):
                blk = jnp.transpose(w[:, :, kd, kh, kw], (1, 0)) * scale[None, :]
                bp = jnp.zeros((CPAD, CPAD), jnp.float32).at[:cin, :cout].set(blk)
                blocks.append(bp)
    wp = jnp.stack(blocks, axis=0)                   # [8,128,128]
    sp = jnp.zeros((1, CPAD), jnp.float32).at[0, :cout].set(shift)
    return wp.astype(jnp.bfloat16), sp


def _pack_fc(w, bias, in_pad):
    out, inp = w.shape
    out_pad = ((out + LANE - 1) // LANE) * LANE
    wt = jnp.zeros((in_pad, out_pad), jnp.float32).at[:inp, :out].set(w.T)
    bp = jnp.zeros((1, out_pad), jnp.float32).at[0, :out].set(bias)
    return wt.astype(jnp.bfloat16), bp


def init_params(key, num_actions, num_obsers, dueling):
    keys = iter(jax.random.split(key, 64))
    cin0 = num_obsers * 2

    def conv_w(cout, cin, k):
        return 0.01 * jax.random.normal(next(keys), (cout, cin, k, k, k),
                                        jnp.float32)

    def default_bn(c):
        return (jnp.ones((c,), jnp.float32), jnp.zeros((c,), jnp.float32),
                jnp.zeros((c,), jnp.float32), jnp.ones((c,), jnp.float32))

    w1, s1 = _pack_conv1(conv_w(32, cin0, 4), jnp.zeros((32,), jnp.float32),
                         default_bn(32))
    w2, s2 = _pack_conv2(conv_w(32, 32, 3), jnp.zeros((32,), jnp.float32),
                         default_bn(32))
    w3, s3 = _pack_conv_blocks(conv_w(46, 32, 2), jnp.zeros((46,), jnp.float32),
                               default_bn(46))
    w4, s4 = _pack_conv_blocks(conv_w(46, 46, 2), jnp.zeros((46,), jnp.float32),
                               None)
    params = {"conv": dict(w1=w1, s1=s1, w2=w2, s2=s2, w3=w3, s3=s3,
                           w4=w4, s4=s4)}

    def head(out_dim):
        layers = []
        dims = ((46, 256, CPAD), (256, 128, 256), (128, out_dim, 128))
        for fin, fout, in_pad in dims:
            w = 0.01 * jax.random.normal(next(keys), (fout, fin), jnp.float32)
            layers.append(_pack_fc(w, jnp.zeros((fout,), jnp.float32), in_pad))
        return layers

    if dueling:
        params["state_fc"] = head(1)
        params["advan_fc"] = head(num_actions)
    else:
        params["base_fc"] = head(num_actions)
    return params


# ----------------------------------------------------------------------------
# Forward pass
# ----------------------------------------------------------------------------
def dqn_forward(x, params, *, num_actions, num_obsers, shape_obser, method):
    assert tuple(shape_obser) == (16, 16, 16), \
        "fused kernel specialized to 16^3 observations"
    b = x.shape[0]
    cin = num_obsers * 2
    h = x.astype(jnp.bfloat16).reshape(b, cin, 16, 16, 16)   # bf16 before layout glue
    h = jnp.transpose(h, (0, 2, 3, 4, 1))                    # single NCDHW->NDHWC

    p1 = _conv1_patches(h)                                   # [B*512, 64*cin] bf16
    y1 = conv1_matmul(p1, params["conv"]["w1"], params["conv"]["s1"])
    p2 = _conv2_patches(y1, b)                               # [64B, 3456] bf16
    q = tail_forward(p2, params, num_actions, b, dueling=("Dueling" in method))
    return q[:, :num_actions]


# ----------------------------------------------------------------------------
if __name__ == "__main__":
    num_actions = 6
    shape_obser = (16, 16, 16)
    num_obsers = 2
    method = "DuelingDQN"
    batch = 2

    hidden_len = int(np.prod(np.ceil(np.array(shape_obser) / 16)).astype("int"))
    assert hidden_len == 1

    key = jax.random.PRNGKey(0)
    k_params, k_x = jax.random.split(key)
    params = init_params(k_params, num_actions, num_obsers,
                         dueling=("Dueling" in method))

    x = jax.random.normal(
        k_x, (batch, num_obsers * 2, shape_obser[0], shape_obser[1],
              shape_obser[2]), dtype=jnp.float32)

    fwd = jax.jit(functools.partial(
        dqn_forward, num_actions=num_actions, num_obsers=num_obsers,
        shape_obser=shape_obser, method=method))

    q = jax.block_until_ready(fwd(x, params))

    assert q.shape == (batch, num_actions), q.shape
    assert bool(jnp.all(jnp.isfinite(q)))
    print("KERNEL_OK")
</pallas_src>

<mosaic_0001>
module attributes {stable_mosaic.version = 11 : i64} {
  func.func @_conv1_kernel(%arg0: i32, %arg1: memref<512x256xbf16, #tpu.memory_space<vmem>>, %arg2: memref<256x128xbf16, #tpu.memory_space<vmem>>, %arg3: memref<1x128xf32, #tpu.memory_space<vmem>>, %arg4: memref<512x128xbf16, #tpu.memory_space<vmem>>) attributes {dimension_semantics = [#tpu.dimension_semantics<parallel>], iteration_bounds = array<i64: 2>, scalar_prefetch = 0 : i64, scratch_operands = 0 : i64, tpu.core_type = #tpu.core_type<tc>, window_params = [{transform_indices = @transform_0, window_bounds = array<i64: 512, 256>}, {pipeline_mode = #tpu.pipeline_mode<synchronous>, transform_indices = @transform_1, window_bounds = array<i64: 256, 128>}, {pipeline_mode = #tpu.pipeline_mode<synchronous>, transform_indices = @transform_2, window_bounds = array<i64: 1, 128>}, {transform_indices = @transform_3, window_bounds = array<i64: 512, 128>}]} {
    %c0 = arith.constant 0 : index
    %c0_0 = arith.constant 0 : index
    %0 = vector.load %arg1[%c0, %c0_0] : memref<512x256xbf16, #tpu.memory_space<vmem>>, vector<512x256xbf16>
    %c0_1 = arith.constant 0 : index
    %c0_2 = arith.constant 0 : index
    %1 = vector.load %arg2[%c0_1, %c0_2] : memref<256x128xbf16, #tpu.memory_space<vmem>>, vector<256x128xbf16>
    %cst = arith.constant dense<0.000000e+00> : vector<512x128xf32>
    %2 = tpu.matmul %0, %1, %cst {dimension_numbers = #tpu.dot_dimension_numbers<[1], [0], [0], [1], [0, 0, 1, 1], [], []>} : vector<512x256xbf16>, vector<256x128xbf16>, vector<512x128xf32> -> vector<512x128xf32>
    %c0_3 = arith.constant 0 : index
    %c0_4 = arith.constant 0 : index
    %3 = vector.load %arg3[%c0_3, %c0_4] : memref<1x128xf32, #tpu.memory_space<vmem>>, vector<1x128xf32>
    %4 = vector.broadcast %3 : vector<1x128xf32> to vector<512x128xf32>
    %5 = arith.addf %2, %4 : vector<512x128xf32>
    %cst_5 = arith.constant 0.000000e+00 : f32
    %6 = vector.broadcast %cst_5 : f32 to vector<512x128xf32>
    %7 = arith.cmpf ogt, %5, %6 : vector<512x128xf32>
    %cst_6 = arith.constant 0.00999999977 : f32
    %8 = vector.broadcast %cst_6 : f32 to vector<512x128xf32>
    %9 = arith.mulf %8, %5 : vector<512x128xf32>
    %10 = arith.select %7, %5, %9 : vector<512x128xi1>, vector<512x128xf32>
    %11 = arith.truncf %10 : vector<512x128xf32> to vector<512x128xbf16>
    %c0_7 = arith.constant 0 : index
    %c0_8 = arith.constant 0 : index
    %12 = vector.load %arg4[%c0_7, %c0_8] : memref<512x128xbf16, #tpu.memory_space<vmem>>, vector<512x128xbf16>
    tpu.vector_store %arg4[%c0_7, %c0_8], %11 {strides = array<i32>} : memref<512x128xbf16, #tpu.memory_space<vmem>>, vector<512x128xbf16>,
    return
  }
  func.func @transform_0(%arg0: i32) -> (i32, i32) {
    %c0_i32 = arith.constant 0 : i32
    %c0_i32_0 = arith.constant 0 : i32
    return %arg0, %c0_i32 : i32, i32
  }
  func.func @transform_1(%arg0: i32) -> (i32, i32) {
    %c0_i32 = arith.constant 0 : i32
    %c0_i32_0 = arith.constant 0 : i32
    %c0_i32_1 = arith.constant 0 : i32
    return %c0_i32, %c0_i32_0 : i32, i32
  }
  func.func @transform_2(%arg0: i32) -> (i32, i32) {
    %c0_i32 = arith.constant 0 : i32
    %c0_i32_0 = arith.constant 0 : i32
    %c0_i32_1 = arith.constant 0 : i32
    return %c0_i32, %c0_i32_0 : i32, i32
  }
  func.func @transform_3(%arg0: i32) -> (i32, i32) {
    %c0_i32 = arith.constant 0 : i32
    %c0_i32_0 = arith.constant 0 : i32
    return %arg0, %c0_i32 : i32, i32
  }
}

module attributes {stable_mosaic.version = 11 : i64} {
  func.func @_tail_dueling_kernel(%arg0: memref<128x3456xbf16, #tpu.memory_space<vmem>>, %arg1: memref<3456x128xbf16, #tpu.memory_space<vmem>>, %arg2: memref<1x128xf32, #tpu.memory_space<vmem>>, %arg3: memref<8x128x128xbf16, #tpu.memory_space<vmem>>, %arg4: memref<1x128xf32, #tpu.memory_space<vmem>>, %arg5: memref<8x128x128xbf16, #tpu.memory_space<vmem>>, %arg6: memref<1x128xf32, #tpu.memory_space<vmem>>, %arg7: memref<128x256xbf16, #tpu.memory_space<vmem>>, %arg8: memref<1x256xf32, #tpu.memory_space<vmem>>, %arg9: memref<256x128xbf16, #tpu.memory_space<vmem>>, %arg10: memref<1x128xf32, #tpu.memory_space<vmem>>, %arg11: memref<128x128xbf16, #tpu.memory_space<vmem>>, %arg12: memref<1x128xf32, #tpu.memory_space<vmem>>, %arg13: memref<128x256xbf16, #tpu.memory_space<vmem>>, %arg14: memref<1x256xf32, #tpu.memory_space<vmem>>, %arg15: memref<256x128xbf16, #tpu.memory_space<vmem>>, %arg16: memref<1x128xf32, #tpu.memory_space<vmem>>, %arg17: memref<128x128xbf16, #tpu.memory_space<vmem>>, %arg18: memref<1x128xf32, #tpu.memory_space<vmem>>, %arg19: memref<2x128xf32, #tpu.memory_space<vmem>>) attributes {dimension_semantics = [], scalar_prefetch = 0 : i64, scratch_operands = 0 : i64, tpu.core_type = #tpu.core_type<tc>} {
    %c0 = arith.constant 0 : index
    %c0_0 = arith.constant 0 : index
    %0 = vector.load %arg0[%c0, %c0_0] : memref<128x3456xbf16, #tpu.memory_space<vmem>>, vector<128x3456xbf16>
    %c0_1 = arith.constant 0 : index
    %c0_2 = arith.constant 0 : index
    %1 = vector.load %arg1[%c0_1, %c0_2] : memref<3456x128xbf16, #tpu.memory_space<vmem>>, vector<3456x128xbf16>
    %cst = arith.constant dense<0.000000e+00> : vector<128x128xf32>
    %2 = tpu.matmul %0, %1, %cst {dimension_numbers = #tpu.dot_dimension_numbers<[1], [0], [0], [1], [0, 0, 1, 1], [], []>} : vector<128x3456xbf16>, vector<3456x128xbf16>, vector<128x128xf32> -> vector<128x128xf32>
    %c0_3 = arith.constant 0 : index
    %c0_4 = arith.constant 0 : index
    %3 = vector.load %arg2[%c0_3, %c0_4] : memref<1x128xf32, #tpu.memory_space<vmem>>, vector<1x128xf32>
    %4 = vector.broadcast %3 : vector<1x128xf32> to vector<128x128xf32>
    %5 = arith.addf %2, %4 : vector<128x128xf32>
    %cst_5 = arith.constant 0.000000e+00 : f32
    %6 = vector.broadcast %cst_5 : f32 to vector<128x128xf32>
    %7 = arith.cmpf ogt, %5, %6 : vector<128x128xf32>
    %cst_6 = arith.constant 0.00999999977 : f32
    %8 = vector.broadcast %cst_6 : f32 to vector<128x128xf32>
    %9 = arith.mulf %8, %5 : vector<128x128xf32>
    %10 = arith.select %7, %5, %9 : vector<128x128xi1>, vector<128x128xf32>
    %11 = arith.truncf %10 : vector<128x128xf32> to vector<128x128xbf16>
    %cst_7 = arith.constant 0.000000e+00 : f32
    %12 = vector.broadcast %cst_7 : f32 to vector<16x128xf32>
    %13 = vector.extract_strided_slice %11 {offsets = [0, 0], sizes = [16, 128], strides = [1, 1]} : vector<128x128xbf16> to vector<16x128xbf16>
    %c0_8 = arith.constant 0 : index
    %c0_9 = arith.constant 0 : index
    %c0_10 = arith.constant 0 : index
    %14 = vector.load %arg3[%c0_8, %c0_9, %c0_10] : memref<8x128x128xbf16, #tpu.memory_space<vmem>>, vector<1x128x128xbf16>
    %15 = vector.shape_cast %14 : vector<1x128x128xbf16> to vector<128x128xbf16>
    %cst_11 = arith.constant dense<0.000000e+00> : vector<16x128xf32>
    %16 = tpu.matmul %13, %15, %cst_11 {dimension_numbers = #tpu.dot_dimension_numbers<[1], [0], [0], [1], [0, 0, 1, 1], [], []>} : vector<16x128xbf16>, vector<128x128xbf16>, vector<16x128xf32> -> vector<16x128xf32>
    %17 = arith.addf %12, %16 : vector<16x128xf32>
    %18 = vector.extract_strided_slice %11 {offsets = [16, 0], sizes = [16, 128], strides = [1, 1]} : vector<128x128xbf16> to vector<16x128xbf16>
    %c1 = arith.constant 1 : index
    %c0_12 = arith.constant 0 : index
    %c0_13 = arith.constant 0 : index
    %19 = vector.load %arg3[%c1, %c0_12, %c0_13] : memref<8x128x128xbf16, #tpu.memory_space<vmem>>, vector<1x128x128xbf16>
    %20 = vector.shape_cast %19 : vector<1x128x128xbf16> to vector<128x128xbf16>
    %cst_14 = arith.constant dense<0.000000e+00> : vector<16x128xf32>
    %21 = tpu.matmul %18, %20, %cst_14 {dimension_numbers = #tpu.dot_dimension_numbers<[1], [0], [0], [1], [0, 0, 1, 1], [], []>} : vector<16x128xbf16>, vector<128x128xbf16>, vector<16x128xf32> -> vector<16x128xf32>
    %22 = arith.addf %17, %21 : vector<16x128xf32>
    %23 = vector.extract_strided_slice %11 {offsets = [32, 0], sizes = [16, 128], strides = [1, 1]} : vector<128x128xbf16> to vector<16x128xbf16>
    %c2 = arith.constant 2 : index
    %c0_15 = arith.constant 0 : index
    %c0_16 = arith.constant 0 : index
    %24 = vector.load %arg3[%c2, %c0_15, %c0_16] : memref<8x128x128xbf16, #tpu.memory_space<vmem>>, vector<1x128x128xbf16>
    %25 = vector.shape_cast %24 : vector<1x128x128xbf16> to vector<128x128xbf16>
    %cst_17 = arith.constant dense<0.000000e+00> : vector<16x128xf32>
    %26 = tpu.matmul %23, %25, %cst_17 {dimension_numbers = #tpu.dot_dimension_numbers<[1], [0], [0], [1], [0, 0, 1, 1], [], []>} : vector<16x128xbf16>, vector<128x128xbf16>, vector<16x128xf32> -> vector<16x128xf32>
    %27 = arith.addf %22, %26 : vector<16x128xf32>
    %28 = vector.extract_strided_slice %11 {offsets = [48, 0], sizes = [16, 128], strides = [1, 1]} : vector<128x128xbf16> to vector<16x128xbf16>
    %c3 = arith.constant 3 : index
    %c0_18 = arith.constant 0 : index
    %c0_19 = arith.constant 0 : index
    %29 = vector.load %arg3[%c3, %c0_18, %c0_19] : memref<8x128x128xbf16, #tpu.memory_space<vmem>>, vector<1x128x128xbf16>
    %30 = vector.shape_cast %29 : vector<1x128x128xbf16> to vector<128x128xbf16>
    %cst_20 = arith.constant dense<0.000000e+00> : vector<16x128xf32>
    %31 = tpu.matmul %28, %30, %cst_20 {dimension_numbers = #tpu.dot_dimension_numbers<[1], [0], [0], [1], [0, 0, 1, 1], [], []>} : vector<16x128xbf16>, vector<128x128xbf16>, vector<16x128xf32> -> vector<16x128xf32>
    %32 = arith.addf %27, %31 : vector<16x128xf32>
    %33 = vector.extract_strided_slice %11 {offsets = [64, 0], sizes = [16, 128], strides = [1, 1]} : vector<128x128xbf16> to vector<16x128xbf16>
    %c4 = arith.constant 4 : index
    %c0_21 = arith.constant 0 : index
    %c0_22 = arith.constant 0 : index
    %34 = vector.load %arg3[%c4, %c0_21, %c0_22] : memref<8x128x128xbf16, #tpu.memory_space<vmem>>, vector<1x128x128xbf16>
    %35 = vector.shape_cast %34 : vector<1x128x128xbf16> to vector<128x128xbf16>
    %cst_23 = arith.constant dense<0.000000e+00> : vector<16x128xf32>
    %36 = tpu.matmul %33, %35, %cst_23 {dimension_numbers = #tpu.dot_dimension_numbers<[1], [0], [0], [1], [0, 0, 1, 1], [], []>} : vector<16x128xbf16>, vector<128x128xbf16>, vector<16x128xf32> -> vector<16x128xf32>
    %37 = arith.addf %32, %36 : vector<16x128xf32>
    %38 = vector.extract_strided_slice %11 {offsets = [80, 0], sizes = [16, 128], strides = [1, 1]} : vector<128x128xbf16> to vector<16x128xbf16>
    %c5 = arith.constant 5 : index
    %c0_24 = arith.constant 0 : index
    %c0_25 = arith.constant 0 : index
    %39 = vector.load %arg3[%c5, %c0_24, %c0_25] : memref<8x128x128xbf16, #tpu.memory_space<vmem>>, vector<1x128x128xbf16>
    %40 = vector.shape_cast %39 : vector<1x128x128xbf16> to vector<128x128xbf16>
    %cst_26 = arith.constant dense<0.000000e+00> : vector<16x128xf32>
    %41 = tpu.matmul %38, %40, %cst_26 {dimension_numbers = #tpu.dot_dimension_numbers<[1], [0], [0], [1], [0, 0, 1, 1], [], []>} : vector<16x128xbf16>, vector<128x128xbf16>, vector<16x128xf32> -> vector<16x128xf32>
    %42 = arith.addf %37, %41 : vector<16x128xf32>
    %43 = vector.extract_strided_slice %11 {offsets = [96, 0], sizes = [16, 128], strides = [1, 1]} : vector<128x128xbf16> to vector<16x128xbf16>
    %c6 = arith.constant 6 : index
    %c0_27 = arith.constant 0 : index
    %c0_28 = arith.constant 0 : index
    %44 = vector.load %arg3[%c6, %c0_27, %c0_28] : memref<8x128x128xbf16, #tpu.memory_space<vmem>>, vector<1x128x128xbf16>
    %45 = vector.shape_cast %44 : vector<1x128x128xbf16> to vector<128x128xbf16>
    %cst_29 = arith.constant dense<0.000000e+00> : vector<16x128xf32>
    %46 = tpu.matmul %43, %45, %cst_29 {dimension_numbers = #tpu.dot_dimension_numbers<[1], [0], [0], [1], [0, 0, 1, 1], [], []>} : vector<16x128xbf16>, vector<128x128xbf16>, vector<16x128xf32> -> vector<16x128xf32>
    %47 = arith.addf %42, %46 : vector<16x128xf32>
    %48 = vector.extract_strided_slice %11 {offsets = [112, 0], sizes = [16, 128], strides = [1, 1]} : vector<128x128xbf16> to vector<16x128xbf16>
    %c7 = arith.constant 7 : index
    %c0_30 = arith.constant 0 : index
    %c0_31 = arith.constant 0 : index
    %49 = vector.load %arg3[%c7, %c0_30, %c0_31] : memref<8x128x128xbf16, #tpu.memory_space<vmem>>, vector<1x128x128xbf16>
    %50 = vector.shape_cast %49 : vector<1x128x128xbf16> to vector<128x128xbf16>
    %cst_32 = arith.constant dense<0.000000e+00> : vector<16x128xf32>
    %51 = tpu.matmul %48, %50, %cst_32 {dimension_numbers = #tpu.dot_dimension_numbers<[1], [0], [0], [1], [0, 0, 1, 1], [], []>} : vector<16x128xbf16>, vector<128x128xbf16>, vector<16x128xf32> -> vector<16x128xf32>
    %52 = arith.addf %47, %51 : vector<16x128xf32>
    %c0_33 = arith.constant 0 : index
    %c0_34 = arith.constant 0 : index
    %53 = vector.load %arg4[%c0_33, %c0_34] : memref<1x128xf32, #tpu.memory_space<vmem>>, vector<1x128xf32>
    %54 = vector.broadcast %53 : vector<1x128xf32> to vector<16x128xf32>
    %55 = arith.addf %52, %54 : vector<16x128xf32>
    %cst_35 = arith.constant 0.000000e+00 : f32
    %56 = vector.broadcast %cst_35 : f32 to vector<16x128xf32>
    %57 = arith.cmpf ogt, %55, %56 : vector<16x128xf32>
    %cst_36 = arith.constant 0.00999999977 : f32
    %58 = vector.broadcast %cst_36 : f32 to vector<16x128xf32>
    %59 = arith.mulf %58, %55 : vector<16x128xf32>
    %60 = arith.select %57, %55, %59 : vector<16x128xi1>, vector<16x128xf32>
    %cst_37 = arith.constant 0.000000e+00 : f32
    %61 = vector.broadcast %cst_37 : f32 to vector<2x128xf32>
    %62 = vector.extract_strided_slice %60 {offsets = [0, 0], sizes = [2, 128], strides = [1, 1]} : vector<16x128xf32> to vector<2x128xf32>
    %63 = arith.truncf %62 : vector<2x128xf32> to vector<2x128xbf16>
    %c0_38 = arith.constant 0 : index
    %c0_39 = arith.constant 0 : index
    %c0_40 = arith.constant 0 : index
    %64 = vector.load %arg5[%c0_38, %c0_39, %c0_40] : memref<8x128x128xbf16, #tpu.memory_space<vmem>>, vector<1x128x128xbf16>
    %65 = vector.shape_cast %64 : vector<1x128x128xbf16> to vector<128x128xbf16>
    %cst_41 = arith.constant dense<0.000000e+00> : vector<2x128xf32>
    %66 = tpu.matmul %63, %65, %cst_41 {dimension_numbers = #tpu.dot_dimension_numbers<[1], [0], [0], [1], [0, 0, 1, 1], [], []>} : vector<2x128xbf16>, vector<128x128xbf16>, vector<2x128xf32> -> vector<2x128xf32>
    %67 = arith.addf %61, %66 : vector<2x128xf32>
    %68 = vector.extract_strided_slice %60 {offsets = [2, 0], sizes = [2, 128], strides = [1, 1]} : vector<16x128xf32> to vector<2x128xf32>
    %69 = arith.truncf %68 : vector<2x128xf32> to vector<2x128xbf16>
    %c1_42 = arith.constant 1 : index
    %c0_43 = arith.constant 0 : index
    %c0_44 = arith.constant 0 : index
    %70 = vector.load %arg5[%c1_42, %c0_43, %c0_44] : memref<8x128x128xbf16, #tpu.memory_space<vmem>>, vector<1x128x128xbf16>
    %71 = vector.shape_cast %70 : vector<1x128x128xbf16> to vector<128x128xbf16>
    %cst_45 = arith.constant dense<0.000000e+00> : vector<2x128xf32>
    %72 = tpu.matmul %69, %71, %cst_45 {dimension_numbers = #tpu.dot_dimension_numbers<[1], [0], [0], [1], [0, 0, 1, 1], [], []>} : vector<2x128xbf16>, vector<128x128xbf16>, vector<2x128xf32> -> vector<2x128xf32>
    %73 = arith.addf %67, %72 : vector<2x128xf32>
    %74 = vector.extract_strided_slice %60 {offsets = [4, 0], sizes = [2, 128], strides = [1, 1]} : vector<16x128xf32> to vector<2x128xf32>
    %75 = arith.truncf %74 : vector<2x128xf32> to vector<2x128xbf16>
    %c2_46 = arith.constant 2 : index
    %c0_47 = arith.constant 0 : index
    %c0_48 = arith.constant 0 : index
    %76 = vector.load %arg5[%c2_46, %c0_47, %c0_48] : memref<8x128x128xbf16, #tpu.memory_space<vmem>>, vector<1x128x128xbf16>
    %77 = vector.shape_cast %76 : vector<1x128x128xbf16> to vector<128x128xbf16>
    %cst_49 = arith.constant dense<0.000000e+00> : vector<2x128xf32>
    %78 = tpu.matmul %75, %77, %cst_49 {dimension_numbers = #tpu.dot_dimension_numbers<[1], [0], [0], [1], [0, 0, 1, 1], [], []>} : vector<2x128xbf16>, vector<128x128xbf16>, vector<2x128xf32> -> vector<2x128xf32>
    %79 = arith.addf %73, %78 : vector<2x128xf32>
    %80 = vector.extract_strided_slice %60 {offsets = [6, 0], sizes = [2, 128], strides = [1, 1]} : vector<16x128xf32> to vector<2x128xf32>
    %81 = arith.truncf %80 : vector<2x128xf32> to vector<2x128xbf16>
    %c3_50 = arith.constant 3 : index
    %c0_51 = arith.constant 0 : index
    %c0_52 = arith.constant 0 : index
    %82 = vector.load %arg5[%c3_50, %c0_51, %c0_52] : memref<8x128x128xbf16, #tpu.memory_space<vmem>>, vector<1x128x128xbf16>
    %83 = vector.shape_cast %82 : vector<1x128x128xbf16> to vector<128x128xbf16>
    %cst_53 = arith.constant dense<0.000000e+00> : vector<2x128xf32>
    %84 = tpu.matmul %81, %83, %cst_53 {dimension_numbers = #tpu.dot_dimension_numbers<[1], [0], [0], [1], [0, 0, 1, 1], [], []>} : vector<2x128xbf16>, vector<128x128xbf16>, vector<2x128xf32> -> vector<2x128xf32>
    %85 = arith.addf %79, %84 : vector<2x128xf32>
    %86 = vector.extract_strided_slice %60 {offsets = [8, 0], sizes = [2, 128], strides = [1, 1]} : vector<16x128xf32> to vector<2x128xf32>
    %87 = arith.truncf %86 : vector<2x128xf32> to vector<2x128xbf16>
    %c4_54 = arith.constant 4 : index
    %c0_55 = arith.constant 0 : index
    %c0_56 = arith.constant 0 : index
    %88 = vector.load %arg5[%c4_54, %c0_55, %c0_56] : memref<8x128x128xbf16, #tpu.memory_space<vmem>>, vector<1x128x128xbf16>
    %89 = vector.shape_cast %88 : vector<1x128x128xbf16> to vector<128x128xbf16>
    %cst_57 = arith.constant dense<0.000000e+00> : vector<2x128xf32>
    %90 = tpu.matmul %87, %89, %cst_57 {dimension_numbers = #tpu.dot_dimension_numbers<[1], [0], [0], [1], [0, 0, 1, 1], [], []>} : vector<2x128xbf16>, vector<128x128xbf16>, vector<2x128xf32> -> vector<2x128xf32>
    %91 = arith.addf %85, %90 : vector<2x128xf32>
    %92 = vector.extract_strided_slice %60 {offsets = [10, 0], sizes = [2, 128], strides = [1, 1]} : vector<16x128xf32> to vector<2x128xf32>
    %93 = arith.truncf %92 : vector<2x128xf32> to vector<2x128xbf16>
    %c5_58 = arith.constant 5 : index
    %c0_59 = arith.constant 0 : index
    %c0_60 = arith.constant 0 : index
    %94 = vector.load %arg5[%c5_58, %c0_59, %c0_60] : memref<8x128x128xbf16, #tpu.memory_space<vmem>>, vector<1x128x128xbf16>
    %95 = vector.shape_cast %94 : vector<1x128x128xbf16> to vector<128x128xbf16>
    %cst_61 = arith.constant dense<0.000000e+00> : vector<2x128xf32>
    %96 = tpu.matmul %93, %95, %cst_61 {dimension_numbers = #tpu.dot_dimension_numbers<[1], [0], [0], [1], [0, 0, 1, 1], [], []>} : vector<2x128xbf16>, vector<128x128xbf16>, vector<2x128xf32> -> vector<2x128xf32>
    %97 = arith.addf %91, %96 : vector<2x128xf32>
    %98 = vector.extract_strided_slice %60 {offsets = [12, 0], sizes = [2, 128], strides = [1, 1]} : vector<16x128xf32> to vector<2x128xf32>
    %99 = arith.truncf %98 : vector<2x128xf32> to vector<2x128xbf16>
    %c6_62 = arith.constant 6 : index
    %c0_63 = arith.constant 0 : index
    %c0_64 = arith.constant 0 : index
    %100 = vector.load %arg5[%c6_62, %c0_63, %c0_64] : memref<8x128x128xbf16, #tpu.memory_space<vmem>>, vector<1x128x128xbf16>
    %101 = vector.shape_cast %100 : vector<1x128x128xbf16> to vector<128x128xbf16>
    %cst_65 = arith.constant dense<0.000000e+00> : vector<2x128xf32>
    %102 = tpu.matmul %99, %101, %cst_65 {dimension_numbers = #tpu.dot_dimension_numbers<[1], [0], [0], [1], [0, 0, 1, 1], [], []>} : vector<2x128xbf16>, vector<128x128xbf16>, vector<2x128xf32> -> vector<2x128xf32>
    %103 = arith.addf %97, %102 : vector<2x128xf32>
    %104 = vector.extract_strided_slice %60 {offsets = [14, 0], sizes = [2, 128], strides = [1, 1]} : vector<16x128xf32> to vector<2x128xf32>
    %105 = arith.truncf %104 : vector<2x128xf32> to vector<2x128xbf16>
    %c7_66 = arith.constant 7 : index
    %c0_67 = arith.constant 0 : index
    %c0_68 = arith.constant 0 : index
    %106 = vector.load %arg5[%c7_66, %c0_67, %c0_68] : memref<8x128x128xbf16, #tpu.memory_space<vmem>>, vector<1x128x128xbf16>
    %107 = vector.shape_cast %106 : vector<1x128x128xbf16> to vector<128x128xbf16>
    %cst_69 = arith.constant dense<0.000000e+00> : vector<2x128xf32>
    %108 = tpu.matmul %105, %107, %cst_69 {dimension_numbers = #tpu.dot_dimension_numbers<[1], [0], [0], [1], [0, 0, 1, 1], [], []>} : vector<2x128xbf16>, vector<128x128xbf16>, vector<2x128xf32> -> vector<2x128xf32>
    %109 = arith.addf %103, %108 : vector<2x128xf32>
    %c0_70 = arith.constant 0 : index
    %c0_71 = arith.constant 0 : index
    %110 = vector.load %arg6[%c0_70, %c0_71] : memref<1x128xf32, #tpu.memory_space<vmem>>, vector<1x128xf32>
    %111 = vector.broadcast %110 : vector<1x128xf32> to vector<2x128xf32>
    %112 = arith.addf %109, %111 : vector<2x128xf32>
    %113 = arith.truncf %112 : vector<2x128xf32> to vector<2x128xbf16>
    %c0_72 = arith.constant 0 : index
    %c0_73 = arith.constant 0 : index
    %114 = vector.load %arg7[%c0_72, %c0_73] : memref<128x256xbf16, #tpu.memory_space<vmem>>, vector<128x256xbf16>
    %cst_74 = arith.constant dense<0.000000e+00> : vector<2x256xf32>
    %115 = tpu.matmul %113, %114, %cst_74 {dimension_numbers = #tpu.dot_dimension_numbers<[1], [0], [0], [1], [0, 0, 1, 1], [], []>} : vector<2x128xbf16>, vector<128x256xbf16>, vector<2x256xf32> -> vector<2x256xf32>
    %c0_75 = arith.constant 0 : index
    %c0_76 = arith.constant 0 : index
    %116 = vector.load %arg8[%c0_75, %c0_76] : memref<1x256xf32, #tpu.memory_space<vmem>>, vector<1x256xf32>
    %117 = vector.broadcast %116 : vector<1x256xf32> to vector<2x256xf32>
    %118 = arith.addf %115, %117 : vector<2x256xf32>
    %cst_77 = arith.constant 0.000000e+00 : f32
    %119 = vector.broadcast %cst_77 : f32 to vector<2x256xf32>
    %120 = arith.cmpf ogt, %118, %119 : vector<2x256xf32>
    %cst_78 = arith.constant 0.00999999977 : f32
    %121 = vector.broadcast %cst_78 : f32 to vector<2x256xf32>
    %122 = arith.mulf %121, %118 : vector<2x256xf32>
    %123 = arith.select %120, %118, %122 : vector<2x256xi1>, vector<2x256xf32>
    %124 = arith.truncf %123 : vector<2x256xf32> to vector<2x256xbf16>
    %c0_79 = arith.constant 0 : index
    %c0_80 = arith.constant 0 : index
    %125 = vector.load %arg9[%c0_79, %c0_80] : memref<256x128xbf16, #tpu.memory_space<vmem>>, vector<256x128xbf16>
    %cst_81 = arith.constant dense<0.000000e+00> : vector<2x128xf32>
    %126 = tpu.matmul %124, %125, %cst_81 {dimension_numbers = #tpu.dot_dimension_numbers<[1], [0], [0], [1], [0, 0, 1, 1], [], []>} : vector<2x256xbf16>, vector<256x128xbf16>, vector<2x128xf32> -> vector<2x128xf32>
    %c0_82 = arith.constant 0 : index
    %c0_83 = arith.constant 0 : index
    %127 = vector.load %arg10[%c0_82, %c0_83] : memref<1x128xf32, #tpu.memory_space<vmem>>, vector<1x128xf32>
    %128 = vector.broadcast %127 : vector<1x128xf32> to vector<2x128xf32>
    %129 = arith.addf %126, %128 : vector<2x128xf32>
    %cst_84 = arith.constant 0.000000e+00 : f32
    %130 = vector.broadcast %cst_84 : f32 to vector<2x128xf32>
    %131 = arith.cmpf ogt, %129, %130 : vector<2x128xf32>
    %cst_85 = arith.constant 0.00999999977 : f32
    %132 = vector.broadcast %cst_85 : f32 to vector<2x128xf32>
    %133 = arith.mulf %132, %129 : vector<2x128xf32>
    %134 = arith.select %131, %129, %133 : vector<2x128xi1>, vector<2x128xf32>
    %135 = arith.truncf %134 : vector<2x128xf32> to vector<2x128xbf16>
    %c0_86 = arith.constant 0 : index
    %c0_87 = arith.constant 0 : index
    %136 = vector.load %arg11[%c0_86, %c0_87] : memref<128x128xbf16, #tpu.memory_space<vmem>>, vector<128x128xbf16>
    %cst_88 = arith.constant dense<0.000000e+00> : vector<2x128xf32>
    %137 = tpu.matmul %135, %136, %cst_88 {dimension_numbers = #tpu.dot_dimension_numbers<[1], [0], [0], [1], [0, 0, 1, 1], [], []>} : vector<2x128xbf16>, vector<128x128xbf16>, vector<2x128xf32> -> vector<2x128xf32>
    %c0_89 = arith.constant 0 : index
    %c0_90 = arith.constant 0 : index
    %138 = vector.load %arg12[%c0_89, %c0_90] : memref<1x128xf32, #tpu.memory_space<vmem>>, vector<1x128xf32>
    %139 = vector.broadcast %138 : vector<1x128xf32> to vector<2x128xf32>
    %140 = arith.addf %137, %139 : vector<2x128xf32>
    %c0_91 = arith.constant 0 : index
    %c0_92 = arith.constant 0 : index
    %141 = vector.load %arg13[%c0_91, %c0_92] : memref<128x256xbf16, #tpu.memory_space<vmem>>, vector<128x256xbf16>
    %cst_93 = arith.constant dense<0.000000e+00> : vector<2x256xf32>
    %142 = tpu.matmul %113, %141, %cst_93 {dimension_numbers = #tpu.dot_dimension_numbers<[1], [0], [0], [1], [0, 0, 1, 1], [], []>} : vector<2x128xbf16>, vector<128x256xbf16>, vector<2x256xf32> -> vector<2x256xf32>
    %c0_94 = arith.constant 0 : index
    %c0_95 = arith.constant 0 : index
    %143 = vector.load %arg14[%c0_94, %c0_95] : memref<1x256xf32, #tpu.memory_space<vmem>>, vector<1x256xf32>
    %144 = vector.broadcast %143 : vector<1x256xf32> to vector<2x256xf32>
    %145 = arith.addf %142, %144 : vector<2x256xf32>
    %cst_96 = arith.constant 0.000000e+00 : f32
    %146 = vector.broadcast %cst_96 : f32 to vector<2x256xf32>
    %147 = arith.cmpf ogt, %145, %146 : vector<2x256xf32>
    %cst_97 = arith.constant 0.00999999977 : f32
    %148 = vector.broadcast %cst_97 : f32 to vector<2x256xf32>
    %149 = arith.mulf %148, %145 : vector<2x256xf32>
    %150 = arith.select %147, %145, %149 : vector<2x256xi1>, vector<2x256xf32>
    %151 = arith.truncf %150 : vector<2x256xf32> to vector<2x256xbf16>
    %c0_98 = arith.constant 0 : index
    %c0_99 = arith.constant 0 : index
    %152 = vector.load %arg15[%c0_98, %c0_99] : memref<256x128xbf16, #tpu.memory_space<vmem>>, vector<256x128xbf16>
    %cst_100 = arith.constant dense<0.000000e+00> : vector<2x128xf32>
    %153 = tpu.matmul %151, %152, %cst_100 {dimension_numbers = #tpu.dot_dimension_numbers<[1], [0], [0], [1], [0, 0, 1, 1], [], []>} : vector<2x256xbf16>, vector<256x128xbf16>, vector<2x128xf32> -> vector<2x128xf32>
    %c0_101 = arith.constant 0 : index
    %c0_102 = arith.constant 0 : index
    %154 = vector.load %arg16[%c0_101, %c0_102] : memref<1x128xf32, #tpu.memory_space<vmem>>, vector<1x128xf32>
    %155 = vector.broadcast %154 : vector<1x128xf32> to vector<2x128xf32>
    %156 = arith.addf %153, %155 : vector<2x128xf32>
    %cst_103 = arith.constant 0.000000e+00 : f32
    %157 = vector.broadcast %cst_103 : f32 to vector<2x128xf32>
    %158 = arith.cmpf ogt, %156, %157 : vector<2x128xf32>
    %cst_104 = arith.constant 0.00999999977 : f32
    %159 = vector.broadcast %cst_104 : f32 to vector<2x128xf32>
    %160 = arith.mulf %159, %156 : vector<2x128xf32>
    %161 = arith.select %158, %156, %160 : vector<2x128xi1>, vector<2x128xf32>
    %162 = arith.truncf %161 : vector<2x128xf32> to vector<2x128xbf16>
    %c0_105 = arith.constant 0 : index
    %c0_106 = arith.constant 0 : index
    %163 = vector.load %arg17[%c0_105, %c0_106] : memref<128x128xbf16, #tpu.memory_space<vmem>>, vector<128x128xbf16>
    %cst_107 = arith.constant dense<0.000000e+00> : vector<2x128xf32>
    %164 = tpu.matmul %162, %163, %cst_107 {dimension_numbers = #tpu.dot_dimension_numbers<[1], [0], [0], [1], [0, 0, 1, 1], [], []>} : vector<2x128xbf16>, vector<128x128xbf16>, vector<2x128xf32> -> vector<2x128xf32>
    %c0_108 = arith.constant 0 : index
    %c0_109 = arith.constant 0 : index
    %165 = vector.load %arg18[%c0_108, %c0_109] : memref<1x128xf32, #tpu.memory_space<vmem>>, vector<1x128xf32>
    %166 = vector.broadcast %165 : vector<1x128xf32> to vector<2x128xf32>
    %167 = arith.addf %164, %166 : vector<2x128xf32>
    %168 = tpu.iota {dimensions = array<i32: 1>} : vector<1x128xi32>
    %c1_i32 = arith.constant 1 : i32
    %169 = vector.broadcast %c1_i32 : i32 to vector<1x128xi32>
    %170 = arith.cmpi slt, %168, %169 : vector<1x128xi32>
    %cst_110 = arith.constant 0.000000e+00 : f32
    %171 = vector.shape_cast %170 : vector<1x128xi1> to vector<1x128xi1>
    %172 = vector.broadcast %171 : vector<1x128xi1> to vector<2x128xi1>
    %173 = vector.broadcast %cst_110 : f32 to vector<2x128xf32>
    %174 = arith.select %172, %140, %173 : vector<2x128xi1>, vector<2x128xf32>
    %cst_111 = arith.constant dense<0.000000e+00> : vector<2xf32>
    %175 = vector.multi_reduction <add>, %174, %cst_111 [1] : vector<2x128xf32> to vector<2xf32>
    %176 = vector.shape_cast %175 : vector<2xf32> to vector<2x1xf32>
    %c6_i32 = arith.constant 6 : i32
    %177 = vector.broadcast %c6_i32 : i32 to vector<1x128xi32>
    %178 = arith.cmpi slt, %168, %177 : vector<1x128xi32>
    %cst_112 = arith.constant 0.000000e+00 : f32
    %179 = vector.shape_cast %178 : vector<1x128xi1> to vector<1x128xi1>
    %180 = vector.broadcast %179 : vector<1x128xi1> to vector<2x128xi1>
    %181 = vector.broadcast %cst_112 : f32 to vector<2x128xf32>
    %182 = arith.select %180, %167, %181 : vector<2x128xi1>, vector<2x128xf32>
    %cst_113 = arith.constant dense<0.000000e+00> : vector<2xf32>
    %183 = vector.multi_reduction <add>, %182, %cst_113 [1] : vector<2x128xf32> to vector<2xf32>
    %184 = vector.shape_cast %183 : vector<2xf32> to vector<2x1xf32>
    %185 = vector.broadcast %176 : vector<2x1xf32> to vector<2x128xf32>
    %186 = arith.addf %185, %167 : vector<2x128xf32>
    %cst_114 = arith.constant 0.166666672 : f32
    %187 = vector.broadcast %cst_114 : f32 to vector<2x1xf32>
    %188 = arith.mulf %184, %187 : vector<2x1xf32>
    %189 = vector.broadcast %188 : vector<2x1xf32> to vector<2x128xf32>
    %190 = arith.subf %186, %189 : vector<2x128xf32>
    %c0_115 = arith.constant 0 : index
    %c0_116 = arith.constant 0 : index
    %191 = vector.load %arg19[%c0_115, %c0_116] : memref<2x128xf32, #tpu.memory_space<vmem>>, vector<2x128xf32>
    tpu.vector_store %arg19[%c0_115, %c0_116], %190 {strides = array<i32>} : memref<2x128xf32, #tpu.memory_space<vmem>>, vector<2x128xf32>,
    return
  }
}

</mosaic_0001>

<llo_original>
// kernel: dqn_forward.2
$region0: #{dqn_forward.2}
  #allocation0 [shape = 'u32[]', space=smem, size = 0x4, offset = 0x4, fixed_abs, tag = 'smem constant byte address 0x4 - core index']
  #allocation1 [shape = 'u32[144,128]{1,0:T(1,128)}', space=vmem, size = 0x12000, scoped, tag = 'internal scratch']
  %s0 = inlined_call_operand.vmem [shape: bf16[1024,256], index: 0, kind: input, shape index: {}]
  %s1 = inlined_call_operand.vmem [shape: bf16[256,128], index: 1, kind: input, shape index: {}]
  %s2 = inlined_call_operand.vmem [shape: f32[1,128], index: 2, kind: input, shape index: {}]
  %s3 = inlined_call_operand.vmem [shape: bf16[1024,128], index: 3, kind: output, shape index: {}]
  %s4 = sld [smem:[#allocation0]]
  $region45: #{dqn_forward.2} parent=0
    _
  %s6 = ssub.s32 1, %s4
  %s7 = scalar_select 0, %s6, %s4
  loop: start=0, step=1, limit=4
  $region2: #{dqn_forward.2} parent=0 // loop_pre_header
    _
  $region3: #{dqn_forward.2} parent=0 // loop_header
    %s9 = sphi 0, %s13
    %p10 = scmp.ge.s32.totalorder %s9, 4
    %s19 = sphi 0, %s21
    %s22 = sphi 0, %s19
    %s23 = sphi 0, %s22
    %s39 = sphi 0, %s23
    %s43 = sphi 0, %s43
    %s45 = sphi 0, %s43
    %s46 = sphi 0, %s45
    %s60 = sphi 0, %s46
    %s64 = sphi 0, %s64
    %s66 = sphi 0, %s64
    %s67 = sphi 0, %s66
    %s81 = sphi 0, %s67
    %s87 = sphi 0, %s89
    %s90 = sphi 0, %s87
    %s91 = sphi 0, %s90
    %s107 = sphi 0, %s91
  $region4: #{dqn_forward.2} parent=0 // loop_header_branch
    %12 = sbr.rel (%p10) target = $region8
  $region5: #{dqn_forward.2} parent=0 // loop_body
    %s14 = ssub.s32 %s9, 1
    %s15 = ssub.s32 %s9, 2
    %s16 = sadd.s32 %s9, 1
    %s17 = ssub.s32 %s9, %s16
    %p18 = scmp.eq.s32.totalorder %s17, 0
    %s20 = sadd.s32 %s19, 1
    %s21 = scalar_select %p18, %s19, %s20
    %p24 = pneg %p18
    %p25 = scmp.eq.s32.totalorder %s9, 1
    %p26 = por %p24, %p25
    %p27 = scmp.ne.s32.totalorder %s19, %s22
    %p28 = scmp.eq.s32.totalorder %s9, 0
    %p29 = por %p27, %p28
    %p30 = scmp.ne.s32.totalorder %s19, %s22
    %p31 = scmp.eq.s32.totalorder %s14, 1
    %p32 = por %p30, %p31
    %p33 = scmp.ne.s32.totalorder %s22, %s23
    %p34 = scmp.eq.s32.totalorder %s14, 0
    %p35 = por %p33, %p34
    %p36 = scmp.ne.s32.totalorder %s22, %s23
    %p37 = scmp.eq.s32.totalorder %s15, 1
    %p38 = por %p36, %p37
    %p40 = scmp.ne.s32.totalorder %s23, %s39
    %p41 = scmp.eq.s32.totalorder %s15, 0
    %p42 = por %p40, %p41
    %s44 = sadd.s32 %s43, 1
    %p47 = scmp.eq.s32.totalorder %s9, 1
    %p48 = scmp.ne.s32.totalorder %s43, %s45
    %p49 = scmp.eq.s32.totalorder %s9, 0
    %p50 = por %p48, %p49
    %p51 = scmp.ne.s32.totalorder %s43, %s45
    %p52 = scmp.eq.s32.totalorder %s14, 1
    %p53 = por %p51, %p52
    %p54 = scmp.ne.s32.totalorder %s45, %s46
    %p55 = scmp.eq.s32.totalorder %s14, 0
    %p56 = por %p54, %p55
    %p57 = scmp.ne.s32.totalorder %s45, %s46
    %p58 = scmp.eq.s32.totalorder %s15, 1
    %p59 = por %p57, %p58
    %p61 = scmp.ne.s32.totalorder %s46, %s60
    %p62 = scmp.eq.s32.totalorder %s15, 0
    %p63 = por %p61, %p62
    %s65 = sadd.s32 %s64, 1
    %p68 = scmp.eq.s32.totalorder %s9, 1
    %p69 = scmp.ne.s32.totalorder %s64, %s66
    %p70 = scmp.eq.s32.totalorder %s9, 0
    %p71 = por %p69, %p70
    %p72 = scmp.ne.s32.totalorder %s64, %s66
    %p73 = scmp.eq.s32.totalorder %s14, 1
    %p74 = por %p72, %p73
    %p75 = scmp.ne.s32.totalorder %s66, %s67
    %p76 = scmp.eq.s32.totalorder %s14, 0
    %p77 = por %p75, %p76
    %p78 = scmp.ne.s32.totalorder %s66, %s67
    %p79 = scmp.eq.s32.totalorder %s15, 1
    %p80 = por %p78, %p79
    %p82 = scmp.ne.s32.totalorder %s67, %s81
    %p83 = scmp.eq.s32.totalorder %s15, 0
    %p84 = por %p82, %p83
    %s85 = ssub.s32 %s9, %s16
    %p86 = scmp.eq.s32.totalorder %s85, 0
    %s88 = sadd.s32 %s87, 1
    %s89 = scalar_select %p86, %s87, %s88
    %p92 = pneg %p86
    %p93 = scmp.eq.s32.totalorder %s9, 1
    %p94 = por %p92, %p93
    %p95 = scmp.ne.s32.totalorder %s87, %s90
    %p96 = scmp.eq.s32.totalorder %s9, 0
    %p97 = por %p95, %p96
    %p98 = scmp.ne.s32.totalorder %s87, %s90
    %p99 = scmp.eq.s32.totalorder %s14, 1
    %p100 = por %p98, %p99
    %p101 = scmp.ne.s32.totalorder %s90, %s91
    %p102 = scmp.eq.s32.totalorder %s14, 0
    %p103 = por %p101, %p102
    %p104 = scmp.ne.s32.totalorder %s90, %s91
    %p105 = scmp.eq.s32.totalorder %s15, 1
    %p106 = por %p104, %p105
    %p108 = scmp.ne.s32.totalorder %s91, %s107
    %p109 = scmp.eq.s32.totalorder %s15, 0
    %p110 = por %p108, %p109
    %p111 = scmp.le.s32.totalorder 1, %s9
    %p112 = scmp.lt.s32.totalorder %s9, 3
    %p113 = pnand %p111, %p112
    %p114 = pneg %p113
    // Predicated region
    $region9: #{dqn_forward.2} parent=5 // pred_check
      _
    $region10: #{dqn_forward.2} parent=5 // pred_check_branch
      %116 = sbr.rel (%p113) target = $region12
    $region11: #{dqn_forward.2} parent=5 // pred_region
      %s117 = ssub.s32 %s9, 1
      // Predicated region
      $region13: #{dqn_forward.2} parent=11 // pred_check
        %p118 = pneg %p56
      $region14: #{dqn_forward.2} parent=11 // pred_check_branch
        %120 = sbr.rel (%p118) target = $region16
      $region15: #{dqn_forward.2} parent=11 // pred_region
        _
      $region16: #{dqn_forward.2} parent=11 // pred_fallthru
        _
      // Predicated region
      $region17: #{dqn_forward.2} parent=11 // pred_check
        %p121 = pneg %p77
      $region18: #{dqn_forward.2} parent=11 // pred_check_branch
        %123 = sbr.rel (%p121) target = $region20
      $region19: #{dqn_forward.2} parent=11 // pred_region
        _
      $region20: #{dqn_forward.2} parent=11 // pred_fallthru
        _
    $region12: #{dqn_forward.2} parent=5 // pred_fallthru
      _
    %p124 = scmp.lt.s32.totalorder %s9, 2
    // Predicated region
    $region21: #{dqn_forward.2} parent=5 // pred_check
      %p125 = pneg %p124
    $region22: #{dqn_forward.2} parent=5 // pred_check_branch
      %127 = sbr.rel (%p125) target = $region24
    $region23: #{dqn_forward.2} parent=5 // pred_region
      // Predicated region
      $region25: #{dqn_forward.2} parent=23 // pred_check
        %p128 = pneg %p29
      $region26: #{dqn_forward.2} parent=23 // pred_check_branch
        %130 = sbr.rel (%p128) target = $region28
      $region27: #{dqn_forward.2} parent=23 // pred_region
        %s131 = smul.u32 64, %s9
        %p132 = scmp.lt.s32.totalorder %s131, 127
        %s133 = scalar_select %p132, %s131, 127
        %s134 = smul.addr %s133, 2
        %s135 = smul.addr %s134, 4
        %s136 = scalar_lea.vmem %s0, %s135
        %s137 = smul.u32 64, %s9
      $region28: #{dqn_forward.2} parent=23 // pred_fallthru
        _
    $region24: #{dqn_forward.2} parent=5 // pred_fallthru
      _
    %p138 = scmp.le.s32.totalorder 1, %s9
    %p139 = scmp.lt.s32.totalorder %s9, 3
    %p140 = pnand %p138, %p139
    %p141 = pneg %p140
    // Predicated region
    $region29: #{dqn_forward.2} parent=5 // pred_check
      _
    $region30: #{dqn_forward.2} parent=5 // pred_check_branch
      %143 = sbr.rel (%p140) target = $region32
    $region31: #{dqn_forward.2} parent=5 // pred_region
      %s144 = ssub.s32 %s9, 1
      %s145 = smul.u32 64, %s14
      %p146 = scmp.lt.s32.totalorder %s145, 127
      %s147 = scalar_select %p146, %s145, 127
      %s148 = smul.addr %s147, 2
      %s149 = smul.addr %s148, 4
      %s150 = scalar_lea.vmem %s0, %s149
      %p151 = pneg %p35
      %p152 = pneg %p32
      %p153 = pneg %p56
      %p154 = pneg %p53
      %p155 = pneg %p77
      %p156 = pneg %p74
      %p157 = pneg %p103
      %p158 = pneg %p100
      %s159 = smul.u32 64, %s14
      %p160 = scmp.lt.s32.totalorder %s159, 127
      %s161 = scalar_select %p160, %s159, 127
      %s162 = smul.addr %s161, 4
      %s163 = scalar_lea.vmem %s3, %s162
      %s164 = smul.u32 64, %s14
      %p165 = scmp.lt.s32.totalorder %s164, 127
      %s166 = scalar_select %p165, %s164, 127
      %s167 = smul.addr %s166, 2
      %s168 = smul.addr %s167, 4
      %s169 = scalar_lea.vmem %s0, %s168
      %s170 = smul.u32 64, %s14
      %s171 = smul.u32 64, %s14
      %p172 = scmp.lt.s32.totalorder %s171, 127
      %s173 = scalar_select %p172, %s171, 127
      %s174 = smul.addr %s173, 4
      %s175 = scalar_lea.vmem %s3, %s174
      %s176 = smul.u32 64, %s14
      %v178 = vld [vmem:[%s169] sm:$0xff]
      %v179 = vld [vmem:[%s169 + $0x8] sm:$0xff]
      %v180 = vld [vmem:[%s169 + $0x10] sm:$0xff]
      %v181 = vld [vmem:[%s169 + $0x18] sm:$0xff]
      %v182 = vld [vmem:[%s169 + $0x20] sm:$0xff]
      %v183 = vld [vmem:[%s169 + $0x28] sm:$0xff]
      %v184 = vld [vmem:[%s169 + $0x30] sm:$0xff]
      %v185 = vld [vmem:[%s169 + $0x38] sm:$0xff]
      %v186 = vld [vmem:[%s169 + $0x40] sm:$0xff]
      %v187 = vld [vmem:[%s169 + $0x48] sm:$0xff]
      %v188 = vld [vmem:[%s169 + $0x50] sm:$0xff]
      %v189 = vld [vmem:[%s169 + $0x58] sm:$0xff]
      %v190 = vld [vmem:[%s169 + $0x60] sm:$0xff]
      %v191 = vld [vmem:[%s169 + $0x68] sm:$0xff]
      %v192 = vld [vmem:[%s169 + $0x70] sm:$0xff]
      %v193 = vld [vmem:[%s169 + $0x78] sm:$0xff]
      %v194 = vld [vmem:[%s169 + $0x80] sm:$0xff]
      %v195 = vld [vmem:[%s169 + $0x88] sm:$0xff]
      %v196 = vld [vmem:[%s169 + $0x90] sm:$0xff]
      %v197 = vld [vmem:[%s169 + $0x98] sm:$0xff]
      %v198 = vld [vmem:[%s169 + $0xa0] sm:$0xff]
      %v199 = vld [vmem:[%s169 + $0xa8] sm:$0xff]
      %v200 = vld [vmem:[%s169 + $0xb0] sm:$0xff]
      %v201 = vld [vmem:[%s169 + $0xb8] sm:$0xff]
      %v202 = vld [vmem:[%s169 + $0xc0] sm:$0xff]
      %v203 = vld [vmem:[%s169 + $0xc8] sm:$0xff]
      %v204 = vld [vmem:[%s169 + $0xd0] sm:$0xff]
      %v205 = vld [vmem:[%s169 + $0xd8] sm:$0xff]
      %v206 = vld [vmem:[%s169 + $0xe0] sm:$0xff]
      %v207 = vld [vmem:[%s169 + $0xe8] sm:$0xff]
      %v208 = vld [vmem:[%s169 + $0xf0] sm:$0xff]
      %v209 = vld [vmem:[%s169 + $0xf8] sm:$0xff]
      %v210 = vld [vmem:[%s169 + $0x100] sm:$0xff]
      %v211 = vld [vmem:[%s169 + $0x108] sm:$0xff]
      %v212 = vld [vmem:[%s169 + $0x110] sm:$0xff]
      %v213 = vld [vmem:[%s169 + $0x118] sm:$0xff]
      %v214 = vld [vmem:[%s169 + $0x120] sm:$0xff]
      %v215 = vld [vmem:[%s169 + $0x128] sm:$0xff]
      %v216 = vld [vmem:[%s169 + $0x130] sm:$0xff]
      %v217 = vld [vmem:[%s169 + $0x138] sm:$0xff]
      %v218 = vld [vmem:[%s169 + $0x140] sm:$0xff]
      %v219 = vld [vmem:[%s169 + $0x148] sm:$0xff]
      %v220 = vld [vmem:[%s169 + $0x150] sm:$0xff]
      %v221 = vld [vmem:[%s169 + $0x158] sm:$0xff]
      %v222 = vld [vmem:[%s169 + $0x160] sm:$0xff]
      %v223 = vld [vmem:[%s169 + $0x168] sm:$0xff]
      %v224 = vld [vmem:[%s169 + $0x170] sm:$0xff]
      %v225 = vld [vmem:[%s169 + $0x178] sm:$0xff]
      %v226 = vld [vmem:[%s169 + $0x180] sm:$0xff]
      %v227 = vld [vmem:[%s169 + $0x188] sm:$0xff]
      %v228 = vld [vmem:[%s169 + $0x190] sm:$0xff]
      %v229 = vld [vmem:[%s169 + $0x198] sm:$0xff]
      %v230 = vld [vmem:[%s169 + $0x1a0] sm:$0xff]
      %v231 = vld [vmem:[%s169 + $0x1a8] sm:$0xff]
      %v232 = vld [vmem:[%s169 + $0x1b0] sm:$0xff]
      %v233 = vld [vmem:[%s169 + $0x1b8] sm:$0xff]
      %v234 = vld [vmem:[%s169 + $0x1c0] sm:$0xff]
      %v235 = vld [vmem:[%s169 + $0x1c8] sm:$0xff]
      %v236 = vld [vmem:[%s169 + $0x1d0] sm:$0xff]
      %v237 = vld [vmem:[%s169 + $0x1d8] sm:$0xff]
      %v238 = vld [vmem:[%s169 + $0x1e0] sm:$0xff]
      %v239 = vld [vmem:[%s169 + $0x1e8] sm:$0xff]
      %v240 = vld [vmem:[%s169 + $0x1f0] sm:$0xff]
      %v241 = vld [vmem:[%s169 + $0x1f8] sm:$0xff]
      %v242 = vld [vmem:[%s1] sm:$0xf]
      %v243 = vld [vmem:[%s1 + $0x4] sm:$0xf]
      %v244 = vld [vmem:[%s1 + $0x8] sm:$0xf]
      %v245 = vld [vmem:[%s1 + $0xc] sm:$0xf]
      %v246 = vld [vmem:[%s1 + $0x10] sm:$0xf]
      %v247 = vld [vmem:[%s1 + $0x14] sm:$0xf]
      %v248 = vld [vmem:[%s1 + $0x18] sm:$0xf]
      %v249 = vld [vmem:[%s1 + $0x1c] sm:$0xf]
      %v250 = vld [vmem:[%s1 + $0x20] sm:$0xf]
      %v251 = vld [vmem:[%s1 + $0x24] sm:$0xf]
      %v252 = vld [vmem:[%s1 + $0x28] sm:$0xf]
      %v253 = vld [vmem:[%s1 + $0x2c] sm:$0xf]
      %v254 = vld [vmem:[%s1 + $0x30] sm:$0xf]
      %v255 = vld [vmem:[%s1 + $0x34] sm:$0xf]
      %v256 = vld [vmem:[%s1 + $0x38] sm:$0xf]
      %v257 = vld [vmem:[%s1 + $0x3c] sm:$0xf]
      %v258 = vld [vmem:[%s1 + $0x40] sm:$0xf]
      %v259 = vld [vmem:[%s1 + $0x44] sm:$0xf]
      %v260 = vld [vmem:[%s1 + $0x48] sm:$0xf]
      %v261 = vld [vmem:[%s1 + $0x4c] sm:$0xf]
      %v262 = vld [vmem:[%s1 + $0x50] sm:$0xf]
      %v263 = vld [vmem:[%s1 + $0x54] sm:$0xf]
      %v264 = vld [vmem:[%s1 + $0x58] sm:$0xf]
      %v265 = vld [vmem:[%s1 + $0x5c] sm:$0xf]
      %v266 = vld [vmem:[%s1 + $0x60] sm:$0xf]
      %v267 = vld [vmem:[%s1 + $0x64] sm:$0xf]
      %v268 = vld [vmem:[%s1 + $0x68] sm:$0xf]
      %v269 = vld [vmem:[%s1 + $0x6c] sm:$0xf]
      %v270 = vld [vmem:[%s1 + $0x70] sm:$0xf]
      %v271 = vld [vmem:[%s1 + $0x74] sm:$0xf]
      %v272 = vld [vmem:[%s1 + $0x78] sm:$0xf]
      %v273 = vld [vmem:[%s1 + $0x7c] sm:$0xf]
      %v274 = vld [vmem:[%s2] sm:$0x1]
      %v276 = vlaneseq
      %v277 = vshrl.u32 %v276, 7
      %v278 = vsub.s32 0, %v277
      %v279 = vrot.slane %v274, %v278
      %v345 = vunpack.c.l.b16 %v178
      %v346 = vunpack.c.h.b16 %v178
      %v347 = vunpack.c.l.b16 %v179
      %v348 = vunpack.c.h.b16 %v179
      %v349 = vunpack.c.l.b16 %v180
      %v350 = vunpack.c.h.b16 %v180
      %v351 = vunpack.c.l.b16 %v181
      %v352 = vunpack.c.h.b16 %v181
      %v353 = vunpack.c.l.b16 %v182
      %v354 = vunpack.c.h.b16 %v182
      %v355 = vunpack.c.l.b16 %v183
      %v356 = vunpack.c.h.b16 %v183
      %v357 = vunpack.c.l.b16 %v184
      %v358 = vunpack.c.h.b16 %v184
      %v359 = vunpack.c.l.b16 %v185
      %v360 = vunpack.c.h.b16 %v185
      %v361 = vunpack.c.l.b16 %v186
      %v362 = vunpack.c.h.b16 %v186
      %v363 = vunpack.c.l.b16 %v187
      %v364 = vunpack.c.h.b16 %v187
      %v365 = vunpack.c.l.b16 %v188
      %v366 = vunpack.c.h.b16 %v188
      %v367 = vunpack.c.l.b16 %v189
      %v368 = vunpack.c.h.b16 %v189
      %v369 = vunpack.c.l.b16 %v190
      %v370 = vunpack.c.h.b16 %v190
      %v371 = vunpack.c.l.b16 %v191
      %v372 = vunpack.c.h.b16 %v191
      %v373 = vunpack.c.l.b16 %v192
      %v374 = vunpack.c.h.b16 %v192
      %v375 = vunpack.c.l.b16 %v193
      %v376 = vunpack.c.h.b16 %v193
      %v377 = vunpack.c.l.b16 %v194
      %v378 = vunpack.c.h.b16 %v194
      %v379 = vunpack.c.l.b16 %v195
      %v380 = vunpack.c.h.b16 %v195
      %v381 = vunpack.c.l.b16 %v196
      %v382 = vunpack.c.h.b16 %v196
      %v383 = vunpack.c.l.b16 %v197
      %v384 = vunpack.c.h.b16 %v197
      %v385 = vunpack.c.l.b16 %v198
      %v386 = vunpack.c.h.b16 %v198
      %v387 = vunpack.c.l.b16 %v199
      %v388 = vunpack.c.h.b16 %v199
      %v389 = vunpack.c.l.b16 %v200
      %v390 = vunpack.c.h.b16 %v200
      %v391 = vunpack.c.l.b16 %v201
      %v392 = vunpack.c.h.b16 %v201
      %v393 = vunpack.c.l.b16 %v202
      %v394 = vunpack.c.h.b16 %v202
      %v395 = vunpack.c.l.b16 %v203
      %v396 = vunpack.c.h.b16 %v203
      %v397 = vunpack.c.l.b16 %v204
      %v398 = vunpack.c.h.b16 %v204
      %v399 = vunpack.c.l.b16 %v205
      %v400 = vunpack.c.h.b16 %v205
      %v401 = vunpack.c.l.b16 %v206
      %v402 = vunpack.c.h.b16 %v206
      %v403 = vunpack.c.l.b16 %v207
      %v404 = vunpack.c.h.b16 %v207
      %v405 = vunpack.c.l.b16 %v208
      %v406 = vunpack.c.h.b16 %v208
      %v407 = vunpack.c.l.b16 %v209
      %v408 = vunpack.c.h.b16 %v209
      %v409 = vunpack.c.l.b16 %v210
      %v410 = vunpack.c.h.b16 %v210
      %v411 = vunpack.c.l.b16 %v211
      %v412 = vunpack.c.h.b16 %v211
      %v413 = vunpack.c.l.b16 %v212
      %v414 = vunpack.c.h.b16 %v212
      %v415 = vunpack.c.l.b16 %v213
      %v416 = vunpack.c.h.b16 %v213
      %v417 = vunpack.c.l.b16 %v214
      %v418 = vunpack.c.h.b16 %v214
      %v419 = vunpack.c.l.b16 %v215
      %v420 = vunpack.c.h.b16 %v215
      %v421 = vunpack.c.l.b16 %v216
      %v422 = vunpack.c.h.b16 %v216
      %v423 = vunpack.c.l.b16 %v217
      %v424 = vunpack.c.h.b16 %v217
      %v425 = vunpack.c.l.b16 %v218
      %v426 = vunpack.c.h.b16 %v218
      %v427 = vunpack.c.l.b16 %v219
      %v428 = vunpack.c.h.b16 %v219
      %v429 = vunpack.c.l.b16 %v220
      %v430 = vunpack.c.h.b16 %v220
      %v431 = vunpack.c.l.b16 %v221
      %v432 = vunpack.c.h.b16 %v221
      %v433 = vunpack.c.l.b16 %v222
      %v434 = vunpack.c.h.b16 %v222
      %v435 = vunpack.c.l.b16 %v223
      %v436 = vunpack.c.h.b16 %v223
      %v437 = vunpack.c.l.b16 %v224
      %v438 = vunpack.c.h.b16 %v224
      %v439 = vunpack.c.l.b16 %v225
      %v440 = vunpack.c.h.b16 %v225
      %v441 = vunpack.c.l.b16 %v226
      %v442 = vunpack.c.h.b16 %v226
      %v443 = vunpack.c.l.b16 %v227
      %v444 = vunpack.c.h.b16 %v227
      %v445 = vunpack.c.l.b16 %v228
      %v446 = vunpack.c.h.b16 %v228
      %v447 = vunpack.c.l.b16 %v229
      %v448 = vunpack.c.h.b16 %v229
      %v449 = vunpack.c.l.b16 %v230
      %v450 = vunpack.c.h.b16 %v230
      %v451 = vunpack.c.l.b16 %v231
      %v452 = vunpack.c.h.b16 %v231
      %v453 = vunpack.c.l.b16 %v232
      %v454 = vunpack.c.h.b16 %v232
      %v455 = vunpack.c.l.b16 %v233
      %v456 = vunpack.c.h.b16 %v233
      %v457 = vunpack.c.l.b16 %v234
      %v458 = vunpack.c.h.b16 %v234
      %v459 = vunpack.c.l.b16 %v235
      %v460 = vunpack.c.h.b16 %v235
      %v461 = vunpack.c.l.b16 %v236
      %v462 = vunpack.c.h.b16 %v236
      %v463 = vunpack.c.l.b16 %v237
      %v464 = vunpack.c.h.b16 %v237
      %v465 = vunpack.c.l.b16 %v238
      %v466 = vunpack.c.h.b16 %v238
      %v467 = vunpack.c.l.b16 %v239
      %v468 = vunpack.c.h.b16 %v239
      %v469 = vunpack.c.l.b16 %v240
      %v470 = vunpack.c.h.b16 %v240
      %v471 = vunpack.c.l.b16 %v241
      %v472 = vunpack.c.h.b16 %v241
      %v473 = vpack.c.b16 %v347, %v345
      %v474 = vpack.c.b16 %v348, %v346
      %v475 = vpack.c.b16 %v351, %v349
      %v476 = vpack.c.b16 %v352, %v350
      %v477 = vpack.c.b16 %v355, %v353
      %v478 = vpack.c.b16 %v356, %v354
      %v479 = vpack.c.b16 %v359, %v357
      %v480 = vpack.c.b16 %v360, %v358
      %v481 = vpack.c.b16 %v363, %v361
      %v482 = vpack.c.b16 %v364, %v362
      %v483 = vpack.c.b16 %v367, %v365
      %v484 = vpack.c.b16 %v368, %v366
      %v485 = vpack.c.b16 %v371, %v369
      %v486 = vpack.c.b16 %v372, %v370
      %v487 = vpack.c.b16 %v375, %v373
      %v488 = vpack.c.b16 %v376, %v374
      %v489 = vpack.c.b16 %v379, %v377
      %v490 = vpack.c.b16 %v380, %v378
      %v491 = vpack.c.b16 %v383, %v381
      %v492 = vpack.c.b16 %v384, %v382
      %v493 = vpack.c.b16 %v387, %v385
      %v494 = vpack.c.b16 %v388, %v386
      %v495 = vpack.c.b16 %v391, %v389
      %v496 = vpack.c.b16 %v392, %v390
      %v497 = vpack.c.b16 %v395, %v393
      %v498 = vpack.c.b16 %v396, %v394
      %v499 = vpack.c.b16 %v399, %v397
      %v500 = vpack.c.b16 %v400, %v398
      %v501 = vpack.c.b16 %v403, %v401
      %v502 = vpack.c.b16 %v404, %v402
      %v503 = vpack.c.b16 %v407, %v405
      %v504 = vpack.c.b16 %v408, %v406
      %v505 = vpack.c.b16 %v411, %v409
      %v506 = vpack.c.b16 %v412, %v410
      %v507 = vpack.c.b16 %v415, %v413
      %v508 = vpack.c.b16 %v416, %v414
      %v509 = vpack.c.b16 %v419, %v417
      %v510 = vpack.c.b16 %v420, %v418
      %v511 = vpack.c.b16 %v423, %v421
      %v512 = vpack.c.b16 %v424, %v422
      %v513 = vpack.c.b16 %v427, %v425
      %v514 = vpack.c.b16 %v428, %v426
      %v515 = vpack.c.b16 %v431, %v429
      %v516 = vpack.c.b16 %v432, %v430
      %v517 = vpack.c.b16 %v435, %v433
      %v518 = vpack.c.b16 %v436, %v434
      %v519 = vpack.c.b16 %v439, %v437
      %v520 = vpack.c.b16 %v440, %v438
      %v521 = vpack.c.b16 %v443, %v441
      %v522 = vpack.c.b16 %v444, %v442
      %v523 = vpack.c.b16 %v447, %v445
      %v524 = vpack.c.b16 %v448, %v446
      %v525 = vpack.c.b16 %v451, %v449
      %v526 = vpack.c.b16 %v452, %v450
      %v527 = vpack.c.b16 %v455, %v453
      %v528 = vpack.c.b16 %v456, %v454
      %v529 = vpack.c.b16 %v459, %v457
      %v530 = vpack.c.b16 %v460, %v458
      %v531 = vpack.c.b16 %v463, %v461
      %v532 = vpack.c.b16 %v464, %v462
      %v533 = vpack.c.b16 %v467, %v465
      %v534 = vpack.c.b16 %v468, %v466
      %v535 = vpack.c.b16 %v471, %v469
      %v536 = vpack.c.b16 %v472, %v470
      %v633 = vunpack.c.l.b16 %v242
      %v634 = vunpack.c.l.b16 %v243
      %v635 = vunpack.c.l.b16 %v244
      %v636 = vunpack.c.l.b16 %v245
      %v637 = vunpack.c.l.b16 %v246
      %v638 = vunpack.c.l.b16 %v247
      %v639 = vunpack.c.l.b16 %v248
      %v640 = vunpack.c.l.b16 %v249
      %v641 = vunpack.c.l.b16 %v250
      %v642 = vunpack.c.l.b16 %v251
      %v643 = vunpack.c.l.b16 %v252
      %v644 = vunpack.c.l.b16 %v253
      %v645 = vunpack.c.l.b16 %v254
      %v646 = vunpack.c.l.b16 %v255
      %v647 = vunpack.c.l.b16 %v256
      %v648 = vunpack.c.l.b16 %v257
      %v649 = vunpack.c.l.b16 %v258
      %v650 = vunpack.c.l.b16 %v259
      %v651 = vunpack.c.l.b16 %v260
      %v652 = vunpack.c.l.b16 %v261
      %v653 = vunpack.c.l.b16 %v262
      %v654 = vunpack.c.l.b16 %v263
      %v655 = vunpack.c.l.b16 %v264
      %v656 = vunpack.c.l.b16 %v265
      %v657 = vunpack.c.l.b16 %v266
      %v658 = vunpack.c.l.b16 %v267
      %v659 = vunpack.c.l.b16 %v268
      %v660 = vunpack.c.l.b16 %v269
      %v661 = vunpack.c.l.b16 %v270
      %v662 = vunpack.c.l.b16 %v271
      %v663 = vunpack.c.l.b16 %v272
      %v664 = vunpack.c.l.b16 %v273
      %v665 = vpack.c.b16 %v634, %v633
      %v666 = vpack.c.b16 %v636, %v635
      %v667 = vpack.c.b16 %v638, %v637
      %v668 = vpack.c.b16 %v640, %v639
      %v669 = vpack.c.b16 %v642, %v641
      %v670 = vpack.c.b16 %v644, %v643
      %v671 = vpack.c.b16 %v646, %v645
      %v672 = vpack.c.b16 %v648, %v647
      %v673 = vpack.c.b16 %v650, %v649
      %v674 = vpack.c.b16 %v652, %v651
      %v675 = vpack.c.b16 %v654, %v653
      %v676 = vpack.c.b16 %v656, %v655
      %v677 = vpack.c.b16 %v658, %v657
      %v678 = vpack.c.b16 %v660, %v659
      %v679 = vpack.c.b16 %v662, %v661
      %v680 = vpack.c.b16 %v664, %v663
      %697 = vmatprep.subr.bf16.mxu0 0
      %698 = vmatpush1.bf16.msra.mxu0 %v665
      %699 = vmatprep.subr.bf16.mxu0 0
      %700 = vmatpush1.bf16.msra.mxu0 %v666
      %701 = vmatprep.subr.bf16.mxu0 0
      %702 = vmatpush1.bf16.msra.mxu0 %v667
      %703 = vmatprep.subr.bf16.mxu0 0
      %704 = vmatpush1.bf16.msra.mxu0 %v668
      %705 = vmatprep.subr.bf16.mxu0 0
      %706 = vmatpush1.bf16.msra.mxu0 %v669
      %707 = vmatprep.subr.bf16.mxu0 0
      %708 = vmatpush1.bf16.msra.mxu0 %v670
      %709 = vmatprep.subr.bf16.mxu0 0
      %710 = vmatpush1.bf16.msra.mxu0 %v671
      %711 = vmatprep.subr.bf16.mxu0 0
      %712 = vmatpush1.bf16.msra.mxu0 %v672
      %713 = vmatprep.subr.bf16.mxu0 0
      %714 = vmatpush1.bf16.msra.mxu0 %v673
      %715 = vmatprep.subr.bf16.mxu0 0
      %716 = vmatpush1.bf16.msra.mxu0 %v674
      %717 = vmatprep.subr.bf16.mxu0 0
      %718 = vmatpush1.bf16.msra.mxu0 %v675
      %719 = vmatprep.subr.bf16.mxu0 0
      %720 = vmatpush1.bf16.msra.mxu0 %v676
      %721 = vmatprep.subr.bf16.mxu0 0
      %722 = vmatpush1.bf16.msra.mxu0 %v677
      %723 = vmatprep.subr.bf16.mxu0 0
      %724 = vmatpush1.bf16.msra.mxu0 %v678
      %725 = vmatprep.subr.bf16.mxu0 0
      %726 = vmatpush1.bf16.msra.mxu0 %v679
      %727 = vmatprep.subr.bf16.mxu0 0
      %728 = vmatpush1.bf16.msra.mxu0 %v680
      %729 = vmatprep.mubr.bf16.mxu0 %v474
      %730 = vmatmul.mubr.bf16.gmra.mrb[0].mxu0 %v473
      %v731 = vpop.f32.mrb[0].mxu0
      %v732 = vadd.f32 %v279, %v731
      %v733 = vpop.f32.mrb[0].mxu0
      %v734 = vpop.f32.mrb[0].mxu0
      %v735 = vadd.f32 %v279, %v734
      %v736 = vpop.f32.mrb[0].mxu0
      %737 = vmatprep.mubr.bf16.mxu0 %v476
      %738 = vmatmul.mubr.bf16.gmra.mrb[0].mxu0 %v475
      %v739 = vpop.f32.mrb[0].mxu0
      %v740 = vadd.f32 %v279, %v739
      %v741 = vpop.f32.mrb[0].mxu0
      %v742 = vpop.f32.mrb[0].mxu0
      %v743 = vadd.f32 %v279, %v742
      %v744 = vpop.f32.mrb[0].mxu0
      %745 = vmatprep.mubr.bf16.mxu0 %v478
      %746 = vmatmul.mubr.bf16.gmra.mrb[0].mxu0 %v477
      %v747 = vpop.f32.mrb[0].mxu0
      %v748 = vadd.f32 %v279, %v747
      %v749 = vpop.f32.mrb[0].mxu0
      %v750 = vpop.f32.mrb[0].mxu0
      %v751 = vadd.f32 %v279, %v750
      %v752 = vpop.f32.mrb[0].mxu0
      %753 = vmatprep.mubr.bf16.mxu0 %v480
      %754 = vmatmul.mubr.bf16.gmra.mrb[0].mxu0 %v479
      %v755 = vpop.f32.mrb[0].mxu0
      %v756 = vadd.f32 %v279, %v755
      %v757 = vpop.f32.mrb[0].mxu0
      %v758 = vpop.f32.mrb[0].mxu0
      %v759 = vadd.f32 %v279, %v758
      %v760 = vpop.f32.mrb[0].mxu0
      %761 = vmatprep.mubr.bf16.mxu0 %v482
      %762 = vmatmul.mubr.bf16.gmra.mrb[0].mxu0 %v481
      %v763 = vpop.f32.mrb[0].mxu0
      %v764 = vadd.f32 %v279, %v763
      %v765 = vpop.f32.mrb[0].mxu0
      %v766 = vpop.f32.mrb[0].mxu0
      %v767 = vadd.f32 %v279, %v766
      %v768 = vpop.f32.mrb[0].mxu0
      %769 = vmatprep.mubr.bf16.mxu0 %v484
      %770 = vmatmul.mubr.bf16.gmra.mrb[0].mxu0 %v483
      %v771 = vpop.f32.mrb[0].mxu0
      %v772 = vadd.f32 %v279, %v771
      %v773 = vpop.f32.mrb[0].mxu0
      %v774 = vpop.f32.mrb[0].mxu0
      %v775 = vadd.f32 %v279, %v774
      %v776 = vpop.f32.mrb[0].mxu0
      %777 = vmatprep.mubr.bf16.mxu0 %v486
      %778 = vmatmul.mubr.bf16.gmra.mrb[0].mxu0 %v485
      %v779 = vpop.f32.mrb[0].mxu0
      %v780 = vadd.f32 %v279, %v779
      %v781 = vpop.f32.mrb[0].mxu0
      %v782 = vpop.f32.mrb[0].mxu0
      %v783 = vadd.f32 %v279, %v782
      %v784 = vpop.f32.mrb[0].mxu0
      %785 = vmatprep.mubr.bf16.mxu0 %v488
      %786 = vmatmul.mubr.bf16.gmra.mrb[0].mxu0 %v487
      %v787 = vpop.f32.mrb[0].mxu0
      %v788 = vadd.f32 %v279, %v787
      %v789 = vpop.f32.mrb[0].mxu0
      %v790 = vpop.f32.mrb[0].mxu0
      %v791 = vadd.f32 %v279, %v790
      %v792 = vpop.f32.mrb[0].mxu0
      %793 = vmatprep.mubr.bf16.mxu0 %v490
      %794 = vmatmul.mubr.bf16.gmra.mrb[0].mxu0 %v489
      %v795 = vpop.f32.mrb[0].mxu0
      %v796 = vadd.f32 %v279, %v795
      %v797 = vpop.f32.mrb[0].mxu0
      %v798 = vpop.f32.mrb[0].mxu0
      %v799 = vadd.f32 %v279, %v798
      %v800 = vpop.f32.mrb[0].mxu0
      %801 = vmatprep.mubr.bf16.mxu0 %v492
      %802 = vmatmul.mubr.bf16.gmra.mrb[0].mxu0 %v491
      %v803 = vpop.f32.mrb[0].mxu0
      %v804 = vadd.f32 %v279, %v803
      %v805 = vpop.f32.mrb[0].mxu0
      %v806 = vpop.f32.mrb[0].mxu0
      %v807 = vadd.f32 %v279, %v806
      %v808 = vpop.f32.mrb[0].mxu0
      %809 = vmatprep.mubr.bf16.mxu0 %v494
      %810 = vmatmul.mubr.bf16.gmra.mrb[0].mxu0 %v493
      %v811 = vpop.f32.mrb[0].mxu0
      %v812 = vadd.f32 %v279, %v811
      %v813 = vpop.f32.mrb[0].mxu0
      %v814 = vpop.f32.mrb[0].mxu0
      %v815 = vadd.f32 %v279, %v814
      %v816 = vpop.f32.mrb[0].mxu0
      %817 = vmatprep.mubr.bf16.mxu0 %v496
      %818 = vmatmul.mubr.bf16.gmra.mrb[0].mxu0 %v495
      %v819 = vpop.f32.mrb[0].mxu0
      %v820 = vadd.f32 %v279, %v819
      %v821 = vpop.f32.mrb[0].mxu0
      %v822 = vpop.f32.mrb[0].mxu0
      %v823 = vadd.f32 %v279, %v822
      %v824 = vpop.f32.mrb[0].mxu0
      %825 = vmatprep.mubr.bf16.mxu0 %v498
      %826 = vmatmul.mubr.bf16.gmra.mrb[0].mxu0 %v497
      %v827 = vpop.f32.mrb[0].mxu0
      %v828 = vadd.f32 %v279, %v827
      %v829 = vpop.f32.mrb[0].mxu0
      %v830 = vpop.f32.mrb[0].mxu0
      %v831 = vadd.f32 %v279, %v830
      %v832 = vpop.f32.mrb[0].mxu0
      %833 = vmatprep.mubr.bf16.mxu0 %v500
      %834 = vmatmul.mubr.bf16.gmra.mrb[0].mxu0 %v499
      %v835 = vpop.f32.mrb[0].mxu0
      %v836 = vadd.f32 %v279, %v835
      %v837 = vpop.f32.mrb[0].mxu0
      %v838 = vpop.f32.mrb[0].mxu0
      %v839 = vadd.f32 %v279, %v838
      %v840 = vpop.f32.mrb[0].mxu0
      %841 = vmatprep.mubr.bf16.mxu0 %v502
      %842 = vmatmul.mubr.bf16.gmra.mrb[0].mxu0 %v501
      %v843 = vpop.f32.mrb[0].mxu0
      %v844 = vadd.f32 %v279, %v843
      %v845 = vpop.f32.mrb[0].mxu0
      %v846 = vpop.f32.mrb[0].mxu0
      %v847 = vadd.f32 %v279, %v846
      %v848 = vpop.f32.mrb[0].mxu0
      %849 = vmatprep.mubr.bf16.mxu0 %v504
      %850 = vmatmul.mubr.bf16.gmra.mrb[0].mxu0 %v503
      %v851 = vpop.f32.mrb[0].mxu0
      %v852 = vadd.f32 %v279, %v851
      %v853 = vpop.f32.mrb[0].mxu0
      %v854 = vpop.f32.mrb[0].mxu0
      %v855 = vadd.f32 %v279, %v854
      %v856 = vpop.f32.mrb[0].mxu0
      %857 = vmatprep.mubr.bf16.mxu0 %v506
      %858 = vmatmul.mubr.bf16.gmra.mrb[0].mxu0 %v505
      %v859 = vpop.f32.mrb[0].mxu0
      %v860 = vadd.f32 %v279, %v859
      %v861 = vpop.f32.mrb[0].mxu0
      %v862 = vpop.f32.mrb[0].mxu0
      %v863 = vadd.f32 %v279, %v862
      %v864 = vpop.f32.mrb[0].mxu0
      %865 = vmatprep.mubr.bf16.mxu0 %v508
      %866 = vmatmul.mubr.bf16.gmra.mrb[0].mxu0 %v507
      %v867 = vpop.f32.mrb[0].mxu0
      %v868 = vadd.f32 %v279, %v867
      %v869 = vpop.f32.mrb[0].mxu0
      %v870 = vpop.f32.mrb[0].mxu0
      %v871 = vadd.f32 %v279, %v870
      %v872 = vpop.f32.mrb[0].mxu0
      %873 = vmatprep.mubr.bf16.mxu0 %v510
      %874 = vmatmul.mubr.bf16.gmra.mrb[0].mxu0 %v509
      %v875 = vpop.f32.mrb[0].mxu0
      %v876 = vadd.f32 %v279, %v875
      %v877 = vpop.f32.mrb[0].mxu0
      %v878 = vpop.f32.mrb[0].mxu0
      %v879 = vadd.f32 %v279, %v878
      %v880 = vpop.f32.mrb[0].mxu0
      %881 = vmatprep.mubr.bf16.mxu0 %v512
      %882 = vmatmul.mubr.bf16.gmra.mrb[0].mxu0 %v511
      %v883 = vpop.f32.mrb[0].mxu0
      %v884 = vadd.f32 %v279, %v883
      %v885 = vpop.f32.mrb[0].mxu0
      %v886 = vpop.f32.mrb[0].mxu0
      %v887 = vadd.f32 %v279, %v886
      %v888 = vpop.f32.mrb[0].mxu0
      %889 = vmatprep.mubr.bf16.mxu0 %v514
      %890 = vmatmul.mubr.bf16.gmra.mrb[0].mxu0 %v513
      %v891 = vpop.f32.mrb[0].mxu0
      %v892 = vadd.f32 %v279, %v891
      %v893 = vpop.f32.mrb[0].mxu0
      %v894 = vpop.f32.mrb[0].mxu0
      %v895 = vadd.f32 %v279, %v894
      %v896 = vpop.f32.mrb[0].mxu0
      %897 = vmatprep.mubr.bf16.mxu0 %v516
      %898 = vmatmul.mubr.bf16.gmra.mrb[0].mxu0 %v515
      %v899 = vpop.f32.mrb[0].mxu0
      %v900 = vadd.f32 %v279, %v899
      %v901 = vpop.f32.mrb[0].mxu0
      %v902 = vpop.f32.mrb[0].mxu0
      %v903 = vadd.f32 %v279, %v902
      %v904 = vpop.f32.mrb[0].mxu0
      %905 = vmatprep.mubr.bf16.mxu0 %v518
      %906 = vmatmul.mubr.bf16.gmra.mrb[0].mxu0 %v517
      %v907 = vpop.f32.mrb[0].mxu0
      %v908 = vadd.f32 %v279, %v907
      %v909 = vpop.f32.mrb[0].mxu0
      %v910 = vpop.f32.mrb[0].mxu0
      %v911 = vadd.f32 %v279, %v910
      %v912 = vpop.f32.mrb[0].mxu0
      %913 = vmatprep.mubr.bf16.mxu0 %v520
      %914 = vmatmul.mubr.bf16.gmra.mrb[0].mxu0 %v519
      %v915 = vpop.f32.mrb[0].mxu0
      %v916 = vadd.f32 %v279, %v915
      %v917 = vpop.f32.mrb[0].mxu0
      %v918 = vpop.f32.mrb[0].mxu0
      %v919 = vadd.f32 %v279, %v918
      %v920 = vpop.f32.mrb[0].mxu0
      %921 = vmatprep.mubr.bf16.mxu0 %v522
      %922 = vmatmul.mubr.bf16.gmra.mrb[0].mxu0 %v521
      %v923 = vpop.f32.mrb[0].mxu0
      %v924 = vadd.f32 %v279, %v923
      %v925 = vpop.f32.mrb[0].mxu0
      %v926 = vpop.f32.mrb[0].mxu0
      %v927 = vadd.f32 %v279, %v926
      %v928 = vpop.f32.mrb[0].mxu0
      %929 = vmatprep.mubr.bf16.mxu0 %v524
      %930 = vmatmul.mubr.bf16.gmra.mrb[0].mxu0 %v523
      %v931 = vpop.f32.mrb[0].mxu0
      %v932 = vadd.f32 %v279, %v931
      %v933 = vpop.f32.mrb[0].mxu0
      %v934 = vpop.f32.mrb[0].mxu0
      %v935 = vadd.f32 %v279, %v934
      %v936 = vpop.f32.mrb[0].mxu0
      %937 = vmatprep.mubr.bf16.mxu0 %v526
      %938 = vmatmul.mubr.bf16.gmra.mrb[0].mxu0 %v525
      %v939 = vpop.f32.mrb[0].mxu0
      %v940 = vadd.f32 %v279, %v939
      %v941 = vpop.f32.mrb[0].mxu0
      %v942 = vpop.f32.mrb[0].mxu0
      %v943 = vadd.f32 %v279, %v942
      %v944 = vpop.f32.mrb[0].mxu0
      %945 = vmatprep.mubr.bf16.mxu0 %v528
      %946 = vmatmul.mubr.bf16.gmra.mrb[0].mxu0 %v527
      %v947 = vpop.f32.mrb[0].mxu0
      %v948 = vadd.f32 %v279, %v947
      %v949 = vpop.f32.mrb[0].mxu0
      %v950 = vpop.f32.mrb[0].mxu0
      %v951 = vadd.f32 %v279, %v950
      %v952 = vpop.f32.mrb[0].mxu0
      %953 = vmatprep.mubr.bf16.mxu0 %v530
      %954 = vmatmul.mubr.bf16.gmra.mrb[0].mxu0 %v529
      %v955 = vpop.f32.mrb[0].mxu0
      %v956 = vadd.f32 %v279, %v955
      %v957 = vpop.f32.mrb[0].mxu0
      %v958 = vpop.f32.mrb[0].mxu0
      %v959 = vadd.f32 %v279, %v958
      %v960 = vpop.f32.mrb[0].mxu0
      %961 = vmatprep.mubr.bf16.mxu0 %v532
      %962 = vmatmul.mubr.bf16.gmra.mrb[0].mxu0 %v531
      %v963 = vpop.f32.mrb[0].mxu0
      %v964 = vadd.f32 %v279, %v963
      %v965 = vpop.f32.mrb[0].mxu0
      %v966 = vpop.f32.mrb[0].mxu0
      %v967 = vadd.f32 %v279, %v966
      %v968 = vpop.f32.mrb[0].mxu0
      %969 = vmatprep.mubr.bf16.mxu0 %v534
      %970 = vmatmul.mubr.bf16.gmra.mrb[0].mxu0 %v533
      %v971 = vpop.f32.mrb[0].mxu0
      %v972 = vadd.f32 %v279, %v971
      %v973 = vpop.f32.mrb[0].mxu0
      %v974 = vpop.f32.mrb[0].mxu0
      %v975 = vadd.f32 %v279, %v974
      %v976 = vpop.f32.mrb[0].mxu0
      %977 = vmatprep.mubr.bf16.mxu0 %v536
      %978 = vmatmul.mubr.bf16.gmra.mrb[0].mxu0 %v535
      %v979 = vpop.f32.mrb[0].mxu0
      %v980 = vadd.f32 %v279, %v979
      %v981 = vpop.f32.mrb[0].mxu0
      %v982 = vpop.f32.mrb[0].mxu0
      %v983 = vadd.f32 %v279, %v982
      %v984 = vpop.f32.mrb[0].mxu0
      %985 = vdwg.mxu0
      %vm986 = vcmp.gt.f32.partialorder %v732, 0.0
      %vm987 = vcmp.gt.f32.partialorder %v735, 0.0
      %vm988 = vcmp.gt.f32.partialorder %v740, 0.0
      %vm989 = vcmp.gt.f32.partialorder %v743, 0.0
      %vm990 = vcmp.gt.f32.partialorder %v748, 0.0
      %vm991 = vcmp.gt.f32.partialorder %v751, 0.0
      %vm992 = vcmp.gt.f32.partialorder %v756, 0.0
      %vm993 = vcmp.gt.f32.partialorder %v759, 0.0
      %vm994 = vcmp.gt.f32.partialorder %v764, 0.0
      %vm995 = vcmp.gt.f32.partialorder %v767, 0.0
      %vm996 = vcmp.gt.f32.partialorder %v772, 0.0
      %vm997 = vcmp.gt.f32.partialorder %v775, 0.0
      %vm998 = vcmp.gt.f32.partialorder %v780, 0.0
      %vm999 = vcmp.gt.f32.partialorder %v783, 0.0
      %vm1000 = vcmp.gt.f32.partialorder %v788, 0.0
      %vm1001 = vcmp.gt.f32.partialorder %v791, 0.0
      %vm1002 = vcmp.gt.f32.partialorder %v796, 0.0
      %vm1003 = vcmp.gt.f32.partialorder %v799, 0.0
      %vm1004 = vcmp.gt.f32.partialorder %v804, 0.0
      %vm1005 = vcmp.gt.f32.partialorder %v807, 0.0
      %vm1006 = vcmp.gt.f32.partialorder %v812, 0.0
      %vm1007 = vcmp.gt.f32.partialorder %v815, 0.0
      %vm1008 = vcmp.gt.f32.partialorder %v820, 0.0
      %vm1009 = vcmp.gt.f32.partialorder %v823, 0.0
      %vm1010 = vcmp.gt.f32.partialorder %v828, 0.0
      %vm1011 = vcmp.gt.f32.partialorder %v831, 0.0
      %vm1012 = vcmp.gt.f32.partialorder %v836, 0.0
      %vm1013 = vcmp.gt.f32.partialorder %v839, 0.0
      %vm1014 = vcmp.gt.f32.partialorder %v844, 0.0
      %vm1015 = vcmp.gt.f32.partialorder %v847, 0.0
      %vm1016 = vcmp.gt.f32.partialorder %v852, 0.0
      %vm1017 = vcmp.gt.f32.partialorder %v855, 0.0
      %vm1018 = vcmp.gt.f32.partialorder %v860, 0.0
      %vm1019 = vcmp.gt.f32.partialorder %v863, 0.0
      %vm1020 = vcmp.gt.f32.partialorder %v868, 0.0
      %vm1021 = vcmp.gt.f32.partialorder %v871, 0.0
      %vm1022 = vcmp.gt.f32.partialorder %v876, 0.0
      %vm1023 = vcmp.gt.f32.partialorder %v879, 0.0
      %vm1024 = vcmp.gt.f32.partialorder %v884, 0.0
      %vm1025 = vcmp.gt.f32.partialorder %v887, 0.0
      %vm1026 = vcmp.gt.f32.partialorder %v892, 0.0
      %vm1027 = vcmp.gt.f32.partialorder %v895, 0.0
      %vm1028 = vcmp.gt.f32.partialorder %v900, 0.0
      %vm1029 = vcmp.gt.f32.partialorder %v903, 0.0
      %vm1030 = vcmp.gt.f32.partialorder %v908, 0.0
      %vm1031 = vcmp.gt.f32.partialorder %v911, 0.0
      %vm1032 = vcmp.gt.f32.partialorder %v916, 0.0
      %vm1033 = vcmp.gt.f32.partialorder %v919, 0.0
      %vm1034 = vcmp.gt.f32.partialorder %v924, 0.0
      %vm1035 = vcmp.gt.f32.partialorder %v927, 0.0
      %vm1036 = vcmp.gt.f32.partialorder %v932, 0.0
      %vm1037 = vcmp.gt.f32.partialorder %v935, 0.0
      %vm1038 = vcmp.gt.f32.partialorder %v940, 0.0
      %vm1039 = vcmp.gt.f32.partialorder %v943, 0.0
      %vm1040 = vcmp.gt.f32.partialorder %v948, 0.0
      %vm1041 = vcmp.gt.f32.partialorder %v951, 0.0
      %vm1042 = vcmp.gt.f32.partialorder %v956, 0.0
      %vm1043 = vcmp.gt.f32.partialorder %v959, 0.0
      %vm1044 = vcmp.gt.f32.partialorder %v964, 0.0
      %vm1045 = vcmp.gt.f32.partialorder %v967, 0.0
      %vm1046 = vcmp.gt.f32.partialorder %v972, 0.0
      %vm1047 = vcmp.gt.f32.partialorder %v975, 0.0
      %vm1048 = vcmp.gt.f32.partialorder %v980, 0.0
      %vm1049 = vcmp.gt.f32.partialorder %v983, 0.0
      %v1050 = vmul.f32 %v732, 0.01
      %v1051 = vmul.f32 %v735, 0.01
      %v1052 = vmul.f32 %v740, 0.01
      %v1053 = vmul.f32 %v743, 0.01
      %v1054 = vmul.f32 %v748, 0.01
      %v1055 = vmul.f32 %v751, 0.01
      %v1056 = vmul.f32 %v756, 0.01
      %v1057 = vmul.f32 %v759, 0.01
      %v1058 = vmul.f32 %v764, 0.01
      %v1059 = vmul.f32 %v767, 0.01
      %v1060 = vmul.f32 %v772, 0.01
      %v1061 = vmul.f32 %v775, 0.01
      %v1062 = vmul.f32 %v780, 0.01
      %v1063 = vmul.f32 %v783, 0.01
      %v1064 = vmul.f32 %v788, 0.01
      %v1065 = vmul.f32 %v791, 0.01
      %v1066 = vmul.f32 %v796, 0.01
      %v1067 = vmul.f32 %v799, 0.01
      %v1068 = vmul.f32 %v804, 0.01
      %v1069 = vmul.f32 %v807, 0.01
      %v1070 = vmul.f32 %v812, 0.01
      %v1071 = vmul.f32 %v815, 0.01
      %v1072 = vmul.f32 %v820, 0.01
      %v1073 = vmul.f32 %v823, 0.01
      %v1074 = vmul.f32 %v828, 0.01
      %v1075 = vmul.f32 %v831, 0.01
      %v1076 = vmul.f32 %v836, 0.01
      %v1077 = vmul.f32 %v839, 0.01
      %v1078 = vmul.f32 %v844, 0.01
      %v1079 = vmul.f32 %v847, 0.01
      %v1080 = vmul.f32 %v852, 0.01
      %v1081 = vmul.f32 %v855, 0.01
      %v1082 = vmul.f32 %v860, 0.01
      %v1083 = vmul.f32 %v863, 0.01
      %v1084 = vmul.f32 %v868, 0.01
      %v1085 = vmul.f32 %v871, 0.01
      %v1086 = vmul.f32 %v876, 0.01
      %v1087 = vmul.f32 %v879, 0.01
      %v1088 = vmul.f32 %v884, 0.01
      %v1089 = vmul.f32 %v887, 0.01
      %v1090 = vmul.f32 %v892, 0.01
      %v1091 = vmul.f32 %v895, 0.01
      %v1092 = vmul.f32 %v900, 0.01
      %v1093 = vmul.f32 %v903, 0.01
      %v1094 = vmul.f32 %v908, 0.01
      %v1095 = vmul.f32 %v911, 0.01
      %v1096 = vmul.f32 %v916, 0.01
      %v1097 = vmul.f32 %v919, 0.01
      %v1098 = vmul.f32 %v924, 0.01
      %v1099 = vmul.f32 %v927, 0.01
      %v1100 = vmul.f32 %v932, 0.01
      %v1101 = vmul.f32 %v935, 0.01
      %v1102 = vmul.f32 %v940, 0.01
      %v1103 = vmul.f32 %v943, 0.01
      %v1104 = vmul.f32 %v948, 0.01
      %v1105 = vmul.f32 %v951, 0.01
      %v1106 = vmul.f32 %v956, 0.01
      %v1107 = vmul.f32 %v959, 0.01
      %v1108 = vmul.f32 %v964, 0.01
      %v1109 = vmul.f32 %v967, 0.01
      %v1110 = vmul.f32 %v972, 0.01
      %v1111 = vmul.f32 %v975, 0.01
      %v1112 = vmul.f32 %v980, 0.01
      %v1113 = vmul.f32 %v983, 0.01
      %v1114 = vsel %vm986, %v732, %v1050
      %v1115 = vsel %vm987, %v735, %v1051
      %v1116 = vsel %vm988, %v740, %v1052
      %v1117 = vsel %vm989, %v743, %v1053
      %v1118 = vsel %vm990, %v748, %v1054
      %v1119 = vsel %vm991, %v751, %v1055
      %v1120 = vsel %vm992, %v756, %v1056
      %v1121 = vsel %vm993, %v759, %v1057
      %v1122 = vsel %vm994, %v764, %v1058
      %v1123 = vsel %vm995, %v767, %v1059
      %v1124 = vsel %vm996, %v772, %v1060
      %v1125 = vsel %vm997, %v775, %v1061
      %v1126 = vsel %vm998, %v780, %v1062
      %v1127 = vsel %vm999, %v783, %v1063
      %v1128 = vsel %vm1000, %v788, %v1064
      %v1129 = vsel %vm1001, %v791, %v1065
      %v1130 = vsel %vm1002, %v796, %v1066
      %v1131 = vsel %vm1003, %v799, %v1067
      %v1132 = vsel %vm1004, %v804, %v1068
      %v1133 = vsel %vm1005, %v807, %v1069
      %v1134 = vsel %vm1006, %v812, %v1070
      %v1135 = vsel %vm1007, %v815, %v1071
      %v1136 = vsel %vm1008, %v820, %v1072
      %v1137 = vsel %vm1009, %v823, %v1073
      %v1138 = vsel %vm1010, %v828, %v1074
      %v1139 = vsel %vm1011, %v831, %v1075
      %v1140 = vsel %vm1012, %v836, %v1076
      %v1141 = vsel %vm1013, %v839, %v1077
      %v1142 = vsel %vm1014, %v844, %v1078
      %v1143 = vsel %vm1015, %v847, %v1079
      %v1144 = vsel %vm1016, %v852, %v1080
      %v1145 = vsel %vm1017, %v855, %v1081
      %v1146 = vsel %vm1018, %v860, %v1082
      %v1147 = vsel %vm1019, %v863, %v1083
      %v1148 = vsel %vm1020, %v868, %v1084
      %v1149 = vsel %vm1021, %v871, %v1085
      %v1150 = vsel %vm1022, %v876, %v1086
      %v1151 = vsel %vm1023, %v879, %v1087
      %v1152 = vsel %vm1024, %v884, %v1088
      %v1153 = vsel %vm1025, %v887, %v1089
      %v1154 = vsel %vm1026, %v892, %v1090
      %v1155 = vsel %vm1027, %v895, %v1091
      %v1156 = vsel %vm1028, %v900, %v1092
      %v1157 = vsel %vm1029, %v903, %v1093
      %v1158 = vsel %vm1030, %v908, %v1094
      %v1159 = vsel %vm1031, %v911, %v1095
      %v1160 = vsel %vm1032, %v916, %v1096
      %v1161 = vsel %vm1033, %v919, %v1097
      %v1162 = vsel %vm1034, %v924, %v1098
      %v1163 = vsel %vm1035, %v927, %v1099
      %v1164 = vsel %vm1036, %v932, %v1100
      %v1165 = vsel %vm1037, %v935, %v1101
      %v1166 = vsel %vm1038, %v940, %v1102
      %v1167 = vsel %vm1039, %v943, %v1103
      %v1168 = vsel %vm1040, %v948, %v1104
      %v1169 = vsel %vm1041, %v951, %v1105
      %v1170 = vsel %vm1042, %v956, %v1106
      %v1171 = vsel %vm1043, %v959, %v1107
      %v1172 = vsel %vm1044, %v964, %v1108
      %v1173 = vsel %vm1045, %v967, %v1109
      %v1174 = vsel %vm1046, %v972, %v1110
      %v1175 = vsel %vm1047, %v975, %v1111
      %v1176 = vsel %vm1048, %v980, %v1112
      %v1177 = vsel %vm1049, %v983, %v1113
      %v1178 = vpack.c.bf16 %v1115, %v1114
      %v1179 = vpack.c.bf16 %v1117, %v1116
      %v1180 = vpack.c.bf16 %v1119, %v1118
      %v1181 = vpack.c.bf16 %v1121, %v1120
      %v1182 = vpack.c.bf16 %v1123, %v1122
      %v1183 = vpack.c.bf16 %v1125, %v1124
      %v1184 = vpack.c.bf16 %v1127, %v1126
      %v1185 = vpack.c.bf16 %v1129, %v1128
      %v1186 = vpack.c.bf16 %v1131, %v1130
      %v1187 = vpack.c.bf16 %v1133, %v1132
      %v1188 = vpack.c.bf16 %v1135, %v1134
      %v1189 = vpack.c.bf16 %v1137, %v1136
      %v1190 = vpack.c.bf16 %v1139, %v1138
      %v1191 = vpack.c.bf16 %v1141, %v1140
      %v1192 = vpack.c.bf16 %v1143, %v1142
      %v1193 = vpack.c.bf16 %v1145, %v1144
      %v1194 = vpack.c.bf16 %v1147, %v1146
      %v1195 = vpack.c.bf16 %v1149, %v1148
      %v1196 = vpack.c.bf16 %v1151, %v1150
      %v1197 = vpack.c.bf16 %v1153, %v1152
      %v1198 = vpack.c.bf16 %v1155, %v1154
      %v1199 = vpack.c.bf16 %v1157, %v1156
      %v1200 = vpack.c.bf16 %v1159, %v1158
      %v1201 = vpack.c.bf16 %v1161, %v1160
      %v1202 = vpack.c.bf16 %v1163, %v1162
      %v1203 = vpack.c.bf16 %v1165, %v1164
      %v1204 = vpack.c.bf16 %v1167, %v1166
      %v1205 = vpack.c.bf16 %v1169, %v1168
      %v1206 = vpack.c.bf16 %v1171, %v1170
      %v1207 = vpack.c.bf16 %v1173, %v1172
      %v1208 = vpack.c.bf16 %v1175, %v1174
      %v1209 = vpack.c.bf16 %v1177, %v1176
      %v1242 = vunpack.c.l.b16 %v1178
      %v1243 = vunpack.c.h.b16 %v1178
      %v1244 = vunpack.c.l.b16 %v1179
      %v1245 = vunpack.c.h.b16 %v1179
      %v1246 = vunpack.c.l.b16 %v1180
      %v1247 = vunpack.c.h.b16 %v1180
      %v1248 = vunpack.c.l.b16 %v1181
      %v1249 = vunpack.c.h.b16 %v1181
      %v1250 = vunpack.c.l.b16 %v1182
      %v1251 = vunpack.c.h.b16 %v1182
      %v1252 = vunpack.c.l.b16 %v1183
      %v1253 = vunpack.c.h.b16 %v1183
      %v1254 = vunpack.c.l.b16 %v1184
      %v1255 = vunpack.c.h.b16 %v1184
      %v1256 = vunpack.c.l.b16 %v1185
      %v1257 = vunpack.c.h.b16 %v1185
      %v1258 = vunpack.c.l.b16 %v1186
      %v1259 = vunpack.c.h.b16 %v1186
      %v1260 = vunpack.c.l.b16 %v1187
      %v1261 = vunpack.c.h.b16 %v1187
      %v1262 = vunpack.c.l.b16 %v1188
      %v1263 = vunpack.c.h.b16 %v1188
      %v1264 = vunpack.c.l.b16 %v1189
      %v1265 = vunpack.c.h.b16 %v1189
      %v1266 = vunpack.c.l.b16 %v1190
      %v1267 = vunpack.c.h.b16 %v1190
      %v1268 = vunpack.c.l.b16 %v1191
      %v1269 = vunpack.c.h.b16 %v1191
      %v1270 = vunpack.c.l.b16 %v1192
      %v1271 = vunpack.c.h.b16 %v1192
      %v1272 = vunpack.c.l.b16 %v1193
      %v1273 = vunpack.c.h.b16 %v1193
      %v1274 = vunpack.c.l.b16 %v1194
      %v1275 = vunpack.c.h.b16 %v1194
      %v1276 = vunpack.c.l.b16 %v1195
      %v1277 = vunpack.c.h.b16 %v1195
      %v1278 = vunpack.c.l.b16 %v1196
      %v1279 = vunpack.c.h.b16 %v1196
      %v1280 = vunpack.c.l.b16 %v1197
      %v1281 = vunpack.c.h.b16 %v1197
      %v1282 = vunpack.c.l.b16 %v1198
      %v1283 = vunpack.c.h.b16 %v1198
      %v1284 = vunpack.c.l.b16 %v1199
      %v1285 = vunpack.c.h.b16 %v1199
      %v1286 = vunpack.c.l.b16 %v1200
      %v1287 = vunpack.c.h.b16 %v1200
      %v1288 = vunpack.c.l.b16 %v1201
      %v1289 = vunpack.c.h.b16 %v1201
      %v1290 = vunpack.c.l.b16 %v1202
      %v1291 = vunpack.c.h.b16 %v1202
      %v1292 = vunpack.c.l.b16 %v1203
      %v1293 = vunpack.c.h.b16 %v1203
      %v1294 = vunpack.c.l.b16 %v1204
      %v1295 = vunpack.c.h.b16 %v1204
      %v1296 = vunpack.c.l.b16 %v1205
      %v1297 = vunpack.c.h.b16 %v1205
      %v1298 = vunpack.c.l.b16 %v1206
      %v1299 = vunpack.c.h.b16 %v1206
      %v1300 = vunpack.c.l.b16 %v1207
      %v1301 = vunpack.c.h.b16 %v1207
      %v1302 = vunpack.c.l.b16 %v1208
      %v1303 = vunpack.c.h.b16 %v1208
      %v1304 = vunpack.c.l.b16 %v1209
      %v1305 = vunpack.c.h.b16 %v1209
      %v1306 = vpack.c.b16 %v1242, %v1242
      %v1307 = vpack.c.b16 %v1243, %v1243
      %v1308 = vpack.c.b16 %v1244, %v1244
      %v1309 = vpack.c.b16 %v1245, %v1245
      %v1310 = vpack.c.b16 %v1246, %v1246
      %v1311 = vpack.c.b16 %v1247, %v1247
      %v1312 = vpack.c.b16 %v1248, %v1248
      %v1313 = vpack.c.b16 %v1249, %v1249
      %v1314 = vpack.c.b16 %v1250, %v1250
      %v1315 = vpack.c.b16 %v1251, %v1251
      %v1316 = vpack.c.b16 %v1252, %v1252
      %v1317 = vpack.c.b16 %v1253, %v1253
      %v1318 = vpack.c.b16 %v1254, %v1254
      %v1319 = vpack.c.b16 %v1255, %v1255
      %v1320 = vpack.c.b16 %v1256, %v1256
      %v1321 = vpack.c.b16 %v1257, %v1257
      %v1322 = vpack.c.b16 %v1258, %v1258
      %v1323 = vpack.c.b16 %v1259, %v1259
      %v1324 = vpack.c.b16 %v1260, %v1260
      %v1325 = vpack.c.b16 %v1261, %v1261
      %v1326 = vpack.c.b16 %v1262, %v1262
      %v1327 = vpack.c.b16 %v1263, %v1263
      %v1328 = vpack.c.b16 %v1264, %v1264
      %v1329 = vpack.c.b16 %v1265, %v1265
      %v1330 = vpack.c.b16 %v1266, %v1266
      %v1331 = vpack.c.b16 %v1267, %v1267
      %v1332 = vpack.c.b16 %v1268, %v1268
      %v1333 = vpack.c.b16 %v1269, %v1269
      %v1334 = vpack.c.b16 %v1270, %v1270
      %v1335 = vpack.c.b16 %v1271, %v1271
      %v1336 = vpack.c.b16 %v1272, %v1272
      %v1337 = vpack.c.b16 %v1273, %v1273
      %v1338 = vpack.c.b16 %v1274, %v1274
      %v1339 = vpack.c.b16 %v1275, %v1275
      %v1340 = vpack.c.b16 %v1276, %v1276
      %v1341 = vpack.c.b16 %v1277, %v1277
      %v1342 = vpack.c.b16 %v1278, %v1278
      %v1343 = vpack.c.b16 %v1279, %v1279
      %v1344 = vpack.c.b16 %v1280, %v1280
      %v1345 = vpack.c.b16 %v1281, %v1281
      %v1346 = vpack.c.b16 %v1282, %v1282
      %v1347 = vpack.c.b16 %v1283, %v1283
      %v1348 = vpack.c.b16 %v1284, %v1284
      %v1349 = vpack.c.b16 %v1285, %v1285
      %v1350 = vpack.c.b16 %v1286, %v1286
      %v1351 = vpack.c.b16 %v1287, %v1287
      %v1352 = vpack.c.b16 %v1288, %v1288
      %v1353 = vpack.c.b16 %v1289, %v1289
      %v1354 = vpack.c.b16 %v1290, %v1290
      %v1355 = vpack.c.b16 %v1291, %v1291
      %v1356 = vpack.c.b16 %v1292, %v1292
      %v1357 = vpack.c.b16 %v1293, %v1293
      %v1358 = vpack.c.b16 %v1294, %v1294
      %v1359 = vpack.c.b16 %v1295, %v1295
      %v1360 = vpack.c.b16 %v1296, %v1296
      %v1361 = vpack.c.b16 %v1297, %v1297
      %v1362 = vpack.c.b16 %v1298, %v1298
      %v1363 = vpack.c.b16 %v1299, %v1299
      %v1364 = vpack.c.b16 %v1300, %v1300
      %v1365 = vpack.c.b16 %v1301, %v1301
      %v1366 = vpack.c.b16 %v1302, %v1302
      %v1367 = vpack.c.b16 %v1303, %v1303
      %v1368 = vpack.c.b16 %v1304, %v1304
      %v1369 = vpack.c.b16 %v1305, %v1305
      %1434 = vst [vmem:[%s175] sm:$0xf] %v1306
      %1435 = vst [vmem:[%s175 + $0x4] sm:$0xf] %v1307
      %1436 = vst [vmem:[%s175 + $0x8] sm:$0xf] %v1308
      %1437 = vst [vmem:[%s175 + $0xc] sm:$0xf] %v1309
      %1438 = vst [vmem:[%s175 + $0x10] sm:$0xf] %v1310
      %1439 = vst [vmem:[%s175 + $0x14] sm:$0xf] %v1311
      %1440 = vst [vmem:[%s175 + $0x18] sm:$0xf] %v1312
      %1441 = vst [vmem:[%s175 + $0x1c] sm:$0xf] %v1313
      %1442 = vst [vmem:[%s175 + $0x20] sm:$0xf] %v1314
      %1443 = vst [vmem:[%s175 + $0x24] sm:$0xf] %v1315
      %1444 = vst [vmem:[%s175 + $0x28] sm:$0xf] %v1316
      %1445 = vst [vmem:[%s175 + $0x2c] sm:$0xf] %v1317
      %1446 = vst [vmem:[%s175 + $0x30] sm:$0xf] %v1318
      %1447 = vst [vmem:[%s175 + $0x34] sm:$0xf] %v1319
      %1448 = vst [vmem:[%s175 + $0x38] sm:$0xf] %v1320
      %1449 = vst [vmem:[%s175 + $0x3c] sm:$0xf] %v1321
      %1450 = vst [vmem:[%s175 + $0x40] sm:$0xf] %v1322
      %1451 = vst [vmem:[%s175 + $0x44] sm:$0xf] %v1323
      %1452 = vst [vmem:[%s175 + $0x48] sm:$0xf] %v1324
      %1453 = vst [vmem:[%s175 + $0x4c] sm:$0xf] %v1325
      %1454 = vst [vmem:[%s175 + $0x50] sm:$0xf] %v1326
      %1455 = vst [vmem:[%s175 + $0x54] sm:$0xf] %v1327
      %1456 = vst [vmem:[%s175 + $0x58] sm:$0xf] %v1328
      %1457 = vst [vmem:[%s175 + $0x5c] sm:$0xf] %v1329
      %1458 = vst [vmem:[%s175 + $0x60] sm:$0xf] %v1330
      %1459 = vst [vmem:[%s175 + $0x64] sm:$0xf] %v1331
      %1460 = vst [vmem:[%s175 + $0x68] sm:$0xf] %v1332
      %1461 = vst [vmem:[%s175 + $0x6c] sm:$0xf] %v1333
      %1462 = vst [vmem:[%s175 + $0x70] sm:$0xf] %v1334
      %1463 = vst [vmem:[%s175 + $0x74] sm:$0xf] %v1335
      %1464 = vst [vmem:[%s175 + $0x78] sm:$0xf] %v1336
      %1465 = vst [vmem:[%s175 + $0x7c] sm:$0xf] %v1337
      %1466 = vst [vmem:[%s175 + $0x80] sm:$0xf] %v1338
      %1467 = vst [vmem:[%s175 + $0x84] sm:$0xf] %v1339
      %1468 = vst [vmem:[%s175 + $0x88] sm:$0xf] %v1340
      %1469 = vst [vmem:[%s175 + $0x8c] sm:$0xf] %v1341
      %1470 = vst [vmem:[%s175 + $0x90] sm:$0xf] %v1342
      %1471 = vst [vmem:[%s175 + $0x94] sm:$0xf] %v1343
      %1472 = vst [vmem:[%s175 + $0x98] sm:$0xf] %v1344
      %1473 = vst [vmem:[%s175 + $0x9c] sm:$0xf] %v1345
      %1474 = vst [vmem:[%s175 + $0xa0] sm:$0xf] %v1346
      %1475 = vst [vmem:[%s175 + $0xa4] sm:$0xf] %v1347
      %1476 = vst [vmem:[%s175 + $0xa8] sm:$0xf] %v1348
      %1477 = vst [vmem:[%s175 + $0xac] sm:$0xf] %v1349
      %1478 = vst [vmem:[%s175 + $0xb0] sm:$0xf] %v1350
      %1479 = vst [vmem:[%s175 + $0xb4] sm:$0xf] %v1351
      %1480 = vst [vmem:[%s175 + $0xb8] sm:$0xf] %v1352
      %1481 = vst [vmem:[%s175 + $0xbc] sm:$0xf] %v1353
      %1482 = vst [vmem:[%s175 + $0xc0] sm:$0xf] %v1354
      %1483 = vst [vmem:[%s175 + $0xc4] sm:$0xf] %v1355
      %1484 = vst [vmem:[%s175 + $0xc8] sm:$0xf] %v1356
      %1485 = vst [vmem:[%s175 + $0xcc] sm:$0xf] %v1357
      %1486 = vst [vmem:[%s175 + $0xd0] sm:$0xf] %v1358
      %1487 = vst [vmem:[%s175 + $0xd4] sm:$0xf] %v1359
      %1488 = vst [vmem:[%s175 + $0xd8] sm:$0xf] %v1360
      %1489 = vst [vmem:[%s175 + $0xdc] sm:$0xf] %v1361
      %1490 = vst [vmem:[%s175 + $0xe0] sm:$0xf] %v1362
      %1491 = vst [vmem:[%s175 + $0xe4] sm:$0xf] %v1363
      %1492 = vst [vmem:[%s175 + $0xe8] sm:$0xf] %v1364
      %1493 = vst [vmem:[%s175 + $0xec] sm:$0xf] %v1365
      %1494 = vst [vmem:[%s175 + $0xf0] sm:$0xf] %v1366
      %1495 = vst [vmem:[%s175 + $0xf4] sm:$0xf] %v1367
      %1496 = vst [vmem:[%s175 + $0xf8] sm:$0xf] %v1368
      %1497 = vst [vmem:[%s175 + $0xfc] sm:$0xf] %v1369
      %s1498 = smul.u32 64, %s14
      %p1499 = scmp.lt.s32.totalorder %s1498, 127
      %s1500 = scalar_select %p1499, %s1498, 127
      %s1501 = smul.addr %s1500, 4
      %s1502 = scalar_lea.vmem %s3, %s1501
      // Predicated region
      $region33: #{dqn_forward.2} parent=31 // pred_check
        %p1503 = pneg %p100
      $region34: #{dqn_forward.2} parent=31 // pred_check_branch
        %1505 = sbr.rel (%p1503) target = $region36
      $region35: #{dqn_forward.2} parent=31 // pred_region
        %s1506 = smul.u32 64, %s14
      $region36: #{dqn_forward.2} parent=31 // pred_fallthru
        _
    $region32: #{dqn_forward.2} parent=5 // pred_fallthru
      _
    %p1507 = scmp.le.s32.totalorder 2, %s9
    // Predicated region
    $region37: #{dqn_forward.2} parent=5 // pred_check
      %p1508 = pneg %p1507
    $region38: #{dqn_forward.2} parent=5 // pred_check_branch
      %1510 = sbr.rel (%p1508) target = $region40
    $region39: #{dqn_forward.2} parent=5 // pred_region
      %s1511 = ssub.s32 %s9, 2
      // Predicated region
      $region41: #{dqn_forward.2} parent=39 // pred_check
        %p1512 = pneg %p106
      $region42: #{dqn_forward.2} parent=39 // pred_check_branch
        %1514 = sbr.rel (%p1512) target = $region44
      $region43: #{dqn_forward.2} parent=39 // pred_region
        %s1515 = smul.u32 64, %s15
        %p1516 = scmp.lt.s32.totalorder %s1515, 127
        %s1517 = scalar_select %p1516, %s1515, 127
        %s1518 = smul.addr %s1517, 4
        %s1519 = scalar_lea.vmem %s3, %s1518
      $region44: #{dqn_forward.2} parent=39 // pred_fallthru
        _
    $region40: #{dqn_forward.2} parent=5 // pred_fallthru
      _
  $region6: #{dqn_forward.2} parent=0 // loop_footer
    %s13 = sadd.s32 1, %s9
  $region7: #{dqn_forward.2} parent=0 // loop_footer_branch
    %8 = sbr.rel target = $region3
  $region8: #{dqn_forward.2} parent=0 // loop_exit
    _

// kernel: dqn_forward.3
$region0: #{dqn_forward.3}
  #allocation0 [shape = 'u32[]', space=smem, size = 0x4, offset = 0x4, fixed_abs, tag = 'smem constant byte address 0x4 - core index']
  #allocation1 [shape = 'u32[144,128]{1,0:T(1,128)}', space=vmem, size = 0x12000, scoped, tag = 'internal scratch']
  %s0 = inlined_call_operand.vmem [shape: bf16[128,3456], index: 0, kind: input, shape index: {}]
  %s1 = inlined_call_operand.vmem [shape: bf16[3456,128], index: 1, kind: input, shape index: {}]
  %s2 = inlined_call_operand.vmem [shape: f32[1,128], index: 2, kind: input, shape index: {}]
  %s3 = inlined_call_operand.vmem [shape: bf16[8,128,128], index: 3, kind: input, shape index: {}]
  %s4 = inlined_call_operand.vmem [shape: f32[1,128], index: 4, kind: input, shape index: {}]
  %s5 = inlined_call_operand.vmem [shape: bf16[8,128,128], index: 5, kind: input, shape index: {}]
  %s6 = inlined_call_operand.vmem [shape: f32[1,128], index: 6, kind: input, shape index: {}]
  %s7 = inlined_call_operand.vmem [shape: bf16[128,256], index: 7, kind: input, shape index: {}]
  %s8 = inlined_call_operand.vmem [shape: f32[1,256], index: 8, kind: input, shape index: {}]
  %s9 = inlined_call_operand.vmem [shape: bf16[256,128], index: 9, kind: input, shape index: {}]
  %s10 = inlined_call_operand.vmem [shape: f32[1,128], index: 10, kind: input, shape index: {}]
  %s11 = inlined_call_operand.vmem [shape: bf16[128,128], index: 11, kind: input, shape index: {}]
  %s12 = inlined_call_operand.vmem [shape: f32[1,128], index: 12, kind: input, shape index: {}]
  %s13 = inlined_call_operand.vmem [shape: bf16[128,256], index: 13, kind: input, shape index: {}]
  %s14 = inlined_call_operand.vmem [shape: f32[1,256], index: 14, kind: input, shape index: {}]
  %s15 = inlined_call_operand.vmem [shape: bf16[256,128], index: 15, kind: input, shape index: {}]
  %s16 = inlined_call_operand.vmem [shape: f32[1,128], index: 16, kind: input, shape index: {}]
  %s17 = inlined_call_operand.vmem [shape: bf16[128,128], index: 17, kind: input, shape index: {}]
  %s18 = inlined_call_operand.vmem [shape: f32[1,128], index: 18, kind: input, shape index: {}]
  %s19 = inlined_call_operand.hbm [shape: f32[2,128], index: 19, kind: output, shape index: {}]
  %s20 = sld [smem:[#allocation0]]
  $region86: #{dqn_forward.3} parent=0
    _
  %s22 = ssub.s32 1, %s20
  %s23 = scalar_select 0, %s22, %s20
  $region1: #{dqn_forward.3} parent=0
    #allocation2 [shape = 'u8[1024]{0}', space=vmem, size = 0x400, scoped, tag = 'output window, operand 0, single buffered']
    #allocation3 [shape = 's32[1]{0}', space=sflag, size = 0x4, scoped, tag = 'scoped memory for dqn_forward.3']
    %24 = vsyncpa [#allocation3], 0
    // Predicated region
    $region2: #{dqn_forward.3} parent=1 // pred_check
      _
    $region3: #{dqn_forward.3} parent=1 // pred_check_branch
      %26 = sbr.rel (0) target = $region5
    $region4: #{dqn_forward.3} parent=1 // pred_region
      _
    $region5: #{dqn_forward.3} parent=1 // pred_fallthru
      _
    // Predicated region
    $region6: #{dqn_forward.3} parent=1 // pred_check
      _
    $region7: #{dqn_forward.3} parent=1 // pred_check_branch
      %28 = sbr.rel (0) target = $region9
    $region8: #{dqn_forward.3} parent=1 // pred_region
      _
    $region9: #{dqn_forward.3} parent=1 // pred_fallthru
      _
    // Predicated region
    $region10: #{dqn_forward.3} parent=1 // pred_check
      _
    $region11: #{dqn_forward.3} parent=1 // pred_check_branch
      %30 = sbr.rel (0) target = $region13
    $region12: #{dqn_forward.3} parent=1 // pred_region
      _
    $region13: #{dqn_forward.3} parent=1 // pred_fallthru
      _
    // Predicated region
    $region14: #{dqn_forward.3} parent=1 // pred_check
      _
    $region15: #{dqn_forward.3} parent=1 // pred_check_branch
      %32 = sbr.rel (0) target = $region17
    $region16: #{dqn_forward.3} parent=1 // pred_region
      _
    $region17: #{dqn_forward.3} parent=1 // pred_fallthru
      _
    // Predicated region
    $region18: #{dqn_forward.3} parent=1 // pred_check
      _
    $region19: #{dqn_forward.3} parent=1 // pred_check_branch
      %34 = sbr.rel (0) target = $region21
    $region20: #{dqn_forward.3} parent=1 // pred_region
      _
    $region21: #{dqn_forward.3} parent=1 // pred_fallthru
      _
    // Predicated region
    $region22: #{dqn_forward.3} parent=1 // pred_check
      _
    $region23: #{dqn_forward.3} parent=1 // pred_check_branch
      %36 = sbr.rel (0) target = $region25
    $region24: #{dqn_forward.3} parent=1 // pred_region
      _
    $region25: #{dqn_forward.3} parent=1 // pred_fallthru
      _
    // Predicated region
    $region26: #{dqn_forward.3} parent=1 // pred_check
      _
    $region27: #{dqn_forward.3} parent=1 // pred_check_branch
      %38 = sbr.rel (0) target = $region29
    $region28: #{dqn_forward.3} parent=1 // pred_region
      _
    $region29: #{dqn_forward.3} parent=1 // pred_fallthru
      _
    // Predicated region
    $region30: #{dqn_forward.3} parent=1 // pred_check
      _
    $region31: #{dqn_forward.3} parent=1 // pred_check_branch
      %40 = sbr.rel (0) target = $region33
    $region32: #{dqn_forward.3} parent=1 // pred_region
      _
    $region33: #{dqn_forward.3} parent=1 // pred_fallthru
      _
    // Predicated region
    $region34: #{dqn_forward.3} parent=1 // pred_check
      _
    $region35: #{dqn_forward.3} parent=1 // pred_check_branch
      %42 = sbr.rel (0) target = $region37
    $region36: #{dqn_forward.3} parent=1 // pred_region
      _
    $region37: #{dqn_forward.3} parent=1 // pred_fallthru
      _
    // Predicated region
    $region38: #{dqn_forward.3} parent=1 // pred_check
      _
    $region39: #{dqn_forward.3} parent=1 // pred_check_branch
      %44 = sbr.rel (0) target = $region41
    $region40: #{dqn_forward.3} parent=1 // pred_region
      _
    $region41: #{dqn_forward.3} parent=1 // pred_fallthru
      _
    // Predicated region
    $region42: #{dqn_forward.3} parent=1 // pred_check
      _
    $region43: #{dqn_forward.3} parent=1 // pred_check_branch
      %46 = sbr.rel (0) target = $region45
    $region44: #{dqn_forward.3} parent=1 // pred_region
      _
    $region45: #{dqn_forward.3} parent=1 // pred_fallthru
      _
    // Predicated region
    $region46: #{dqn_forward.3} parent=1 // pred_check
      _
    $region47: #{dqn_forward.3} parent=1 // pred_check_branch
      %48 = sbr.rel (0) target = $region49
    $region48: #{dqn_forward.3} parent=1 // pred_region
      _
    $region49: #{dqn_forward.3} parent=1 // pred_fallthru
      _
    // Predicated region
    $region50: #{dqn_forward.3} parent=1 // pred_check
      _
    $region51: #{dqn_forward.3} parent=1 // pred_check_branch
      %50 = sbr.rel (0) target = $region53
    $region52: #{dqn_forward.3} parent=1 // pred_region
      _
    $region53: #{dqn_forward.3} parent=1 // pred_fallthru
      _
    // Predicated region
    $region54: #{dqn_forward.3} parent=1 // pred_check
      _
    $region55: #{dqn_forward.3} parent=1 // pred_check_branch
      %52 = sbr.rel (0) target = $region57
    $region56: #{dqn_forward.3} parent=1 // pred_region
      _
    $region57: #{dqn_forward.3} parent=1 // pred_fallthru
      _
    // Predicated region
    $region58: #{dqn_forward.3} parent=1 // pred_check
      _
    $region59: #{dqn_forward.3} parent=1 // pred_check_branch
      %54 = sbr.rel (0) target = $region61
    $region60: #{dqn_forward.3} parent=1 // pred_region
      _
    $region61: #{dqn_forward.3} parent=1 // pred_fallthru
      _
    // Predicated region
    $region62: #{dqn_forward.3} parent=1 // pred_check
      _
    $region63: #{dqn_forward.3} parent=1 // pred_check_branch
      %56 = sbr.rel (0) target = $region65
    $region64: #{dqn_forward.3} parent=1 // pred_region
      _
    $region65: #{dqn_forward.3} parent=1 // pred_fallthru
      _
    // Predicated region
    $region66: #{dqn_forward.3} parent=1 // pred_check
      _
    $region67: #{dqn_forward.3} parent=1 // pred_check_branch
      %58 = sbr.rel (0) target = $region69
    $region68: #{dqn_forward.3} parent=1 // pred_region
      _
    $region69: #{dqn_forward.3} parent=1 // pred_fallthru
      _
    // Predicated region
    $region70: #{dqn_forward.3} parent=1 // pred_check
      _
    $region71: #{dqn_forward.3} parent=1 // pred_check_branch
      %60 = sbr.rel (0) target = $region73
    $region72: #{dqn_forward.3} parent=1 // pred_region
      _
    $region73: #{dqn_forward.3} parent=1 // pred_fallthru
      _
    // Predicated region
    $region74: #{dqn_forward.3} parent=1 // pred_check
      _
    $region75: #{dqn_forward.3} parent=1 // pred_check_branch
      %62 = sbr.rel (0) target = $region77
    $region76: #{dqn_forward.3} parent=1 // pred_region
      _
    $region77: #{dqn_forward.3} parent=1 // pred_fallthru
      _
    %v64 = vld [vmem:[%s0] sm:$0xff]
    %v65 = vld [vmem:[%s0 + $0x8] sm:$0xff]
    %v66 = vld [vmem:[%s0 + $0x10] sm:$0xff]
    %v67 = vld [vmem:[%s0 + $0x18] sm:$0xff]
    %v68 = vld [vmem:[%s0 + $0x20] sm:$0xff]
    %v69 = vld [vmem:[%s0 + $0x28] sm:$0xff]
    %v70 = vld [vmem:[%s0 + $0x30] sm:$0xff]
    %v71 = vld [vmem:[%s0 + $0x38] sm:$0xff]
    %v72 = vld [vmem:[%s0 + $0x40] sm:$0xff]
    %v73 = vld [vmem:[%s0 + $0x48] sm:$0xff]
    %v74 = vld [vmem:[%s0 + $0x50] sm:$0xff]
    %v75 = vld [vmem:[%s0 + $0x58] sm:$0xff]
    %v76 = vld [vmem:[%s0 + $0x60] sm:$0xff]
    %v77 = vld [vmem:[%s0 + $0x68] sm:$0xf]
    %v78 = vld [vmem:[%s0 + $0x6c] sm:$0xff]
    %v79 = vld [vmem:[%s0 + $0x74] sm:$0xff]
    %v80 = vld [vmem:[%s0 + $0x7c] sm:$0xff]
    %v81 = vld [vmem:[%s0 + $0x84] sm:$0xff]
    %v82 = vld [vmem:[%s0 + $0x8c] sm:$0xff]
    %v83 = vld [vmem:[%s0 + $0x94] sm:$0xff]
    %v84 = vld [vmem:[%s0 + $0x9c] sm:$0xff]
    %v85 = vld [vmem:[%s0 + $0xa4] sm:$0xff]
    %v86 = vld [vmem:[%s0 + $0xac] sm:$0xff]
    %v87 = vld [vmem:[%s0 + $0xb4] sm:$0xff]
    %v88 = vld [vmem:[%s0 + $0xbc] sm:$0xff]
    %v89 = vld [vmem:[%s0 + $0xc4] sm:$0xff]
    %v90 = vld [vmem:[%s0 + $0xcc] sm:$0xff]
    %v91 = vld [vmem:[%s0 + $0xd4] sm:$0xf]
    %v92 = vld [vmem:[%s0 + $0xd8] sm:$0xff]
    %v93 = vld [vmem:[%s0 + $0xe0] sm:$0xff]
    %v94 = vld [vmem:[%s0 + $0xe8] sm:$0xff]
    %v95 = vld [vmem:[%s0 + $0xf0] sm:$0xff]
    %v96 = vld [vmem:[%s0 + $0xf8] sm:$0xff]
    %v97 = vld [vmem:[%s0 + $0x100] sm:$0xff]
    %v98 = vld [vmem:[%s0 + $0x108] sm:$0xff]
    %v99 = vld [vmem:[%s0 + $0x110] sm:$0xff]
    %v100 = vld [vmem:[%s0 + $0x118] sm:$0xff]
    %v101 = vld [vmem:[%s0 + $0x120] sm:$0xff]
    %v102 = vld [vmem:[%s0 + $0x128] sm:$0xff]
    %v103 = vld [vmem:[%s0 + $0x130] sm:$0xff]
    %v104 = vld [vmem:[%s0 + $0x138] sm:$0xff]
    %v105 = vld [vmem:[%s0 + $0x140] sm:$0xf]
    %v106 = vld [vmem:[%s0 + $0x144] sm:$0xff]
    %v107 = vld [vmem:[%s0 + $0x14c] sm:$0xff]
    %v108 = vld [vmem:[%s0 + $0x154] sm:$0xff]
    %v109 = vld [vmem:[%s0 + $0x15c] sm:$0xff]
    %v110 = vld [vmem:[%s0 + $0x164] sm:$0xff]
    %v111 = vld [vmem:[%s0 + $0x16c] sm:$0xff]
    %v112 = vld [vmem:[%s0 + $0x174] sm:$0xff]
    %v113 = vld [vmem:[%s0 + $0x17c] sm:$0xff]
    %v114 = vld [vmem:[%s0 + $0x184] sm:$0xff]
    %v115 = vld [vmem:[%s0 + $0x18c] sm:$0xff]
    %v116 = vld [vmem:[%s0 + $0x194] sm:$0xff]
    %v117 = vld [vmem:[%s0 + $0x19c] sm:$0xff]
    %v118 = vld [vmem:[%s0 + $0x1a4] sm:$0xff]
    %v119 = vld [vmem:[%s0 + $0x1ac] sm:$0xf]
    %v120 = vld [vmem:[%s0 + $0x1b0] sm:$0xff]
    %v121 = vld [vmem:[%s0 + $0x1b8] sm:$0xff]
    %v122 = vld [vmem:[%s0 + $0x1c0] sm:$0xff]
    %v123 = vld [vmem:[%s0 + $0x1c8] sm:$0xff]
    %v124 = vld [vmem:[%s0 + $0x1d0] sm:$0xff]
    %v125 = vld [vmem:[%s0 + $0x1d8] sm:$0xff]
    %v126 = vld [vmem:[%s0 + $0x1e0] sm:$0xff]
    %v127 = vld [vmem:[%s0 + $0x1e8] sm:$0xff]
    %v128 = vld [vmem:[%s0 + $0x1f0] sm:$0xff]
    %v129 = vld [vmem:[%s0 + $0x1f8] sm:$0xff]
    %v130 = vld [vmem:[%s0 + $0x200] sm:$0xff]
    %v131 = vld [vmem:[%s0 + $0x208] sm:$0xff]
    %v132 = vld [vmem:[%s0 + $0x210] sm:$0xff]
    %v133 = vld [vmem:[%s0 + $0x218] sm:$0xf]
    %v134 = vld [vmem:[%s0 + $0x21c] sm:$0xff]
    %v135 = vld [vmem:[%s0 + $0x224] sm:$0xff]
    %v136 = vld [vmem:[%s0 + $0x22c] sm:$0xff]
    %v137 = vld [vmem:[%s0 + $0x234] sm:$0xff]
    %v138 = vld [vmem:[%s0 + $0x23c] sm:$0xff]
    %v139 = vld [vmem:[%s0 + $0x244] sm:$0xff]
    %v140 = vld [vmem:[%s0 + $0x24c] sm:$0xff]
    %v141 = vld [vmem:[%s0 + $0x254] sm:$0xff]
    %v142 = vld [vmem:[%s0 + $0x25c] sm:$0xff]
    %v143 = vld [vmem:[%s0 + $0x264] sm:$0xff]
    %v144 = vld [vmem:[%s0 + $0x26c] sm:$0xff]
    %v145 = vld [vmem:[%s0 + $0x274] sm:$0xff]
    %v146 = vld [vmem:[%s0 + $0x27c] sm:$0xff]
    %v147 = vld [vmem:[%s0 + $0x284] sm:$0xf]
    %v148 = vld [vmem:[%s0 + $0x288] sm:$0xff]
    %v149 = vld [vmem:[%s0 + $0x290] sm:$0xff]
    %v150 = vld [vmem:[%s0 + $0x298] sm:$0xff]
    %v151 = vld [vmem:[%s0 + $0x2a0] sm:$0xff]
    %v152 = vld [vmem:[%s0 + $0x2a8] sm:$0xff]
    %v153 = vld [vmem:[%s0 + $0x2b0] sm:$0xff]
    %v154 = vld [vmem:[%s0 + $0x2b8] sm:$0xff]
    %v155 = vld [vmem:[%s0 + $0x2c0] sm:$0xff]
    %v156 = vld [vmem:[%s0 + $0x2c8] sm:$0xff]
    %v157 = vld [vmem:[%s0 + $0x2d0] sm:$0xff]
    %v158 = vld [vmem:[%s0 + $0x2d8] sm:$0xff]
    %v159 = vld [vmem:[%s0 + $0x2e0] sm:$0xff]
    %v160 = vld [vmem:[%s0 + $0x2e8] sm:$0xff]
    %v161 = vld [vmem:[%s0 + $0x2f0] sm:$0xf]
    %v162 = vld [vmem:[%s0 + $0x2f4] sm:$0xff]
    %v163 = vld [vmem:[%s0 + $0x2fc] sm:$0xff]
    %v164 = vld [vmem:[%s0 + $0x304] sm:$0xff]
    %v165 = vld [vmem:[%s0 + $0x30c] sm:$0xff]
    %v166 = vld [vmem:[%s0 + $0x314] sm:$0xff]
    %v167 = vld [vmem:[%s0 + $0x31c] sm:$0xff]
    %v168 = vld [vmem:[%s0 + $0x324] sm:$0xff]
    %v169 = vld [vmem:[%s0 + $0x32c] sm:$0xff]
    %v170 = vld [vmem:[%s0 + $0x334] sm:$0xff]
    %v171 = vld [vmem:[%s0 + $0x33c] sm:$0xff]
    %v172 = vld [vmem:[%s0 + $0x344] sm:$0xff]
    %v173 = vld [vmem:[%s0 + $0x34c] sm:$0xff]
    %v174 = vld [vmem:[%s0 + $0x354] sm:$0xff]
    %v175 = vld [vmem:[%s0 + $0x35c] sm:$0xf]
    %v176 = vld [vmem:[%s0 + $0x360] sm:$0xff]
    %v177 = vld [vmem:[%s0 + $0x368] sm:$0xff]
    %v178 = vld [vmem:[%s0 + $0x370] sm:$0xff]
    %v179 = vld [vmem:[%s0 + $0x378] sm:$0xff]
    %v180 = vld [vmem:[%s0 + $0x380] sm:$0xff]
    %v181 = vld [vmem:[%s0 + $0x388] sm:$0xff]
    %v182 = vld [vmem:[%s0 + $0x390] sm:$0xff]
    %v183 = vld [vmem:[%s0 + $0x398] sm:$0xff]
    %v184 = vld [vmem:[%s0 + $0x3a0] sm:$0xff]
    %v185 = vld [vmem:[%s0 + $0x3a8] sm:$0xff]
    %v186 = vld [vmem:[%s0 + $0x3b0] sm:$0xff]
    %v187 = vld [vmem:[%s0 + $0x3b8] sm:$0xff]
    %v188 = vld [vmem:[%s0 + $0x3c0] sm:$0xff]
    %v189 = vld [vmem:[%s0 + $0x3c8] sm:$0xf]
    %v190 = vld [vmem:[%s0 + $0x3cc] sm:$0xff]
    %v191 = vld [vmem:[%s0 + $0x3d4] sm:$0xff]
    %v192 = vld [vmem:[%s0 + $0x3dc] sm:$0xff]
    %v193 = vld [vmem:[%s0 + $0x3e4] sm:$0xff]
    %v194 = vld [vmem:[%s0 + $0x3ec] sm:$0xff]
    %v195 = vld [vmem:[%s0 + $0x3f4] sm:$0xff]
    %v196 = vld [vmem:[%s0 + $0x3fc] sm:$0xff]
    %v197 = vld [vmem:[%s0 + $0x404] sm:$0xff]
    %v198 = vld [vmem:[%s0 + $0x40c] sm:$0xff]
    %v199 = vld [vmem:[%s0 + $0x414] sm:$0xff]
    %v200 = vld [vmem:[%s0 + $0x41c] sm:$0xff]
    %v201 = vld [vmem:[%s0 + $0x424] sm:$0xff]
    %v202 = vld [vmem:[%s0 + $0x42c] sm:$0xff]
    %v203 = vld [vmem:[%s0 + $0x434] sm:$0xf]
    %v204 = vld [vmem:[%s0 + $0x438] sm:$0xff]
    %v205 = vld [vmem:[%s0 + $0x440] sm:$0xff]
    %v206 = vld [vmem:[%s0 + $0x448] sm:$0xff]
    %v207 = vld [vmem:[%s0 + $0x450] sm:$0xff]
    %v208 = vld [vmem:[%s0 + $0x458] sm:$0xff]
    %v209 = vld [vmem:[%s0 + $0x460] sm:$0xff]
    %v210 = vld [vmem:[%s0 + $0x468] sm:$0xff]
    %v211 = vld [vmem:[%s0 + $0x470] sm:$0xff]
    %v212 = vld [vmem:[%s0 + $0x478] sm:$0xff]
    %v213 = vld [vmem:[%s0 + $0x480] sm:$0xff]
    %v214 = vld [vmem:[%s0 + $0x488] sm:$0xff]
    %v215 = vld [vmem:[%s0 + $0x490] sm:$0xff]
    %v216 = vld [vmem:[%s0 + $0x498] sm:$0xff]
    %v217 = vld [vmem:[%s0 + $0x4a0] sm:$0xf]
    %v218 = vld [vmem:[%s0 + $0x4a4] sm:$0xff]
    %v219 = vld [vmem:[%s0 + $0x4ac] sm:$0xff]
    %v220 = vld [vmem:[%s0 + $0x4b4] sm:$0xff]
    %v221 = vld [vmem:[%s0 + $0x4bc] sm:$0xff]
    %v222 = vld [vmem:[%s0 + $0x4c4] sm:$0xff]
    %v223 = vld [vmem:[%s0 + $0x4cc] sm:$0xff]
    %v224 = vld [vmem:[%s0 + $0x4d4] sm:$0xff]
    %v225 = vld [vmem:[%s0 + $0x4dc] sm:$0xff]
    %v226 = vld [vmem:[%s0 + $0x4e4] sm:$0xff]
    %v227 = vld [vmem:[%s0 + $0x4ec] sm:$0xff]
    %v228 = vld [vmem:[%s0 + $0x4f4] sm:$0xff]
    %v229 = vld [vmem:[%s0 + $0x4fc] sm:$0xff]
    %v230 = vld [vmem:[%s0 + $0x504] sm:$0xff]
    %v231 = vld [vmem:[%s0 + $0x50c] sm:$0xf]
    %v232 = vld [vmem:[%s0 + $0x510] sm:$0xff]
    %v233 = vld [vmem:[%s0 + $0x518] sm:$0xff]
    %v234 = vld [vmem:[%s0 + $0x520] sm:$0xff]
    %v235 = vld [vmem:[%s0 + $0x528] sm:$0xff]
    %v236 = vld [vmem:[%s0 + $0x530] sm:$0xff]
    %v237 = vld [vmem:[%s0 + $0x538] sm:$0xff]
    %v238 = vld [vmem:[%s0 + $0x540] sm:$0xff]
    %v239 = vld [vmem:[%s0 + $0x548] sm:$0xff]
    %v240 = vld [vmem:[%s0 + $0x550] sm:$0xff]
    %v241 = vld [vmem:[%s0 + $0x558] sm:$0xff]
    %v242 = vld [vmem:[%s0 + $0x560] sm:$0xff]
    %v243 = vld [vmem:[%s0 + $0x568] sm:$0xff]
    %v244 = vld [vmem:[%s0 + $0x570] sm:$0xff]
    %v245 = vld [vmem:[%s0 + $0x578] sm:$0xf]
    %v246 = vld [vmem:[%s0 + $0x57c] sm:$0xff]
    %v247 = vld [vmem:[%s0 + $0x584] sm:$0xff]
    %v248 = vld [vmem:[%s0 + $0x58c] sm:$0xff]
    %v249 = vld [vmem:[%s0 + $0x594] sm:$0xff]
    %v250 = vld [vmem:[%s0 + $0x59c] sm:$0xff]
    %v251 = vld [vmem:[%s0 + $0x5a4] sm:$0xff]
    %v252 = vld [vmem:[%s0 + $0x5ac] sm:$0xff]
    %v253 = vld [vmem:[%s0 + $0x5b4] sm:$0xff]
    %v254 = vld [vmem:[%s0 + $0x5bc] sm:$0xff]
    %v255 = vld [vmem:[%s0 + $0x5c4] sm:$0xff]
    %v256 = vld [vmem:[%s0 + $0x5cc] sm:$0xff]
    %v257 = vld [vmem:[%s0 + $0x5d4] sm:$0xff]
    %v258 = vld [vmem:[%s0 + $0x5dc] sm:$0xff]
    %v259 = vld [vmem:[%s0 + $0x5e4] sm:$0xf]
    %v260 = vld [vmem:[%s0 + $0x5e8] sm:$0xff]
    %v261 = vld [vmem:[%s0 + $0x5f0] sm:$0xff]
    %v262 = vld [vmem:[%s0 + $0x5f8] sm:$0xff]
    %v263 = vld [vmem:[%s0 + $0x600] sm:$0xff]
    %v264 = vld [vmem:[%s0 + $0x608] sm:$0xff]
    %v265 = vld [vmem:[%s0 + $0x610] sm:$0xff]
    %v266 = vld [vmem:[%s0 + $0x618] sm:$0xff]
    %v267 = vld [vmem:[%s0 + $0x620] sm:$0xff]
    %v268 = vld [vmem:[%s0 + $0x628] sm:$0xff]
    %v269 = vld [vmem:[%s0 + $0x630] sm:$0xff]
    %v270 = vld [vmem:[%s0 + $0x638] sm:$0xff]
    %v271 = vld [vmem:[%s0 + $0x640] sm:$0xff]
    %v272 = vld [vmem:[%s0 + $0x648] sm:$0xff]
    %v273 = vld [vmem:[%s0 + $0x650] sm:$0xf]
    %v274 = vld [vmem:[%s0 + $0x654] sm:$0xff]
    %v275 = vld [vmem:[%s0 + $0x65c] sm:$0xff]
    %v276 = vld [vmem:[%s0 + $0x664] sm:$0xff]
    %v277 = vld [vmem:[%s0 + $0x66c] sm:$0xff]
    %v278 = vld [vmem:[%s0 + $0x674] sm:$0xff]
    %v279 = vld [vmem:[%s0 + $0x67c] sm:$0xff]
    %v280 = vld [vmem:[%s0 + $0x684] sm:$0xff]
    %v281 = vld [vmem:[%s0 + $0x68c] sm:$0xff]
    %v282 = vld [vmem:[%s0 + $0x694] sm:$0xff]
    %v283 = vld [vmem:[%s0 + $0x69c] sm:$0xff]
    %v284 = vld [vmem:[%s0 + $0x6a4] sm:$0xff]
    %v285 = vld [vmem:[%s0 + $0x6ac] sm:$0xff]
    %v286 = vld [vmem:[%s0 + $0x6b4] sm:$0xff]
    %v287 = vld [vmem:[%s0 + $0x6bc] sm:$0xf]
    %v288 = vld [vmem:[%s1] sm:$0xf]
    %v289 = vld [vmem:[%s1 + $0x4] sm:$0xf]
    %v290 = vld [vmem:[%s1 + $0x8] sm:$0xf]
    %v291 = vld [vmem:[%s1 + $0xc] sm:$0xf]
    %v292 = vld [vmem:[%s1 + $0x10] sm:$0xf]
    %v293 = vld [vmem:[%s1 + $0x14] sm:$0xf]
    %v294 = vld [vmem:[%s1 + $0x18] sm:$0xf]
    %v295 = vld [vmem:[%s1 + $0x1c] sm:$0xf]
    %v296 = vld [vmem:[%s1 + $0x20] sm:$0xf]
    %v297 = vld [vmem:[%s1 + $0x24] sm:$0xf]
    %v298 = vld [vmem:[%s1 + $0x28] sm:$0xf]
    %v299 = vld [vmem:[%s1 + $0x2c] sm:$0xf]
    %v300 = vld [vmem:[%s1 + $0x30] sm:$0xf]
    %v301 = vld [vmem:[%s1 + $0x34] sm:$0xf]
    %v302 = vld [vmem:[%s1 + $0x38] sm:$0xf]
    %v303 = vld [vmem:[%s1 + $0x3c] sm:$0xf]
    %v304 = vld [vmem:[%s1 + $0x40] sm:$0xf]
    %v305 = vld [vmem:[%s1 + $0x44] sm:$0xf]
    %v306 = vld [vmem:[%s1 + $0x48] sm:$0xf]
    %v307 = vld [vmem:[%s1 + $0x4c] sm:$0xf]
    %v308 = vld [vmem:[%s1 + $0x50] sm:$0xf]
    %v309 = vld [vmem:[%s1 + $0x54] sm:$0xf]
    %v310 = vld [vmem:[%s1 + $0x58] sm:$0xf]
    %v311 = vld [vmem:[%s1 + $0x5c] sm:$0xf]
    %v312 = vld [vmem:[%s1 + $0x60] sm:$0xf]
    %v313 = vld [vmem:[%s1 + $0x64] sm:$0xf]
    %v314 = vld [vmem:[%s1 + $0x68] sm:$0xf]
    %v315 = vld [vmem:[%s1 + $0x6c] sm:$0xf]
    %v316 = vld [vmem:[%s1 + $0x70] sm:$0xf]
    %v317 = vld [vmem:[%s1 + $0x74] sm:$0xf]
    %v318 = vld [vmem:[%s1 + $0x78] sm:$0xf]
    %v319 = vld [vmem:[%s1 + $0x7c] sm:$0xf]
    %v320 = vld [vmem:[%s1 + $0x80] sm:$0xf]
    %v321 = vld [vmem:[%s1 + $0x84] sm:$0xf]
    %v322 = vld [vmem:[%s1 + $0x88] sm:$0xf]
    %v323 = vld [vmem:[%s1 + $0x8c] sm:$0xf]
    %v324 = vld [vmem:[%s1 + $0x90] sm:$0xf]
    %v325 = vld [vmem:[%s1 + $0x94] sm:$0xf]
    %v326 = vld [vmem:[%s1 + $0x98] sm:$0xf]
    %v327 = vld [vmem:[%s1 + $0x9c] sm:$0xf]
    %v328 = vld [vmem:[%s1 + $0xa0] sm:$0xf]
    %v329 = vld [vmem:[%s1 + $0xa4] sm:$0xf]
    %v330 = vld [vmem:[%s1 + $0xa8] sm:$0xf]
    %v331 = vld [vmem:[%s1 + $0xac] sm:$0xf]
    %v332 = vld [vmem:[%s1 + $0xb0] sm:$0xf]
    %v333 = vld [vmem:[%s1 + $0xb4] sm:$0xf]
    %v334 = vld [vmem:[%s1 + $0xb8] sm:$0xf]
    %v335 = vld [vmem:[%s1 + $0xbc] sm:$0xf]
    %v336 = vld [vmem:[%s1 + $0xc0] sm:$0xf]
    %v337 = vld [vmem:[%s1 + $0xc4] sm:$0xf]
    %v338 = vld [vmem:[%s1 + $0xc8] sm:$0xf]
    %v339 = vld [vmem:[%s1 + $0xcc] sm:$0xf]
    %v340 = vld [vmem:[%s1 + $0xd0] sm:$0xf]
    %v341 = vld [vmem:[%s1 + $0xd4] sm:$0xf]
    %v342 = vld [vmem:[%s1 + $0xd8] sm:$0xf]
    %v343 = vld [vmem:[%s1 + $0xdc] sm:$0xf]
    %v344 = vld [vmem:[%s1 + $0xe0] sm:$0xf]
    %v345 = vld [vmem:[%s1 + $0xe4] sm:$0xf]
    %v346 = vld [vmem:[%s1 + $0xe8] sm:$0xf]
    %v347 = vld [vmem:[%s1 + $0xec] sm:$0xf]
    %v348 = vld [vmem:[%s1 + $0xf0] sm:$0xf]
    %v349 = vld [vmem:[%s1 + $0xf4] sm:$0xf]
    %v350 = vld [vmem:[%s1 + $0xf8] sm:$0xf]
    %v351 = vld [vmem:[%s1 + $0xfc] sm:$0xf]
    %v352 = vld [vmem:[%s1 + $0x100] sm:$0xf]
    %v353 = vld [vmem:[%s1 + $0x104] sm:$0xf]
    %v354 = vld [vmem:[%s1 + $0x108] sm:$0xf]
    %v355 = vld [vmem:[%s1 + $0x10c] sm:$0xf]
    %v356 = vld [vmem:[%s1 + $0x110] sm:$0xf]
    %v357 = vld [vmem:[%s1 + $0x114] sm:$0xf]
    %v358 = vld [vmem:[%s1 + $0x118] sm:$0xf]
    %v359 = vld [vmem:[%s1 + $0x11c] sm:$0xf]
    %v360 = vld [vmem:[%s1 + $0x120] sm:$0xf]
    %v361 = vld [vmem:[%s1 + $0x124] sm:$0xf]
    %v362 = vld [vmem:[%s1 + $0x128] sm:$0xf]
    %v363 = vld [vmem:[%s1 + $0x12c] sm:$0xf]
    %v364 = vld [vmem:[%s1 + $0x130] sm:$0xf]
    %v365 = vld [vmem:[%s1 + $0x134] sm:$0xf]
    %v366 = vld [vmem:[%s1 + $0x138] sm:$0xf]
    %v367 = vld [vmem:[%s1 + $0x13c] sm:$0xf]
    %v368 = vld [vmem:[%s1 + $0x140] sm:$0xf]
    %v369 = vld [vmem:[%s1 + $0x144] sm:$0xf]
    %v370 = vld [vmem:[%s1 + $0x148] sm:$0xf]
    %v371 = vld [vmem:[%s1 + $0x14c] sm:$0xf]
    %v372 = vld [vmem:[%s1 + $0x150] sm:$0xf]
    %v373 = vld [vmem:[%s1 + $0x154] sm:$0xf]
    %v374 = vld [vmem:[%s1 + $0x158] sm:$0xf]
    %v375 = vld [vmem:[%s1 + $0x15c] sm:$0xf]
    %v376 = vld [vmem:[%s1 + $0x160] sm:$0xf]
    %v377 = vld [vmem:[%s1 + $0x164] sm:$0xf]
    %v378 = vld [vmem:[%s1 + $0x168] sm:$0xf]
    %v379 = vld [vmem:[%s1 + $0x16c] sm:$0xf]
    %v380 = vld [vmem:[%s1 + $0x170] sm:$0xf]
    %v381 = vld [vmem:[%s1 + $0x174] sm:$0xf]
    %v382 = vld [vmem:[%s1 + $0x178] sm:$0xf]
    %v383 = vld [vmem:[%s1 + $0x17c] sm:$0xf]
    %v384 = vld [vmem:[%s1 + $0x180] sm:$0xf]
    %v385 = vld [vmem:[%s1 + $0x184] sm:$0xf]
    %v386 = vld [vmem:[%s1 + $0x188] sm:$0xf]
    %v387 = vld [vmem:[%s1 + $0x18c] sm:$0xf]
    %v388 = vld [vmem:[%s1 + $0x190] sm:$0xf]
    %v389 = vld [vmem:[%s1 + $0x194] sm:$0xf]
    %v390 = vld [vmem:[%s1 + $0x198] sm:$0xf]
    %v391 = vld [vmem:[%s1 + $0x19c] sm:$0xf]
    %v392 = vld [vmem:[%s1 + $0x1a0] sm:$0xf]
    %v393 = vld [vmem:[%s1 + $0x1a4] sm:$0xf]
    %v394 = vld [vmem:[%s1 + $0x1a8] sm:$0xf]
    %v395 = vld [vmem:[%s1 + $0x1ac] sm:$0xf]
    %v396 = vld [vmem:[%s1 + $0x1b0] sm:$0xf]
    %v397 = vld [vmem:[%s1 + $0x1b4] sm:$0xf]
    %v398 = vld [vmem:[%s1 + $0x1b8] sm:$0xf]
    %v399 = vld [vmem:[%s1 + $0x1bc] sm:$0xf]
    %v400 = vld [vmem:[%s1 + $0x1c0] sm:$0xf]
    %v401 = vld [vmem:[%s1 + $0x1c4] sm:$0xf]
    %v402 = vld [vmem:[%s1 + $0x1c8] sm:$0xf]
    %v403 = vld [vmem:[%s1 + $0x1cc] sm:$0xf]
    %v404 = vld [vmem:[%s1 + $0x1d0] sm:$0xf]
    %v405 = vld [vmem:[%s1 + $0x1d4] sm:$0xf]
    %v406 = vld [vmem:[%s1 + $0x1d8] sm:$0xf]
    %v407 = vld [vmem:[%s1 + $0x1dc] sm:$0xf]
    %v408 = vld [vmem:[%s1 + $0x1e0] sm:$0xf]
    %v409 = vld [vmem:[%s1 + $0x1e4] sm:$0xf]
    %v410 = vld [vmem:[%s1 + $0x1e8] sm:$0xf]
    %v411 = vld [vmem:[%s1 + $0x1ec] sm:$0xf]
    %v412 = vld [vmem:[%s1 + $0x1f0] sm:$0xf]
    %v413 = vld [vmem:[%s1 + $0x1f4] sm:$0xf]
    %v414 = vld [vmem:[%s1 + $0x1f8] sm:$0xf]
    %v415 = vld [vmem:[%s1 + $0x1fc] sm:$0xf]
    %v416 = vld [vmem:[%s1 + $0x200] sm:$0xf]
    %v417 = vld [vmem:[%s1 + $0x204] sm:$0xf]
    %v418 = vld [vmem:[%s1 + $0x208] sm:$0xf]
    %v419 = vld [vmem:[%s1 + $0x20c] sm:$0xf]
    %v420 = vld [vmem:[%s1 + $0x210] sm:$0xf]
    %v421 = vld [vmem:[%s1 + $0x214] sm:$0xf]
    %v422 = vld [vmem:[%s1 + $0x218] sm:$0xf]
    %v423 = vld [vmem:[%s1 + $0x21c] sm:$0xf]
    %v424 = vld [vmem:[%s1 + $0x220] sm:$0xf]
    %v425 = vld [vmem:[%s1 + $0x224] sm:$0xf]
    %v426 = vld [vmem:[%s1 + $0x228] sm:$0xf]
    %v427 = vld [vmem:[%s1 + $0x22c] sm:$0xf]
    %v428 = vld [vmem:[%s1 + $0x230] sm:$0xf]
    %v429 = vld [vmem:[%s1 + $0x234] sm:$0xf]
    %v430 = vld [vmem:[%s1 + $0x238] sm:$0xf]
    %v431 = vld [vmem:[%s1 + $0x23c] sm:$0xf]
    %v432 = vld [vmem:[%s1 + $0x240] sm:$0xf]
    %v433 = vld [vmem:[%s1 + $0x244] sm:$0xf]
    %v434 = vld [vmem:[%s1 + $0x248] sm:$0xf]
    %v435 = vld [vmem:[%s1 + $0x24c] sm:$0xf]
    %v436 = vld [vmem:[%s1 + $0x250] sm:$0xf]
    %v437 = vld [vmem:[%s1 + $0x254] sm:$0xf]
    %v438 = vld [vmem:[%s1 + $0x258] sm:$0xf]
    %v439 = vld [vmem:[%s1 + $0x25c] sm:$0xf]
    %v440 = vld [vmem:[%s1 + $0x260] sm:$0xf]
    %v441 = vld [vmem:[%s1 + $0x264] sm:$0xf]
    %v442 = vld [vmem:[%s1 + $0x268] sm:$0xf]
    %v443 = vld [vmem:[%s1 + $0x26c] sm:$0xf]
    %v444 = vld [vmem:[%s1 + $0x270] sm:$0xf]
    %v445 = vld [vmem:[%s1 + $0x274] sm:$0xf]
    %v446 = vld [vmem:[%s1 + $0x278] sm:$0xf]
    %v447 = vld [vmem:[%s1 + $0x27c] sm:$0xf]
    %v448 = vld [vmem:[%s1 + $0x280] sm:$0xf]
    %v449 = vld [vmem:[%s1 + $0x284] sm:$0xf]
    %v450 = vld [vmem:[%s1 + $0x288] sm:$0xf]
    %v451 = vld [vmem:[%s1 + $0x28c] sm:$0xf]
    %v452 = vld [vmem:[%s1 + $0x290] sm:$0xf]
    %v453 = vld [vmem:[%s1 + $0x294] sm:$0xf]
    %v454 = vld [vmem:[%s1 + $0x298] sm:$0xf]
    %v455 = vld [vmem:[%s1 + $0x29c] sm:$0xf]
    %v456 = vld [vmem:[%s1 + $0x2a0] sm:$0xf]
    %v457 = vld [vmem:[%s1 + $0x2a4] sm:$0xf]
    %v458 = vld [vmem:[%s1 + $0x2a8] sm:$0xf]
    %v459 = vld [vmem:[%s1 + $0x2ac] sm:$0xf]
    %v460 = vld [vmem:[%s1 + $0x2b0] sm:$0xf]
    %v461 = vld [vmem:[%s1 + $0x2b4] sm:$0xf]
    %v462 = vld [vmem:[%s1 + $0x2b8] sm:$0xf]
    %v463 = vld [vmem:[%s1 + $0x2bc] sm:$0xf]
    %v464 = vld [vmem:[%s1 + $0x2c0] sm:$0xf]
    %v465 = vld [vmem:[%s1 + $0x2c4] sm:$0xf]
    %v466 = vld [vmem:[%s1 + $0x2c8] sm:$0xf]
    %v467 = vld [vmem:[%s1 + $0x2cc] sm:$0xf]
    %v468 = vld [vmem:[%s1 + $0x2d0] sm:$0xf]
    %v469 = vld [vmem:[%s1 + $0x2d4] sm:$0xf]
    %v470 = vld [vmem:[%s1 + $0x2d8] sm:$0xf]
    %v471 = vld [vmem:[%s1 + $0x2dc] sm:$0xf]
    %v472 = vld [vmem:[%s1 + $0x2e0] sm:$0xf]
    %v473 = vld [vmem:[%s1 + $0x2e4] sm:$0xf]
    %v474 = vld [vmem:[%s1 + $0x2e8] sm:$0xf]
    %v475 = vld [vmem:[%s1 + $0x2ec] sm:$0xf]
    %v476 = vld [vmem:[%s1 + $0x2f0] sm:$0xf]
    %v477 = vld [vmem:[%s1 + $0x2f4] sm:$0xf]
    %v478 = vld [vmem:[%s1 + $0x2f8] sm:$0xf]
    %v479 = vld [vmem:[%s1 + $0x2fc] sm:$0xf]
    %v480 = vld [vmem:[%s1 + $0x300] sm:$0xf]
    %v481 = vld [vmem:[%s1 + $0x304] sm:$0xf]
    %v482 = vld [vmem:[%s1 + $0x308] sm:$0xf]
    %v483 = vld [vmem:[%s1 + $0x30c] sm:$0xf]
    %v484 = vld [vmem:[%s1 + $0x310] sm:$0xf]
    %v485 = vld [vmem:[%s1 + $0x314] sm:$0xf]
    %v486 = vld [vmem:[%s1 + $0x318] sm:$0xf]
    %v487 = vld [vmem:[%s1 + $0x31c] sm:$0xf]
    %v488 = vld [vmem:[%s1 + $0x320] sm:$0xf]
    %v489 = vld [vmem:[%s1 + $0x324] sm:$0xf]
    %v490 = vld [vmem:[%s1 + $0x328] sm:$0xf]
    %v491 = vld [vmem:[%s1 + $0x32c] sm:$0xf]
    %v492 = vld [vmem:[%s1 + $0x330] sm:$0xf]
    %v493 = vld [vmem:[%s1 + $0x334] sm:$0xf]
    %v494 = vld [vmem:[%s1 + $0x338] sm:$0xf]
    %v495 = vld [vmem:[%s1 + $0x33c] sm:$0xf]
    %v496 = vld [vmem:[%s1 + $0x340] sm:$0xf]
    %v497 = vld [vmem:[%s1 + $0x344] sm:$0xf]
    %v498 = vld [vmem:[%s1 + $0x348] sm:$0xf]
    %v499 = vld [vmem:[%s1 + $0x34c] sm:$0xf]
    %v500 = vld [vmem:[%s1 + $0x350] sm:$0xf]
    %v501 = vld [vmem:[%s1 + $0x354] sm:$0xf]
    %v502 = vld [vmem:[%s1 + $0x358] sm:$0xf]
    %v503 = vld [vmem:[%s1 + $0x35c] sm:$0xf]
    %v504 = vld [vmem:[%s1 + $0x360] sm:$0xf]
    %v505 = vld [vmem:[%s1 + $0x364] sm:$0xf]
    %v506 = vld [vmem:[%s1 + $0x368] sm:$0xf]
    %v507 = vld [vmem:[%s1 + $0x36c] sm:$0xf]
    %v508 = vld [vmem:[%s1 + $0x370] sm:$0xf]
    %v509 = vld [vmem:[%s1 + $0x374] sm:$0xf]
    %v510 = vld [vmem:[%s1 + $0x378] sm:$0xf]
    %v511 = vld [vmem:[%s1 + $0x37c] sm:$0xf]
    %v512 = vld [vmem:[%s1 + $0x380] sm:$0xf]
    %v513 = vld [vmem:[%s1 + $0x384] sm:$0xf]
    %v514 = vld [vmem:[%s1 + $0x388] sm:$0xf]
    %v515 = vld [vmem:[%s1 + $0x38c] sm:$0xf]
    %v516 = vld [vmem:[%s1 + $0x390] sm:$0xf]
    %v517 = vld [vmem:[%s1 + $0x394] sm:$0xf]
    %v518 = vld [vmem:[%s1 + $0x398] sm:$0xf]
    %v519 = vld [vmem:[%s1 + $0x39c] sm:$0xf]
    %v520 = vld [vmem:[%s1 + $0x3a0] sm:$0xf]
    %v521 = vld [vmem:[%s1 + $0x3a4] sm:$0xf]
    %v522 = vld [vmem:[%s1 + $0x3a8] sm:$0xf]
    %v523 = vld [vmem:[%s1 + $0x3ac] sm:$0xf]
    %v524 = vld [vmem:[%s1 + $0x3b0] sm:$0xf]
    %v525 = vld [vmem:[%s1 + $0x3b4] sm:$0xf]
    %v526 = vld [vmem:[%s1 + $0x3b8] sm:$0xf]
    %v527 = vld [vmem:[%s1 + $0x3bc] sm:$0xf]
    %v528 = vld [vmem:[%s1 + $0x3c0] sm:$0xf]
    %v529 = vld [vmem:[%s1 + $0x3c4] sm:$0xf]
    %v530 = vld [vmem:[%s1 + $0x3c8] sm:$0xf]
    %v531 = vld [vmem:[%s1 + $0x3cc] sm:$0xf]
    %v532 = vld [vmem:[%s1 + $0x3d0] sm:$0xf]
    %v533 = vld [vmem:[%s1 + $0x3d4] sm:$0xf]
    %v534 = vld [vmem:[%s1 + $0x3d8] sm:$0xf]
    %v535 = vld [vmem:[%s1 + $0x3dc] sm:$0xf]
    %v536 = vld [vmem:[%s1 + $0x3e0] sm:$0xf]
    %v537 = vld [vmem:[%s1 + $0x3e4] sm:$0xf]
    %v538 = vld [vmem:[%s1 + $0x3e8] sm:$0xf]
    %v539 = vld [vmem:[%s1 + $0x3ec] sm:$0xf]
    %v540 = vld [vmem:[%s1 + $0x3f0] sm:$0xf]
    %v541 = vld [vmem:[%s1 + $0x3f4] sm:$0xf]
    %v542 = vld [vmem:[%s1 + $0x3f8] sm:$0xf]
    %v543 = vld [vmem:[%s1 + $0x3fc] sm:$0xf]
    %v544 = vld [vmem:[%s1 + $0x400] sm:$0xf]
    %v545 = vld [vmem:[%s1 + $0x404] sm:$0xf]
    %v546 = vld [vmem:[%s1 + $0x408] sm:$0xf]
    %v547 = vld [vmem:[%s1 + $0x40c] sm:$0xf]
    %v548 = vld [vmem:[%s1 + $0x410] sm:$0xf]
    %v549 = vld [vmem:[%s1 + $0x414] sm:$0xf]
    %v550 = vld [vmem:[%s1 + $0x418] sm:$0xf]
    %v551 = vld [vmem:[%s1 + $0x41c] sm:$0xf]
    %v552 = vld [vmem:[%s1 + $0x420] sm:$0xf]
    %v553 = vld [vmem:[%s1 + $0x424] sm:$0xf]
    %v554 = vld [vmem:[%s1 + $0x428] sm:$0xf]
    %v555 = vld [vmem:[%s1 + $0x42c] sm:$0xf]
    %v556 = vld [vmem:[%s1 + $0x430] sm:$0xf]
    %v557 = vld [vmem:[%s1 + $0x434] sm:$0xf]
    %v558 = vld [vmem:[%s1 + $0x438] sm:$0xf]
    %v559 = vld [vmem:[%s1 + $0x43c] sm:$0xf]
    %v560 = vld [vmem:[%s1 + $0x440] sm:$0xf]
    %v561 = vld [vmem:[%s1 + $0x444] sm:$0xf]
    %v562 = vld [vmem:[%s1 + $0x448] sm:$0xf]
    %v563 = vld [vmem:[%s1 + $0x44c] sm:$0xf]
    %v564 = vld [vmem:[%s1 + $0x450] sm:$0xf]
    %v565 = vld [vmem:[%s1 + $0x454] sm:$0xf]
    %v566 = vld [vmem:[%s1 + $0x458] sm:$0xf]
    %v567 = vld [vmem:[%s1 + $0x45c] sm:$0xf]
    %v568 = vld [vmem:[%s1 + $0x460] sm:$0xf]
    %v569 = vld [vmem:[%s1 + $0x464] sm:$0xf]
    %v570 = vld [vmem:[%s1 + $0x468] sm:$0xf]
    %v571 = vld [vmem:[%s1 + $0x46c] sm:$0xf]
    %v572 = vld [vmem:[%s1 + $0x470] sm:$0xf]
    %v573 = vld [vmem:[%s1 + $0x474] sm:$0xf]
    %v574 = vld [vmem:[%s1 + $0x478] sm:$0xf]
    %v575 = vld [vmem:[%s1 + $0x47c] sm:$0xf]
    %v576 = vld [vmem:[%s1 + $0x480] sm:$0xf]
    %v577 = vld [vmem:[%s1 + $0x484] sm:$0xf]
    %v578 = vld [vmem:[%s1 + $0x488] sm:$0xf]
    %v579 = vld [vmem:[%s1 + $0x48c] sm:$0xf]
    %v580 = vld [vmem:[%s1 + $0x490] sm:$0xf]
    %v581 = vld [vmem:[%s1 + $0x494] sm:$0xf]
    %v582 = vld [vmem:[%s1 + $0x498] sm:$0xf]
    %v583 = vld [vmem:[%s1 + $0x49c] sm:$0xf]
    %v584 = vld [vmem:[%s1 + $0x4a0] sm:$0xf]
    %v585 = vld [vmem:[%s1 + $0x4a4] sm:$0xf]
    %v586 = vld [vmem:[%s1 + $0x4a8] sm:$0xf]
    %v587 = vld [vmem:[%s1 + $0x4ac] sm:$0xf]
    %v588 = vld [vmem:[%s1 + $0x4b0] sm:$0xf]
    %v589 = vld [vmem:[%s1 + $0x4b4] sm:$0xf]
    %v590 = vld [vmem:[%s1 + $0x4b8] sm:$0xf]
    %v591 = vld [vmem:[%s1 + $0x4bc] sm:$0xf]
    %v592 = vld [vmem:[%s1 + $0x4c0] sm:$0xf]
    %v593 = vld [vmem:[%s1 + $0x4c4] sm:$0xf]
    %v594 = vld [vmem:[%s1 + $0x4c8] sm:$0xf]
    %v595 = vld [vmem:[%s1 + $0x4cc] sm:$0xf]
    %v596 = vld [vmem:[%s1 + $0x4d0] sm:$0xf]
    %v597 = vld [vmem:[%s1 + $0x4d4] sm:$0xf]
    %v598 = vld [vmem:[%s1 + $0x4d8] sm:$0xf]
    %v599 = vld [vmem:[%s1 + $0x4dc] sm:$0xf]
    %v600 = vld [vmem:[%s1 + $0x4e0] sm:$0xf]
    %v601 = vld [vmem:[%s1 + $0x4e4] sm:$0xf]
    %v602 = vld [vmem:[%s1 + $0x4e8] sm:$0xf]
    %v603 = vld [vmem:[%s1 + $0x4ec] sm:$0xf]
    %v604 = vld [vmem:[%s1 + $0x4f0] sm:$0xf]
    %v605 = vld [vmem:[%s1 + $0x4f4] sm:$0xf]
    %v606 = vld [vmem:[%s1 + $0x4f8] sm:$0xf]
    %v607 = vld [vmem:[%s1 + $0x4fc] sm:$0xf]
    %v608 = vld [vmem:[%s1 + $0x500] sm:$0xf]
    %v609 = vld [vmem:[%s1 + $0x504] sm:$0xf]
    %v610 = vld [vmem:[%s1 + $0x508] sm:$0xf]
    %v611 = vld [vmem:[%s1 + $0x50c] sm:$0xf]
    %v612 = vld [vmem:[%s1 + $0x510] sm:$0xf]
    %v613 = vld [vmem:[%s1 + $0x514] sm:$0xf]
    %v614 = vld [vmem:[%s1 + $0x518] sm:$0xf]
    %v615 = vld [vmem:[%s1 + $0x51c] sm:$0xf]
    %v616 = vld [vmem:[%s1 + $0x520] sm:$0xf]
    %v617 = vld [vmem:[%s1 + $0x524] sm:$0xf]
    %v618 = vld [vmem:[%s1 + $0x528] sm:$0xf]
    %v619 = vld [vmem:[%s1 + $0x52c] sm:$0xf]
    %v620 = vld [vmem:[%s1 + $0x530] sm:$0xf]
    %v621 = vld [vmem:[%s1 + $0x534] sm:$0xf]
    %v622 = vld [vmem:[%s1 + $0x538] sm:$0xf]
    %v623 = vld [vmem:[%s1 + $0x53c] sm:$0xf]
    %v624 = vld [vmem:[%s1 + $0x540] sm:$0xf]
    %v625 = vld [vmem:[%s1 + $0x544] sm:$0xf]
    %v626 = vld [vmem:[%s1 + $0x548] sm:$0xf]
    %v627 = vld [vmem:[%s1 + $0x54c] sm:$0xf]
    %v628 = vld [vmem:[%s1 + $0x550] sm:$0xf]
    %v629 = vld [vmem:[%s1 + $0x554] sm:$0xf]
    %v630 = vld [vmem:[%s1 + $0x558] sm:$0xf]
    %v631 = vld [vmem:[%s1 + $0x55c] sm:$0xf]
    %v632 = vld [vmem:[%s1 + $0x560] sm:$0xf]
    %v633 = vld [vmem:[%s1 + $0x564] sm:$0xf]
    %v634 = vld [vmem:[%s1 + $0x568] sm:$0xf]
    %v635 = vld [vmem:[%s1 + $0x56c] sm:$0xf]
    %v636 = vld [vmem:[%s1 + $0x570] sm:$0xf]
    %v637 = vld [vmem:[%s1 + $0x574] sm:$0xf]
    %v638 = vld [vmem:[%s1 + $0x578] sm:$0xf]
    %v639 = vld [vmem:[%s1 + $0x57c] sm:$0xf]
    %v640 = vld [vmem:[%s1 + $0x580] sm:$0xf]
    %v641 = vld [vmem:[%s1 + $0x584] sm:$0xf]
    %v642 = vld [vmem:[%s1 + $0x588] sm:$0xf]
    %v643 = vld [vmem:[%s1 + $0x58c] sm:$0xf]
    %v644 = vld [vmem:[%s1 + $0x590] sm:$0xf]
    %v645 = vld [vmem:[%s1 + $0x594] sm:$0xf]
    %v646 = vld [vmem:[%s1 + $0x598] sm:$0xf]
    %v647 = vld [vmem:[%s1 + $0x59c] sm:$0xf]
    %v648 = vld [vmem:[%s1 + $0x5a0] sm:$0xf]
    %v649 = vld [vmem:[%s1 + $0x5a4] sm:$0xf]
    %v650 = vld [vmem:[%s1 + $0x5a8] sm:$0xf]
    %v651 = vld [vmem:[%s1 + $0x5ac] sm:$0xf]
    %v652 = vld [vmem:[%s1 + $0x5b0] sm:$0xf]
    %v653 = vld [vmem:[%s1 + $0x5b4] sm:$0xf]
    %v654 = vld [vmem:[%s1 + $0x5b8] sm:$0xf]
    %v655 = vld [vmem:[%s1 + $0x5bc] sm:$0xf]
    %v656 = vld [vmem:[%s1 + $0x5c0] sm:$0xf]
    %v657 = vld [vmem:[%s1 + $0x5c4] sm:$0xf]
    %v658 = vld [vmem:[%s1 + $0x5c8] sm:$0xf]
    %v659 = vld [vmem:[%s1 + $0x5cc] sm:$0xf]
    %v660 = vld [vmem:[%s1 + $0x5d0] sm:$0xf]
    %v661 = vld [vmem:[%s1 + $0x5d4] sm:$0xf]
    %v662 = vld [vmem:[%s1 + $0x5d8] sm:$0xf]
    %v663 = vld [vmem:[%s1 + $0x5dc] sm:$0xf]
    %v664 = vld [vmem:[%s1 + $0x5e0] sm:$0xf]
    %v665 = vld [vmem:[%s1 + $0x5e4] sm:$0xf]
    %v666 = vld [vmem:[%s1 + $0x5e8] sm:$0xf]
    %v667 = vld [vmem:[%s1 + $0x5ec] sm:$0xf]
    %v668 = vld [vmem:[%s1 + $0x5f0] sm:$0xf]
    %v669 = vld [vmem:[%s1 + $0x5f4] sm:$0xf]
    %v670 = vld [vmem:[%s1 + $0x5f8] sm:$0xf]
    %v671 = vld [vmem:[%s1 + $0x5fc] sm:$0xf]
    %v672 = vld [vmem:[%s1 + $0x600] sm:$0xf]
    %v673 = vld [vmem:[%s1 + $0x604] sm:$0xf]
    %v674 = vld [vmem:[%s1 + $0x608] sm:$0xf]
    %v675 = vld [vmem:[%s1 + $0x60c] sm:$0xf]
    %v676 = vld [vmem:[%s1 + $0x610] sm:$0xf]
    %v677 = vld [vmem:[%s1 + $0x614] sm:$0xf]
    %v678 = vld [vmem:[%s1 + $0x618] sm:$0xf]
    %v679 = vld [vmem:[%s1 + $0x61c] sm:$0xf]
    %v680 = vld [vmem:[%s1 + $0x620] sm:$0xf]
    %v681 = vld [vmem:[%s1 + $0x624] sm:$0xf]
    %v682 = vld [vmem:[%s1 + $0x628] sm:$0xf]
    %v683 = vld [vmem:[%s1 + $0x62c] sm:$0xf]
    %v684 = vld [vmem:[%s1 + $0x630] sm:$0xf]
    %v685 = vld [vmem:[%s1 + $0x634] sm:$0xf]
    %v686 = vld [vmem:[%s1 + $0x638] sm:$0xf]
    %v687 = vld [vmem:[%s1 + $0x63c] sm:$0xf]
    %v688 = vld [vmem:[%s1 + $0x640] sm:$0xf]
    %v689 = vld [vmem:[%s1 + $0x644] sm:$0xf]
    %v690 = vld [vmem:[%s1 + $0x648] sm:$0xf]
    %v691 = vld [vmem:[%s1 + $0x64c] sm:$0xf]
    %v692 = vld [vmem:[%s1 + $0x650] sm:$0xf]
    %v693 = vld [vmem:[%s1 + $0x654] sm:$0xf]
    %v694 = vld [vmem:[%s1 + $0x658] sm:$0xf]
    %v695 = vld [vmem:[%s1 + $0x65c] sm:$0xf]
    %v696 = vld [vmem:[%s1 + $0x660] sm:$0xf]
    %v697 = vld [vmem:[%s1 + $0x664] sm:$0xf]
    %v698 = vld [vmem:[%s1 + $0x668] sm:$0xf]
    %v699 = vld [vmem:[%s1 + $0x66c] sm:$0xf]
    %v700 = vld [vmem:[%s1 + $0x670] sm:$0xf]
    %v701 = vld [vmem:[%s1 + $0x674] sm:$0xf]
    %v702 = vld [vmem:[%s1 + $0x678] sm:$0xf]
    %v703 = vld [vmem:[%s1 + $0x67c] sm:$0xf]
    %v704 = vld [vmem:[%s1 + $0x680] sm:$0xf]
    %v705 = vld [vmem:[%s1 + $0x684] sm:$0xf]
    %v706 = vld [vmem:[%s1 + $0x688] sm:$0xf]
    %v707 = vld [vmem:[%s1 + $0x68c] sm:$0xf]
    %v708 = vld [vmem:[%s1 + $0x690] sm:$0xf]
    %v709 = vld [vmem:[%s1 + $0x694] sm:$0xf]
    %v710 = vld [vmem:[%s1 + $0x698] sm:$0xf]
    %v711 = vld [vmem:[%s1 + $0x69c] sm:$0xf]
    %v712 = vld [vmem:[%s1 + $0x6a0] sm:$0xf]
    %v713 = vld [vmem:[%s1 + $0x6a4] sm:$0xf]
    %v714 = vld [vmem:[%s1 + $0x6a8] sm:$0xf]
    %v715 = vld [vmem:[%s1 + $0x6ac] sm:$0xf]
    %v716 = vld [vmem:[%s1 + $0x6b0] sm:$0xf]
    %v717 = vld [vmem:[%s1 + $0x6b4] sm:$0xf]
    %v718 = vld [vmem:[%s1 + $0x6b8] sm:$0xf]
    %v719 = vld [vmem:[%s1 + $0x6bc] sm:$0xf]
    %v720 = vld [vmem:[%s2] sm:$0x1]
    %v722 = vlaneseq
    %v723 = vshrl.u32 %v722, 7
    %v724 = vsub.s32 0, %v723
    %v725 = vrot.slane %v720, %v724
    %v951 = vunpack.c.l.b16 %v64
    %v952 = vunpack.c.h.b16 %v64
    %v953 = vunpack.c.l.b16 %v65
    %v954 = vunpack.c.h.b16 %v65
    %v955 = vunpack.c.l.b16 %v66
    %v956 = vunpack.c.h.b16 %v66
    %v957 = vunpack.c.l.b16 %v67
    %v958 = vunpack.c.h.b16 %v67
    %v959 = vunpack.c.l.b16 %v68
    %v960 = vunpack.c.h.b16 %v68
    %v961 = vunpack.c.l.b16 %v69
    %v962 = vunpack.c.h.b16 %v69
    %v963 = vunpack.c.l.b16 %v70
    %v964 = vunpack.c.h.b16 %v70
    %v965 = vunpack.c.l.b16 %v71
    %v966 = vunpack.c.h.b16 %v71
    %v967 = vunpack.c.l.b16 %v72
    %v968 = vunpack.c.h.b16 %v72
    %v969 = vunpack.c.l.b16 %v73
    %v970 = vunpack.c.h.b16 %v73
    %v971 = vunpack.c.l.b16 %v74
    %v972 = vunpack.c.h.b16 %v74
    %v973 = vunpack.c.l.b16 %v75
    %v974 = vunpack.c.h.b16 %v75
    %v975 = vunpack.c.l.b16 %v76
    %v976 = vunpack.c.h.b16 %v76
    %v977 = vunpack.c.l.b16 %v77
    %v978 = vunpack.c.l.b16 %v78
    %v979 = vunpack.c.h.b16 %v78
    %v980 = vunpack.c.l.b16 %v79
    %v981 = vunpack.c.h.b16 %v79
    %v982 = vunpack.c.l.b16 %v80
    %v983 = vunpack.c.h.b16 %v80
    %v984 = vunpack.c.l.b16 %v81
    %v985 = vunpack.c.h.b16 %v81
    %v986 = vunpack.c.l.b16 %v82
    %v987 = vunpack.c.h.b16 %v82
    %v988 = vunpack.c.l.b16 %v83
    %v989 = vunpack.c.h.b16 %v83
    %v990 = vunpack.c.l.b16 %v84
    %v991 = vunpack.c.h.b16 %v84
    %v992 = vunpack.c.l.b16 %v85
    %v993 = vunpack.c.h.b16 %v85
    %v994 = vunpack.c.l.b16 %v86
    %v995 = vunpack.c.h.b16 %v86
    %v996 = vunpack.c.l.b16 %v87
    %v997 = vunpack.c.h.b16 %v87
    %v998 = vunpack.c.l.b16 %v88
    %v999 = vunpack.c.h.b16 %v88
    %v1000 = vunpack.c.l.b16 %v89
    %v1001 = vunpack.c.h.b16 %v89
    %v1002 = vunpack.c.l.b16 %v90
    %v1003 = vunpack.c.h.b16 %v90
    %v1004 = vunpack.c.l.b16 %v91
    %v1005 = vunpack.c.l.b16 %v92
    %v1006 = vunpack.c.h.b16 %v92
    %v1007 = vunpack.c.l.b16 %v93
    %v1008 = vunpack.c.h.b16 %v93
    %v1009 = vunpack.c.l.b16 %v94
    %v1010 = vunpack.c.h.b16 %v94
    %v1011 = vunpack.c.l.b16 %v95
    %v1012 = vunpack.c.h.b16 %v95
    %v1013 = vunpack.c.l.b16 %v96
    %v1014 = vunpack.c.h.b16 %v96
    %v1015 = vunpack.c.l.b16 %v97
    %v1016 = vunpack.c.h.b16 %v97
    %v1017 = vunpack.c.l.b16 %v98
    %v1018 = vunpack.c.h.b16 %v98
    %v1019 = vunpack.c.l.b16 %v99
    %v1020 = vunpack.c.h.b16 %v99
    %v1021 = vunpack.c.l.b16 %v100
    %v1022 = vunpack.c.h.b16 %v100
    %v1023 = vunpack.c.l.b16 %v101
    %v1024 = vunpack.c.h.b16 %v101
    %v1025 = vunpack.c.l.b16 %v102
    %v1026 = vunpack.c.h.b16 %v102
    %v1027 = vunpack.c.l.b16 %v103
    %v1028 = vunpack.c.h.b16 %v103
    %v1029 = vunpack.c.l.b16 %v104
    %v1030 = vunpack.c.h.b16 %v104
    %v1031 = vunpack.c.l.b16 %v105
    %v1032 = vunpack.c.l.b16 %v106
    %v1033 = vunpack.c.h.b16 %v106
    %v1034 = vunpack.c.l.b16 %v107
    %v1035 = vunpack.c.h.b16 %v107
    %v1036 = vunpack.c.l.b16 %v108
    %v1037 = vunpack.c.h.b16 %v108
    %v1038 = vunpack.c.l.b16 %v109
    %v1039 = vunpack.c.h.b16 %v109
    %v1040 = vunpack.c.l.b16 %v110
    %v1041 = vunpack.c.h.b16 %v110
    %v1042 = vunpack.c.l.b16 %v111
    %v1043 = vunpack.c.h.b16 %v111
    %v1044 = vunpack.c.l.b16 %v112
    %v1045 = vunpack.c.h.b16 %v112
    %v1046 = vunpack.c.l.b16 %v113
    %v1047 = vunpack.c.h.b16 %v113
    %v1048 = vunpack.c.l.b16 %v114
    %v1049 = vunpack.c.h.b16 %v114
    %v1050 = vunpack.c.l.b16 %v115
    %v1051 = vunpack.c.h.b16 %v115
    %v1052 = vunpack.c.l.b16 %v116
    %v1053 = vunpack.c.h.b16 %v116
    %v1054 = vunpack.c.l.b16 %v117
    %v1055 = vunpack.c.h.b16 %v117
    %v1056 = vunpack.c.l.b16 %v118
    %v1057 = vunpack.c.h.b16 %v118
    %v1058 = vunpack.c.l.b16 %v119
    %v1059 = vunpack.c.l.b16 %v120
    %v1060 = vunpack.c.h.b16 %v120
    %v1061 = vunpack.c.l.b16 %v121
    %v1062 = vunpack.c.h.b16 %v121
    %v1063 = vunpack.c.l.b16 %v122
    %v1064 = vunpack.c.h.b16 %v122
    %v1065 = vunpack.c.l.b16 %v123
    %v1066 = vunpack.c.h.b16 %v123
    %v1067 = vunpack.c.l.b16 %v124
    %v1068 = vunpack.c.h.b16 %v124
    %v1069 = vunpack.c.l.b16 %v125
    %v1070 = vunpack.c.h.b16 %v125
    %v1071 = vunpack.c.l.b16 %v126
    %v1072 = vunpack.c.h.b16 %v126
    %v1073 = vunpack.c.l.b16 %v127
    %v1074 = vunpack.c.h.b16 %v127
    %v1075 = vunpack.c.l.b16 %v128
    %v1076 = vunpack.c.h.b16 %v128
    %v1077 = vunpack.c.l.b16 %v129
    %v1078 = vunpack.c.h.b16 %v129
    %v1079 = vunpack.c.l.b16 %v130
    %v1080 = vunpack.c.h.b16 %v130
    %v1081 = vunpack.c.l.b16 %v131
    %v1082 = vunpack.c.h.b16 %v131
    %v1083 = vunpack.c.l.b16 %v132
    %v1084 = vunpack.c.h.b16 %v132
    %v1085 = vunpack.c.l.b16 %v133
    %v1086 = vunpack.c.l.b16 %v134
    %v1087 = vunpack.c.h.b16 %v134
    %v1088 = vunpack.c.l.b16 %v135
    %v1089 = vunpack.c.h.b16 %v135
    %v1090 = vunpack.c.l.b16 %v136
    %v1091 = vunpack.c.h.b16 %v136
    %v1092 = vunpack.c.l.b16 %v137
    %v1093 = vunpack.c.h.b16 %v137
    %v1094 = vunpack.c.l.b16 %v138
    %v1095 = vunpack.c.h.b16 %v138
    %v1096 = vunpack.c.l.b16 %v139
    %v1097 = vunpack.c.h.b16 %v139
    %v1098 = vunpack.c.l.b16 %v140
    %v1099 = vunpack.c.h.b16 %v140
    %v1100 = vunpack.c.l.b16 %v141
    %v1101 = vunpack.c.h.b16 %v141
    %v1102 = vunpack.c.l.b16 %v142
    %v1103 = vunpack.c.h.b16 %v142
    %v1104 = vunpack.c.l.b16 %v143
    %v1105 = vunpack.c.h.b16 %v143
    %v1106 = vunpack.c.l.b16 %v144
    %v1107 = vunpack.c.h.b16 %v144
    %v1108 = vunpack.c.l.b16 %v145
    %v1109 = vunpack.c.h.b16 %v145
    %v1110 = vunpack.c.l.b16 %v146
    %v1111 = vunpack.c.h.b16 %v146
    %v1112 = vunpack.c.l.b16 %v147
    %v1113 = vunpack.c.l.b16 %v148
    %v1114 = vunpack.c.h.b16 %v148
    %v1115 = vunpack.c.l.b16 %v149
    %v1116 = vunpack.c.h.b16 %v149
    %v1117 = vunpack.c.l.b16 %v150
    %v1118 = vunpack.c.h.b16 %v150
    %v1119 = vunpack.c.l.b16 %v151
    %v1120 = vunpack.c.h.b16 %v151
    %v1121 = vunpack.c.l.b16 %v152
    %v1122 = vunpack.c.h.b16 %v152
    %v1123 = vunpack.c.l.b16 %v153
    %v1124 = vunpack.c.h.b16 %v153
    %v1125 = vunpack.c.l.b16 %v154
    %v1126 = vunpack.c.h.b16 %v154
    %v1127 = vunpack.c.l.b16 %v155
    %v1128 = vunpack.c.h.b16 %v155
    %v1129 = vunpack.c.l.b16 %v156
    %v1130 = vunpack.c.h.b16 %v156
    %v1131 = vunpack.c.l.b16 %v157
    %v1132 = vunpack.c.h.b16 %v157
    %v1133 = vunpack.c.l.b16 %v158
    %v1134 = vunpack.c.h.b16 %v158
    %v1135 = vunpack.c.l.b16 %v159
    %v1136 = vunpack.c.h.b16 %v159
    %v1137 = vunpack.c.l.b16 %v160
    %v1138 = vunpack.c.h.b16 %v160
    %v1139 = vunpack.c.l.b16 %v161
    %v1140 = vunpack.c.l.b16 %v162
    %v1141 = vunpack.c.h.b16 %v162
    %v1142 = vunpack.c.l.b16 %v163
    %v1143 = vunpack.c.h.b16 %v163
    %v1144 = vunpack.c.l.b16 %v164
    %v1145 = vunpack.c.h.b16 %v164
    %v1146 = vunpack.c.l.b16 %v165
    %v1147 = vunpack.c.h.b16 %v165
    %v1148 = vunpack.c.l.b16 %v166
    %v1149 = vunpack.c.h.b16 %v166
    %v1150 = vunpack.c.l.b16 %v167
    %v1151 = vunpack.c.h.b16 %v167
    %v1152 = vunpack.c.l.b16 %v168
    %v1153 = vunpack.c.h.b16 %v168
    %v1154 = vunpack.c.l.b16 %v169
    %v1155 = vunpack.c.h.b16 %v169
    %v1156 = vunpack.c.l.b16 %v170
    %v1157 = vunpack.c.h.b16 %v170
    %v1158 = vunpack.c.l.b16 %v171
    %v1159 = vunpack.c.h.b16 %v171
    %v1160 = vunpack.c.l.b16 %v172
    %v1161 = vunpack.c.h.b16 %v172
    %v1162 = vunpack.c.l.b16 %v173
    %v1163 = vunpack.c.h.b16 %v173
    %v1164 = vunpack.c.l.b16 %v174
    %v1165 = vunpack.c.h.b16 %v174
    %v1166 = vunpack.c.l.b16 %v175
    %v1167 = vunpack.c.l.b16 %v176
    %v1168 = vunpack.c.h.b16 %v176
    %v1169 = vunpack.c.l.b16 %v177
    %v1170 = vunpack.c.h.b16 %v177
    %v1171 = vunpack.c.l.b16 %v178
    %v1172 = vunpack.c.h.b16 %v178
    %v1173 = vunpack.c.l.b16 %v179
    %v1174 = vunpack.c.h.b16 %v179
    %v1175 = vunpack.c.l.b16 %v180
    %v1176 = vunpack.c.h.b16 %v180
    %v1177 = vunpack.c.l.b16 %v181
    %v1178 = vunpack.c.h.b16 %v181
    %v1179 = vunpack.c.l.b16 %v182
    %v1180 = vunpack.c.h.b16 %v182
    %v1181 = vunpack.c.l.b16 %v183
    %v1182 = vunpack.c.h.b16 %v183
    %v1183 = vunpack.c.l.b16 %v184
    %v1184 = vunpack.c.h.b16 %v184
    %v1185 = vunpack.c.l.b16 %v185
    %v1186 = vunpack.c.h.b16 %v185
    %v1187 = vunpack.c.l.b16 %v186
    %v1188 = vunpack.c.h.b16 %v186
    %v1189 = vunpack.c.l.b16 %v187
    %v1190 = vunpack.c.h.b16 %v187
    %v1191 = vunpack.c.l.b16 %v188
    %v1192 = vunpack.c.h.b16 %v188
    %v1193 = vunpack.c.l.b16 %v189
    %v1194 = vunpack.c.l.b16 %v190
    %v1195 = vunpack.c.h.b16 %v190
    %v1196 = vunpack.c.l.b16 %v191
    %v1197 = vunpack.c.h.b16 %v191
    %v1198 = vunpack.c.l.b16 %v192
    %v1199 = vunpack.c.h.b16 %v192
    %v1200 = vunpack.c.l.b16 %v193
    %v1201 = vunpack.c.h.b16 %v193
    %v1202 = vunpack.c.l.b16 %v194
    %v1203 = vunpack.c.h.b16 %v194
    %v1204 = vunpack.c.l.b16 %v195
    %v1205 = vunpack.c.h.b16 %v195
    %v1206 = vunpack.c.l.b16 %v196
    %v1207 = vunpack.c.h.b16 %v196
    %v1208 = vunpack.c.l.b16 %v197
    %v1209 = vunpack.c.h.b16 %v197
    %v1210 = vunpack.c.l.b16 %v198
    %v1211 = vunpack.c.h.b16 %v198
    %v1212 = vunpack.c.l.b16 %v199
    %v1213 = vunpack.c.h.b16 %v199
    %v1214 = vunpack.c.l.b16 %v200
    %v1215 = vunpack.c.h.b16 %v200
    %v1216 = vunpack.c.l.b16 %v201
    %v1217 = vunpack.c.h.b16 %v201
    %v1218 = vunpack.c.l.b16 %v202
    %v1219 = vunpack.c.h.b16 %v202
    %v1220 = vunpack.c.l.b16 %v203
    %v1221 = vunpack.c.l.b16 %v204
    %v1222 = vunpack.c.h.b16 %v204
    %v1223 = vunpack.c.l.b16 %v205
    %v1224 = vunpack.c.h.b16 %v205
    %v1225 = vunpack.c.l.b16 %v206
    %v1226 = vunpack.c.h.b16 %v206
    %v1227 = vunpack.c.l.b16 %v207
    %v1228 = vunpack.c.h.b16 %v207
    %v1229 = vunpack.c.l.b16 %v208
    %v1230 = vunpack.c.h.b16 %v208
    %v1231 = vunpack.c.l.b16 %v209
    %v1232 = vunpack.c.h.b16 %v209
    %v1233 = vunpack.c.l.b16 %v210
    %v1234 = vunpack.c.h.b16 %v210
    %v1235 = vunpack.c.l.b16 %v211
    %v1236 = vunpack.c.h.b16 %v211
    %v1237 = vunpack.c.l.b16 %v212
    %v1238 = vunpack.c.h.b16 %v212
    %v1239 = vunpack.c.l.b16 %v213
    %v1240 = vunpack.c.h.b16 %v213
    %v1241 = vunpack.c.l.b16 %v214
    %v1242 = vunpack.c.h.b16 %v214
    %v1243 = vunpack.c.l.b16 %v215
    %v1244 = vunpack.c.h.b16 %v215
    %v1245 = vunpack.c.l.b16 %v216
    %v1246 = vunpack.c.h.b16 %v216
    %v1247 = vunpack.c.l.b16 %v217
    %v1248 = vunpack.c.l.b16 %v218
    %v1249 = vunpack.c.h.b16 %v218
    %v1250 = vunpack.c.l.b16 %v219
    %v1251 = vunpack.c.h.b16 %v219
    %v1252 = vunpack.c.l.b16 %v220
    %v1253 = vunpack.c.h.b16 %v220
    %v1254 = vunpack.c.l.b16 %v221
    %v1255 = vunpack.c.h.b16 %v221
    %v1256 = vunpack.c.l.b16 %v222
    %v1257 = vunpack.c.h.b16 %v222
    %v1258 = vunpack.c.l.b16 %v223
    %v1259 = vunpack.c.h.b16 %v223
    %v1260 = vunpack.c.l.b16 %v224
    %v1261 = vunpack.c.h.b16 %v224
    %v1262 = vunpack.c.l.b16 %v225
    %v1263 = vunpack.c.h.b16 %v225
    %v1264 = vunpack.c.l.b16 %v226
    %v1265 = vunpack.c.h.b16 %v226
    %v1266 = vunpack.c.l.b16 %v227
    %v1267 = vunpack.c.h.b16 %v227
    %v1268 = vunpack.c.l.b16 %v228
    %v1269 = vunpack.c.h.b16 %v228
    %v1270 = vunpack.c.l.b16 %v229
    %v1271 = vunpack.c.h.b16 %v229
    %v1272 = vunpack.c.l.b16 %v230
    %v1273 = vunpack.c.h.b16 %v230
    %v1274 = vunpack.c.l.b16 %v231
    %v1275 = vunpack.c.l.b16 %v232
    %v1276 = vunpack.c.h.b16 %v232
    %v1277 = vunpack.c.l.b16 %v233
    %v1278 = vunpack.c.h.b16 %v233
    %v1279 = vunpack.c.l.b16 %v234
    %v1280 = vunpack.c.h.b16 %v234
    %v1281 = vunpack.c.l.b16 %v235
    %v1282 = vunpack.c.h.b16 %v235
    %v1283 = vunpack.c.l.b16 %v236
    %v1284 = vunpack.c.h.b16 %v236
    %v1285 = vunpack.c.l.b16 %v237
    %v1286 = vunpack.c.h.b16 %v237
    %v1287 = vunpack.c.l.b16 %v238
    %v1288 = vunpack.c.h.b16 %v238
    %v1289 = vunpack.c.l.b16 %v239
    %v1290 = vunpack.c.h.b16 %v239
    %v1291 = vunpack.c.l.b16 %v240
    %v1292 = vunpack.c.h.b16 %v240
    %v1293 = vunpack.c.l.b16 %v241
    %v1294 = vunpack.c.h.b16 %v241
    %v1295 = vunpack.c.l.b16 %v242
    %v1296 = vunpack.c.h.b16 %v242
    %v1297 = vunpack.c.l.b16 %v243
    %v1298 = vunpack.c.h.b16 %v243
    %v1299 = vunpack.c.l.b16 %v244
    %v1300 = vunpack.c.h.b16 %v244
    %v1301 = vunpack.c.l.b16 %v245
    %v1302 = vunpack.c.l.b16 %v246
    %v1303 = vunpack.c.h.b16 %v246
    %v1304 = vunpack.c.l.b16 %v247
    %v1305 = vunpack.c.h.b16 %v247
    %v1306 = vunpack.c.l.b16 %v248
    %v1307 = vunpack.c.h.b16 %v248
    %v1308 = vunpack.c.l.b16 %v249
    %v1309 = vunpack.c.h.b16 %v249
    %v1310 = vunpack.c.l.b16 %v250
    %v1311 = vunpack.c.h.b16 %v250
    %v1312 = vunpack.c.l.b16 %v251
    %v1313 = vunpack.c.h.b16 %v251
    %v1314 = vunpack.c.l.b16 %v252
    %v1315 = vunpack.c.h.b16 %v252
    %v1316 = vunpack.c.l.b16 %v253
    %v1317 = vunpack.c.h.b16 %v253
    %v1318 = vunpack.c.l.b16 %v254
    %v1319 = vunpack.c.h.b16 %v254
    %v1320 = vunpack.c.l.b16 %v255
    %v1321 = vunpack.c.h.b16 %v255
    %v1322 = vunpack.c.l.b16 %v256
    %v1323 = vunpack.c.h.b16 %v256
    %v1324 = vunpack.c.l.b16 %v257
    %v1325 = vunpack.c.h.b16 %v257
    %v1326 = vunpack.c.l.b16 %v258
    %v1327 = vunpack.c.h.b16 %v258
    %v1328 = vunpack.c.l.b16 %v259
    %v1329 = vunpack.c.l.b16 %v260
    %v1330 = vunpack.c.h.b16 %v260
    %v1331 = vunpack.c.l.b16 %v261
    %v1332 = vunpack.c.h.b16 %v261
    %v1333 = vunpack.c.l.b16 %v262
    %v1334 = vunpack.c.h.b16 %v262
    %v1335 = vunpack.c.l.b16 %v263
    %v1336 = vunpack.c.h.b16 %v263
    %v1337 = vunpack.c.l.b16 %v264
    %v1338 = vunpack.c.h.b16 %v264
    %v1339 = vunpack.c.l.b16 %v265
    %v1340 = vunpack.c.h.b16 %v265
    %v1341 = vunpack.c.l.b16 %v266
    %v1342 = vunpack.c.h.b16 %v266
    %v1343 = vunpack.c.l.b16 %v267
    %v1344 = vunpack.c.h.b16 %v267
    %v1345 = vunpack.c.l.b16 %v268
    %v1346 = vunpack.c.h.b16 %v268
    %v1347 = vunpack.c.l.b16 %v269
    %v1348 = vunpack.c.h.b16 %v269
    %v1349 = vunpack.c.l.b16 %v270
    %v1350 = vunpack.c.h.b16 %v270
    %v1351 = vunpack.c.l.b16 %v271
    %v1352 = vunpack.c.h.b16 %v271
    %v1353 = vunpack.c.l.b16 %v272
    %v1354 = vunpack.c.h.b16 %v272
    %v1355 = vunpack.c.l.b16 %v273
    %v1356 = vunpack.c.l.b16 %v274
    %v1357 = vunpack.c.h.b16 %v274
    %v1358 = vunpack.c.l.b16 %v275
    %v1359 = vunpack.c.h.b16 %v275
    %v1360 = vunpack.c.l.b16 %v276
    %v1361 = vunpack.c.h.b16 %v276
    %v1362 = vunpack.c.l.b16 %v277
    %v1363 = vunpack.c.h.b16 %v277
    %v1364 = vunpack.c.l.b16 %v278
    %v1365 = vunpack.c.h.b16 %v278
    %v1366 = vunpack.c.l.b16 %v279
    %v1367 = vunpack.c.h.b16 %v279
    %v1368 = vunpack.c.l.b16 %v280
    %v1369 = vunpack.c.h.b16 %v280
    %v1370 = vunpack.c.l.b16 %v281
    %v1371 = vunpack.c.h.b16 %v281
    %v1372 = vunpack.c.l.b16 %v282
    %v1373 = vunpack.c.h.b16 %v282
    %v1374 = vunpack.c.l.b16 %v283
    %v1375 = vunpack.c.h.b16 %v283
    %v1376 = vunpack.c.l.b16 %v284
    %v1377 = vunpack.c.h.b16 %v284
    %v1378 = vunpack.c.l.b16 %v285
    %v1379 = vunpack.c.h.b16 %v285
    %v1380 = vunpack.c.l.b16 %v286
    %v1381 = vunpack.c.h.b16 %v286
    %v1382 = vunpack.c.l.b16 %v287
    %v1383 = vpack.c.b16 %v978, %v951
    %v1384 = vpack.c.b16 %v979, %v952
    %v1385 = vpack.c.b16 %v980, %v953
    %v1386 = vpack.c.b16 %v981, %v954
    %v1387 = vpack.c.b16 %v982, %v955
    %v1388 = vpack.c.b16 %v983, %v956
    %v1389 = vpack.c.b16 %v984, %v957
    %v1390 = vpack.c.b16 %v985, %v958
    %v1391 = vpack.c.b16 %v986, %v959
    %v1392 = vpack.c.b16 %v987, %v960
    %v1393 = vpack.c.b16 %v988, %v961
    %v1394 = vpack.c.b16 %v989, %v962
    %v1395 = vpack.c.b16 %v990, %v963
    %v1396 = vpack.c.b16 %v991, %v964
    %v1397 = vpack.c.b16 %v992, %v965
    %v1398 = vpack.c.b16 %v993, %v966
    %v1399 = vpack.c.b16 %v994, %v967
    %v1400 = vpack.c.b16 %v995, %v968
    %v1401 = vpack.c.b16 %v996, %v969
    %v1402 = vpack.c.b16 %v997, %v970
    %v1403 = vpack.c.b16 %v998, %v971
    %v1404 = vpack.c.b16 %v999, %v972
    %v1405 = vpack.c.b16 %v1000, %v973
    %v1406 = vpack.c.b16 %v1001, %v974
    %v1407 = vpack.c.b16 %v1002, %v975
    %v1408 = vpack.c.b16 %v1003, %v976
    %v1409 = vpack.c.b16 %v1004, %v977
    %v1410 = vpack.c.b16 %v1032, %v1005
    %v1411 = vpack.c.b16 %v1033, %v1006
    %v1412 = vpack.c.b16 %v1034, %v1007
    %v1413 = vpack.c.b16 %v1035, %v1008
    %v1414 = vpack.c.b16 %v1036, %v1009
    %v1415 = vpack.c.b16 %v1037, %v1010
    %v1416 = vpack.c.b16 %v1038, %v1011
    %v1417 = vpack.c.b16 %v1039, %v1012
    %v1418 = vpack.c.b16 %v1040, %v1013
    %v1419 = vpack.c.b16 %v1041, %v1014
    %v1420 = vpack.c.b16 %v1042, %v1015
    %v1421 = vpack.c.b16 %v1043, %v1016
    %v1422 = vpack.c.b16 %v1044, %v1017
    %v1423 = vpack.c.b16 %v1045, %v1018
    %v1424 = vpack.c.b16 %v1046, %v1019
    %v1425 = vpack.c.b16 %v1047, %v1020
    %v1426 = vpack.c.b16 %v1048, %v1021
    %v1427 = vpack.c.b16 %v1049, %v1022
    %v1428 = vpack.c.b16 %v1050, %v1023
    %v1429 = vpack.c.b16 %v1051, %v1024
    %v1430 = vpack.c.b16 %v1052, %v1025
    %v1431 = vpack.c.b16 %v1053, %v1026
    %v1432 = vpack.c.b16 %v1054, %v1027
    %v1433 = vpack.c.b16 %v1055, %v1028
    %v1434 = vpack.c.b16 %v1056, %v1029
    %v1435 = vpack.c.b16 %v1057, %v1030
    %v1436 = vpack.c.b16 %v1058, %v1031
    %v1437 = vpack.c.b16 %v1086, %v1059
    %v1438 = vpack.c.b16 %v1087, %v1060
    %v1439 = vpack.c.b16 %v1088, %v1061
    %v1440 = vpack.c.b16 %v1089, %v1062
    %v1441 = vpack.c.b16 %v1090, %v1063
    %v1442 = vpack.c.b16 %v1091, %v1064
    %v1443 = vpack.c.b16 %v1092, %v1065
    %v1444 = vpack.c.b16 %v1093, %v1066
    %v1445 = vpack.c.b16 %v1094, %v1067
    %v1446 = vpack.c.b16 %v1095, %v1068
    %v1447 = vpack.c.b16 %v1096, %v1069
    %v1448 = vpack.c.b16 %v1097, %v1070
    %v1449 = vpack.c.b16 %v1098, %v1071
    %v1450 = vpack.c.b16 %v1099, %v1072
    %v1451 = vpack.c.b16 %v1100, %v1073
    %v1452 = vpack.c.b16 %v1101, %v1074
    %v1453 = vpack.c.b16 %v1102, %v1075
    %v1454 = vpack.c.b16 %v1103, %v1076
    %v1455 = vpack.c.b16 %v1104, %v1077
    %v1456 = vpack.c.b16 %v1105, %v1078
    %v1457 = vpack.c.b16 %v1106, %v1079
    %v1458 = vpack.c.b16 %v1107, %v1080
    %v1459 = vpack.c.b16 %v1108, %v1081
    %v1460 = vpack.c.b16 %v1109, %v1082
    %v1461 = vpack.c.b16 %v1110, %v1083
    %v1462 = vpack.c.b16 %v1111, %v1084
    %v1463 = vpack.c.b16 %v1112, %v1085
    %v1464 = vpack.c.b16 %v1140, %v1113
    %v1465 = vpack.c.b16 %v1141, %v1114
    %v1466 = vpack.c.b16 %v1142, %v1115
    %v1467 = vpack.c.b16 %v1143, %v1116
    %v1468 = vpack.c.b16 %v1144, %v1117
    %v1469 = vpack.c.b16 %v1145, %v1118
    %v1470 = vpack.c.b16 %v1146, %v1119
    %v1471 = vpack.c.b16 %v1147, %v1120
    %v1472 = vpack.c.b16 %v1148, %v1121
    %v1473 = vpack.c.b16 %v1149, %v1122
    %v1474 = vpack.c.b16 %v1150, %v1123
    %v1475 = vpack.c.b16 %v1151, %v1124
    %v1476 = vpack.c.b16 %v1152, %v1125
    %v1477 = vpack.c.b16 %v1153, %v1126
    %v1478 = vpack.c.b16 %v1154, %v1127
    %v1479 = vpack.c.b16 %v1155, %v1128
    %v1480 = vpack.c.b16 %v1156, %v1129
    %v1481 = vpack.c.b16 %v1157, %v1130
    %v1482 = vpack.c.b16 %v1158, %v1131
    %v1483 = vpack.c.b16 %v1159, %v1132
    %v1484 = vpack.c.b16 %v1160, %v1133
    %v1485 = vpack.c.b16 %v1161, %v1134
    %v1486 = vpack.c.b16 %v1162, %v1135
    %v1487 = vpack.c.b16 %v1163, %v1136
    %v1488 = vpack.c.b16 %v1164, %v1137
    %v1489 = vpack.c.b16 %v1165, %v1138
    %v1490 = vpack.c.b16 %v1166, %v1139
    %v1491 = vpack.c.b16 %v1194, %v1167
    %v1492 = vpack.c.b16 %v1195, %v1168
    %v1493 = vpack.c.b16 %v1196, %v1169
    %v1494 = vpack.c.b16 %v1197, %v1170
    %v1495 = vpack.c.b16 %v1198, %v1171
    %v1496 = vpack.c.b16 %v1199, %v1172
    %v1497 = vpack.c.b16 %v1200, %v1173
    %v1498 = vpack.c.b16 %v1201, %v1174
    %v1499 = vpack.c.b16 %v1202, %v1175
    %v1500 = vpack.c.b16 %v1203, %v1176
    %v1501 = vpack.c.b16 %v1204, %v1177
    %v1502 = vpack.c.b16 %v1205, %v1178
    %v1503 = vpack.c.b16 %v1206, %v1179
    %v1504 = vpack.c.b16 %v1207, %v1180
    %v1505 = vpack.c.b16 %v1208, %v1181
    %v1506 = vpack.c.b16 %v1209, %v1182
    %v1507 = vpack.c.b16 %v1210, %v1183
    %v1508 = vpack.c.b16 %v1211, %v1184
    %v1509 = vpack.c.b16 %v1212, %v1185
    %v1510 = vpack.c.b16 %v1213, %v1186
    %v1511 = vpack.c.b16 %v1214, %v1187
    %v1512 = vpack.c.b16 %v1215, %v1188
    %v1513 = vpack.c.b16 %v1216, %v1189
    %v1514 = vpack.c.b16 %v1217, %v1190
    %v1515 = vpack.c.b16 %v1218, %v1191
    %v1516 = vpack.c.b16 %v1219, %v1192
    %v1517 = vpack.c.b16 %v1220, %v1193
    %v1518 = vpack.c.b16 %v1248, %v1221
    %v1519 = vpack.c.b16 %v1249, %v1222
    %v1520 = vpack.c.b16 %v1250, %v1223
    %v1521 = vpack.c.b16 %v1251, %v1224
    %v1522 = vpack.c.b16 %v1252, %v1225
    %v1523 = vpack.c.b16 %v1253, %v1226
    %v1524 = vpack.c.b16 %v1254, %v1227
    %v1525 = vpack.c.b16 %v1255, %v1228
    %v1526 = vpack.c.b16 %v1256, %v1229
    %v1527 = vpack.c.b16 %v1257, %v1230
    %v1528 = vpack.c.b16 %v1258, %v1231
    %v1529 = vpack.c.b16 %v1259, %v1232
    %v1530 = vpack.c.b16 %v1260, %v1233
    %v1531 = vpack.c.b16 %v1261, %v1234
    %v1532 = vpack.c.b16 %v1262, %v1235
    %v1533 = vpack.c.b16 %v1263, %v1236
    %v1534 = vpack.c.b16 %v1264, %v1237
    %v1535 = vpack.c.b16 %v1265, %v1238
    %v1536 = vpack.c.b16 %v1266, %v1239
    %v1537 = vpack.c.b16 %v1267, %v1240
    %v1538 = vpack.c.b16 %v1268, %v1241
    %v1539 = vpack.c.b16 %v1269, %v1242
    %v1540 = vpack.c.b16 %v1270, %v1243
    %v1541 = vpack.c.b16 %v1271, %v1244
    %v1542 = vpack.c.b16 %v1272, %v1245
    %v1543 = vpack.c.b16 %v1273, %v1246
    %v1544 = vpack.c.b16 %v1274, %v1247
    %v1545 = vpack.c.b16 %v1302, %v1275
    %v1546 = vpack.c.b16 %v1303, %v1276
    %v1547 = vpack.c.b16 %v1304, %v1277
    %v1548 = vpack.c.b16 %v1305, %v1278
    %v1549 = vpack.c.b16 %v1306, %v1279
    %v1550 = vpack.c.b16 %v1307, %v1280
    %v1551 = vpack.c.b16 %v1308, %v1281
    %v1552 = vpack.c.b16 %v1309, %v1282
    %v1553 = vpack.c.b16 %v1310, %v1283
    %v1554 = vpack.c.b16 %v1311, %v1284
    %v1555 = vpack.c.b16 %v1312, %v1285
    %v1556 = vpack.c.b16 %v1313, %v1286
    %v1557 = vpack.c.b16 %v1314, %v1287
    %v1558 = vpack.c.b16 %v1315, %v1288
    %v1559 = vpack.c.b16 %v1316, %v1289
    %v1560 = vpack.c.b16 %v1317, %v1290
    %v1561 = vpack.c.b16 %v1318, %v1291
    %v1562 = vpack.c.b16 %v1319, %v1292
    %v1563 = vpack.c.b16 %v1320, %v1293
    %v1564 = vpack.c.b16 %v1321, %v1294
    %v1565 = vpack.c.b16 %v1322, %v1295
    %v1566 = vpack.c.b16 %v1323, %v1296
    %v1567 = vpack.c.b16 %v1324, %v1297
    %v1568 = vpack.c.b16 %v1325, %v1298
    %v1569 = vpack.c.b16 %v1326, %v1299
    %v1570 = vpack.c.b16 %v1327, %v1300
    %v1571 = vpack.c.b16 %v1328, %v1301
    %v1572 = vpack.c.b16 %v1356, %v1329
    %v1573 = vpack.c.b16 %v1357, %v1330
    %v1574 = vpack.c.b16 %v1358, %v1331
    %v1575 = vpack.c.b16 %v1359, %v1332
    %v1576 = vpack.c.b16 %v1360, %v1333
    %v1577 = vpack.c.b16 %v1361, %v1334
    %v1578 = vpack.c.b16 %v1362, %v1335
    %v1579 = vpack.c.b16 %v1363, %v1336
    %v1580 = vpack.c.b16 %v1364, %v1337
    %v1581 = vpack.c.b16 %v1365, %v1338
    %v1582 = vpack.c.b16 %v1366, %v1339
    %v1583 = vpack.c.b16 %v1367, %v1340
    %v1584 = vpack.c.b16 %v1368, %v1341
    %v1585 = vpack.c.b16 %v1369, %v1342
    %v1586 = vpack.c.b16 %v1370, %v1343
    %v1587 = vpack.c.b16 %v1371, %v1344
    %v1588 = vpack.c.b16 %v1372, %v1345
    %v1589 = vpack.c.b16 %v1373, %v1346
    %v1590 = vpack.c.b16 %v1374, %v1347
    %v1591 = vpack.c.b16 %v1375, %v1348
    %v1592 = vpack.c.b16 %v1376, %v1349
    %v1593 = vpack.c.b16 %v1377, %v1350
    %v1594 = vpack.c.b16 %v1378, %v1351
    %v1595 = vpack.c.b16 %v1379, %v1352
    %v1596 = vpack.c.b16 %v1380, %v1353
    %v1597 = vpack.c.b16 %v1381, %v1354
    %v1598 = vpack.c.b16 %v1382, %v1355
    %v2247 = vunpack.c.l.b16 %v288
    %v2248 = vunpack.c.l.b16 %v289
    %v2249 = vunpack.c.l.b16 %v290
    %v2250 = vunpack.c.l.b16 %v291
    %v2251 = vunpack.c.l.b16 %v292
    %v2252 = vunpack.c.l.b16 %v293
    %v2253 = vunpack.c.l.b16 %v294
    %v2254 = vunpack.c.l.b16 %v295
    %v2255 = vunpack.c.l.b16 %v296
    %v2256 = vunpack.c.l.b16 %v297
    %v2257 = vunpack.c.l.b16 %v298
    %v2258 = vunpack.c.l.b16 %v299
    %v2259 = vunpack.c.l.b16 %v300
    %v2260 = vunpack.c.l.b16 %v301
    %v2261 = vunpack.c.l.b16 %v302
    %v2262 = vunpack.c.l.b16 %v303
    %v2263 = vunpack.c.l.b16 %v304
    %v2264 = vunpack.c.l.b16 %v305
    %v2265 = vunpack.c.l.b16 %v306
    %v2266 = vunpack.c.l.b16 %v307
    %v2267 = vunpack.c.l.b16 %v308
    %v2268 = vunpack.c.l.b16 %v309
    %v2269 = vunpack.c.l.b16 %v310
    %v2270 = vunpack.c.l.b16 %v311
    %v2271 = vunpack.c.l.b16 %v312
    %v2272 = vunpack.c.l.b16 %v313
    %v2273 = vunpack.c.l.b16 %v314
    %v2274 = vunpack.c.l.b16 %v315
    %v2275 = vunpack.c.l.b16 %v316
    %v2276 = vunpack.c.l.b16 %v317
    %v2277 = vunpack.c.l.b16 %v318
    %v2278 = vunpack.c.l.b16 %v319
    %v2279 = vunpack.c.l.b16 %v320
    %v2280 = vunpack.c.l.b16 %v321
    %v2281 = vunpack.c.l.b16 %v322
    %v2282 = vunpack.c.l.b16 %v323
    %v2283 = vunpack.c.l.b16 %v324
    %v2284 = vunpack.c.l.b16 %v325
    %v2285 = vunpack.c.l.b16 %v326
    %v2286 = vunpack.c.l.b16 %v327
    %v2287 = vunpack.c.l.b16 %v328
    %v2288 = vunpack.c.l.b16 %v329
    %v2289 = vunpack.c.l.b16 %v330
    %v2290 = vunpack.c.l.b16 %v331
    %v2291 = vunpack.c.l.b16 %v332
    %v2292 = vunpack.c.l.b16 %v333
    %v2293 = vunpack.c.l.b16 %v334
    %v2294 = vunpack.c.l.b16 %v335
    %v2295 = vunpack.c.l.b16 %v336
    %v2296 = vunpack.c.l.b16 %v337
    %v2297 = vunpack.c.l.b16 %v338
    %v2298 = vunpack.c.l.b16 %v339
    %v2299 = vunpack.c.l.b16 %v340
    %v2300 = vunpack.c.l.b16 %v341
    %v2301 = vunpack.c.l.b16 %v342
    %v2302 = vunpack.c.l.b16 %v343
    %v2303 = vunpack.c.l.b16 %v344
    %v2304 = vunpack.c.l.b16 %v345
    %v2305 = vunpack.c.l.b16 %v346
    %v2306 = vunpack.c.l.b16 %v347
    %v2307 = vunpack.c.l.b16 %v348
    %v2308 = vunpack.c.l.b16 %v349
    %v2309 = vunpack.c.l.b16 %v350
    %v2310 = vunpack.c.l.b16 %v351
    %v2311 = vunpack.c.l.b16 %v352
    %v2312 = vunpack.c.l.b16 %v353
    %v2313 = vunpack.c.l.b16 %v354
    %v2314 = vunpack.c.l.b16 %v355
    %v2315 = vunpack.c.l.b16 %v356
    %v2316 = vunpack.c.l.b16 %v357
    %v2317 = vunpack.c.l.b16 %v358
    %v2318 = vunpack.c.l.b16 %v359
    %v2319 = vunpack.c.l.b16 %v360
    %v2320 = vunpack.c.l.b16 %v361
    %v2321 = vunpack.c.l.b16 %v362
    %v2322 = vunpack.c.l.b16 %v363
    %v2323 = vunpack.c.l.b16 %v364
    %v2324 = vunpack.c.l.b16 %v365
    %v2325 = vunpack.c.l.b16 %v366
    %v2326 = vunpack.c.l.b16 %v367
    %v2327 = vunpack.c.l.b16 %v368
    %v2328 = vunpack.c.l.b16 %v369
    %v2329 = vunpack.c.l.b16 %v370
    %v2330 = vunpack.c.l.b16 %v371
    %v2331 = vunpack.c.l.b16 %v372
    %v2332 = vunpack.c.l.b16 %v373
    %v2333 = vunpack.c.l.b16 %v374
    %v2334 = vunpack.c.l.b16 %v375
    %v2335 = vunpack.c.l.b16 %v376
    %v2336 = vunpack.c.l.b16 %v377
    %v2337 = vunpack.c.l.b16 %v378
    %v2338 = vunpack.c.l.b16 %v379
    %v2339 = vunpack.c.l.b16 %v380
    %v2340 = vunpack.c.l.b16 %v381
    %v2341 = vunpack.c.l.b16 %v382
    %v2342 = vunpack.c.l.b16 %v383
    %v2343 = vunpack.c.l.b16 %v384
    %v2344 = vunpack.c.l.b16 %v385
    %v2345 = vunpack.c.l.b16 %v386
    %v2346 = vunpack.c.l.b16 %v387
    %v2347 = vunpack.c.l.b16 %v388
    %v2348 = vunpack.c.l.b16 %v389
    %v2349 = vunpack.c.l.b16 %v390
    %v2350 = vunpack.c.l.b16 %v391
    %v2351 = vunpack.c.l.b16 %v392
    %v2352 = vunpack.c.l.b16 %v393
    %v2353 = vunpack.c.l.b16 %v394
    %v2354 = vunpack.c.l.b16 %v395
    %v2355 = vunpack.c.l.b16 %v396
    %v2356 = vunpack.c.l.b16 %v397
    %v2357 = vunpack.c.l.b16 %v398
    %v2358 = vunpack.c.l.b16 %v399
    %v2359 = vunpack.c.l.b16 %v400
    %v2360 = vunpack.c.l.b16 %v401
    %v2361 = vunpack.c.l.b16 %v402
    %v2362 = vunpack.c.l.b16 %v403
    %v2363 = vunpack.c.l.b16 %v404
    %v2364 = vunpack.c.l.b16 %v405
    %v2365 = vunpack.c.l.b16 %v406
    %v2366 = vunpack.c.l.b16 %v407
    %v2367 = vunpack.c.l.b16 %v408
    %v2368 = vunpack.c.l.b16 %v409
    %v2369 = vunpack.c.l.b16 %v410
    %v2370 = vunpack.c.l.b16 %v411
    %v2371 = vunpack.c.l.b16 %v412
    %v2372 = vunpack.c.l.b16 %v413
    %v2373 = vunpack.c.l.b16 %v414
    %v2374 = vunpack.c.l.b16 %v415
    %v2375 = vunpack.c.l.b16 %v416
    %v2376 = vunpack.c.l.b16 %v417
    %v2377 = vunpack.c.l.b16 %v418
    %v2378 = vunpack.c.l.b16 %v419
    %v2379 = vunpack.c.l.b16 %v420
    %v2380 = vunpack.c.l.b16 %v421
    %v2381 = vunpack.c.l.b16 %v422
    %v2382 = vunpack.c.l.b16 %v423
    %v2383 = vunpack.c.l.b16 %v424
    %v2384 = vunpack.c.l.b16 %v425
    %v2385 = vunpack.c.l.b16 %v426
    %v2386 = vunpack.c.l.b16 %v427
    %v2387 = vunpack.c.l.b16 %v428
    %v2388 = vunpack.c.l.b16 %v429
    %v2389 = vunpack.c.l.b16 %v430
    %v2390 = vunpack.c.l.b16 %v431
    %v2391 = vunpack.c.l.b16 %v432
    %v2392 = vunpack.c.l.b16 %v433
    %v2393 = vunpack.c.l.b16 %v434
    %v2394 = vunpack.c.l.b16 %v435
    %v2395 = vunpack.c.l.b16 %v436
    %v2396 = vunpack.c.l.b16 %v437
    %v2397 = vunpack.c.l.b16 %v438
    %v2398 = vunpack.c.l.b16 %v439
    %v2399 = vunpack.c.l.b16 %v440
    %v2400 = vunpack.c.l.b16 %v441
    %v2401 = vunpack.c.l.b16 %v442
    %v2402 = vunpack.c.l.b16 %v443
    %v2403 = vunpack.c.l.b16 %v444
    %v2404 = vunpack.c.l.b16 %v445
    %v2405 = vunpack.c.l.b16 %v446
    %v2406 = vunpack.c.l.b16 %v447
    %v2407 = vunpack.c.l.b16 %v448
    %v2408 = vunpack.c.l.b16 %v449
    %v2409 = vunpack.c.l.b16 %v450
    %v2410 = vunpack.c.l.b16 %v451
    %v2411 = vunpack.c.l.b16 %v452
    %v2412 = vunpack.c.l.b16 %v453
    %v2413 = vunpack.c.l.b16 %v454
    %v2414 = vunpack.c.l.b16 %v455
    %v2415 = vunpack.c.l.b16 %v456
    %v2416 = vunpack.c.l.b16 %v457
    %v2417 = vunpack.c.l.b16 %v458
    %v2418 = vunpack.c.l.b16 %v459
    %v2419 = vunpack.c.l.b16 %v460
    %v2420 = vunpack.c.l.b16 %v461
    %v2421 = vunpack.c.l.b16 %v462
    %v2422 = vunpack.c.l.b16 %v463
    %v2423 = vunpack.c.l.b16 %v464
    %v2424 = vunpack.c.l.b16 %v465
    %v2425 = vunpack.c.l.b16 %v466
    %v2426 = vunpack.c.l.b16 %v467
    %v2427 = vunpack.c.l.b16 %v468
    %v2428 = vunpack.c.l.b16 %v469
    %v2429 = vunpack.c.l.b16 %v470
    %v2430 = vunpack.c.l.b16 %v471
    %v2431 = vunpack.c.l.b16 %v472
    %v2432 = vunpack.c.l.b16 %v473
    %v2433 = vunpack.c.l.b16 %v474
    %v2434 = vunpack.c.l.b16 %v475
    %v2435 = vunpack.c.l.b16 %v476
    %v2436 = vunpack.c.l.b16 %v477
    %v2437 = vunpack.c.l.b16 %v478
    %v2438 = vunpack.c.l.b16 %v479
    %v2439 = vunpack.c.l.b16 %v480
    %v2440 = vunpack.c.l.b16 %v481
    %v2441 = vunpack.c.l.b16 %v482
    %v2442 = vunpack.c.l.b16 %v483
    %v2443 = vunpack.c.l.b16 %v484
    %v2444 = vunpack.c.l.b16 %v485
    %v2445 = vunpack.c.l.b16 %v486
    %v2446 = vunpack.c.l.b16 %v487
    %v2447 = vunpack.c.l.b16 %v488
    %v2448 = vunpack.c.l.b16 %v489
    %v2449 = vunpack.c.l.b16 %v490
    %v2450 = vunpack.c.l.b16 %v491
    %v2451 = vunpack.c.l.b16 %v492
    %v2452 = vunpack.c.l.b16 %v493
    %v2453 = vunpack.c.l.b16 %v494
    %v2454 = vunpack.c.l.b16 %v495
    %v2455 = vunpack.c.l.b16 %v496
    %v2456 = vunpack.c.l.b16 %v497
    %v2457 = vunpack.c.l.b16 %v498
    %v2458 = vunpack.c.l.b16 %v499
    %v2459 = vunpack.c.l.b16 %v500
    %v2460 = vunpack.c.l.b16 %v501
    %v2461 = vunpack.c.l.b16 %v502
    %v2462 = vunpack.c.l.b16 %v503
    %v2463 = vunpack.c.l.b16 %v504
    %v2464 = vunpack.c.l.b16 %v505
    %v2465 = vunpack.c.l.b16 %v506
    %v2466 = vunpack.c.l.b16 %v507
    %v2467 = vunpack.c.l.b16 %v508
    %v2468 = vunpack.c.l.b16 %v509
    %v2469 = vunpack.c.l.b16 %v510
    %v2470 = vunpack.c.l.b16 %v511
    %v2471 = vunpack.c.l.b16 %v512
    %v2472 = vunpack.c.l.b16 %v513
    %v2473 = vunpack.c.l.b16 %v514
    %v2474 = vunpack.c.l.b16 %v515
    %v2475 = vunpack.c.l.b16 %v516
    %v2476 = vunpack.c.l.b16 %v517
    %v2477 = vunpack.c.l.b16 %v518
    %v2478 = vunpack.c.l.b16 %v519
    %v2479 = vunpack.c.l.b16 %v520
    %v2480 = vunpack.c.l.b16 %v521
    %v2481 = vunpack.c.l.b16 %v522
    %v2482 = vunpack.c.l.b16 %v523
    %v2483 = vunpack.c.l.b16 %v524
    %v2484 = vunpack.c.l.b16 %v525
    %v2485 = vunpack.c.l.b16 %v526
    %v2486 = vunpack.c.l.b16 %v527
    %v2487 = vunpack.c.l.b16 %v528
    %v2488 = vunpack.c.l.b16 %v529
    %v2489 = vunpack.c.l.b16 %v530
    %v2490 = vunpack.c.l.b16 %v531
    %v2491 = vunpack.c.l.b16 %v532
    %v2492 = vunpack.c.l.b16 %v533
    %v2493 = vunpack.c.l.b16 %v534
    %v2494 = vunpack.c.l.b16 %v535
    %v2495 = vunpack.c.l.b16 %v536
    %v2496 = vunpack.c.l.b16 %v537
    %v2497 = vunpack.c.l.b16 %v538
    %v2498 = vunpack.c.l.b16 %v539
    %v2499 = vunpack.c.l.b16 %v540
    %v2500 = vunpack.c.l.b16 %v541
    %v2501 = vunpack.c.l.b16 %v542
    %v2502 = vunpack.c.l.b16 %v543
    %v2503 = vunpack.c.l.b16 %v544
    %v2504 = vunpack.c.l.b16 %v545
    %v2505 = vunpack.c.l.b16 %v546
    %v2506 = vunpack.c.l.b16 %v547
    %v2507 = vunpack.c.l.b16 %v548
    %v2508 = vunpack.c.l.b16 %v549
    %v2509 = vunpack.c.l.b16 %v550
    %v2510 = vunpack.c.l.b16 %v551
    %v2511 = vunpack.c.l.b16 %v552
    %v2512 = vunpack.c.l.b16 %v553
    %v2513 = vunpack.c.l.b16 %v554
    %v2514 = vunpack.c.l.b16 %v555
    %v2515 = vunpack.c.l.b16 %v556
    %v2516 = vunpack.c.l.b16 %v557
    %v2517 = vunpack.c.l.b16 %v558
    %v2518 = vunpack.c.l.b16 %v559
    %v2519 = vunpack.c.l.b16 %v560
    %v2520 = vunpack.c.l.b16 %v561
    %v2521 = vunpack.c.l.b16 %v562
    %v2522 = vunpack.c.l.b16 %v563
    %v2523 = vunpack.c.l.b16 %v564
    %v2524 = vunpack.c.l.b16 %v565
    %v2525 = vunpack.c.l.b16 %v566
    %v2526 = vunpack.c.l.b16 %v567
    %v2527 = vunpack.c.l.b16 %v568
    %v2528 = vunpack.c.l.b16 %v569
    %v2529 = vunpack.c.l.b16 %v570
    %v2530 = vunpack.c.l.b16 %v571
    %v2531 = vunpack.c.l.b16 %v572
    %v2532 = vunpack.c.l.b16 %v573
    %v2533 = vunpack.c.l.b16 %v574
    %v2534 = vunpack.c.l.b16 %v575
    %v2535 = vunpack.c.l.b16 %v576
    %v2536 = vunpack.c.l.b16 %v577
    %v2537 = vunpack.c.l.b16 %v578
    %v2538 = vunpack.c.l.b16 %v579
    %v2539 = vunpack.c.l.b16 %v580
    %v2540 = vunpack.c.l.b16 %v581
    %v2541 = vunpack.c.l.b16 %v582
    %v2542 = vunpack.c.l.b16 %v583
    %v2543 = vunpack.c.l.b16 %v584
    %v2544 = vunpack.c.l.b16 %v585
    %v2545 = vunpack.c.l.b16 %v586
    %v2546 = vunpack.c.l.b16 %v587
    %v2547 = vunpack.c.l.b16 %v588
    %v2548 = vunpack.c.l.b16 %v589
    %v2549 = vunpack.c.l.b16 %v590
    %v2550 = vunpack.c.l.b16 %v591
    %v2551 = vunpack.c.l.b16 %v592
    %v2552 = vunpack.c.l.b16 %v593
    %v2553 = vunpack.c.l.b16 %v594
    %v2554 = vunpack.c.l.b16 %v595
    %v2555 = vunpack.c.l.b16 %v596
    %v2556 = vunpack.c.l.b16 %v597
    %v2557 = vunpack.c.l.b16 %v598
    %v2558 = vunpack.c.l.b16 %v599
    %v2559 = vunpack.c.l.b16 %v600
    %v2560 = vunpack.c.l.b16 %v601
    %v2561 = vunpack.c.l.b16 %v602
    %v2562 = vunpack.c.l.b16 %v603
    %v2563 = vunpack.c.l.b16 %v604
    %v2564 = vunpack.c.l.b16 %v605
    %v2565 = vunpack.c.l.b16 %v606
    %v2566 = vunpack.c.l.b16 %v607
    %v2567 = vunpack.c.l.b16 %v608
    %v2568 = vunpack.c.l.b16 %v609
    %v2569 = vunpack.c.l.b16 %v610
    %v2570 = vunpack.c.l.b16 %v611
    %v2571 = vunpack.c.l.b16 %v612
    %v2572 = vunpack.c.l.b16 %v613
    %v2573 = vunpack.c.l.b16 %v614
    %v2574 = vunpack.c.l.b16 %v615
    %v2575 = vunpack.c.l.b16 %v616
    %v2576 = vunpack.c.l.b16 %v617
    %v2577 = vunpack.c.l.b16 %v618
    %v2578 = vunpack.c.l.b16 %v619
    %v2579 = vunpack.c.l.b16 %v620
    %v2580 = vunpack.c.l.b16 %v621
    %v2581 = vunpack.c.l.b16 %v622
    %v2582 = vunpack.c.l.b16 %v623
    %v2583 = vunpack.c.l.b16 %v624
    %v2584 = vunpack.c.l.b16 %v625
    %v2585 = vunpack.c.l.b16 %v626
    %v2586 = vunpack.c.l.b16 %v627
    %v2587 = vunpack.c.l.b16 %v628
    %v2588 = vunpack.c.l.b16 %v629
    %v2589 = vunpack.c.l.b16 %v630
    %v2590 = vunpack.c.l.b16 %v631
    %v2591 = vunpack.c.l.b16 %v632
    %v2592 = vunpack.c.l.b16 %v633
    %v2593 = vunpack.c.l.b16 %v634
    %v2594 = vunpack.c.l.b16 %v635
    %v2595 = vunpack.c.l.b16 %v636
    %v2596 = vunpack.c.l.b16 %v637
    %v2597 = vunpack.c.l.b16 %v638
    %v2598 = vunpack.c.l.b16 %v639
    %v2599 = vunpack.c.l.b16 %v640
    %v2600 = vunpack.c.l.b16 %v641
    %v2601 = vunpack.c.l.b16 %v642
    %v2602 = vunpack.c.l.b16 %v643
    %v2603 = vunpack.c.l.b16 %v644
    %v2604 = vunpack.c.l.b16 %v645
    %v2605 = vunpack.c.l.b16 %v646
    %v2606 = vunpack.c.l.b16 %v647
    %v2607 = vunpack.c.l.b16 %v648
    %v2608 = vunpack.c.l.b16 %v649
    %v2609 = vunpack.c.l.b16 %v650
    %v2610 = vunpack.c.l.b16 %v651
    %v2611 = vunpack.c.l.b16 %v652
    %v2612 = vunpack.c.l.b16 %v653
    %v2613 = vunpack.c.l.b16 %v654
    %v2614 = vunpack.c.l.b16 %v655
    %v2615 = vunpack.c.l.b16 %v656
    %v2616 = vunpack.c.l.b16 %v657
    %v2617 = vunpack.c.l.b16 %v658
    %v2618 = vunpack.c.l.b16 %v659
    %v2619 = vunpack.c.l.b16 %v660
    %v2620 = vunpack.c.l.b16 %v661
    %v2621 = vunpack.c.l.b16 %v662
    %v2622 = vunpack.c.l.b16 %v663
    %v2623 = vunpack.c.l.b16 %v664
    %v2624 = vunpack.c.l.b16 %v665
    %v2625 = vunpack.c.l.b16 %v666
    %v2626 = vunpack.c.l.b16 %v667
    %v2627 = vunpack.c.l.b16 %v668
    %v2628 = vunpack.c.l.b16 %v669
    %v2629 = vunpack.c.l.b16 %v670
    %v2630 = vunpack.c.l.b16 %v671
    %v2631 = vunpack.c.l.b16 %v672
    %v2632 = vunpack.c.l.b16 %v673
    %v2633 = vunpack.c.l.b16 %v674
    %v2634 = vunpack.c.l.b16 %v675
    %v2635 = vunpack.c.l.b16 %v676
    %v2636 = vunpack.c.l.b16 %v677
    %v2637 = vunpack.c.l.b16 %v678
    %v2638 = vunpack.c.l.b16 %v679
    %v2639 = vunpack.c.l.b16 %v680
    %v2640 = vunpack.c.l.b16 %v681
    %v2641 = vunpack.c.l.b16 %v682
    %v2642 = vunpack.c.l.b16 %v683
    %v2643 = vunpack.c.l.b16 %v684
    %v2644 = vunpack.c.l.b16 %v685
    %v2645 = vunpack.c.l.b16 %v686
    %v2646 = vunpack.c.l.b16 %v687
    %v2647 = vunpack.c.l.b16 %v688
    %v2648 = vunpack.c.l.b16 %v689
    %v2649 = vunpack.c.l.b16 %v690
    %v2650 = vunpack.c.l.b16 %v691
    %v2651 = vunpack.c.l.b16 %v692
    %v2652 = vunpack.c.l.b16 %v693
    %v2653 = vunpack.c.l.b16 %v694
    %v2654 = vunpack.c.l.b16 %v695
    %v2655 = vunpack.c.l.b16 %v696
    %v2656 = vunpack.c.l.b16 %v697
    %v2657 = vunpack.c.l.b16 %v698
    %v2658 = vunpack.c.l.b16 %v699
    %v2659 = vunpack.c.l.b16 %v700
    %v2660 = vunpack.c.l.b16 %v701
    %v2661 = vunpack.c.l.b16 %v702
    %v2662 = vunpack.c.l.b16 %v703
    %v2663 = vunpack.c.l.b16 %v704
    %v2664 = vunpack.c.l.b16 %v705
    %v2665 = vunpack.c.l.b16 %v706
    %v2666 = vunpack.c.l.b16 %v707
    %v2667 = vunpack.c.l.b16 %v708
    %v2668 = vunpack.c.l.b16 %v709
    %v2669 = vunpack.c.l.b16 %v710
    %v2670 = vunpack.c.l.b16 %v711
    %v2671 = vunpack.c.l.b16 %v712
    %v2672 = vunpack.c.l.b16 %v713
    %v2673 = vunpack.c.l.b16 %v714
    %v2674 = vunpack.c.l.b16 %v715
    %v2675 = vunpack.c.l.b16 %v716
    %v2676 = vunpack.c.l.b16 %v717
    %v2677 = vunpack.c.l.b16 %v718
    %v2678 = vunpack.c.l.b16 %v719
    %v2679 = vpack.c.b16 %v2248, %v2247
    %v2680 = vpack.c.b16 %v2250, %v2249
    %v2681 = vpack.c.b16 %v2252, %v2251
    %v2682 = vpack.c.b16 %v2254, %v2253
    %v2683 = vpack.c.b16 %v2256, %v2255
    %v2684 = vpack.c.b16 %v2258, %v2257
    %v2685 = vpack.c.b16 %v2260, %v2259
    %v2686 = vpack.c.b16 %v2262, %v2261
    %v2687 = vpack.c.b16 %v2264, %v2263
    %v2688 = vpack.c.b16 %v2266, %v2265
    %v2689 = vpack.c.b16 %v2268, %v2267
    %v2690 = vpack.c.b16 %v2270, %v2269
    %v2691 = vpack.c.b16 %v2272, %v2271
    %v2692 = vpack.c.b16 %v2274, %v2273
    %v2693 = vpack.c.b16 %v2276, %v2275
    %v2694 = vpack.c.b16 %v2278, %v2277
    %v2695 = vpack.c.b16 %v2280, %v2279
    %v2696 = vpack.c.b16 %v2282, %v2281
    %v2697 = vpack.c.b16 %v2284, %v2283
    %v2698 = vpack.c.b16 %v2286, %v2285
    %v2699 = vpack.c.b16 %v2288, %v2287
    %v2700 = vpack.c.b16 %v2290, %v2289
    %v2701 = vpack.c.b16 %v2292, %v2291
    %v2702 = vpack.c.b16 %v2294, %v2293
    %v2703 = vpack.c.b16 %v2296, %v2295
    %v2704 = vpack.c.b16 %v2298, %v2297
    %v2705 = vpack.c.b16 %v2300, %v2299
    %v2706 = vpack.c.b16 %v2302, %v2301
    %v2707 = vpack.c.b16 %v2304, %v2303
    %v2708 = vpack.c.b16 %v2306, %v2305
    %v2709 = vpack.c.b16 %v2308, %v2307
    %v2710 = vpack.c.b16 %v2310, %v2309
    %v2711 = vpack.c.b16 %v2312, %v2311
    %v2712 = vpack.c.b16 %v2314, %v2313
    %v2713 = vpack.c.b16 %v2316, %v2315
    %v2714 = vpack.c.b16 %v2318, %v2317
    %v2715 = vpack.c.b16 %v2320, %v2319
    %v2716 = vpack.c.b16 %v2322, %v2321
    %v2717 = vpack.c.b16 %v2324, %v2323
    %v2718 = vpack.c.b16 %v2326, %v2325
    %v2719 = vpack.c.b16 %v2328, %v2327
    %v2720 = vpack.c.b16 %v2330, %v2329
    %v2721 = vpack.c.b16 %v2332, %v2331
    %v2722 = vpack.c.b16 %v2334, %v2333
    %v2723 = vpack.c.b16 %v2336, %v2335
    %v2724 = vpack.c.b16 %v2338, %v2337
    %v2725 = vpack.c.b16 %v2340, %v2339
    %v2726 = vpack.c.b16 %v2342, %v2341
    %v2727 = vpack.c.b16 %v2344, %v2343
    %v2728 = vpack.c.b16 %v2346, %v2345
    %v2729 = vpack.c.b16 %v2348, %v2347
    %v2730 = vpack.c.b16 %v2350, %v2349
    %v2731 = vpack.c.b16 %v2352, %v2351
    %v2732 = vpack.c.b16 %v2354, %v2353
    %v2733 = vpack.c.b16 %v2356, %v2355
    %v2734 = vpack.c.b16 %v2358, %v2357
    %v2735 = vpack.c.b16 %v2360, %v2359
    %v2736 = vpack.c.b16 %v2362, %v2361
    %v2737 = vpack.c.b16 %v2364, %v2363
    %v2738 = vpack.c.b16 %v2366, %v2365
    %v2739 = vpack.c.b16 %v2368, %v2367
    %v2740 = vpack.c.b16 %v2370, %v2369
    %v2741 = vpack.c.b16 %v2372, %v2371
    %v2742 = vpack.c.b16 %v2374, %v2373
    %v2743 = vpack.c.b16 %v2376, %v2375
    %v2744 = vpack.c.b16 %v2378, %v2377
    %v2745 = vpack.c.b16 %v2380, %v2379
    %v2746 = vpack.c.b16 %v2382, %v2381
    %v2747 = vpack.c.b16 %v2384, %v2383
    %v2748 = vpack.c.b16 %v2386, %v2385
    %v2749 = vpack.c.b16 %v2388, %v2387
    %v2750 = vpack.c.b16 %v2390, %v2389
    %v2751 = vpack.c.b16 %v2392, %v2391
    %v2752 = vpack.c.b16 %v2394, %v2393
    %v2753 = vpack.c.b16 %v2396, %v2395
    %v2754 = vpack.c.b16 %v2398, %v2397
    %v2755 = vpack.c.b16 %v2400, %v2399
    %v2756 = vpack.c.b16 %v2402, %v2401
    %v2757 = vpack.c.b16 %v2404, %v2403
    %v2758 = vpack.c.b16 %v2406, %v2405
    %v2759 = vpack.c.b16 %v2408, %v2407
    %v2760 = vpack.c.b16 %v2410, %v2409
    %v2761 = vpack.c.b16 %v2412, %v2411
    %v2762 = vpack.c.b16 %v2414, %v2413
    %v2763 = vpack.c.b16 %v2416, %v2415
    %v2764 = vpack.c.b16 %v2418, %v2417
    %v2765 = vpack.c.b16 %v2420, %v2419
    %v2766 = vpack.c.b16 %v2422, %v2421
    %v2767 = vpack.c.b16 %v2424, %v2423
    %v2768 = vpack.c.b16 %v2426, %v2425
    %v2769 = vpack.c.b16 %v2428, %v2427
    %v2770 = vpack.c.b16 %v2430, %v2429
    %v2771 = vpack.c.b16 %v2432, %v2431
    %v2772 = vpack.c.b16 %v2434, %v2433
    %v2773 = vpack.c.b16 %v2436, %v2435
    %v2774 = vpack.c.b16 %v2438, %v2437
    %v2775 = vpack.c.b16 %v2440, %v2439
    %v2776 = vpack.c.b16 %v2442, %v2441
    %v2777 = vpack.c.b16 %v2444, %v2443
    %v2778 = vpack.c.b16 %v2446, %v2445
    %v2779 = vpack.c.b16 %v2448, %v2447
    %v2780 = vpack.c.b16 %v2450, %v2449
    %v2781 = vpack.c.b16 %v2452, %v2451
    %v2782 = vpack.c.b16 %v2454, %v2453
    %v2783 = vpack.c.b16 %v2456, %v2455
    %v2784 = vpack.c.b16 %v2458, %v2457
    %v2785 = vpack.c.b16 %v2460, %v2459
    %v2786 = vpack.c.b16 %v2462, %v2461
    %v2787 = vpack.c.b16 %v2464, %v2463
    %v2788 = vpack.c.b16 %v2466, %v2465
    %v2789 = vpack.c.b16 %v2468, %v2467
    %v2790 = vpack.c.b16 %v2470, %v2469
    %v2791 = vpack.c.b16 %v2472, %v2471
    %v2792 = vpack.c.b16 %v2474, %v2473
    %v2793 = vpack.c.b16 %v2476, %v2475
    %v2794 = vpack.c.b16 %v2478, %v2477
    %v2795 = vpack.c.b16 %v2480, %v2479
    %v2796 = vpack.c.b16 %v2482, %v2481
    %v2797 = vpack.c.b16 %v2484, %v2483
    %v2798 = vpack.c.b16 %v2486, %v2485
    %v2799 = vpack.c.b16 %v2488, %v2487
    %v2800 = vpack.c.b16 %v2490, %v2489
    %v2801 = vpack.c.b16 %v2492, %v2491
    %v2802 = vpack.c.b16 %v2494, %v2493
    %v2803 = vpack.c.b16 %v2496, %v2495
    %v2804 = vpack.c.b16 %v2498, %v2497
    %v2805 = vpack.c.b16 %v2500, %v2499
    %v2806 = vpack.c.b16 %v2502, %v2501
    %v2807 = vpack.c.b16 %v2504, %v2503
    %v2808 = vpack.c.b16 %v2506, %v2505
    %v2809 = vpack.c.b16 %v2508, %v2507
    %v2810 = vpack.c.b16 %v2510, %v2509
    %v2811 = vpack.c.b16 %v2512, %v2511
    %v2812 = vpack.c.b16 %v2514, %v2513
    %v2813 = vpack.c.b16 %v2516, %v2515
    %v2814 = vpack.c.b16 %v2518, %v2517
    %v2815 = vpack.c.b16 %v2520, %v2519
    %v2816 = vpack.c.b16 %v2522, %v2521
    %v2817 = vpack.c.b16 %v2524, %v2523
    %v2818 = vpack.c.b16 %v2526, %v2525
    %v2819 = vpack.c.b16 %v2528, %v2527
    %v2820 = vpack.c.b16 %v2530, %v2529
    %v2821 = vpack.c.b16 %v2532, %v2531
    %v2822 = vpack.c.b16 %v2534, %v2533
    %v2823 = vpack.c.b16 %v2536, %v2535
    %v2824 = vpack.c.b16 %v2538, %v2537
    %v2825 = vpack.c.b16 %v2540, %v2539
    %v2826 = vpack.c.b16 %v2542, %v2541
    %v2827 = vpack.c.b16 %v2544, %v2543
    %v2828 = vpack.c.b16 %v2546, %v2545
    %v2829 = vpack.c.b16 %v2548, %v2547
    %v2830 = vpack.c.b16 %v2550, %v2549
    %v2831 = vpack.c.b16 %v2552, %v2551
    %v2832 = vpack.c.b16 %v2554, %v2553
    %v2833 = vpack.c.b16 %v2556, %v2555
    %v2834 = vpack.c.b16 %v2558, %v2557
    %v2835 = vpack.c.b16 %v2560, %v2559
    %v2836 = vpack.c.b16 %v2562, %v2561
    %v2837 = vpack.c.b16 %v2564, %v2563
    %v2838 = vpack.c.b16 %v2566, %v2565
    %v2839 = vpack.c.b16 %v2568, %v2567
    %v2840 = vpack.c.b16 %v2570, %v2569
    %v2841 = vpack.c.b16 %v2572, %v2571
    %v2842 = vpack.c.b16 %v2574, %v2573
    %v2843 = vpack.c.b16 %v2576, %v2575
    %v2844 = vpack.c.b16 %v2578, %v2577
    %v2845 = vpack.c.b16 %v2580, %v2579
    %v2846 = vpack.c.b16 %v2582, %v2581
    %v2847 = vpack.c.b16 %v2584, %v2583
    %v2848 = vpack.c.b16 %v2586, %v2585
    %v2849 = vpack.c.b16 %v2588, %v2587
    %v2850 = vpack.c.b16 %v2590, %v2589
    %v2851 = vpack.c.b16 %v2592, %v2591
    %v2852 = vpack.c.b16 %v2594, %v2593
    %v2853 = vpack.c.b16 %v2596, %v2595
    %v2854 = vpack.c.b16 %v2598, %v2597
    %v2855 = vpack.c.b16 %v2600, %v2599
    %v2856 = vpack.c.b16 %v2602, %v2601
    %v2857 = vpack.c.b16 %v2604, %v2603
    %v2858 = vpack.c.b16 %v2606, %v2605
    %v2859 = vpack.c.b16 %v2608, %v2607
    %v2860 = vpack.c.b16 %v2610, %v2609
    %v2861 = vpack.c.b16 %v2612, %v2611
    %v2862 = vpack.c.b16 %v2614, %v2613
    %v2863 = vpack.c.b16 %v2616, %v2615
    %v2864 = vpack.c.b16 %v2618, %v2617
    %v2865 = vpack.c.b16 %v2620, %v2619
    %v2866 = vpack.c.b16 %v2622, %v2621
    %v2867 = vpack.c.b16 %v2624, %v2623
    %v2868 = vpack.c.b16 %v2626, %v2625
    %v2869 = vpack.c.b16 %v2628, %v2627
    %v2870 = vpack.c.b16 %v2630, %v2629
    %v2871 = vpack.c.b16 %v2632, %v2631
    %v2872 = vpack.c.b16 %v2634, %v2633
    %v2873 = vpack.c.b16 %v2636, %v2635
    %v2874 = vpack.c.b16 %v2638, %v2637
    %v2875 = vpack.c.b16 %v2640, %v2639
    %v2876 = vpack.c.b16 %v2642, %v2641
    %v2877 = vpack.c.b16 %v2644, %v2643
    %v2878 = vpack.c.b16 %v2646, %v2645
    %v2879 = vpack.c.b16 %v2648, %v2647
    %v2880 = vpack.c.b16 %v2650, %v2649
    %v2881 = vpack.c.b16 %v2652, %v2651
    %v2882 = vpack.c.b16 %v2654, %v2653
    %v2883 = vpack.c.b16 %v2656, %v2655
    %v2884 = vpack.c.b16 %v2658, %v2657
    %v2885 = vpack.c.b16 %v2660, %v2659
    %v2886 = vpack.c.b16 %v2662, %v2661
    %v2887 = vpack.c.b16 %v2664, %v2663
    %v2888 = vpack.c.b16 %v2666, %v2665
    %v2889 = vpack.c.b16 %v2668, %v2667
    %v2890 = vpack.c.b16 %v2670, %v2669
    %v2891 = vpack.c.b16 %v2672, %v2671
    %v2892 = vpack.c.b16 %v2674, %v2673
    %v2893 = vpack.c.b16 %v2676, %v2675
    %v2894 = vpack.c.b16 %v2678, %v2677
    %3111 = vmatprep.subr.bf16.mxu0 0
    %3112 = vmatpush1.bf16.msra.mxu0 %v2679
    %3113 = vmatprep.subr.bf16.mxu0 0
    %3114 = vmatpush1.bf16.msra.mxu0 %v2680
    %3115 = vmatprep.subr.bf16.mxu0 0
    %3116 = vmatpush1.bf16.msra.mxu0 %v2681
    %3117 = vmatprep.subr.bf16.mxu0 0
    %3118 = vmatpush1.bf16.msra.mxu0 %v2682
    %3119 = vmatprep.subr.bf16.mxu0 0
    %3120 = vmatpush1.bf16.msra.mxu0 %v2683
    %3121 = vmatprep.subr.bf16.mxu0 0
    %3122 = vmatpush1.bf16.msra.mxu0 %v2684
    %3123 = vmatprep.subr.bf16.mxu0 0
    %3124 = vmatpush1.bf16.msra.mxu0 %v2685
    %3125 = vmatprep.subr.bf16.mxu0 0
    %3126 = vmatpush1.bf16.msra.mxu0 %v2686
    %3127 = vmatprep.subr.bf16.mxu0 0
    %3128 = vmatpush1.bf16.msra.mxu0 %v2687
    %3129 = vmatprep.subr.bf16.mxu0 0
    %3130 = vmatpush1.bf16.msra.mxu0 %v2688
    %3131 = vmatprep.subr.bf16.mxu0 0
    %3132 = vmatpush1.bf16.msra.mxu0 %v2689
    %3133 = vmatprep.subr.bf16.mxu0 0
    %3134 = vmatpush1.bf16.msra.mxu0 %v2690
    %3135 = vmatprep.subr.bf16.mxu0 0
    %3136 = vmatpush1.bf16.msra.mxu0 %v2691
    %3137 = vmatprep.subr.bf16.mxu0 0
    %3138 = vmatpush1.bf16.msra.mxu0 %v2692
    %3139 = vmatprep.subr.bf16.mxu0 0
    %3140 = vmatpush1.bf16.msra.mxu0 %v2693
    %3141 = vmatprep.subr.bf16.mxu0 0
    %3142 = vmatpush1.bf16.msra.mxu0 %v2694
    %3143 = vmatprep.mubr.bf16.mxu0 %v1384
    %3144 = vmatmul.mubr.bf16.gmra.mrb[0].mxu0 %v1383
    %v3145 = vpop.f32.mrb[0].mxu0
    %v3146 = vadd.f32 %v725, %v3145
    %v3147 = vpop.f32.mrb[0].mxu0
    %v3148 = vpop.f32.mrb[0].mxu0
    %v3149 = vadd.f32 %v725, %v3148
    %v3150 = vpop.f32.mrb[0].mxu0
    %3151 = vmatprep.mubr.bf16.mxu0 %v1411
    %3152 = vmatmul.mubr.bf16.gmra.mrb[0].mxu0 %v1410
    %v3153 = vpop.f32.mrb[0].mxu0
    %v3154 = vadd.f32 %v725, %v3153
    %v3155 = vpop.f32.mrb[0].mxu0
    %v3156 = vpop.f32.mrb[0].mxu0
    %v3157 = vadd.f32 %v725, %v3156
    %v3158 = vpop.f32.mrb[0].mxu0
    %3159 = vmatprep.mubr.bf16.mxu0 %v1438
    %3160 = vmatmul.mubr.bf16.gmra.mrb[0].mxu0 %v1437
    %v3161 = vpop.f32.mrb[0].mxu0
    %v3162 = vadd.f32 %v725, %v3161
    %v3163 = vpop.f32.mrb[0].mxu0
    %v3164 = vpop.f32.mrb[0].mxu0
    %v3165 = vadd.f32 %v725, %v3164
    %v3166 = vpop.f32.mrb[0].mxu0
    %3167 = vmatprep.mubr.bf16.mxu0 %v1465
    %3168 = vmatmul.mubr.bf16.gmra.mrb[0].mxu0 %v1464
    %v3169 = vpop.f32.mrb[0].mxu0
    %v3170 = vadd.f32 %v725, %v3169
    %v3171 = vpop.f32.mrb[0].mxu0
    %v3172 = vpop.f32.mrb[0].mxu0
    %v3173 = vadd.f32 %v725, %v3172
    %v3174 = vpop.f32.mrb[0].mxu0
    %3175 = vmatprep.mubr.bf16.mxu0 %v1492
    %3176 = vmatmul.mubr.bf16.gmra.mrb[0].mxu0 %v1491
    %v3177 = vpop.f32.mrb[0].mxu0
    %v3178 = vadd.f32 %v725, %v3177
    %v3179 = vpop.f32.mrb[0].mxu0
    %v3180 = vpop.f32.mrb[0].mxu0
    %v3181 = vadd.f32 %v725, %v3180
    %v3182 = vpop.f32.mrb[0].mxu0
    %3183 = vmatprep.mubr.bf16.mxu0 %v1519
    %3184 = vmatmul.mubr.bf16.gmra.mrb[0].mxu0 %v1518
    %v3185 = vpop.f32.mrb[0].mxu0
    %v3186 = vadd.f32 %v725, %v3185
    %v3187 = vpop.f32.mrb[0].mxu0
    %v3188 = vpop.f32.mrb[0].mxu0
    %v3189 = vadd.f32 %v725, %v3188
    %v3190 = vpop.f32.mrb[0].mxu0
    %3191 = vmatprep.mubr.bf16.mxu0 %v1546
    %3192 = vmatmul.mubr.bf16.gmra.mrb[0].mxu0 %v1545
    %v3193 = vpop.f32.mrb[0].mxu0
    %v3194 = vadd.f32 %v725, %v3193
    %v3195 = vpop.f32.mrb[0].mxu0
    %v3196 = vpop.f32.mrb[0].mxu0
    %v3197 = vadd.f32 %v725, %v3196
    %v3198 = vpop.f32.mrb[0].mxu0
    %3199 = vmatprep.mubr.bf16.mxu0 %v1573
    %3200 = vmatmul.mubr.bf16.gmra.mrb[0].mxu0 %v1572
    %v3201 = vpop.f32.mrb[0].mxu0
    %v3202 = vadd.f32 %v725, %v3201
    %v3203 = vpop.f32.mrb[0].mxu0
    %v3204 = vpop.f32.mrb[0].mxu0
    %v3205 = vadd.f32 %v725, %v3204
    %v3206 = vpop.f32.mrb[0].mxu0
    %3207 = vdwg.mxu0
    %3208 = vmatprep.subr.bf16.mxu0 0
    %3209 = vmatpush1.bf16.msra.mxu0 %v2695
    %3210 = vmatprep.subr.bf16.mxu0 0
    %3211 = vmatpush1.bf16.msra.mxu0 %v2696
    %3212 = vmatprep.subr.bf16.mxu0 0
    %3213 = vmatpush1.bf16.msra.mxu0 %v2697
    %3214 = vmatprep.subr.bf16.mxu0 0
    %3215 = vmatpush1.bf16.msra.mxu0 %v2698
    %3216 = vmatprep.subr.bf16.mxu0 0
    %3217 = vmatpush1.bf16.msra.mxu0 %v2699
    %3218 = vmatprep.subr.bf16.mxu0 0
    %3219 = vmatpush1.bf16.msra.mxu0 %v2700
    %3220 = vmatprep.subr.bf16.mxu0 0
    %3221 = vmatpush1.bf16.msra.mxu0 %v2701
    %3222 = vmatprep.subr.bf16.mxu0 0
    %3223 = vmatpush1.bf16.msra.mxu0 %v2702
    %3224 = vmatprep.subr.bf16.mxu0 0
    %3225 = vmatpush1.bf16.msra.mxu0 %v2703
    %3226 = vmatprep.subr.bf16.mxu0 0
    %3227 = vmatpush1.bf16.msra.mxu0 %v2704
    %3228 = vmatprep.subr.bf16.mxu0 0
    %3229 = vmatpush1.bf16.msra.mxu0 %v2705
    %3230 = vmatprep.subr.bf16.mxu0 0
    %3231 = vmatpush1.bf16.msra.mxu0 %v2706
    %3232 = vmatprep.subr.bf16.mxu0 0
    %3233 = vmatpush1.bf16.msra.mxu0 %v2707
    %3234 = vmatprep.subr.bf16.mxu0 0
    %3235 = vmatpush1.bf16.msra.mxu0 %v2708
    %3236 = vmatprep.subr.bf16.mxu0 0
    %3237 = vmatpush1.bf16.msra.mxu0 %v2709
    %3238 = vmatprep.subr.bf16.mxu0 0
    %3239 = vmatpush1.bf16.msra.mxu0 %v2710
    %3240 = vmatprep.mubr.bf16.mxu0 %v1386
    %3241 = vmatmul.mubr.bf16.gmra.mrb[0].mxu0 %v1385
    %v3242 = vpop.f32.mrb[0].mxu0
    %v3243 = vadd.f32 %v3146, %v3242
    %v3244 = vpop.f32.mrb[0].mxu0
    %v3245 = vpop.f32.mrb[0].mxu0
    %v3246 = vadd.f32 %v3149, %v3245
    %v3247 = vpop.f32.mrb[0].mxu0
    %3248 = vmatprep.mubr.bf16.mxu0 %v1413
    %3249 = vmatmul.mubr.bf16.gmra.mrb[0].mxu0 %v1412
    %v3250 = vpop.f32.mrb[0].mxu0
    %v3251 = vadd.f32 %v3154, %v3250
    %v3252 = vpop.f32.mrb[0].mxu0
    %v3253 = vpop.f32.mrb[0].mxu0
    %v3254 = vadd.f32 %v3157, %v3253
    %v3255 = vpop.f32.mrb[0].mxu0
    %3256 = vmatprep.mubr.bf16.mxu0 %v1440
    %3257 = vmatmul.mubr.bf16.gmra.mrb[0].mxu0 %v1439
    %v3258 = vpop.f32.mrb[0].mxu0
    %v3259 = vadd.f32 %v3162, %v3258
    %v3260 = vpop.f32.mrb[0].mxu0
    %v3261 = vpop.f32.mrb[0].mxu0
    %v3262 = vadd.f32 %v3165, %v3261
    %v3263 = vpop.f32.mrb[0].mxu0
    %3264 = vmatprep.mubr.bf16.mxu0 %v1467
    %3265 = vmatmul.mubr.bf16.gmra.mrb[0].mxu0 %v1466
    %v3266 = vpop.f32.mrb[0].mxu0
    %v3267 = vadd.f32 %v3170, %v3266
    %v3268 = vpop.f32.mrb[0].mxu0
    %v3269 = vpop.f32.mrb[0].mxu0
    %v3270 = vadd.f32 %v3173, %v3269
    %v3271 = vpop.f32.mrb[0].mxu0
    %3272 = vmatprep.mubr.bf16.mxu0 %v1494
    %3273 = vmatmul.mubr.bf16.gmra.mrb[0].mxu0 %v1493
    %v3274 = vpop.f32.mrb[0].mxu0
    %v3275 = vadd.f32 %v3178, %v3274
    %v3276 = vpop.f32.mrb[0].mxu0
    %v3277 = vpop.f32.mrb[0].mxu0
    %v3278 = vadd.f32 %v3181, %v3277
    %v3279 = vpop.f32.mrb[0].mxu0
    %3280 = vmatprep.mubr.bf16.mxu0 %v1521
    %3281 = vmatmul.mubr.bf16.gmra.mrb[0].mxu0 %v1520
    %v3282 = vpop.f32.mrb[0].mxu0
    %v3283 = vadd.f32 %v3186, %v3282
    %v3284 = vpop.f32.mrb[0].mxu0
    %v3285 = vpop.f32.mrb[0].mxu0
    %v3286 = vadd.f32 %v3189, %v3285
    %v3287 = vpop.f32.mrb[0].mxu0
    %3288 = vmatprep.mubr.bf16.mxu0 %v1548
    %3289 = vmatmul.mubr.bf16.gmra.mrb[0].mxu0 %v1547
    %v3290 = vpop.f32.mrb[0].mxu0
    %v3291 = vadd.f32 %v3194, %v3290
    %v3292 = vpop.f32.mrb[0].mxu0
    %v3293 = vpop.f32.mrb[0].mxu0
    %v3294 = vadd.f32 %v3197, %v3293
    %v3295 = vpop.f32.mrb[0].mxu0
    %3296 = vmatprep.mubr.bf16.mxu0 %v1575
    %3297 = vmatmul.mubr.bf16.gmra.mrb[0].mxu0 %v1574
    %v3298 = vpop.f32.mrb[0].mxu0
    %v3299 = vadd.f32 %v3202, %v3298
    %v3300 = vpop.f32.mrb[0].mxu0
    %v3301 = vpop.f32.mrb[0].mxu0
    %v3302 = vadd.f32 %v3205, %v3301
    %v3303 = vpop.f32.mrb[0].mxu0
    %3304 = vdwg.mxu0
    %3305 = vmatprep.subr.bf16.mxu0 0
    %3306 = vmatpush1.bf16.msra.mxu0 %v2711
    %3307 = vmatprep.subr.bf16.mxu0 0
    %3308 = vmatpush1.bf16.msra.mxu0 %v2712
    %3309 = vmatprep.subr.bf16.mxu0 0
    %3310 = vmatpush1.bf16.msra.mxu0 %v2713
    %3311 = vmatprep.subr.bf16.mxu0 0
    %3312 = vmatpush1.bf16.msra.mxu0 %v2714
    %3313 = vmatprep.subr.bf16.mxu0 0
    %3314 = vmatpush1.bf16.msra.mxu0 %v2715
    %3315 = vmatprep.subr.bf16.mxu0 0
    %3316 = vmatpush1.bf16.msra.mxu0 %v2716
    %3317 = vmatprep.subr.bf16.mxu0 0
    %3318 = vmatpush1.bf16.msra.mxu0 %v2717
    %3319 = vmatprep.subr.bf16.mxu0 0
    %3320 = vmatpush1.bf16.msra.mxu0 %v2718
    %3321 = vmatprep.subr.bf16.mxu0 0
    %3322 = vmatpush1.bf16.msra.mxu0 %v2719
    %3323 = vmatprep.subr.bf16.mxu0 0
    %3324 = vmatpush1.bf16.msra.mxu0 %v2720
    %3325 = vmatprep.subr.bf16.mxu0 0
    %3326 = vmatpush1.bf16.msra.mxu0 %v2721
    %3327 = vmatprep.subr.bf16.mxu0 0
    %3328 = vmatpush1.bf16.msra.mxu0 %v2722
    %3329 = vmatprep.subr.bf16.mxu0 0
    %3330 = vmatpush1.bf16.msra.mxu0 %v2723
    %3331 = vmatprep.subr.bf16.mxu0 0
    %3332 = vmatpush1.bf16.msra.mxu0 %v2724
    %3333 = vmatprep.subr.bf16.mxu0 0
    %3334 = vmatpush1.bf16.msra.mxu0 %v2725
    %3335 = vmatprep.subr.bf16.mxu0 0
    %3336 = vmatpush1.bf16.msra.mxu0 %v2726
    %3337 = vmatprep.mubr.bf16.mxu0 %v1388
    %3338 = vmatmul.mubr.bf16.gmra.mrb[0].mxu0 %v1387
    %v3339 = vpop.f32.mrb[0].mxu0
    %v3340 = vadd.f32 %v3243, %v3339
    %v3341 = vpop.f32.mrb[0].mxu0
    %v3342 = vpop.f32.mrb[0].mxu0
    %v3343 = vadd.f32 %v3246, %v3342
    %v3344 = vpop.f32.mrb[0].mxu0
    %3345 = vmatprep.mubr.bf16.mxu0 %v1415
    %3346 = vmatmul.mubr.bf16.gmra.mrb[0].mxu0 %v1414
    %v3347 = vpop.f32.mrb[0].mxu0
    %v3348 = vadd.f32 %v3251, %v3347
    %v3349 = vpop.f32.mrb[0].mxu0
    %v3350 = vpop.f32.mrb[0].mxu0
    %v3351 = vadd.f32 %v3254, %v3350
    %v3352 = vpop.f32.mrb[0].mxu0
    %3353 = vmatprep.mubr.bf16.mxu0 %v1442
    %3354 = vmatmul.mubr.bf16.gmra.mrb[0].mxu0 %v1441
    %v3355 = vpop.f32.mrb[0].mxu0
    %v3356 = vadd.f32 %v3259, %v3355
    %v3357 = vpop.f32.mrb[0].mxu0
    %v3358 = vpop.f32.mrb[0].mxu0
    %v3359 = vadd.f32 %v3262, %v3358
    %v3360 = vpop.f32.mrb[0].mxu0
    %3361 = vmatprep.mubr.bf16.mxu0 %v1469
    %3362 = vmatmul.mubr.bf16.gmra.mrb[0].mxu0 %v1468
    %v3363 = vpop.f32.mrb[0].mxu0
    %v3364 = vadd.f32 %v3267, %v3363
    %v3365 = vpop.f32.mrb[0].mxu0
    %v3366 = vpop.f32.mrb[0].mxu0
    %v3367 = vadd.f32 %v3270, %v3366
    %v3368 = vpop.f32.mrb[0].mxu0
    %3369 = vmatprep.mubr.bf16.mxu0 %v1496
    %3370 = vmatmul.mubr.bf16.gmra.mrb[0].mxu0 %v1495
    %v3371 = vpop.f32.mrb[0].mxu0
    %v3372 = vadd.f32 %v3275, %v3371
    %v3373 = vpop.f32.mrb[0].mxu0
    %v3374 = vpop.f32.mrb[0].mxu0
    %v3375 = vadd.f32 %v3278, %v3374
    %v3376 = vpop.f32.mrb[0].mxu0
    %3377 = vmatprep.mubr.bf16.mxu0 %v1523
    %3378 = vmatmul.mubr.bf16.gmra.mrb[0].mxu0 %v1522
    %v3379 = vpop.f32.mrb[0].mxu0
    %v3380 = vadd.f32 %v3283, %v3379
    %v3381 = vpop.f32.mrb[0].mxu0
    %v3382 = vpop.f32.mrb[0].mxu0
    %v3383 = vadd.f32 %v3286, %v3382
    %v3384 = vpop.f32.mrb[0].mxu0
    %3385 = vmatprep.mubr.bf16.mxu0 %v1550
    %3386 = vmatmul.mubr.bf16.gmra.mrb[0].mxu0 %v1549
    %v3387 = vpop.f32.mrb[0].mxu0
    %v3388 = vadd.f32 %v3291, %v3387
    %v3389 = vpop.f32.mrb[0].mxu0
    %v3390 = vpop.f32.mrb[0].mxu0
    %v3391 = vadd.f32 %v3294, %v3390
    %v3392 = vpop.f32.mrb[0].mxu0
    %3393 = vmatprep.mubr.bf16.mxu0 %v1577
    %3394 = vmatmul.mubr.bf16.gmra.mrb[0].mxu0 %v1576
    %v3395 = vpop.f32.mrb[0].mxu0
    %v3396 = vadd.f32 %v3299, %v3395
    %v3397 = vpop.f32.mrb[0].mxu0
    %v3398 = vpop.f32.mrb[0].mxu0
    %v3399 = vadd.f32 %v3302, %v3398
    %v3400 = vpop.f32.mrb[0].mxu0
    %3401 = vdwg.mxu0
    %3402 = vmatprep.subr.bf16.mxu0 0
    %3403 = vmatpush1.bf16.msra.mxu0 %v2727
    %3404 = vmatprep.subr.bf16.mxu0 0
    %3405 = vmatpush1.bf16.msra.mxu0 %v2728
    %3406 = vmatprep.subr.bf16.mxu0 0
    %3407 = vmatpush1.bf16.msra.mxu0 %v2729
    %3408 = vmatprep.subr.bf16.mxu0 0
    %3409 = vmatpush1.bf16.msra.mxu0 %v2730
    %3410 = vmatprep.subr.bf16.mxu0 0
    %3411 = vmatpush1.bf16.msra.mxu0 %v2731
    %3412 = vmatprep.subr.bf16.mxu0 0
    %3413 = vmatpush1.bf16.msra.mxu0 %v2732
    %3414 = vmatprep.subr.bf16.mxu0 0
    %3415 = vmatpush1.bf16.msra.mxu0 %v2733
    %3416 = vmatprep.subr.bf16.mxu0 0
    %3417 = vmatpush1.bf16.msra.mxu0 %v2734
    %3418 = vmatprep.subr.bf16.mxu0 0
    %3419 = vmatpush1.bf16.msra.mxu0 %v2735
    %3420 = vmatprep.subr.bf16.mxu0 0
    %3421 = vmatpush1.bf16.msra.mxu0 %v2736
    %3422 = vmatprep.subr.bf16.mxu0 0
    %3423 = vmatpush1.bf16.msra.mxu0 %v2737
    %3424 = vmatprep.subr.bf16.mxu0 0
    %3425 = vmatpush1.bf16.msra.mxu0 %v2738
    %3426 = vmatprep.subr.bf16.mxu0 0
    %3427 = vmatpush1.bf16.msra.mxu0 %v2739
    %3428 = vmatprep.subr.bf16.mxu0 0
    %3429 = vmatpush1.bf16.msra.mxu0 %v2740
    %3430 = vmatprep.subr.bf16.mxu0 0
    %3431 = vmatpush1.bf16.msra.mxu0 %v2741
    %3432 = vmatprep.subr.bf16.mxu0 0
    %3433 = vmatpush1.bf16.msra.mxu0 %v2742
    %3434 = vmatprep.mubr.bf16.mxu0 %v1390
    %3435 = vmatmul.mubr.bf16.gmra.mrb[0].mxu0 %v1389
    %v3436 = vpop.f32.mrb[0].mxu0
    %v3437 = vadd.f32 %v3340, %v3436
    %v3438 = vpop.f32.mrb[0].mxu0
    %v3439 = vpop.f32.mrb[0].mxu0
    %v3440 = vadd.f32 %v3343, %v3439
    %v3441 = vpop.f32.mrb[0].mxu0
    %3442 = vmatprep.mubr.bf16.mxu0 %v1417
    %3443 = vmatmul.mubr.bf16.gmra.mrb[0].mxu0 %v1416
    %v3444 = vpop.f32.mrb[0].mxu0
    %v3445 = vadd.f32 %v3348, %v3444
    %v3446 = vpop.f32.mrb[0].mxu0
    %v3447 = vpop.f32.mrb[0].mxu0
    %v3448 = vadd.f32 %v3351, %v3447
    %v3449 = vpop.f32.mrb[0].mxu0
    %3450 = vmatprep.mubr.bf16.mxu0 %v1444
    %3451 = vmatmul.mubr.bf16.gmra.mrb[0].mxu0 %v1443
    %v3452 = vpop.f32.mrb[0].mxu0
    %v3453 = vadd.f32 %v3356, %v3452
    %v3454 = vpop.f32.mrb[0].mxu0
    %v3455 = vpop.f32.mrb[0].mxu0
    %v3456 = vadd.f32 %v3359, %v3455
    %v3457 = vpop.f32.mrb[0].mxu0
    %3458 = vmatprep.mubr.bf16.mxu0 %v1471
    %3459 = vmatmul.mubr.bf16.gmra.mrb[0].mxu0 %v1470
    %v3460 = vpop.f32.mrb[0].mxu0
    %v3461 = vadd.f32 %v3364, %v3460
    %v3462 = vpop.f32.mrb[0].mxu0
    %v3463 = vpop.f32.mrb[0].mxu0
    %v3464 = vadd.f32 %v3367, %v3463
    %v3465 = vpop.f32.mrb[0].mxu0
    %3466 = vmatprep.mubr.bf16.mxu0 %v1498
    %3467 = vmatmul.mubr.bf16.gmra.mrb[0].mxu0 %v1497
    %v3468 = vpop.f32.mrb[0].mxu0
    %v3469 = vadd.f32 %v3372, %v3468
    %v3470 = vpop.f32.mrb[0].mxu0
    %v3471 = vpop.f32.mrb[0].mxu0
    %v3472 = vadd.f32 %v3375, %v3471
    %v3473 = vpop.f32.mrb[0].mxu0
    %3474 = vmatprep.mubr.bf16.mxu0 %v1525
    %3475 = vmatmul.mubr.bf16.gmra.mrb[0].mxu0 %v1524
    %v3476 = vpop.f32.mrb[0].mxu0
    %v3477 = vadd.f32 %v3380, %v3476
    %v3478 = vpop.f32.mrb[0].mxu0
    %v3479 = vpop.f32.mrb[0].mxu0
    %v3480 = vadd.f32 %v3383, %v3479
    %v3481 = vpop.f32.mrb[0].mxu0
    %3482 = vmatprep.mubr.bf16.mxu0 %v1552
    %3483 = vmatmul.mubr.bf16.gmra.mrb[0].mxu0 %v1551
    %v3484 = vpop.f32.mrb[0].mxu0
    %v3485 = vadd.f32 %v3388, %v3484
    %v3486 = vpop.f32.mrb[0].mxu0
    %v3487 = vpop.f32.mrb[0].mxu0
    %v3488 = vadd.f32 %v3391, %v3487
    %v3489 = vpop.f32.mrb[0].mxu0
    %3490 = vmatprep.mubr.bf16.mxu0 %v1579
    %3491 = vmatmul.mubr.bf16.gmra.mrb[0].mxu0 %v1578
    %v3492 = vpop.f32.mrb[0].mxu0
    %v3493 = vadd.f32 %v3396, %v3492
    %v3494 = vpop.f32.mrb[0].mxu0
    %v3495 = vpop.f32.mrb[0].mxu0
    %v3496 = vadd.f32 %v3399, %v3495
    %v3497 = vpop.f32.mrb[0].mxu0
    %3498 = vdwg.mxu0
    %3499 = vmatprep.subr.bf16.mxu0 0
    %3500 = vmatpush1.bf16.msra.mxu0 %v2743
    %3501 = vmatprep.subr.bf16.mxu0 0
    %3502 = vmatpush1.bf16.msra.mxu0 %v2744
    %3503 = vmatprep.subr.bf16.mxu0 0
    %3504 = vmatpush1.bf16.msra.mxu0 %v2745
    %3505 = vmatprep.subr.bf16.mxu0 0
    %3506 = vmatpush1.bf16.msra.mxu0 %v2746
    %3507 = vmatprep.subr.bf16.mxu0 0
    %3508 = vmatpush1.bf16.msra.mxu0 %v2747
    %3509 = vmatprep.subr.bf16.mxu0 0
    %3510 = vmatpush1.bf16.msra.mxu0 %v2748
    %3511 = vmatprep.subr.bf16.mxu0 0
    %3512 = vmatpush1.bf16.msra.mxu0 %v2749
    %3513 = vmatprep.subr.bf16.mxu0 0
    %3514 = vmatpush1.bf16.msra.mxu0 %v2750
    %3515 = vmatprep.subr.bf16.mxu0 0
    %3516 = vmatpush1.bf16.msra.mxu0 %v2751
    %3517 = vmatprep.subr.bf16.mxu0 0
    %3518 = vmatpush1.bf16.msra.mxu0 %v2752
    %3519 = vmatprep.subr.bf16.mxu0 0
    %3520 = vmatpush1.bf16.msra.mxu0 %v2753
    %3521 = vmatprep.subr.bf16.mxu0 0
    %3522 = vmatpush1.bf16.msra.mxu0 %v2754
    %3523 = vmatprep.subr.bf16.mxu0 0
    %3524 = vmatpush1.bf16.msra.mxu0 %v2755
    %3525 = vmatprep.subr.bf16.mxu0 0
    %3526 = vmatpush1.bf16.msra.mxu0 %v2756
    %3527 = vmatprep.subr.bf16.mxu0 0
    %3528 = vmatpush1.bf16.msra.mxu0 %v2757
    %3529 = vmatprep.subr.bf16.mxu0 0
    %3530 = vmatpush1.bf16.msra.mxu0 %v2758
    %3531 = vmatprep.mubr.bf16.mxu0 %v1392
    %3532 = vmatmul.mubr.bf16.gmra.mrb[0].mxu0 %v1391
    %v3533 = vpop.f32.mrb[0].mxu0
    %v3534 = vadd.f32 %v3437, %v3533
    %v3535 = vpop.f32.mrb[0].mxu0
    %v3536 = vpop.f32.mrb[0].mxu0
    %v3537 = vadd.f32 %v3440, %v3536
    %v3538 = vpop.f32.mrb[0].mxu0
    %3539 = vmatprep.mubr.bf16.mxu0 %v1419
    %3540 = vmatmul.mubr.bf16.gmra.mrb[0].mxu0 %v1418
    %v3541 = vpop.f32.mrb[0].mxu0
    %v3542 = vadd.f32 %v3445, %v3541
    %v3543 = vpop.f32.mrb[0].mxu0
    %v3544 = vpop.f32.mrb[0].mxu0
    %v3545 = vadd.f32 %v3448, %v3544
    %v3546 = vpop.f32.mrb[0].mxu0
    %3547 = vmatprep.mubr.bf16.mxu0 %v1446
    %3548 = vmatmul.mubr.bf16.gmra.mrb[0].mxu0 %v1445
    %v3549 = vpop.f32.mrb[0].mxu0
    %v3550 = vadd.f32 %v3453, %v3549
    %v3551 = vpop.f32.mrb[0].mxu0
    %v3552 = vpop.f32.mrb[0].mxu0
    %v3553 = vadd.f32 %v3456, %v3552
    %v3554 = vpop.f32.mrb[0].mxu0
    %3555 = vmatprep.mubr.bf16.mxu0 %v1473
    %3556 = vmatmul.mubr.bf16.gmra.mrb[0].mxu0 %v1472
    %v3557 = vpop.f32.mrb[0].mxu0
    %v3558 = vadd.f32 %v3461, %v3557
    %v3559 = vpop.f32.mrb[0].mxu0
    %v3560 = vpop.f32.mrb[0].mxu0
    %v3561 = vadd.f32 %v3464, %v3560
    %v3562 = vpop.f32.mrb[0].mxu0
    %3563 = vmatprep.mubr.bf16.mxu0 %v1500
    %3564 = vmatmul.mubr.bf16.gmra.mrb[0].mxu0 %v1499
    %v3565 = vpop.f32.mrb[0].mxu0
    %v3566 = vadd.f32 %v3469, %v3565
    %v3567 = vpop.f32.mrb[0].mxu0
    %v3568 = vpop.f32.mrb[0].mxu0
    %v3569 = vadd.f32 %v3472, %v3568
    %v3570 = vpop.f32.mrb[0].mxu0
    %3571 = vmatprep.mubr.bf16.mxu0 %v1527
    %3572 = vmatmul.mubr.bf16.gmra.mrb[0].mxu0 %v1526
    %v3573 = vpop.f32.mrb[0].mxu0
    %v3574 = vadd.f32 %v3477, %v3573
    %v3575 = vpop.f32.mrb[0].mxu0
    %v3576 = vpop.f32.mrb[0].mxu0
    %v3577 = vadd.f32 %v3480, %v3576
    %v3578 = vpop.f32.mrb[0].mxu0
    %3579 = vmatprep.mubr.bf16.mxu0 %v1554
    %3580 = vmatmul.mubr.bf16.gmra.mrb[0].mxu0 %v1553
    %v3581 = vpop.f32.mrb[0].mxu0
    %v3582 = vadd.f32 %v3485, %v3581
    %v3583 = vpop.f32.mrb[0].mxu0
    %v3584 = vpop.f32.mrb[0].mxu0
    %v3585 = vadd.f32 %v3488, %v3584
    %v3586 = vpop.f32.mrb[0].mxu0
    %3587 = vmatprep.mubr.bf16.mxu0 %v1581
    %3588 = vmatmul.mubr.bf16.gmra.mrb[0].mxu0 %v1580
    %v3589 = vpop.f32.mrb[0].mxu0
    %v3590 = vadd.f32 %v3493, %v3589
    %v3591 = vpop.f32.mrb[0].mxu0
    %v3592 = vpop.f32.mrb[0].mxu0
    %v3593 = vadd.f32 %v3496, %v3592
    %v3594 = vpop.f32.mrb[0].mxu0
    %3595 = vdwg.mxu0
    %3596 = vmatprep.subr.bf16.mxu0 0
    %3597 = vmatpush1.bf16.msra.mxu0 %v2759
    %3598 = vmatprep.subr.bf16.mxu0 0
    %3599 = vmatpush1.bf16.msra.mxu0 %v2760
    %3600 = vmatprep.subr.bf16.mxu0 0
    %3601 = vmatpush1.bf16.msra.mxu0 %v2761
    %3602 = vmatprep.subr.bf16.mxu0 0
    %3603 = vmatpush1.bf16.msra.mxu0 %v2762
    %3604 = vmatprep.subr.bf16.mxu0 0
    %3605 = vmatpush1.bf16.msra.mxu0 %v2763
    %3606 = vmatprep.subr.bf16.mxu0 0
    %3607 = vmatpush1.bf16.msra.mxu0 %v2764
    %3608 = vmatprep.subr.bf16.mxu0 0
    %3609 = vmatpush1.bf16.msra.mxu0 %v2765
    %3610 = vmatprep.subr.bf16.mxu0 0
    %3611 = vmatpush1.bf16.msra.mxu0 %v2766
    %3612 = vmatprep.subr.bf16.mxu0 0
    %3613 = vmatpush1.bf16.msra.mxu0 %v2767
    %3614 = vmatprep.subr.bf16.mxu0 0
    %3615 = vmatpush1.bf16.msra.mxu0 %v2768
    %3616 = vmatprep.subr.bf16.mxu0 0
    %3617 = vmatpush1.bf16.msra.mxu0 %v2769
    %3618 = vmatprep.subr.bf16.mxu0 0
    %3619 = vmatpush1.bf16.msra.mxu0 %v2770
    %3620 = vmatprep.subr.bf16.mxu0 0
    %3621 = vmatpush1.bf16.msra.mxu0 %v2771
    %3622 = vmatprep.subr.bf16.mxu0 0
    %3623 = vmatpush1.bf16.msra.mxu0 %v2772
    %3624 = vmatprep.subr.bf16.mxu0 0
    %3625 = vmatpush1.bf16.msra.mxu0 %v2773
    %3626 = vmatprep.subr.bf16.mxu0 0
    %3627 = vmatpush1.bf16.msra.mxu0 %v2774
    %3628 = vmatprep.mubr.bf16.mxu0 %v1394
    %3629 = vmatmul.mubr.bf16.gmra.mrb[0].mxu0 %v1393
    %v3630 = vpop.f32.mrb[0].mxu0
    %v3631 = vadd.f32 %v3534, %v3630
    %v3632 = vpop.f32.mrb[0].mxu0
    %v3633 = vpop.f32.mrb[0].mxu0
    %v3634 = vadd.f32 %v3537, %v3633
    %v3635 = vpop.f32.mrb[0].mxu0
    %3636 = vmatprep.mubr.bf16.mxu0 %v1421
    %3637 = vmatmul.mubr.bf16.gmra.mrb[0].mxu0 %v1420
    %v3638 = vpop.f32.mrb[0].mxu0
    %v3639 = vadd.f32 %v3542, %v3638
    %v3640 = vpop.f32.mrb[0].mxu0
    %v3641 = vpop.f32.mrb[0].mxu0
    %v3642 = vadd.f32 %v3545, %v3641
    %v3643 = vpop.f32.mrb[0].mxu0
    %3644 = vmatprep.mubr.bf16.mxu0 %v1448
    %3645 = vmatmul.mubr.bf16.gmra.mrb[0].mxu0 %v1447
    %v3646 = vpop.f32.mrb[0].mxu0
    %v3647 = vadd.f32 %v3550, %v3646
    %v3648 = vpop.f32.mrb[0].mxu0
    %v3649 = vpop.f32.mrb[0].mxu0
    %v3650 = vadd.f32 %v3553, %v3649
    %v3651 = vpop.f32.mrb[0].mxu0
    %3652 = vmatprep.mubr.bf16.mxu0 %v1475
    %3653 = vmatmul.mubr.bf16.gmra.mrb[0].mxu0 %v1474
    %v3654 = vpop.f32.mrb[0].mxu0
    %v3655 = vadd.f32 %v3558, %v3654
    %v3656 = vpop.f32.mrb[0].mxu0
    %v3657 = vpop.f32.mrb[0].mxu0
    %v3658 = vadd.f32 %v3561, %v3657
    %v3659 = vpop.f32.mrb[0].mxu0
    %3660 = vmatprep.mubr.bf16.mxu0 %v1502
    %3661 = vmatmul.mubr.bf16.gmra.mrb[0].mxu0 %v1501
    %v3662 = vpop.f32.mrb[0].mxu0
    %v3663 = vadd.f32 %v3566, %v3662
    %v3664 = vpop.f32.mrb[0].mxu0
    %v3665 = vpop.f32.mrb[0].mxu0
    %v3666 = vadd.f32 %v3569, %v3665
    %v3667 = vpop.f32.mrb[0].mxu0
    %3668 = vmatprep.mubr.bf16.mxu0 %v1529
    %3669 = vmatmul.mubr.bf16.gmra.mrb[0].mxu0 %v1528
    %v3670 = vpop.f32.mrb[0].mxu0
    %v3671 = vadd.f32 %v3574, %v3670
    %v3672 = vpop.f32.mrb[0].mxu0
    %v3673 = vpop.f32.mrb[0].mxu0
    %v3674 = vadd.f32 %v3577, %v3673
    %v3675 = vpop.f32.mrb[0].mxu0
    %3676 = vmatprep.mubr.bf16.mxu0 %v1556
    %3677 = vmatmul.mubr.bf16.gmra.mrb[0].mxu0 %v1555
    %v3678 = vpop.f32.mrb[0].mxu0
    %v3679 = vadd.f32 %v3582, %v3678
    %v3680 = vpop.f32.mrb[0].mxu0
    %v3681 = vpop.f32.mrb[0].mxu0
    %v3682 = vadd.f32 %v3585, %v3681
    %v3683 = vpop.f32.mrb[0].mxu0
    %3684 = vmatprep.mubr.bf16.mxu0 %v1583
    %3685 = vmatmul.mubr.bf16.gmra.mrb[0].mxu0 %v1582
    %v3686 = vpop.f32.mrb[0].mxu0
    %v3687 = vadd.f32 %v3590, %v3686
    %v3688 = vpop.f32.mrb[0].mxu0
    %v3689 = vpop.f32.mrb[0].mxu0
    %v3690 = vadd.f32 %v3593, %v3689
    %v3691 = vpop.f32.mrb[0].mxu0
    %3692 = vdwg.mxu0
    %3693 = vmatprep.subr.bf16.mxu0 0
    %3694 = vmatpush1.bf16.msra.mxu0 %v2775
    %3695 = vmatprep.subr.bf16.mxu0 0
    %3696 = vmatpush1.bf16.msra.mxu0 %v2776
    %3697 = vmatprep.subr.bf16.mxu0 0
    %3698 = vmatpush1.bf16.msra.mxu0 %v2777
    %3699 = vmatprep.subr.bf16.mxu0 0
    %3700 = vmatpush1.bf16.msra.mxu0 %v2778
    %3701 = vmatprep.subr.bf16.mxu0 0
    %3702 = vmatpush1.bf16.msra.mxu0 %v2779
    %3703 = vmatprep.subr.bf16.mxu0 0
    %3704 = vmatpush1.bf16.msra.mxu0 %v2780
    %3705 = vmatprep.subr.bf16.mxu0 0
    %3706 = vmatpush1.bf16.msra.mxu0 %v2781
    %3707 = vmatprep.subr.bf16.mxu0 0
    %3708 = vmatpush1.bf16.msra.mxu0 %v2782
    %3709 = vmatprep.subr.bf16.mxu0 0
    %3710 = vmatpush1.bf16.msra.mxu0 %v2783
    %3711 = vmatprep.subr.bf16.mxu0 0
    %3712 = vmatpush1.bf16.msra.mxu0 %v2784
    %3713 = vmatprep.subr.bf16.mxu0 0
    %3714 = vmatpush1.bf16.msra.mxu0 %v2785
    %3715 = vmatprep.subr.bf16.mxu0 0
    %3716 = vmatpush1.bf16.msra.mxu0 %v2786
    %3717 = vmatprep.subr.bf16.mxu0 0
    %3718 = vmatpush1.bf16.msra.mxu0 %v2787
    %3719 = vmatprep.subr.bf16.mxu0 0
    %3720 = vmatpush1.bf16.msra.mxu0 %v2788
    %3721 = vmatprep.subr.bf16.mxu0 0
    %3722 = vmatpush1.bf16.msra.mxu0 %v2789
    %3723 = vmatprep.subr.bf16.mxu0 0
    %3724 = vmatpush1.bf16.msra.mxu0 %v2790
    %3725 = vmatprep.mubr.bf16.mxu0 %v1396
    %3726 = vmatmul.mubr.bf16.gmra.mrb[0].mxu0 %v1395
    %v3727 = vpop.f32.mrb[0].mxu0
    %v3728 = vadd.f32 %v3631, %v3727
    %v3729 = vpop.f32.mrb[0].mxu0
    %v3730 = vpop.f32.mrb[0].mxu0
    %v3731 = vadd.f32 %v3634, %v3730
    %v3732 = vpop.f32.mrb[0].mxu0
    %3733 = vmatprep.mubr.bf16.mxu0 %v1423
    %3734 = vmatmul.mubr.bf16.gmra.mrb[0].mxu0 %v1422
    %v3735 = vpop.f32.mrb[0].mxu0
    %v3736 = vadd.f32 %v3639, %v3735
    %v3737 = vpop.f32.mrb[0].mxu0
    %v3738 = vpop.f32.mrb[0].mxu0
    %v3739 = vadd.f32 %v3642, %v3738
    %v3740 = vpop.f32.mrb[0].mxu0
    %3741 = vmatprep.mubr.bf16.mxu0 %v1450
    %3742 = vmatmul.mubr.bf16.gmra.mrb[0].mxu0 %v1449
    %v3743 = vpop.f32.mrb[0].mxu0
    %v3744 = vadd.f32 %v3647, %v3743
    %v3745 = vpop.f32.mrb[0].mxu0
    %v3746 = vpop.f32.mrb[0].mxu0
    %v3747 = vadd.f32 %v3650, %v3746
    %v3748 = vpop.f32.mrb[0].mxu0
    %3749 = vmatprep.mubr.bf16.mxu0 %v1477
    %3750 = vmatmul.mubr.bf16.gmra.mrb[0].mxu0 %v1476
    %v3751 = vpop.f32.mrb[0].mxu0
    %v3752 = vadd.f32 %v3655, %v3751
    %v3753 = vpop.f32.mrb[0].mxu0
    %v3754 = vpop.f32.mrb[0].mxu0
    %v3755 = vadd.f32 %v3658, %v3754
    %v3756 = vpop.f32.mrb[0].mxu0
    %3757 = vmatprep.mubr.bf16.mxu0 %v1504
    %3758 = vmatmul.mubr.bf16.gmra.mrb[0].mxu0 %v1503
    %v3759 = vpop.f32.mrb[0].mxu0
    %v3760 = vadd.f32 %v3663, %v3759
    %v3761 = vpop.f32.mrb[0].mxu0
    %v3762 = vpop.f32.mrb[0].mxu0
    %v3763 = vadd.f32 %v3666, %v3762
    %v3764 = vpop.f32.mrb[0].mxu0
    %3765 = vmatprep.mubr.bf16.mxu0 %v1531
    %3766 = vmatmul.mubr.bf16.gmra.mrb[0].mxu0 %v1530
    %v3767 = vpop.f32.mrb[0].mxu0
    %v3768 = vadd.f32 %v3671, %v3767
    %v3769 = vpop.f32.mrb[0].mxu0
    %v3770 = vpop.f32.mrb[0].mxu0
    %v3771 = vadd.f32 %v3674, %v3770
    %v3772 = vpop.f32.mrb[0].mxu0
    %3773 = vmatprep.mubr.bf16.mxu0 %v1558
    %3774 = vmatmul.mubr.bf16.gmra.mrb[0].mxu0 %v1557
    %v3775 = vpop.f32.mrb[0].mxu0
    %v3776 = vadd.f32 %v3679, %v3775
    %v3777 = vpop.f32.mrb[0].mxu0
    %v3778 = vpop.f32.mrb[0].mxu0
    %v3779 = vadd.f32 %v3682, %v3778
    %v3780 = vpop.f32.mrb[0].mxu0
    %3781 = vmatprep.mubr.bf16.mxu0 %v1585
    %3782 = vmatmul.mubr.bf16.gmra.mrb[0].mxu0 %v1584
    %v3783 = vpop.f32.mrb[0].mxu0
    %v3784 = vadd.f32 %v3687, %v3783
    %v3785 = vpop.f32.mrb[0].mxu0
    %v3786 = vpop.f32.mrb[0].mxu0
    %v3787 = vadd.f32 %v3690, %v3786
    %v3788 = vpop.f32.mrb[0].mxu0
    %3789 = vdwg.mxu0
    %3790 = vmatprep.subr.bf16.mxu0 0
    %3791 = vmatpush1.bf16.msra.mxu0 %v2791
    %3792 = vmatprep.subr.bf16.mxu0 0
    %3793 = vmatpush1.bf16.msra.mxu0 %v2792
    %3794 = vmatprep.subr.bf16.mxu0 0
    %3795 = vmatpush1.bf16.msra.mxu0 %v2793
    %3796 = vmatprep.subr.bf16.mxu0 0
    %3797 = vmatpush1.bf16.msra.mxu0 %v2794
    %3798 = vmatprep.subr.bf16.mxu0 0
    %3799 = vmatpush1.bf16.msra.mxu0 %v2795
    %3800 = vmatprep.subr.bf16.mxu0 0
    %3801 = vmatpush1.bf16.msra.mxu0 %v2796
    %3802 = vmatprep.subr.bf16.mxu0 0
    %3803 = vmatpush1.bf16.msra.mxu0 %v2797
    %3804 = vmatprep.subr.bf16.mxu0 0
    %3805 = vmatpush1.bf16.msra.mxu0 %v2798
    %3806 = vmatprep.subr.bf16.mxu0 0
    %3807 = vmatpush1.bf16.msra.mxu0 %v2799
    %3808 = vmatprep.subr.bf16.mxu0 0
    %3809 = vmatpush1.bf16.msra.mxu0 %v2800
    %3810 = vmatprep.subr.bf16.mxu0 0
    %3811 = vmatpush1.bf16.msra.mxu0 %v2801
    %3812 = vmatprep.subr.bf16.mxu0 0
    %3813 = vmatpush1.bf16.msra.mxu0 %v2802
    %3814 = vmatprep.subr.bf16.mxu0 0
    %3815 = vmatpush1.bf16.msra.mxu0 %v2803
    %3816 = vmatprep.subr.bf16.mxu0 0
    %3817 = vmatpush1.bf16.msra.mxu0 %v2804
    %3818 = vmatprep.subr.bf16.mxu0 0
    %3819 = vmatpush1.bf16.msra.mxu0 %v2805
    %3820 = vmatprep.subr.bf16.mxu0 0
    %3821 = vmatpush1.bf16.msra.mxu0 %v2806
    %3822 = vmatprep.mubr.bf16.mxu0 %v1398
    %3823 = vmatmul.mubr.bf16.gmra.mrb[0].mxu0 %v1397
    %v3824 = vpop.f32.mrb[0].mxu0
    %v3825 = vadd.f32 %v3728, %v3824
    %v3826 = vpop.f32.mrb[0].mxu0
    %v3827 = vpop.f32.mrb[0].mxu0
    %v3828 = vadd.f32 %v3731, %v3827
    %v3829 = vpop.f32.mrb[0].mxu0
    %3830 = vmatprep.mubr.bf16.mxu0 %v1425
    %3831 = vmatmul.mubr.bf16.gmra.mrb[0].mxu0 %v1424
    %v3832 = vpop.f32.mrb[0].mxu0
    %v3833 = vadd.f32 %v3736, %v3832
    %v3834 = vpop.f32.mrb[0].mxu0
    %v3835 = vpop.f32.mrb[0].mxu0
    %v3836 = vadd.f32 %v3739, %v3835
    %v3837 = vpop.f32.mrb[0].mxu0
    %3838 = vmatprep.mubr.bf16.mxu0 %v1452
    %3839 = vmatmul.mubr.bf16.gmra.mrb[0].mxu0 %v1451
    %v3840 = vpop.f32.mrb[0].mxu0
    %v3841 = vadd.f32 %v3744, %v3840
    %v3842 = vpop.f32.mrb[0].mxu0
    %v3843 = vpop.f32.mrb[0].mxu0
    %v3844 = vadd.f32 %v3747, %v3843
    %v3845 = vpop.f32.mrb[0].mxu0
    %3846 = vmatprep.mubr.bf16.mxu0 %v1479
    %3847 = vmatmul.mubr.bf16.gmra.mrb[0].mxu0 %v1478
    %v3848 = vpop.f32.mrb[0].mxu0
    %v3849 = vadd.f32 %v3752, %v3848
    %v3850 = vpop.f32.mrb[0].mxu0
    %v3851 = vpop.f32.mrb[0].mxu0
    %v3852 = vadd.f32 %v3755, %v3851
    %v3853 = vpop.f32.mrb[0].mxu0
    %3854 = vmatprep.mubr.bf16.mxu0 %v1506
    %3855 = vmatmul.mubr.bf16.gmra.mrb[0].mxu0 %v1505
    %v3856 = vpop.f32.mrb[0].mxu0
    %v3857 = vadd.f32 %v3760, %v3856
    %v3858 = vpop.f32.mrb[0].mxu0
    %v3859 = vpop.f32.mrb[0].mxu0
    %v3860 = vadd.f32 %v3763, %v3859
    %v3861 = vpop.f32.mrb[0].mxu0
    %3862 = vmatprep.mubr.bf16.mxu0 %v1533
    %3863 = vmatmul.mubr.bf16.gmra.mrb[0].mxu0 %v1532
    %v3864 = vpop.f32.mrb[0].mxu0
    %v3865 = vadd.f32 %v3768, %v3864
    %v3866 = vpop.f32.mrb[0].mxu0
    %v3867 = vpop.f32.mrb[0].mxu0
    %v3868 = vadd.f32 %v3771, %v3867
    %v3869 = vpop.f32.mrb[0].mxu0
    %3870 = vmatprep.mubr.bf16.mxu0 %v1560
    %3871 = vmatmul.mubr.bf16.gmra.mrb[0].mxu0 %v1559
    %v3872 = vpop.f32.mrb[0].mxu0
    %v3873 = vadd.f32 %v3776, %v3872
    %v3874 = vpop.f32.mrb[0].mxu0
    %v3875 = vpop.f32.mrb[0].mxu0
    %v3876 = vadd.f32 %v3779, %v3875
    %v3877 = vpop.f32.mrb[0].mxu0
    %3878 = vmatprep.mubr.bf16.mxu0 %v1587
    %3879 = vmatmul.mubr.bf16.gmra.mrb[0].mxu0 %v1586
    %v3880 = vpop.f32.mrb[0].mxu0
    %v3881 = vadd.f32 %v3784, %v3880
    %v3882 = vpop.f32.mrb[0].mxu0
    %v3883 = vpop.f32.mrb[0].mxu0
    %v3884 = vadd.f32 %v3787, %v3883
    %v3885 = vpop.f32.mrb[0].mxu0
    %3886 = vdwg.mxu0
    %3887 = vmatprep.subr.bf16.mxu0 0
    %3888 = vmatpush1.bf16.msra.mxu0 %v2807
    %3889 = vmatprep.subr.bf16.mxu0 0
    %3890 = vmatpush1.bf16.msra.mxu0 %v2808
    %3891 = vmatprep.subr.bf16.mxu0 0
    %3892 = vmatpush1.bf16.msra.mxu0 %v2809
    %3893 = vmatprep.subr.bf16.mxu0 0
    %3894 = vmatpush1.bf16.msra.mxu0 %v2810
    %3895 = vmatprep.subr.bf16.mxu0 0
    %3896 = vmatpush1.bf16.msra.mxu0 %v2811
    %3897 = vmatprep.subr.bf16.mxu0 0
    %3898 = vmatpush1.bf16.msra.mxu0 %v2812
    %3899 = vmatprep.subr.bf16.mxu0 0
    %3900 = vmatpush1.bf16.msra.mxu0 %v2813
    %3901 = vmatprep.subr.bf16.mxu0 0
    %3902 = vmatpush1.bf16.msra.mxu0 %v2814
    %3903 = vmatprep.subr.bf16.mxu0 0
    %3904 = vmatpush1.bf16.msra.mxu0 %v2815
    %3905 = vmatprep.subr.bf16.mxu0 0
    %3906 = vmatpush1.bf16.msra.mxu0 %v2816
    %3907 = vmatprep.subr.bf16.mxu0 0
    %3908 = vmatpush1.bf16.msra.mxu0 %v2817
    %3909 = vmatprep.subr.bf16.mxu0 0
    %3910 = vmatpush1.bf16.msra.mxu0 %v2818
    %3911 = vmatprep.subr.bf16.mxu0 0
    %3912 = vmatpush1.bf16.msra.mxu0 %v2819
    %3913 = vmatprep.subr.bf16.mxu0 0
    %3914 = vmatpush1.bf16.msra.mxu0 %v2820
    %3915 = vmatprep.subr.bf16.mxu0 0
    %3916 = vmatpush1.bf16.msra.mxu0 %v2821
    %3917 = vmatprep.subr.bf16.mxu0 0
    %3918 = vmatpush1.bf16.msra.mxu0 %v2822
    %3919 = vmatprep.mubr.bf16.mxu0 %v1400
    %3920 = vmatmul.mubr.bf16.gmra.mrb[0].mxu0 %v1399
    %v3921 = vpop.f32.mrb[0].mxu0
    %v3922 = vadd.f32 %v3825, %v3921
    %v3923 = vpop.f32.mrb[0].mxu0
    %v3924 = vpop.f32.mrb[0].mxu0
    %v3925 = vadd.f32 %v3828, %v3924
    %v3926 = vpop.f32.mrb[0].mxu0
    %3927 = vmatprep.mubr.bf16.mxu0 %v1427
    %3928 = vmatmul.mubr.bf16.gmra.mrb[0].mxu0 %v1426
    %v3929 = vpop.f32.mrb[0].mxu0
    %v3930 = vadd.f32 %v3833, %v3929
    %v3931 = vpop.f32.mrb[0].mxu0
    %v3932 = vpop.f32.mrb[0].mxu0
    %v3933 = vadd.f32 %v3836, %v3932
    %v3934 = vpop.f32.mrb[0].mxu0
    %3935 = vmatprep.mubr.bf16.mxu0 %v1454
    %3936 = vmatmul.mubr.bf16.gmra.mrb[0].mxu0 %v1453
    %v3937 = vpop.f32.mrb[0].mxu0
    %v3938 = vadd.f32 %v3841, %v3937
    %v3939 = vpop.f32.mrb[0].mxu0
    %v3940 = vpop.f32.mrb[0].mxu0
    %v3941 = vadd.f32 %v3844, %v3940
    %v3942 = vpop.f32.mrb[0].mxu0
    %3943 = vmatprep.mubr.bf16.mxu0 %v1481
    %3944 = vmatmul.mubr.bf16.gmra.mrb[0].mxu0 %v1480
    %v3945 = vpop.f32.mrb[0].mxu0
    %v3946 = vadd.f32 %v3849, %v3945
    %v3947 = vpop.f32.mrb[0].mxu0
    %v3948 = vpop.f32.mrb[0].mxu0
    %v3949 = vadd.f32 %v3852, %v3948
    %v3950 = vpop.f32.mrb[0].mxu0
    %3951 = vmatprep.mubr.bf16.mxu0 %v1508
    %3952 = vmatmul.mubr.bf16.gmra.mrb[0].mxu0 %v1507
    %v3953 = vpop.f32.mrb[0].mxu0
    %v3954 = vadd.f32 %v3857, %v3953
    %v3955 = vpop.f32.mrb[0].mxu0
    %v3956 = vpop.f32.mrb[0].mxu0
    %v3957 = vadd.f32 %v3860, %v3956
    %v3958 = vpop.f32.mrb[0].mxu0
    %3959 = vmatprep.mubr.bf16.mxu0 %v1535
    %3960 = vmatmul.mubr.bf16.gmra.mrb[0].mxu0 %v1534
    %v3961 = vpop.f32.mrb[0].mxu0
    %v3962 = vadd.f32 %v3865, %v3961
    %v3963 = vpop.f32.mrb[0].mxu0
    %v3964 = vpop.f32.mrb[0].mxu0
    %v3965 = vadd.f32 %v3868, %v3964
    %v3966 = vpop.f32.mrb[0].mxu0
    %3967 = vmatprep.mubr.bf16.mxu0 %v1562
    %3968 = vmatmul.mubr.bf16.gmra.mrb[0].mxu0 %v1561
    %v3969 = vpop.f32.mrb[0].mxu0
    %v3970 = vadd.f32 %v3873, %v3969
    %v3971 = vpop.f32.mrb[0].mxu0
    %v3972 = vpop.f32.mrb[0].mxu0
    %v3973 = vadd.f32 %v3876, %v3972
    %v3974 = vpop.f32.mrb[0].mxu0
    %3975 = vmatprep.mubr.bf16.mxu0 %v1589
    %3976 = vmatmul.mubr.bf16.gmra.mrb[0].mxu0 %v1588
    %v3977 = vpop.f32.mrb[0].mxu0
    %v3978 = vadd.f32 %v3881, %v3977
    %v3979 = vpop.f32.mrb[0].mxu0
    %v3980 = vpop.f32.mrb[0].mxu0
    %v3981 = vadd.f32 %v3884, %v3980
    %v3982 = vpop.f32.mrb[0].mxu0
    %3983 = vdwg.mxu0
    %3984 = vmatprep.subr.bf16.mxu0 0
    %3985 = vmatpush1.bf16.msra.mxu0 %v2823
    %3986 = vmatprep.subr.bf16.mxu0 0
    %3987 = vmatpush1.bf16.msra.mxu0 %v2824
    %3988 = vmatprep.subr.bf16.mxu0 0
    %3989 = vmatpush1.bf16.msra.mxu0 %v2825
    %3990 = vmatprep.subr.bf16.mxu0 0
    %3991 = vmatpush1.bf16.msra.mxu0 %v2826
    %3992 = vmatprep.subr.bf16.mxu0 0
    %3993 = vmatpush1.bf16.msra.mxu0 %v2827
    %3994 = vmatprep.subr.bf16.mxu0 0
    %3995 = vmatpush1.bf16.msra.mxu0 %v2828
    %3996 = vmatprep.subr.bf16.mxu0 0
    %3997 = vmatpush1.bf16.msra.mxu0 %v2829
    %3998 = vmatprep.subr.bf16.mxu0 0
    %3999 = vmatpush1.bf16.msra.mxu0 %v2830
    %4000 = vmatprep.subr.bf16.mxu0 0
    %4001 = vmatpush1.bf16.msra.mxu0 %v2831
    %4002 = vmatprep.subr.bf16.mxu0 0
    %4003 = vmatpush1.bf16.msra.mxu0 %v2832
    %4004 = vmatprep.subr.bf16.mxu0 0
    %4005 = vmatpush1.bf16.msra.mxu0 %v2833
    %4006 = vmatprep.subr.bf16.mxu0 0
    %4007 = vmatpush1.bf16.msra.mxu0 %v2834
    %4008 = vmatprep.subr.bf16.mxu0 0
    %4009 = vmatpush1.bf16.msra.mxu0 %v2835
    %4010 = vmatprep.subr.bf16.mxu0 0
    %4011 = vmatpush1.bf16.msra.mxu0 %v2836
    %4012 = vmatprep.subr.bf16.mxu0 0
    %4013 = vmatpush1.bf16.msra.mxu0 %v2837
    %4014 = vmatprep.subr.bf16.mxu0 0
    %4015 = vmatpush1.bf16.msra.mxu0 %v2838
    %4016 = vmatprep.mubr.bf16.mxu0 %v1402
    %4017 = vmatmul.mubr.bf16.gmra.mrb[0].mxu0 %v1401
    %v4018 = vpop.f32.mrb[0].mxu0
    %v4019 = vadd.f32 %v3922, %v4018
    %v4020 = vpop.f32.mrb[0].mxu0
    %v4021 = vpop.f32.mrb[0].mxu0
    %v4022 = vadd.f32 %v3925, %v4021
    %v4023 = vpop.f32.mrb[0].mxu0
    %4024 = vmatprep.mubr.bf16.mxu0 %v1429
    %4025 = vmatmul.mubr.bf16.gmra.mrb[0].mxu0 %v1428
    %v4026 = vpop.f32.mrb[0].mxu0
    %v4027 = vadd.f32 %v3930, %v4026
    %v4028 = vpop.f32.mrb[0].mxu0
    %v4029 = vpop.f32.mrb[0].mxu0
    %v4030 = vadd.f32 %v3933, %v4029
    %v4031 = vpop.f32.mrb[0].mxu0
    %4032 = vmatprep.mubr.bf16.mxu0 %v1456
    %4033 = vmatmul.mubr.bf16.gmra.mrb[0].mxu0 %v1455
    %v4034 = vpop.f32.mrb[0].mxu0
    %v4035 = vadd.f32 %v3938, %v4034
    %v4036 = vpop.f32.mrb[0].mxu0
    %v4037 = vpop.f32.mrb[0].mxu0
    %v4038 = vadd.f32 %v3941, %v4037
    %v4039 = vpop.f32.mrb[0].mxu0
    %4040 = vmatprep.mubr.bf16.mxu0 %v1483
    %4041 = vmatmul.mubr.bf16.gmra.mrb[0].mxu0 %v1482
    %v4042 = vpop.f32.mrb[0].mxu0
    %v4043 = vadd.f32 %v3946, %v4042
    %v4044 = vpop.f32.mrb[0].mxu0
    %v4045 = vpop.f32.mrb[0].mxu0
    %v4046 = vadd.f32 %v3949, %v4045
    %v4047 = vpop.f32.mrb[0].mxu0
    %4048 = vmatprep.mubr.bf16.mxu0 %v1510
    %4049 = vmatmul.mubr.bf16.gmra.mrb[0].mxu0 %v1509
    %v4050 = vpop.f32.mrb[0].mxu0
    %v4051 = vadd.f32 %v3954, %v4050
    %v4052 = vpop.f32.mrb[0].mxu0
    %v4053 = vpop.f32.mrb[0].mxu0
    %v4054 = vadd.f32 %v3957, %v4053
    %v4055 = vpop.f32.mrb[0].mxu0
    %4056 = vmatprep.mubr.bf16.mxu0 %v1537
    %4057 = vmatmul.mubr.bf16.gmra.mrb[0].mxu0 %v1536
    %v4058 = vpop.f32.mrb[0].mxu0
    %v4059 = vadd.f32 %v3962, %v4058
    %v4060 = vpop.f32.mrb[0].mxu0
    %v4061 = vpop.f32.mrb[0].mxu0
    %v4062 = vadd.f32 %v3965, %v4061
    %v4063 = vpop.f32.mrb[0].mxu0
    %4064 = vmatprep.mubr.bf16.mxu0 %v1564
    %4065 = vmatmul.mubr.bf16.gmra.mrb[0].mxu0 %v1563
    %v4066 = vpop.f32.mrb[0].mxu0
    %v4067 = vadd.f32 %v3970, %v4066
    %v4068 = vpop.f32.mrb[0].mxu0
    %v4069 = vpop.f32.mrb[0].mxu0
    %v4070 = vadd.f32 %v3973, %v4069
    %v4071 = vpop.f32.mrb[0].mxu0
    %4072 = vmatprep.mubr.bf16.mxu0 %v1591
    %4073 = vmatmul.mubr.bf16.gmra.mrb[0].mxu0 %v1590
    %v4074 = vpop.f32.mrb[0].mxu0
    %v4075 = vadd.f32 %v3978, %v4074
    %v4076 = vpop.f32.mrb[0].mxu0
    %v4077 = vpop.f32.mrb[0].mxu0
    %v4078 = vadd.f32 %v3981, %v4077
    %v4079 = vpop.f32.mrb[0].mxu0
    %4080 = vdwg.mxu0
    %4081 = vmatprep.subr.bf16.mxu0 0
    %4082 = vmatpush1.bf16.msra.mxu0 %v2839
    %4083 = vmatprep.subr.bf16.mxu0 0
    %4084 = vmatpush1.bf16.msra.mxu0 %v2840
    %4085 = vmatprep.subr.bf16.mxu0 0
    %4086 = vmatpush1.bf16.msra.mxu0 %v2841
    %4087 = vmatprep.subr.bf16.mxu0 0
    %4088 = vmatpush1.bf16.msra.mxu0 %v2842
    %4089 = vmatprep.subr.bf16.mxu0 0
    %4090 = vmatpush1.bf16.msra.mxu0 %v2843
    %4091 = vmatprep.subr.bf16.mxu0 0
    %4092 = vmatpush1.bf16.msra.mxu0 %v2844
    %4093 = vmatprep.subr.bf16.mxu0 0
    %4094 = vmatpush1.bf16.msra.mxu0 %v2845
    %4095 = vmatprep.subr.bf16.mxu0 0
    %4096 = vmatpush1.bf16.msra.mxu0 %v2846
    %4097 = vmatprep.subr.bf16.mxu0 0
    %4098 = vmatpush1.bf16.msra.mxu0 %v2847
    %4099 = vmatprep.subr.bf16.mxu0 0
    %4100 = vmatpush1.bf16.msra.mxu0 %v2848
    %4101 = vmatprep.subr.bf16.mxu0 0
    %4102 = vmatpush1.bf16.msra.mxu0 %v2849
    %4103 = vmatprep.subr.bf16.mxu0 0
    %4104 = vmatpush1.bf16.msra.mxu0 %v2850
    %4105 = vmatprep.subr.bf16.mxu0 0
    %4106 = vmatpush1.bf16.msra.mxu0 %v2851
    %4107 = vmatprep.subr.bf16.mxu0 0
    %4108 = vmatpush1.bf16.msra.mxu0 %v2852
    %4109 = vmatprep.subr.bf16.mxu0 0
    %4110 = vmatpush1.bf16.msra.mxu0 %v2853
    %4111 = vmatprep.subr.bf16.mxu0 0
    %4112 = vmatpush1.bf16.msra.mxu0 %v2854
    %4113 = vmatprep.mubr.bf16.mxu0 %v1404
    %4114 = vmatmul.mubr.bf16.gmra.mrb[0].mxu0 %v1403
    %v4115 = vpop.f32.mrb[0].mxu0
    %v4116 = vadd.f32 %v4019, %v4115
    %v4117 = vpop.f32.mrb[0].mxu0
    %v4118 = vpop.f32.mrb[0].mxu0
    %v4119 = vadd.f32 %v4022, %v4118
    %v4120 = vpop.f32.mrb[0].mxu0
    %4121 = vmatprep.mubr.bf16.mxu0 %v1431
    %4122 = vmatmul.mubr.bf16.gmra.mrb[0].mxu0 %v1430
    %v4123 = vpop.f32.mrb[0].mxu0
    %v4124 = vadd.f32 %v4027, %v4123
    %v4125 = vpop.f32.mrb[0].mxu0
    %v4126 = vpop.f32.mrb[0].mxu0
    %v4127 = vadd.f32 %v4030, %v4126
    %v4128 = vpop.f32.mrb[0].mxu0
    %4129 = vmatprep.mubr.bf16.mxu0 %v1458
    %4130 = vmatmul.mubr.bf16.gmra.mrb[0].mxu0 %v1457
    %v4131 = vpop.f32.mrb[0].mxu0
    %v4132 = vadd.f32 %v4035, %v4131
    %v4133 = vpop.f32.mrb[0].mxu0
    %v4134 = vpop.f32.mrb[0].mxu0
    %v4135 = vadd.f32 %v4038, %v4134
    %v4136 = vpop.f32.mrb[0].mxu0
    %4137 = vmatprep.mubr.bf16.mxu0 %v1485
    %4138 = vmatmul.mubr.bf16.gmra.mrb[0].mxu0 %v1484
    %v4139 = vpop.f32.mrb[0].mxu0
    %v4140 = vadd.f32 %v4043, %v4139
    %v4141 = vpop.f32.mrb[0].mxu0
    %v4142 = vpop.f32.mrb[0].mxu0
    %v4143 = vadd.f32 %v4046, %v4142
    %v4144 = vpop.f32.mrb[0].mxu0
    %4145 = vmatprep.mubr.bf16.mxu0 %v1512
    %4146 = vmatmul.mubr.bf16.gmra.mrb[0].mxu0 %v1511
    %v4147 = vpop.f32.mrb[0].mxu0
    %v4148 = vadd.f32 %v4051, %v4147
    %v4149 = vpop.f32.mrb[0].mxu0
    %v4150 = vpop.f32.mrb[0].mxu0
    %v4151 = vadd.f32 %v4054, %v4150
    %v4152 = vpop.f32.mrb[0].mxu0
    %4153 = vmatprep.mubr.bf16.mxu0 %v1539
    %4154 = vmatmul.mubr.bf16.gmra.mrb[0].mxu0 %v1538
    %v4155 = vpop.f32.mrb[0].mxu0
    %v4156 = vadd.f32 %v4059, %v4155
    %v4157 = vpop.f32.mrb[0].mxu0
    %v4158 = vpop.f32.mrb[0].mxu0
    %v4159 = vadd.f32 %v4062, %v4158
    %v4160 = vpop.f32.mrb[0].mxu0
    %4161 = vmatprep.mubr.bf16.mxu0 %v1566
    %4162 = vmatmul.mubr.bf16.gmra.mrb[0].mxu0 %v1565
    %v4163 = vpop.f32.mrb[0].mxu0
    %v4164 = vadd.f32 %v4067, %v4163
    %v4165 = vpop.f32.mrb[0].mxu0
    %v4166 = vpop.f32.mrb[0].mxu0
    %v4167 = vadd.f32 %v4070, %v4166
    %v4168 = vpop.f32.mrb[0].mxu0
    %4169 = vmatprep.mubr.bf16.mxu0 %v1593
    %4170 = vmatmul.mubr.bf16.gmra.mrb[0].mxu0 %v1592
    %v4171 = vpop.f32.mrb[0].mxu0
    %v4172 = vadd.f32 %v4075, %v4171
    %v4173 = vpop.f32.mrb[0].mxu0
    %v4174 = vpop.f32.mrb[0].mxu0
    %v4175 = vadd.f32 %v4078, %v4174
    %v4176 = vpop.f32.mrb[0].mxu0
    %4177 = vdwg.mxu0
    %4178 = vmatprep.subr.bf16.mxu0 0
    %4179 = vmatpush1.bf16.msra.mxu0 %v2855
    %4180 = vmatprep.subr.bf16.mxu0 0
    %4181 = vmatpush1.bf16.msra.mxu0 %v2856
    %4182 = vmatprep.subr.bf16.mxu0 0
    %4183 = vmatpush1.bf16.msra.mxu0 %v2857
    %4184 = vmatprep.subr.bf16.mxu0 0
    %4185 = vmatpush1.bf16.msra.mxu0 %v2858
    %4186 = vmatprep.subr.bf16.mxu0 0
    %4187 = vmatpush1.bf16.msra.mxu0 %v2859
    %4188 = vmatprep.subr.bf16.mxu0 0
    %4189 = vmatpush1.bf16.msra.mxu0 %v2860
    %4190 = vmatprep.subr.bf16.mxu0 0
    %4191 = vmatpush1.bf16.msra.mxu0 %v2861
    %4192 = vmatprep.subr.bf16.mxu0 0
    %4193 = vmatpush1.bf16.msra.mxu0 %v2862
    %4194 = vmatprep.subr.bf16.mxu0 0
    %4195 = vmatpush1.bf16.msra.mxu0 %v2863
    %4196 = vmatprep.subr.bf16.mxu0 0
    %4197 = vmatpush1.bf16.msra.mxu0 %v2864
    %4198 = vmatprep.subr.bf16.mxu0 0
    %4199 = vmatpush1.bf16.msra.mxu0 %v2865
    %4200 = vmatprep.subr.bf16.mxu0 0
    %4201 = vmatpush1.bf16.msra.mxu0 %v2866
    %4202 = vmatprep.subr.bf16.mxu0 0
    %4203 = vmatpush1.bf16.msra.mxu0 %v2867
    %4204 = vmatprep.subr.bf16.mxu0 0
    %4205 = vmatpush1.bf16.msra.mxu0 %v2868
    %4206 = vmatprep.subr.bf16.mxu0 0
    %4207 = vmatpush1.bf16.msra.mxu0 %v2869
    %4208 = vmatprep.subr.bf16.mxu0 0
    %4209 = vmatpush1.bf16.msra.mxu0 %v2870
    %4210 = vmatprep.mubr.bf16.mxu0 %v1406
    %4211 = vmatmul.mubr.bf16.gmra.mrb[0].mxu0 %v1405
    %v4212 = vpop.f32.mrb[0].mxu0
    %v4213 = vadd.f32 %v4116, %v4212
    %v4214 = vpop.f32.mrb[0].mxu0
    %v4215 = vpop.f32.mrb[0].mxu0
    %v4216 = vadd.f32 %v4119, %v4215
    %v4217 = vpop.f32.mrb[0].mxu0
    %4218 = vmatprep.mubr.bf16.mxu0 %v1433
    %4219 = vmatmul.mubr.bf16.gmra.mrb[0].mxu0 %v1432
    %v4220 = vpop.f32.mrb[0].mxu0
    %v4221 = vadd.f32 %v4124, %v4220
    %v4222 = vpop.f32.mrb[0].mxu0
    %v4223 = vpop.f32.mrb[0].mxu0
    %v4224 = vadd.f32 %v4127, %v4223
    %v4225 = vpop.f32.mrb[0].mxu0
    %4226 = vmatprep.mubr.bf16.mxu0 %v1460
    %4227 = vmatmul.mubr.bf16.gmra.mrb[0].mxu0 %v1459
    %v4228 = vpop.f32.mrb[0].mxu0
    %v4229 = vadd.f32 %v4132, %v4228
    %v4230 = vpop.f32.mrb[0].mxu0
    %v4231 = vpop.f32.mrb[0].mxu0
    %v4232 = vadd.f32 %v4135, %v4231
    %v4233 = vpop.f32.mrb[0].mxu0
    %4234 = vmatprep.mubr.bf16.mxu0 %v1487
    %4235 = vmatmul.mubr.bf16.gmra.mrb[0].mxu0 %v1486
    %v4236 = vpop.f32.mrb[0].mxu0
    %v4237 = vadd.f32 %v4140, %v4236
    %v4238 = vpop.f32.mrb[0].mxu0
    %v4239 = vpop.f32.mrb[0].mxu0
    %v4240 = vadd.f32 %v4143, %v4239
    %v4241 = vpop.f32.mrb[0].mxu0
    %4242 = vmatprep.mubr.bf16.mxu0 %v1514
    %4243 = vmatmul.mubr.bf16.gmra.mrb[0].mxu0 %v1513
    %v4244 = vpop.f32.mrb[0].mxu0
    %v4245 = vadd.f32 %v4148, %v4244
    %v4246 = vpop.f32.mrb[0].mxu0
    %v4247 = vpop.f32.mrb[0].mxu0
    %v4248 = vadd.f32 %v4151, %v4247
    %v4249 = vpop.f32.mrb[0].mxu0
    %4250 = vmatprep.mubr.bf16.mxu0 %v1541
    %4251 = vmatmul.mubr.bf16.gmra.mrb[0].mxu0 %v1540
    %v4252 = vpop.f32.mrb[0].mxu0
    %v4253 = vadd.f32 %v4156, %v4252
    %v4254 = vpop.f32.mrb[0].mxu0
    %v4255 = vpop.f32.mrb[0].mxu0
    %v4256 = vadd.f32 %v4159, %v4255
    %v4257 = vpop.f32.mrb[0].mxu0
    %4258 = vmatprep.mubr.bf16.mxu0 %v1568
    %4259 = vmatmul.mubr.bf16.gmra.mrb[0].mxu0 %v1567
    %v4260 = vpop.f32.mrb[0].mxu0
    %v4261 = vadd.f32 %v4164, %v4260
    %v4262 = vpop.f32.mrb[0].mxu0
    %v4263 = vpop.f32.mrb[0].mxu0
    %v4264 = vadd.f32 %v4167, %v4263
    %v4265 = vpop.f32.mrb[0].mxu0
    %4266 = vmatprep.mubr.bf16.mxu0 %v1595
    %4267 = vmatmul.mubr.bf16.gmra.mrb[0].mxu0 %v1594
    %v4268 = vpop.f32.mrb[0].mxu0
    %v4269 = vadd.f32 %v4172, %v4268
    %v4270 = vpop.f32.mrb[0].mxu0
    %v4271 = vpop.f32.mrb[0].mxu0
    %v4272 = vadd.f32 %v4175, %v4271
    %v4273 = vpop.f32.mrb[0].mxu0
    %4274 = vdwg.mxu0
    %4275 = vmatprep.subr.bf16.mxu0 0
    %4276 = vmatpush1.bf16.msra.mxu0 %v2871
    %4277 = vmatprep.subr.bf16.mxu0 0
    %4278 = vmatpush1.bf16.msra.mxu0 %v2872
    %4279 = vmatprep.subr.bf16.mxu0 0
    %4280 = vmatpush1.bf16.msra.mxu0 %v2873
    %4281 = vmatprep.subr.bf16.mxu0 0
    %4282 = vmatpush1.bf16.msra.mxu0 %v2874
    %4283 = vmatprep.subr.bf16.mxu0 0
    %4284 = vmatpush1.bf16.msra.mxu0 %v2875
    %4285 = vmatprep.subr.bf16.mxu0 0
    %4286 = vmatpush1.bf16.msra.mxu0 %v2876
    %4287 = vmatprep.subr.bf16.mxu0 0
    %4288 = vmatpush1.bf16.msra.mxu0 %v2877
    %4289 = vmatprep.subr.bf16.mxu0 0
    %4290 = vmatpush1.bf16.msra.mxu0 %v2878
    %4291 = vmatprep.subr.bf16.mxu0 0
    %4292 = vmatpush1.bf16.msra.mxu0 %v2879
    %4293 = vmatprep.subr.bf16.mxu0 0
    %4294 = vmatpush1.bf16.msra.mxu0 %v2880
    %4295 = vmatprep.subr.bf16.mxu0 0
    %4296 = vmatpush1.bf16.msra.mxu0 %v2881
    %4297 = vmatprep.subr.bf16.mxu0 0
    %4298 = vmatpush1.bf16.msra.mxu0 %v2882
    %4299 = vmatprep.subr.bf16.mxu0 0
    %4300 = vmatpush1.bf16.msra.mxu0 %v2883
    %4301 = vmatprep.subr.bf16.mxu0 0
    %4302 = vmatpush1.bf16.msra.mxu0 %v2884
    %4303 = vmatprep.subr.bf16.mxu0 0
    %4304 = vmatpush1.bf16.msra.mxu0 %v2885
    %4305 = vmatprep.subr.bf16.mxu0 0
    %4306 = vmatpush1.bf16.msra.mxu0 %v2886
    %4307 = vmatprep.mubr.bf16.mxu0 %v1408
    %4308 = vmatmul.mubr.bf16.gmra.mrb[0].mxu0 %v1407
    %v4309 = vpop.f32.mrb[0].mxu0
    %v4310 = vadd.f32 %v4213, %v4309
    %v4311 = vpop.f32.mrb[0].mxu0
    %v4312 = vpop.f32.mrb[0].mxu0
    %v4313 = vadd.f32 %v4216, %v4312
    %v4314 = vpop.f32.mrb[0].mxu0
    %4315 = vmatprep.mubr.bf16.mxu0 %v1435
    %4316 = vmatmul.mubr.bf16.gmra.mrb[0].mxu0 %v1434
    %v4317 = vpop.f32.mrb[0].mxu0
    %v4318 = vadd.f32 %v4221, %v4317
    %v4319 = vpop.f32.mrb[0].mxu0
    %v4320 = vpop.f32.mrb[0].mxu0
    %v4321 = vadd.f32 %v4224, %v4320
    %v4322 = vpop.f32.mrb[0].mxu0
    %4323 = vmatprep.mubr.bf16.mxu0 %v1462
    %4324 = vmatmul.mubr.bf16.gmra.mrb[0].mxu0 %v1461
    %v4325 = vpop.f32.mrb[0].mxu0
    %v4326 = vadd.f32 %v4229, %v4325
    %v4327 = vpop.f32.mrb[0].mxu0
    %v4328 = vpop.f32.mrb[0].mxu0
    %v4329 = vadd.f32 %v4232, %v4328
    %v4330 = vpop.f32.mrb[0].mxu0
    %4331 = vmatprep.mubr.bf16.mxu0 %v1489
    %4332 = vmatmul.mubr.bf16.gmra.mrb[0].mxu0 %v1488
    %v4333 = vpop.f32.mrb[0].mxu0
    %v4334 = vadd.f32 %v4237, %v4333
    %v4335 = vpop.f32.mrb[0].mxu0
    %v4336 = vpop.f32.mrb[0].mxu0
    %v4337 = vadd.f32 %v4240, %v4336
    %v4338 = vpop.f32.mrb[0].mxu0
    %4339 = vmatprep.mubr.bf16.mxu0 %v1516
    %4340 = vmatmul.mubr.bf16.gmra.mrb[0].mxu0 %v1515
    %v4341 = vpop.f32.mrb[0].mxu0
    %v4342 = vadd.f32 %v4245, %v4341
    %v4343 = vpop.f32.mrb[0].mxu0
    %v4344 = vpop.f32.mrb[0].mxu0
    %v4345 = vadd.f32 %v4248, %v4344
    %v4346 = vpop.f32.mrb[0].mxu0
    %4347 = vmatprep.mubr.bf16.mxu0 %v1543
    %4348 = vmatmul.mubr.bf16.gmra.mrb[0].mxu0 %v1542
    %v4349 = vpop.f32.mrb[0].mxu0
    %v4350 = vadd.f32 %v4253, %v4349
    %v4351 = vpop.f32.mrb[0].mxu0
    %v4352 = vpop.f32.mrb[0].mxu0
    %v4353 = vadd.f32 %v4256, %v4352
    %v4354 = vpop.f32.mrb[0].mxu0
    %4355 = vmatprep.mubr.bf16.mxu0 %v1570
    %4356 = vmatmul.mubr.bf16.gmra.mrb[0].mxu0 %v1569
    %v4357 = vpop.f32.mrb[0].mxu0
    %v4358 = vadd.f32 %v4261, %v4357
    %v4359 = vpop.f32.mrb[0].mxu0
    %v4360 = vpop.f32.mrb[0].mxu0
    %v4361 = vadd.f32 %v4264, %v4360
    %v4362 = vpop.f32.mrb[0].mxu0
    %4363 = vmatprep.mubr.bf16.mxu0 %v1597
    %4364 = vmatmul.mubr.bf16.gmra.mrb[0].mxu0 %v1596
    %v4365 = vpop.f32.mrb[0].mxu0
    %v4366 = vadd.f32 %v4269, %v4365
    %v4367 = vpop.f32.mrb[0].mxu0
    %v4368 = vpop.f32.mrb[0].mxu0
    %v4369 = vadd.f32 %v4272, %v4368
    %v4370 = vpop.f32.mrb[0].mxu0
    %4371 = vdwg.mxu0
    %4372 = vmatprep.subr.bf16.mxu0 0
    %4373 = vmatpush1.bf16.msra.mxu0 %v2887
    %4374 = vmatprep.subr.bf16.mxu0 0
    %4375 = vmatpush1.bf16.msra.mxu0 %v2888
    %4376 = vmatprep.subr.bf16.mxu0 0
    %4377 = vmatpush1.bf16.msra.mxu0 %v2889
    %4378 = vmatprep.subr.bf16.mxu0 0
    %4379 = vmatpush1.bf16.msra.mxu0 %v2890
    %4380 = vmatprep.subr.bf16.mxu0 0
    %4381 = vmatpush1.bf16.msra.mxu0 %v2891
    %4382 = vmatprep.subr.bf16.mxu0 0
    %4383 = vmatpush1.bf16.msra.mxu0 %v2892
    %4384 = vmatprep.subr.bf16.mxu0 0
    %4385 = vmatpush1.bf16.msra.mxu0 %v2893
    %4386 = vmatprep.subr.bf16.mxu0 0
    %4387 = vmatpush1.bf16.msra.mxu0 %v2894
    %4388 = vmatprep.subr.bf16.mxu0 0
    %4389 = vmatpush1.bf16.msra.mxu0 0
    %4390 = vmatprep.subr.bf16.mxu0 0
    %4391 = vmatpush1.bf16.msra.mxu0 0
    %4392 = vmatprep.subr.bf16.mxu0 0
    %4393 = vmatpush1.bf16.msra.mxu0 0
    %4394 = vmatprep.subr.bf16.mxu0 0
    %4395 = vmatpush1.bf16.msra.mxu0 0
    %4396 = vmatprep.subr.bf16.mxu0 0
    %4397 = vmatpush1.bf16.msra.mxu0 0
    %4398 = vmatprep.subr.bf16.mxu0 0
    %4399 = vmatpush1.bf16.msra.mxu0 0
    %4400 = vmatprep.subr.bf16.mxu0 0
    %4401 = vmatpush1.bf16.msra.mxu0 0
    %4402 = vmatprep.subr.bf16.mxu0 0
    %4403 = vmatpush1.bf16.msra.mxu0 0
    %4404 = vmatprep.mubr.bf16.mxu0 0
    %4405 = vmatmul.mubr.bf16.gmra.mrb[0].mxu0 %v1409
    %v4406 = vpop.f32.mrb[0].mxu0
    %v4407 = vadd.f32 %v4310, %v4406
    %v4408 = vpop.f32.mrb[0].mxu0
    %v4409 = vpop.f32.mrb[0].mxu0
    %v4410 = vadd.f32 %v4313, %v4409
    %v4411 = vpop.f32.mrb[0].mxu0
    %4412 = vmatprep.mubr.bf16.mxu0 0
    %4413 = vmatmul.mubr.bf16.gmra.mrb[0].mxu0 %v1436
    %v4414 = vpop.f32.mrb[0].mxu0
    %v4415 = vadd.f32 %v4318, %v4414
    %v4416 = vpop.f32.mrb[0].mxu0
    %v4417 = vpop.f32.mrb[0].mxu0
    %v4418 = vadd.f32 %v4321, %v4417
    %v4419 = vpop.f32.mrb[0].mxu0
    %4420 = vmatprep.mubr.bf16.mxu0 0
    %4421 = vmatmul.mubr.bf16.gmra.mrb[0].mxu0 %v1463
    %v4422 = vpop.f32.mrb[0].mxu0
    %v4423 = vadd.f32 %v4326, %v4422
    %v4424 = vpop.f32.mrb[0].mxu0
    %v4425 = vpop.f32.mrb[0].mxu0
    %v4426 = vadd.f32 %v4329, %v4425
    %v4427 = vpop.f32.mrb[0].mxu0
    %4428 = vmatprep.mubr.bf16.mxu0 0
    %4429 = vmatmul.mubr.bf16.gmra.mrb[0].mxu0 %v1490
    %v4430 = vpop.f32.mrb[0].mxu0
    %v4431 = vadd.f32 %v4334, %v4430
    %v4432 = vpop.f32.mrb[0].mxu0
    %v4433 = vpop.f32.mrb[0].mxu0
    %v4434 = vadd.f32 %v4337, %v4433
    %v4435 = vpop.f32.mrb[0].mxu0
    %4436 = vmatprep.mubr.bf16.mxu0 0
    %4437 = vmatmul.mubr.bf16.gmra.mrb[0].mxu0 %v1517
    %v4438 = vpop.f32.mrb[0].mxu0
    %v4439 = vadd.f32 %v4342, %v4438
    %v4440 = vpop.f32.mrb[0].mxu0
    %v4441 = vpop.f32.mrb[0].mxu0
    %v4442 = vadd.f32 %v4345, %v4441
    %v4443 = vpop.f32.mrb[0].mxu0
    %4444 = vmatprep.mubr.bf16.mxu0 0
    %4445 = vmatmul.mubr.bf16.gmra.mrb[0].mxu0 %v1544
    %v4446 = vpop.f32.mrb[0].mxu0
    %v4447 = vadd.f32 %v4350, %v4446
    %v4448 = vpop.f32.mrb[0].mxu0
    %v4449 = vpop.f32.mrb[0].mxu0
    %v4450 = vadd.f32 %v4353, %v4449
    %v4451 = vpop.f32.mrb[0].mxu0
    %4452 = vmatprep.mubr.bf16.mxu0 0
    %4453 = vmatmul.mubr.bf16.gmra.mrb[0].mxu0 %v1571
    %v4454 = vpop.f32.mrb[0].mxu0
    %v4455 = vadd.f32 %v4358, %v4454
    %v4456 = vpop.f32.mrb[0].mxu0
    %v4457 = vpop.f32.mrb[0].mxu0
    %v4458 = vadd.f32 %v4361, %v4457
    %v4459 = vpop.f32.mrb[0].mxu0
    %4460 = vmatprep.mubr.bf16.mxu0 0
    %4461 = vmatmul.mubr.bf16.gmra.mrb[0].mxu0 %v1598
    %v4462 = vpop.f32.mrb[0].mxu0
    %v4463 = vadd.f32 %v4366, %v4462
    %v4464 = vpop.f32.mrb[0].mxu0
    %v4465 = vpop.f32.mrb[0].mxu0
    %v4466 = vadd.f32 %v4369, %v4465
    %v4467 = vpop.f32.mrb[0].mxu0
    %4468 = vdwg.mxu0
    %vm4469 = vcmp.gt.f32.partialorder %v4407, 0.0
    %vm4470 = vcmp.gt.f32.partialorder %v4410, 0.0
    %vm4471 = vcmp.gt.f32.partialorder %v4415, 0.0
    %vm4472 = vcmp.gt.f32.partialorder %v4418, 0.0
    %vm4473 = vcmp.gt.f32.partialorder %v4423, 0.0
    %vm4474 = vcmp.gt.f32.partialorder %v4426, 0.0
    %vm4475 = vcmp.gt.f32.partialorder %v4431, 0.0
    %vm4476 = vcmp.gt.f32.partialorder %v4434, 0.0
    %vm4477 = vcmp.gt.f32.partialorder %v4439, 0.0
    %vm4478 = vcmp.gt.f32.partialorder %v4442, 0.0
    %vm4479 = vcmp.gt.f32.partialorder %v4447, 0.0
    %vm4480 = vcmp.gt.f32.partialorder %v4450, 0.0
    %vm4481 = vcmp.gt.f32.partialorder %v4455, 0.0
    %vm4482 = vcmp.gt.f32.partialorder %v4458, 0.0
    %vm4483 = vcmp.gt.f32.partialorder %v4463, 0.0
    %vm4484 = vcmp.gt.f32.partialorder %v4466, 0.0
    %v4485 = vmul.f32 %v4407, 0.01
    %v4486 = vmul.f32 %v4410, 0.01
    %v4487 = vmul.f32 %v4415, 0.01
    %v4488 = vmul.f32 %v4418, 0.01
    %v4489 = vmul.f32 %v4423, 0.01
    %v4490 = vmul.f32 %v4426, 0.01
    %v4491 = vmul.f32 %v4431, 0.01
    %v4492 = vmul.f32 %v4434, 0.01
    %v4493 = vmul.f32 %v4439, 0.01
    %v4494 = vmul.f32 %v4442, 0.01
    %v4495 = vmul.f32 %v4447, 0.01
    %v4496 = vmul.f32 %v4450, 0.01
    %v4497 = vmul.f32 %v4455, 0.01
    %v4498 = vmul.f32 %v4458, 0.01
    %v4499 = vmul.f32 %v4463, 0.01
    %v4500 = vmul.f32 %v4466, 0.01
    %v4501 = vsel %vm4469, %v4407, %v4485
    %v4502 = vsel %vm4470, %v4410, %v4486
    %v4503 = vsel %vm4471, %v4415, %v4487
    %v4504 = vsel %vm4472, %v4418, %v4488
    %v4505 = vsel %vm4473, %v4423, %v4489
    %v4506 = vsel %vm4474, %v4426, %v4490
    %v4507 = vsel %vm4475, %v4431, %v4491
    %v4508 = vsel %vm4476, %v4434, %v4492
    %v4509 = vsel %vm4477, %v4439, %v4493
    %v4510 = vsel %vm4478, %v4442, %v4494
    %v4511 = vsel %vm4479, %v4447, %v4495
    %v4512 = vsel %vm4480, %v4450, %v4496
    %v4513 = vsel %vm4481, %v4455, %v4497
    %v4514 = vsel %vm4482, %v4458, %v4498
    %v4515 = vsel %vm4483, %v4463, %v4499
    %v4516 = vsel %vm4484, %v4466, %v4500
    %v4517 = vpack.c.bf16 %v4502, %v4501
    %v4518 = vpack.c.bf16 %v4504, %v4503
    %v4519 = vpack.c.bf16 %v4506, %v4505
    %v4520 = vpack.c.bf16 %v4508, %v4507
    %v4521 = vpack.c.bf16 %v4510, %v4509
    %v4522 = vpack.c.bf16 %v4512, %v4511
    %v4523 = vpack.c.bf16 %v4514, %v4513
    %v4524 = vpack.c.bf16 %v4516, %v4515
    %v4525 = vld [vmem:[%s3] sm:$0xf]
    %v4526 = vld [vmem:[%s3 + $0x4] sm:$0xf]
    %v4527 = vld [vmem:[%s3 + $0x8] sm:$0xf]
    %v4528 = vld [vmem:[%s3 + $0xc] sm:$0xf]
    %v4529 = vld [vmem:[%s3 + $0x10] sm:$0xf]
    %v4530 = vld [vmem:[%s3 + $0x14] sm:$0xf]
    %v4531 = vld [vmem:[%s3 + $0x18] sm:$0xf]
    %v4532 = vld [vmem:[%s3 + $0x1c] sm:$0xf]
    %v4533 = vld [vmem:[%s3 + $0x20] sm:$0xf]
    %v4534 = vld [vmem:[%s3 + $0x24] sm:$0xf]
    %v4535 = vld [vmem:[%s3 + $0x28] sm:$0xf]
    %v4536 = vld [vmem:[%s3 + $0x2c] sm:$0xf]
    %v4537 = vld [vmem:[%s3 + $0x30] sm:$0xf]
    %v4538 = vld [vmem:[%s3 + $0x34] sm:$0xf]
    %v4539 = vld [vmem:[%s3 + $0x38] sm:$0xf]
    %v4540 = vld [vmem:[%s3 + $0x3c] sm:$0xf]
    %s4541 = scalar_lea.vmem %s3, 64
    %v4542 = vld [vmem:[%s4541] sm:$0xf]
    %v4543 = vld [vmem:[%s4541 + $0x4] sm:$0xf]
    %v4544 = vld [vmem:[%s4541 + $0x8] sm:$0xf]
    %v4545 = vld [vmem:[%s4541 + $0xc] sm:$0xf]
    %v4546 = vld [vmem:[%s4541 + $0x10] sm:$0xf]
    %v4547 = vld [vmem:[%s4541 + $0x14] sm:$0xf]
    %v4548 = vld [vmem:[%s4541 + $0x18] sm:$0xf]
    %v4549 = vld [vmem:[%s4541 + $0x1c] sm:$0xf]
    %v4550 = vld [vmem:[%s4541 + $0x20] sm:$0xf]
    %v4551 = vld [vmem:[%s4541 + $0x24] sm:$0xf]
    %v4552 = vld [vmem:[%s4541 + $0x28] sm:$0xf]
    %v4553 = vld [vmem:[%s4541 + $0x2c] sm:$0xf]
    %v4554 = vld [vmem:[%s4541 + $0x30] sm:$0xf]
    %v4555 = vld [vmem:[%s4541 + $0x34] sm:$0xf]
    %v4556 = vld [vmem:[%s4541 + $0x38] sm:$0xf]
    %v4557 = vld [vmem:[%s4541 + $0x3c] sm:$0xf]
    %v4574 = vunpack.c.l.b16 %v4542
    %v4575 = vunpack.c.l.b16 %v4543
    %v4576 = vunpack.c.l.b16 %v4544
    %v4577 = vunpack.c.l.b16 %v4545
    %v4578 = vunpack.c.l.b16 %v4546
    %v4579 = vunpack.c.l.b16 %v4547
    %v4580 = vunpack.c.l.b16 %v4548
    %v4581 = vunpack.c.l.b16 %v4549
    %v4582 = vunpack.c.l.b16 %v4550
    %v4583 = vunpack.c.l.b16 %v4551
    %v4584 = vunpack.c.l.b16 %v4552
    %v4585 = vunpack.c.l.b16 %v4553
    %v4586 = vunpack.c.l.b16 %v4554
    %v4587 = vunpack.c.l.b16 %v4555
    %v4588 = vunpack.c.l.b16 %v4556
    %v4589 = vunpack.c.l.b16 %v4557
    %v4590 = vpack.c.b16 %v4575, %v4574
    %v4591 = vpack.c.b16 %v4577, %v4576
    %v4592 = vpack.c.b16 %v4579, %v4578
    %v4593 = vpack.c.b16 %v4581, %v4580
    %v4594 = vpack.c.b16 %v4583, %v4582
    %v4595 = vpack.c.b16 %v4585, %v4584
    %v4596 = vpack.c.b16 %v4587, %v4586
    %v4597 = vpack.c.b16 %v4589, %v4588
    %4606 = vmatprep.subr.bf16.mxu0 0
    %4607 = vmatpush1.bf16.msra.mxu0 %v4590
    %4608 = vmatprep.subr.bf16.mxu0 0
    %4609 = vmatpush1.bf16.msra.mxu0 %v4591
    %4610 = vmatprep.subr.bf16.mxu0 0
    %4611 = vmatpush1.bf16.msra.mxu0 %v4592
    %4612 = vmatprep.subr.bf16.mxu0 0
    %4613 = vmatpush1.bf16.msra.mxu0 %v4593
    %4614 = vmatprep.subr.bf16.mxu0 0
    %4615 = vmatpush1.bf16.msra.mxu0 %v4594
    %4616 = vmatprep.subr.bf16.mxu0 0
    %4617 = vmatpush1.bf16.msra.mxu0 %v4595
    %4618 = vmatprep.subr.bf16.mxu0 0
    %4619 = vmatpush1.bf16.msra.mxu0 %v4596
    %4620 = vmatprep.subr.bf16.mxu0 0
    %4621 = vmatpush1.bf16.msra.mxu0 %v4597
    %4622 = vmatprep.subr.bf16.mxu0 0
    %4623 = vmatpush1.bf16.msra.mxu0 0
    %4624 = vmatprep.subr.bf16.mxu0 0
    %4625 = vmatpush1.bf16.msra.mxu0 0
    %4626 = vmatprep.subr.bf16.mxu0 0
    %4627 = vmatpush1.bf16.msra.mxu0 0
    %4628 = vmatprep.subr.bf16.mxu0 0
    %4629 = vmatpush1.bf16.msra.mxu0 0
    %4630 = vmatprep.subr.bf16.mxu0 0
    %4631 = vmatpush1.bf16.msra.mxu0 0
    %4632 = vmatprep.subr.bf16.mxu0 0
    %4633 = vmatpush1.bf16.msra.mxu0 0
    %4634 = vmatprep.subr.bf16.mxu0 0
    %4635 = vmatpush1.bf16.msra.mxu0 0
    %4636 = vmatprep.subr.bf16.mxu0 0
    %4637 = vmatpush1.bf16.msra.mxu0 0
    %4638 = vmatprep.mubr.bf16.mxu0 0
    %4639 = vmatmul.mubr.bf16.gmra.mrb[0].mxu0 %v4518
    %v4640 = vpop.f32.mrb[0].mxu0
    %v4641 = vadd.f32 0.0, %v4640
    %v4642 = vpop.f32.mrb[0].mxu0
    %v4643 = vpop.f32.mrb[0].mxu0
    %v4644 = vadd.f32 0.0, %v4643
    %v4645 = vpop.f32.mrb[0].mxu0
    %4646 = vdwg.mxu0
    %v4663 = vunpack.c.l.b16 %v4525
    %v4664 = vunpack.c.l.b16 %v4526
    %v4665 = vunpack.c.l.b16 %v4527
    %v4666 = vunpack.c.l.b16 %v4528
    %v4667 = vunpack.c.l.b16 %v4529
    %v4668 = vunpack.c.l.b16 %v4530
    %v4669 = vunpack.c.l.b16 %v4531
    %v4670 = vunpack.c.l.b16 %v4532
    %v4671 = vunpack.c.l.b16 %v4533
    %v4672 = vunpack.c.l.b16 %v4534
    %v4673 = vunpack.c.l.b16 %v4535
    %v4674 = vunpack.c.l.b16 %v4536
    %v4675 = vunpack.c.l.b16 %v4537
    %v4676 = vunpack.c.l.b16 %v4538
    %v4677 = vunpack.c.l.b16 %v4539
    %v4678 = vunpack.c.l.b16 %v4540
    %v4679 = vpack.c.b16 %v4664, %v4663
    %v4680 = vpack.c.b16 %v4666, %v4665
    %v4681 = vpack.c.b16 %v4668, %v4667
    %v4682 = vpack.c.b16 %v4670, %v4669
    %v4683 = vpack.c.b16 %v4672, %v4671
    %v4684 = vpack.c.b16 %v4674, %v4673
    %v4685 = vpack.c.b16 %v4676, %v4675
    %v4686 = vpack.c.b16 %v4678, %v4677
    %4695 = vmatprep.subr.bf16.mxu0 0
    %4696 = vmatpush1.bf16.msra.mxu0 %v4679
    %4697 = vmatprep.subr.bf16.mxu0 0
    %4698 = vmatpush1.bf16.msra.mxu0 %v4680
    %4699 = vmatprep.subr.bf16.mxu0 0
    %4700 = vmatpush1.bf16.msra.mxu0 %v4681
    %4701 = vmatprep.subr.bf16.mxu0 0
    %4702 = vmatpush1.bf16.msra.mxu0 %v4682
    %4703 = vmatprep.subr.bf16.mxu0 0
    %4704 = vmatpush1.bf16.msra.mxu0 %v4683
    %4705 = vmatprep.subr.bf16.mxu0 0
    %4706 = vmatpush1.bf16.msra.mxu0 %v4684
    %4707 = vmatprep.subr.bf16.mxu0 0
    %4708 = vmatpush1.bf16.msra.mxu0 %v4685
    %4709 = vmatprep.subr.bf16.mxu0 0
    %4710 = vmatpush1.bf16.msra.mxu0 %v4686
    %4711 = vmatprep.subr.bf16.mxu0 0
    %4712 = vmatpush1.bf16.msra.mxu0 0
    %4713 = vmatprep.subr.bf16.mxu0 0
    %4714 = vmatpush1.bf16.msra.mxu0 0
    %4715 = vmatprep.subr.bf16.mxu0 0
    %4716 = vmatpush1.bf16.msra.mxu0 0
    %4717 = vmatprep.subr.bf16.mxu0 0
    %4718 = vmatpush1.bf16.msra.mxu0 0
    %4719 = vmatprep.subr.bf16.mxu0 0
    %4720 = vmatpush1.bf16.msra.mxu0 0
    %4721 = vmatprep.subr.bf16.mxu0 0
    %4722 = vmatpush1.bf16.msra.mxu0 0
    %4723 = vmatprep.subr.bf16.mxu0 0
    %4724 = vmatpush1.bf16.msra.mxu0 0
    %4725 = vmatprep.subr.bf16.mxu0 0
    %4726 = vmatpush1.bf16.msra.mxu0 0
    %4727 = vmatprep.mubr.bf16.mxu0 0
    %4728 = vmatmul.mubr.bf16.gmra.mrb[0].mxu0 %v4517
    %v4729 = vpop.f32.mrb[0].mxu0
    %v4730 = vadd.f32 %v4641, %v4729
    %v4731 = vpop.f32.mrb[0].mxu0
    %v4732 = vpop.f32.mrb[0].mxu0
    %v4733 = vadd.f32 %v4644, %v4732
    %v4734 = vpop.f32.mrb[0].mxu0
    %4735 = vdwg.mxu0
    %s4736 = scalar_lea.vmem %s3, 128
    %v4737 = vld [vmem:[%s4736] sm:$0xf]
    %v4738 = vld [vmem:[%s4736 + $0x4] sm:$0xf]
    %v4739 = vld [vmem:[%s4736 + $0x8] sm:$0xf]
    %v4740 = vld [vmem:[%s4736 + $0xc] sm:$0xf]
    %v4741 = vld [vmem:[%s4736 + $0x10] sm:$0xf]
    %v4742 = vld [vmem:[%s4736 + $0x14] sm:$0xf]
    %v4743 = vld [vmem:[%s4736 + $0x18] sm:$0xf]
    %v4744 = vld [vmem:[%s4736 + $0x1c] sm:$0xf]
    %v4745 = vld [vmem:[%s4736 + $0x20] sm:$0xf]
    %v4746 = vld [vmem:[%s4736 + $0x24] sm:$0xf]
    %v4747 = vld [vmem:[%s4736 + $0x28] sm:$0xf]
    %v4748 = vld [vmem:[%s4736 + $0x2c] sm:$0xf]
    %v4749 = vld [vmem:[%s4736 + $0x30] sm:$0xf]
    %v4750 = vld [vmem:[%s4736 + $0x34] sm:$0xf]
    %v4751 = vld [vmem:[%s4736 + $0x38] sm:$0xf]
    %v4752 = vld [vmem:[%s4736 + $0x3c] sm:$0xf]
    %v4769 = vunpack.c.l.b16 %v4737
    %v4770 = vunpack.c.l.b16 %v4738
    %v4771 = vunpack.c.l.b16 %v4739
    %v4772 = vunpack.c.l.b16 %v4740
    %v4773 = vunpack.c.l.b16 %v4741
    %v4774 = vunpack.c.l.b16 %v4742
    %v4775 = vunpack.c.l.b16 %v4743
    %v4776 = vunpack.c.l.b16 %v4744
    %v4777 = vunpack.c.l.b16 %v4745
    %v4778 = vunpack.c.l.b16 %v4746
    %v4779 = vunpack.c.l.b16 %v4747
    %v4780 = vunpack.c.l.b16 %v4748
    %v4781 = vunpack.c.l.b16 %v4749
    %v4782 = vunpack.c.l.b16 %v4750
    %v4783 = vunpack.c.l.b16 %v4751
    %v4784 = vunpack.c.l.b16 %v4752
    %v4785 = vpack.c.b16 %v4770, %v4769
    %v4786 = vpack.c.b16 %v4772, %v4771
    %v4787 = vpack.c.b16 %v4774, %v4773
    %v4788 = vpack.c.b16 %v4776, %v4775
    %v4789 = vpack.c.b16 %v4778, %v4777
    %v4790 = vpack.c.b16 %v4780, %v4779
    %v4791 = vpack.c.b16 %v4782, %v4781
    %v4792 = vpack.c.b16 %v4784, %v4783
    %4801 = vmatprep.subr.bf16.mxu0 0
    %4802 = vmatpush1.bf16.msra.mxu0 %v4785
    %4803 = vmatprep.subr.bf16.mxu0 0
    %4804 = vmatpush1.bf16.msra.mxu0 %v4786
    %4805 = vmatprep.subr.bf16.mxu0 0
    %4806 = vmatpush1.bf16.msra.mxu0 %v4787
    %4807 = vmatprep.subr.bf16.mxu0 0
    %4808 = vmatpush1.bf16.msra.mxu0 %v4788
    %4809 = vmatprep.subr.bf16.mxu0 0
    %4810 = vmatpush1.bf16.msra.mxu0 %v4789
    %4811 = vmatprep.subr.bf16.mxu0 0
    %4812 = vmatpush1.bf16.msra.mxu0 %v4790
    %4813 = vmatprep.subr.bf16.mxu0 0
    %4814 = vmatpush1.bf16.msra.mxu0 %v4791
    %4815 = vmatprep.subr.bf16.mxu0 0
    %4816 = vmatpush1.bf16.msra.mxu0 %v4792
    %4817 = vmatprep.subr.bf16.mxu0 0
    %4818 = vmatpush1.bf16.msra.mxu0 0
    %4819 = vmatprep.subr.bf16.mxu0 0
    %4820 = vmatpush1.bf16.msra.mxu0 0
    %4821 = vmatprep.subr.bf16.mxu0 0
    %4822 = vmatpush1.bf16.msra.mxu0 0
    %4823 = vmatprep.subr.bf16.mxu0 0
    %4824 = vmatpush1.bf16.msra.mxu0 0
    %4825 = vmatprep.subr.bf16.mxu0 0
    %4826 = vmatpush1.bf16.msra.mxu0 0
    %4827 = vmatprep.subr.bf16.mxu0 0
    %4828 = vmatpush1.bf16.msra.mxu0 0
    %4829 = vmatprep.subr.bf16.mxu0 0
    %4830 = vmatpush1.bf16.msra.mxu0 0
    %4831 = vmatprep.subr.bf16.mxu0 0
    %4832 = vmatpush1.bf16.msra.mxu0 0
    %4833 = vmatprep.mubr.bf16.mxu0 0
    %4834 = vmatmul.mubr.bf16.gmra.mrb[0].mxu0 %v4519
    %v4835 = vpop.f32.mrb[0].mxu0
    %v4836 = vadd.f32 0.0, %v4835
    %v4837 = vpop.f32.mrb[0].mxu0
    %v4838 = vpop.f32.mrb[0].mxu0
    %v4839 = vadd.f32 0.0, %v4838
    %v4840 = vpop.f32.mrb[0].mxu0
    %4841 = vdwg.mxu0
    %v4842 = vadd.f32 %v4730, %v4836
    %v4843 = vadd.f32 %v4733, %v4839
    %s4844 = scalar_lea.vmem %s3, 192
    %v4845 = vld [vmem:[%s4844] sm:$0xf]
    %v4846 = vld [vmem:[%s4844 + $0x4] sm:$0xf]
    %v4847 = vld [vmem:[%s4844 + $0x8] sm:$0xf]
    %v4848 = vld [vmem:[%s4844 + $0xc] sm:$0xf]
    %v4849 = vld [vmem:[%s4844 + $0x10] sm:$0xf]
    %v4850 = vld [vmem:[%s4844 + $0x14] sm:$0xf]
    %v4851 = vld [vmem:[%s4844 + $0x18] sm:$0xf]
    %v4852 = vld [vmem:[%s4844 + $0x1c] sm:$0xf]
    %v4853 = vld [vmem:[%s4844 + $0x20] sm:$0xf]
    %v4854 = vld [vmem:[%s4844 + $0x24] sm:$0xf]
    %v4855 = vld [vmem:[%s4844 + $0x28] sm:$0xf]
    %v4856 = vld [vmem:[%s4844 + $0x2c] sm:$0xf]
    %v4857 = vld [vmem:[%s4844 + $0x30] sm:$0xf]
    %v4858 = vld [vmem:[%s4844 + $0x34] sm:$0xf]
    %v4859 = vld [vmem:[%s4844 + $0x38] sm:$0xf]
    %v4860 = vld [vmem:[%s4844 + $0x3c] sm:$0xf]
    %v4877 = vunpack.c.l.b16 %v4845
    %v4878 = vunpack.c.l.b16 %v4846
    %v4879 = vunpack.c.l.b16 %v4847
    %v4880 = vunpack.c.l.b16 %v4848
    %v4881 = vunpack.c.l.b16 %v4849
    %v4882 = vunpack.c.l.b16 %v4850
    %v4883 = vunpack.c.l.b16 %v4851
    %v4884 = vunpack.c.l.b16 %v4852
    %v4885 = vunpack.c.l.b16 %v4853
    %v4886 = vunpack.c.l.b16 %v4854
    %v4887 = vunpack.c.l.b16 %v4855
    %v4888 = vunpack.c.l.b16 %v4856
    %v4889 = vunpack.c.l.b16 %v4857
    %v4890 = vunpack.c.l.b16 %v4858
    %v4891 = vunpack.c.l.b16 %v4859
    %v4892 = vunpack.c.l.b16 %v4860
    %v4893 = vpack.c.b16 %v4878, %v4877
    %v4894 = vpack.c.b16 %v4880, %v4879
    %v4895 = vpack.c.b16 %v4882, %v4881
    %v4896 = vpack.c.b16 %v4884, %v4883
    %v4897 = vpack.c.b16 %v4886, %v4885
    %v4898 = vpack.c.b16 %v4888, %v4887
    %v4899 = vpack.c.b16 %v4890, %v4889
    %v4900 = vpack.c.b16 %v4892, %v4891
    %4909 = vmatprep.subr.bf16.mxu0 0
    %4910 = vmatpush1.bf16.msra.mxu0 %v4893
    %4911 = vmatprep.subr.bf16.mxu0 0
    %4912 = vmatpush1.bf16.msra.mxu0 %v4894
    %4913 = vmatprep.subr.bf16.mxu0 0
    %4914 = vmatpush1.bf16.msra.mxu0 %v4895
    %4915 = vmatprep.subr.bf16.mxu0 0
    %4916 = vmatpush1.bf16.msra.mxu0 %v4896
    %4917 = vmatprep.subr.bf16.mxu0 0
    %4918 = vmatpush1.bf16.msra.mxu0 %v4897
    %4919 = vmatprep.subr.bf16.mxu0 0
    %4920 = vmatpush1.bf16.msra.mxu0 %v4898
    %4921 = vmatprep.subr.bf16.mxu0 0
    %4922 = vmatpush1.bf16.msra.mxu0 %v4899
    %4923 = vmatprep.subr.bf16.mxu0 0
    %4924 = vmatpush1.bf16.msra.mxu0 %v4900
    %4925 = vmatprep.subr.bf16.mxu0 0
    %4926 = vmatpush1.bf16.msra.mxu0 0
    %4927 = vmatprep.subr.bf16.mxu0 0
    %4928 = vmatpush1.bf16.msra.mxu0 0
    %4929 = vmatprep.subr.bf16.mxu0 0
    %4930 = vmatpush1.bf16.msra.mxu0 0
    %4931 = vmatprep.subr.bf16.mxu0 0
    %4932 = vmatpush1.bf16.msra.mxu0 0
    %4933 = vmatprep.subr.bf16.mxu0 0
    %4934 = vmatpush1.bf16.msra.mxu0 0
    %4935 = vmatprep.subr.bf16.mxu0 0
    %4936 = vmatpush1.bf16.msra.mxu0 0
    %4937 = vmatprep.subr.bf16.mxu0 0
    %4938 = vmatpush1.bf16.msra.mxu0 0
    %4939 = vmatprep.subr.bf16.mxu0 0
    %4940 = vmatpush1.bf16.msra.mxu0 0
    %4941 = vmatprep.mubr.bf16.mxu0 0
    %4942 = vmatmul.mubr.bf16.gmra.mrb[0].mxu0 %v4520
    %v4943 = vpop.f32.mrb[0].mxu0
    %v4944 = vadd.f32 0.0, %v4943
    %v4945 = vpop.f32.mrb[0].mxu0
    %v4946 = vpop.f32.mrb[0].mxu0
    %v4947 = vadd.f32 0.0, %v4946
    %v4948 = vpop.f32.mrb[0].mxu0
    %4949 = vdwg.mxu0
    %v4950 = vadd.f32 %v4842, %v4944
    %v4951 = vadd.f32 %v4843, %v4947
    %s4952 = scalar_lea.vmem %s3, 256
    %v4953 = vld [vmem:[%s4952] sm:$0xf]
    %v4954 = vld [vmem:[%s4952 + $0x4] sm:$0xf]
    %v4955 = vld [vmem:[%s4952 + $0x8] sm:$0xf]
    %v4956 = vld [vmem:[%s4952 + $0xc] sm:$0xf]
    %v4957 = vld [vmem:[%s4952 + $0x10] sm:$0xf]
    %v4958 = vld [vmem:[%s4952 + $0x14] sm:$0xf]
    %v4959 = vld [vmem:[%s4952 + $0x18] sm:$0xf]
    %v4960 = vld [vmem:[%s4952 + $0x1c] sm:$0xf]
    %v4961 = vld [vmem:[%s4952 + $0x20] sm:$0xf]
    %v4962 = vld [vmem:[%s4952 + $0x24] sm:$0xf]
    %v4963 = vld [vmem:[%s4952 + $0x28] sm:$0xf]
    %v4964 = vld [vmem:[%s4952 + $0x2c] sm:$0xf]
    %v4965 = vld [vmem:[%s4952 + $0x30] sm:$0xf]
    %v4966 = vld [vmem:[%s4952 + $0x34] sm:$0xf]
    %v4967 = vld [vmem:[%s4952 + $0x38] sm:$0xf]
    %v4968 = vld [vmem:[%s4952 + $0x3c] sm:$0xf]
    %v4985 = vunpack.c.l.b16 %v4953
    %v4986 = vunpack.c.l.b16 %v4954
    %v4987 = vunpack.c.l.b16 %v4955
    %v4988 = vunpack.c.l.b16 %v4956
    %v4989 = vunpack.c.l.b16 %v4957
    %v4990 = vunpack.c.l.b16 %v4958
    %v4991 = vunpack.c.l.b16 %v4959
    %v4992 = vunpack.c.l.b16 %v4960
    %v4993 = vunpack.c.l.b16 %v4961
    %v4994 = vunpack.c.l.b16 %v4962
    %v4995 = vunpack.c.l.b16 %v4963
    %v4996 = vunpack.c.l.b16 %v4964
    %v4997 = vunpack.c.l.b16 %v4965
    %v4998 = vunpack.c.l.b16 %v4966
    %v4999 = vunpack.c.l.b16 %v4967
    %v5000 = vunpack.c.l.b16 %v4968
    %v5001 = vpack.c.b16 %v4986, %v4985
    %v5002 = vpack.c.b16 %v4988, %v4987
    %v5003 = vpack.c.b16 %v4990, %v4989
    %v5004 = vpack.c.b16 %v4992, %v4991
    %v5005 = vpack.c.b16 %v4994, %v4993
    %v5006 = vpack.c.b16 %v4996, %v4995
    %v5007 = vpack.c.b16 %v4998, %v4997
    %v5008 = vpack.c.b16 %v5000, %v4999
    %5017 = vmatprep.subr.bf16.mxu0 0
    %5018 = vmatpush1.bf16.msra.mxu0 %v5001
    %5019 = vmatprep.subr.bf16.mxu0 0
    %5020 = vmatpush1.bf16.msra.mxu0 %v5002
    %5021 = vmatprep.subr.bf16.mxu0 0
    %5022 = vmatpush1.bf16.msra.mxu0 %v5003
    %5023 = vmatprep.subr.bf16.mxu0 0
    %5024 = vmatpush1.bf16.msra.mxu0 %v5004
    %5025 = vmatprep.subr.bf16.mxu0 0
    %5026 = vmatpush1.bf16.msra.mxu0 %v5005
    %5027 = vmatprep.subr.bf16.mxu0 0
    %5028 = vmatpush1.bf16.msra.mxu0 %v5006
    %5029 = vmatprep.subr.bf16.mxu0 0
    %5030 = vmatpush1.bf16.msra.mxu0 %v5007
    %5031 = vmatprep.subr.bf16.mxu0 0
    %5032 = vmatpush1.bf16.msra.mxu0 %v5008
    %5033 = vmatprep.subr.bf16.mxu0 0
    %5034 = vmatpush1.bf16.msra.mxu0 0
    %5035 = vmatprep.subr.bf16.mxu0 0
    %5036 = vmatpush1.bf16.msra.mxu0 0
    %5037 = vmatprep.subr.bf16.mxu0 0
    %5038 = vmatpush1.bf16.msra.mxu0 0
    %5039 = vmatprep.subr.bf16.mxu0 0
    %5040 = vmatpush1.bf16.msra.mxu0 0
    %5041 = vmatprep.subr.bf16.mxu0 0
    %5042 = vmatpush1.bf16.msra.mxu0 0
    %5043 = vmatprep.subr.bf16.mxu0 0
    %5044 = vmatpush1.bf16.msra.mxu0 0
    %5045 = vmatprep.subr.bf16.mxu0 0
    %5046 = vmatpush1.bf16.msra.mxu0 0
    %5047 = vmatprep.subr.bf16.mxu0 0
    %5048 = vmatpush1.bf16.msra.mxu0 0
    %5049 = vmatprep.mubr.bf16.mxu0 0
    %5050 = vmatmul.mubr.bf16.gmra.mrb[0].mxu0 %v4521
    %v5051 = vpop.f32.mrb[0].mxu0
    %v5052 = vadd.f32 0.0, %v5051
    %v5053 = vpop.f32.mrb[0].mxu0
    %v5054 = vpop.f32.mrb[0].mxu0
    %v5055 = vadd.f32 0.0, %v5054
    %v5056 = vpop.f32.mrb[0].mxu0
    %5057 = vdwg.mxu0
    %v5058 = vadd.f32 %v4950, %v5052
    %v5059 = vadd.f32 %v4951, %v5055
    %s5060 = scalar_lea.vmem %s3, 320
    %v5061 = vld [vmem:[%s5060] sm:$0xf]
    %v5062 = vld [vmem:[%s5060 + $0x4] sm:$0xf]
    %v5063 = vld [vmem:[%s5060 + $0x8] sm:$0xf]
    %v5064 = vld [vmem:[%s5060 + $0xc] sm:$0xf]
    %v5065 = vld [vmem:[%s5060 + $0x10] sm:$0xf]
    %v5066 = vld [vmem:[%s5060 + $0x14] sm:$0xf]
    %v5067 = vld [vmem:[%s5060 + $0x18] sm:$0xf]
    %v5068 = vld [vmem:[%s5060 + $0x1c] sm:$0xf]
    %v5069 = vld [vmem:[%s5060 + $0x20] sm:$0xf]
    %v5070 = vld [vmem:[%s5060 + $0x24] sm:$0xf]
    %v5071 = vld [vmem:[%s5060 + $0x28] sm:$0xf]
    %v5072 = vld [vmem:[%s5060 + $0x2c] sm:$0xf]
    %v5073 = vld [vmem:[%s5060 + $0x30] sm:$0xf]
    %v5074 = vld [vmem:[%s5060 + $0x34] sm:$0xf]
    %v5075 = vld [vmem:[%s5060 + $0x38] sm:$0xf]
    %v5076 = vld [vmem:[%s5060 + $0x3c] sm:$0xf]
    %v5093 = vunpack.c.l.b16 %v5061
    %v5094 = vunpack.c.l.b16 %v5062
    %v5095 = vunpack.c.l.b16 %v5063
    %v5096 = vunpack.c.l.b16 %v5064
    %v5097 = vunpack.c.l.b16 %v5065
    %v5098 = vunpack.c.l.b16 %v5066
    %v5099 = vunpack.c.l.b16 %v5067
    %v5100 = vunpack.c.l.b16 %v5068
    %v5101 = vunpack.c.l.b16 %v5069
    %v5102 = vunpack.c.l.b16 %v5070
    %v5103 = vunpack.c.l.b16 %v5071
    %v5104 = vunpack.c.l.b16 %v5072
    %v5105 = vunpack.c.l.b16 %v5073
    %v5106 = vunpack.c.l.b16 %v5074
    %v5107 = vunpack.c.l.b16 %v5075
    %v5108 = vunpack.c.l.b16 %v5076
    %v5109 = vpack.c.b16 %v5094, %v5093
    %v5110 = vpack.c.b16 %v5096, %v5095
    %v5111 = vpack.c.b16 %v5098, %v5097
    %v5112 = vpack.c.b16 %v5100, %v5099
    %v5113 = vpack.c.b16 %v5102, %v5101
    %v5114 = vpack.c.b16 %v5104, %v5103
    %v5115 = vpack.c.b16 %v5106, %v5105
    %v5116 = vpack.c.b16 %v5108, %v5107
    %5125 = vmatprep.subr.bf16.mxu0 0
    %5126 = vmatpush1.bf16.msra.mxu0 %v5109
    %5127 = vmatprep.subr.bf16.mxu0 0
    %5128 = vmatpush1.bf16.msra.mxu0 %v5110
    %5129 = vmatprep.subr.bf16.mxu0 0
    %5130 = vmatpush1.bf16.msra.mxu0 %v5111
    %5131 = vmatprep.subr.bf16.mxu0 0
    %5132 = vmatpush1.bf16.msra.mxu0 %v5112
    %5133 = vmatprep.subr.bf16.mxu0 0
    %5134 = vmatpush1.bf16.msra.mxu0 %v5113
    %5135 = vmatprep.subr.bf16.mxu0 0
    %5136 = vmatpush1.bf16.msra.mxu0 %v5114
    %5137 = vmatprep.subr.bf16.mxu0 0
    %5138 = vmatpush1.bf16.msra.mxu0 %v5115
    %5139 = vmatprep.subr.bf16.mxu0 0
    %5140 = vmatpush1.bf16.msra.mxu0 %v5116
    %5141 = vmatprep.subr.bf16.mxu0 0
    %5142 = vmatpush1.bf16.msra.mxu0 0
    %5143 = vmatprep.subr.bf16.mxu0 0
    %5144 = vmatpush1.bf16.msra.mxu0 0
    %5145 = vmatprep.subr.bf16.mxu0 0
    %5146 = vmatpush1.bf16.msra.mxu0 0
    %5147 = vmatprep.subr.bf16.mxu0 0
    %5148 = vmatpush1.bf16.msra.mxu0 0
    %5149 = vmatprep.subr.bf16.mxu0 0
    %5150 = vmatpush1.bf16.msra.mxu0 0
    %5151 = vmatprep.subr.bf16.mxu0 0
    %5152 = vmatpush1.bf16.msra.mxu0 0
    %5153 = vmatprep.subr.bf16.mxu0 0
    %5154 = vmatpush1.bf16.msra.mxu0 0
    %5155 = vmatprep.subr.bf16.mxu0 0
    %5156 = vmatpush1.bf16.msra.mxu0 0
    %5157 = vmatprep.mubr.bf16.mxu0 0
    %5158 = vmatmul.mubr.bf16.gmra.mrb[0].mxu0 %v4522
    %v5159 = vpop.f32.mrb[0].mxu0
    %v5160 = vadd.f32 0.0, %v5159
    %v5161 = vpop.f32.mrb[0].mxu0
    %v5162 = vpop.f32.mrb[0].mxu0
    %v5163 = vadd.f32 0.0, %v5162
    %v5164 = vpop.f32.mrb[0].mxu0
    %5165 = vdwg.mxu0
    %v5166 = vadd.f32 %v5058, %v5160
    %v5167 = vadd.f32 %v5059, %v5163
    %s5168 = scalar_lea.vmem %s3, 384
    %v5169 = vld [vmem:[%s5168] sm:$0xf]
    %v5170 = vld [vmem:[%s5168 + $0x4] sm:$0xf]
    %v5171 = vld [vmem:[%s5168 + $0x8] sm:$0xf]
    %v5172 = vld [vmem:[%s5168 + $0xc] sm:$0xf]
    %v5173 = vld [vmem:[%s5168 + $0x10] sm:$0xf]
    %v5174 = vld [vmem:[%s5168 + $0x14] sm:$0xf]
    %v5175 = vld [vmem:[%s5168 + $0x18] sm:$0xf]
    %v5176 = vld [vmem:[%s5168 + $0x1c] sm:$0xf]
    %v5177 = vld [vmem:[%s5168 + $0x20] sm:$0xf]
    %v5178 = vld [vmem:[%s5168 + $0x24] sm:$0xf]
    %v5179 = vld [vmem:[%s5168 + $0x28] sm:$0xf]
    %v5180 = vld [vmem:[%s5168 + $0x2c] sm:$0xf]
    %v5181 = vld [vmem:[%s5168 + $0x30] sm:$0xf]
    %v5182 = vld [vmem:[%s5168 + $0x34] sm:$0xf]
    %v5183 = vld [vmem:[%s5168 + $0x38] sm:$0xf]
    %v5184 = vld [vmem:[%s5168 + $0x3c] sm:$0xf]
    %v5201 = vunpack.c.l.b16 %v5169
    %v5202 = vunpack.c.l.b16 %v5170
    %v5203 = vunpack.c.l.b16 %v5171
    %v5204 = vunpack.c.l.b16 %v5172
    %v5205 = vunpack.c.l.b16 %v5173
    %v5206 = vunpack.c.l.b16 %v5174
    %v5207 = vunpack.c.l.b16 %v5175
    %v5208 = vunpack.c.l.b16 %v5176
    %v5209 = vunpack.c.l.b16 %v5177
    %v5210 = vunpack.c.l.b16 %v5178
    %v5211 = vunpack.c.l.b16 %v5179
    %v5212 = vunpack.c.l.b16 %v5180
    %v5213 = vunpack.c.l.b16 %v5181
    %v5214 = vunpack.c.l.b16 %v5182
    %v5215 = vunpack.c.l.b16 %v5183
    %v5216 = vunpack.c.l.b16 %v5184
    %v5217 = vpack.c.b16 %v5202, %v5201
    %v5218 = vpack.c.b16 %v5204, %v5203
    %v5219 = vpack.c.b16 %v5206, %v5205
    %v5220 = vpack.c.b16 %v5208, %v5207
    %v5221 = vpack.c.b16 %v5210, %v5209
    %v5222 = vpack.c.b16 %v5212, %v5211
    %v5223 = vpack.c.b16 %v5214, %v5213
    %v5224 = vpack.c.b16 %v5216, %v5215
    %5233 = vmatprep.subr.bf16.mxu0 0
    %5234 = vmatpush1.bf16.msra.mxu0 %v5217
    %5235 = vmatprep.subr.bf16.mxu0 0
    %5236 = vmatpush1.bf16.msra.mxu0 %v5218
    %5237 = vmatprep.subr.bf16.mxu0 0
    %5238 = vmatpush1.bf16.msra.mxu0 %v5219
    %5239 = vmatprep.subr.bf16.mxu0 0
    %5240 = vmatpush1.bf16.msra.mxu0 %v5220
    %5241 = vmatprep.subr.bf16.mxu0 0
    %5242 = vmatpush1.bf16.msra.mxu0 %v5221
    %5243 = vmatprep.subr.bf16.mxu0 0
    %5244 = vmatpush1.bf16.msra.mxu0 %v5222
    %5245 = vmatprep.subr.bf16.mxu0 0
    %5246 = vmatpush1.bf16.msra.mxu0 %v5223
    %5247 = vmatprep.subr.bf16.mxu0 0
    %5248 = vmatpush1.bf16.msra.mxu0 %v5224
    %5249 = vmatprep.subr.bf16.mxu0 0
    %5250 = vmatpush1.bf16.msra.mxu0 0
    %5251 = vmatprep.subr.bf16.mxu0 0
    %5252 = vmatpush1.bf16.msra.mxu0 0
    %5253 = vmatprep.subr.bf16.mxu0 0
    %5254 = vmatpush1.bf16.msra.mxu0 0
    %5255 = vmatprep.subr.bf16.mxu0 0
    %5256 = vmatpush1.bf16.msra.mxu0 0
    %5257 = vmatprep.subr.bf16.mxu0 0
    %5258 = vmatpush1.bf16.msra.mxu0 0
    %5259 = vmatprep.subr.bf16.mxu0 0
    %5260 = vmatpush1.bf16.msra.mxu0 0
    %5261 = vmatprep.subr.bf16.mxu0 0
    %5262 = vmatpush1.bf16.msra.mxu0 0
    %5263 = vmatprep.subr.bf16.mxu0 0
    %5264 = vmatpush1.bf16.msra.mxu0 0
    %5265 = vmatprep.mubr.bf16.mxu0 0
    %5266 = vmatmul.mubr.bf16.gmra.mrb[0].mxu0 %v4523
    %v5267 = vpop.f32.mrb[0].mxu0
    %v5268 = vadd.f32 0.0, %v5267
    %v5269 = vpop.f32.mrb[0].mxu0
    %v5270 = vpop.f32.mrb[0].mxu0
    %v5271 = vadd.f32 0.0, %v5270
    %v5272 = vpop.f32.mrb[0].mxu0
    %5273 = vdwg.mxu0
    %v5274 = vadd.f32 %v5166, %v5268
    %v5275 = vadd.f32 %v5167, %v5271
    %s5276 = scalar_lea.vmem %s3, 448
    %v5277 = vld [vmem:[%s5276] sm:$0xf]
    %v5278 = vld [vmem:[%s5276 + $0x4] sm:$0xf]
    %v5279 = vld [vmem:[%s5276 + $0x8] sm:$0xf]
    %v5280 = vld [vmem:[%s5276 + $0xc] sm:$0xf]
    %v5281 = vld [vmem:[%s5276 + $0x10] sm:$0xf]
    %v5282 = vld [vmem:[%s5276 + $0x14] sm:$0xf]
    %v5283 = vld [vmem:[%s5276 + $0x18] sm:$0xf]
    %v5284 = vld [vmem:[%s5276 + $0x1c] sm:$0xf]
    %v5285 = vld [vmem:[%s5276 + $0x20] sm:$0xf]
    %v5286 = vld [vmem:[%s5276 + $0x24] sm:$0xf]
    %v5287 = vld [vmem:[%s5276 + $0x28] sm:$0xf]
    %v5288 = vld [vmem:[%s5276 + $0x2c] sm:$0xf]
    %v5289 = vld [vmem:[%s5276 + $0x30] sm:$0xf]
    %v5290 = vld [vmem:[%s5276 + $0x34] sm:$0xf]
    %v5291 = vld [vmem:[%s5276 + $0x38] sm:$0xf]
    %v5292 = vld [vmem:[%s5276 + $0x3c] sm:$0xf]
    %v5309 = vunpack.c.l.b16 %v5277
    %v5310 = vunpack.c.l.b16 %v5278
    %v5311 = vunpack.c.l.b16 %v5279
    %v5312 = vunpack.c.l.b16 %v5280
    %v5313 = vunpack.c.l.b16 %v5281
    %v5314 = vunpack.c.l.b16 %v5282
    %v5315 = vunpack.c.l.b16 %v5283
    %v5316 = vunpack.c.l.b16 %v5284
    %v5317 = vunpack.c.l.b16 %v5285
    %v5318 = vunpack.c.l.b16 %v5286
    %v5319 = vunpack.c.l.b16 %v5287
    %v5320 = vunpack.c.l.b16 %v5288
    %v5321 = vunpack.c.l.b16 %v5289
    %v5322 = vunpack.c.l.b16 %v5290
    %v5323 = vunpack.c.l.b16 %v5291
    %v5324 = vunpack.c.l.b16 %v5292
    %v5325 = vpack.c.b16 %v5310, %v5309
    %v5326 = vpack.c.b16 %v5312, %v5311
    %v5327 = vpack.c.b16 %v5314, %v5313
    %v5328 = vpack.c.b16 %v5316, %v5315
    %v5329 = vpack.c.b16 %v5318, %v5317
    %v5330 = vpack.c.b16 %v5320, %v5319
    %v5331 = vpack.c.b16 %v5322, %v5321
    %v5332 = vpack.c.b16 %v5324, %v5323
    %5341 = vmatprep.subr.bf16.mxu0 0
    %5342 = vmatpush1.bf16.msra.mxu0 %v5325
    %5343 = vmatprep.subr.bf16.mxu0 0
    %5344 = vmatpush1.bf16.msra.mxu0 %v5326
    %5345 = vmatprep.subr.bf16.mxu0 0
    %5346 = vmatpush1.bf16.msra.mxu0 %v5327
    %5347 = vmatprep.subr.bf16.mxu0 0
    %5348 = vmatpush1.bf16.msra.mxu0 %v5328
    %5349 = vmatprep.subr.bf16.mxu0 0
    %5350 = vmatpush1.bf16.msra.mxu0 %v5329
    %5351 = vmatprep.subr.bf16.mxu0 0
    %5352 = vmatpush1.bf16.msra.mxu0 %v5330
    %5353 = vmatprep.subr.bf16.mxu0 0
    %5354 = vmatpush1.bf16.msra.mxu0 %v5331
    %5355 = vmatprep.subr.bf16.mxu0 0
    %5356 = vmatpush1.bf16.msra.mxu0 %v5332
    %5357 = vmatprep.subr.bf16.mxu0 0
    %5358 = vmatpush1.bf16.msra.mxu0 0
    %5359 = vmatprep.subr.bf16.mxu0 0
    %5360 = vmatpush1.bf16.msra.mxu0 0
    %5361 = vmatprep.subr.bf16.mxu0 0
    %5362 = vmatpush1.bf16.msra.mxu0 0
    %5363 = vmatprep.subr.bf16.mxu0 0
    %5364 = vmatpush1.bf16.msra.mxu0 0
    %5365 = vmatprep.subr.bf16.mxu0 0
    %5366 = vmatpush1.bf16.msra.mxu0 0
    %5367 = vmatprep.subr.bf16.mxu0 0
    %5368 = vmatpush1.bf16.msra.mxu0 0
    %5369 = vmatprep.subr.bf16.mxu0 0
    %5370 = vmatpush1.bf16.msra.mxu0 0
    %5371 = vmatprep.subr.bf16.mxu0 0
    %5372 = vmatpush1.bf16.msra.mxu0 0
    %5373 = vmatprep.mubr.bf16.mxu0 0
    %5374 = vmatmul.mubr.bf16.gmra.mrb[0].mxu0 %v4524
    %v5375 = vpop.f32.mrb[0].mxu0
    %v5376 = vadd.f32 0.0, %v5375
    %v5377 = vpop.f32.mrb[0].mxu0
    %v5378 = vpop.f32.mrb[0].mxu0
    %v5379 = vadd.f32 0.0, %v5378
    %v5380 = vpop.f32.mrb[0].mxu0
    %5381 = vdwg.mxu0
    %v5382 = vadd.f32 %v5274, %v5376
    %v5383 = vadd.f32 %v5275, %v5379
    %v5384 = vld [vmem:[%s4] sm:$0x1]
    %v5386 = vlaneseq
    %v5387 = vshrl.u32 %v5386, 7
    %v5388 = vsub.s32 0, %v5387
    %v5389 = vrot.slane %v5384, %v5388
    %v5391 = vadd.f32 %v5382, %v5389
    %v5392 = vadd.f32 %v5383, %v5389
    %vm5393 = vcmp.gt.f32.partialorder %v5391, 0.0
    %vm5394 = vcmp.gt.f32.partialorder %v5392, 0.0
    %v5395 = vmul.f32 %v5391, 0.01
    %v5396 = vmul.f32 %v5392, 0.01
    %v5397 = vsel %vm5393, %v5391, %v5395
    %v5398 = vsel %vm5394, %v5392, %v5396
    %v5399 = vpack.c.bf16 %v5397, %v5397
    %v5400 = vld [vmem:[%s5] sm:$0xf]
    %v5401 = vld [vmem:[%s5 + $0x4] sm:$0xf]
    %v5402 = vld [vmem:[%s5 + $0x8] sm:$0xf]
    %v5403 = vld [vmem:[%s5 + $0xc] sm:$0xf]
    %v5404 = vld [vmem:[%s5 + $0x10] sm:$0xf]
    %v5405 = vld [vmem:[%s5 + $0x14] sm:$0xf]
    %v5406 = vld [vmem:[%s5 + $0x18] sm:$0xf]
    %v5407 = vld [vmem:[%s5 + $0x1c] sm:$0xf]
    %v5408 = vld [vmem:[%s5 + $0x20] sm:$0xf]
    %v5409 = vld [vmem:[%s5 + $0x24] sm:$0xf]
    %v5410 = vld [vmem:[%s5 + $0x28] sm:$0xf]
    %v5411 = vld [vmem:[%s5 + $0x2c] sm:$0xf]
    %v5412 = vld [vmem:[%s5 + $0x30] sm:$0xf]
    %v5413 = vld [vmem:[%s5 + $0x34] sm:$0xf]
    %v5414 = vld [vmem:[%s5 + $0x38] sm:$0xf]
    %v5415 = vld [vmem:[%s5 + $0x3c] sm:$0xf]
    %s5416 = scalar_lea.vmem %s5, 64
    %v5417 = vld [vmem:[%s5416] sm:$0xf]
    %v5418 = vld [vmem:[%s5416 + $0x4] sm:$0xf]
    %v5419 = vld [vmem:[%s5416 + $0x8] sm:$0xf]
    %v5420 = vld [vmem:[%s5416 + $0xc] sm:$0xf]
    %v5421 = vld [vmem:[%s5416 + $0x10] sm:$0xf]
    %v5422 = vld [vmem:[%s5416 + $0x14] sm:$0xf]
    %v5423 = vld [vmem:[%s5416 + $0x18] sm:$0xf]
    %v5424 = vld [vmem:[%s5416 + $0x1c] sm:$0xf]
    %v5425 = vld [vmem:[%s5416 + $0x20] sm:$0xf]
    %v5426 = vld [vmem:[%s5416 + $0x24] sm:$0xf]
    %v5427 = vld [vmem:[%s5416 + $0x28] sm:$0xf]
    %v5428 = vld [vmem:[%s5416 + $0x2c] sm:$0xf]
    %v5429 = vld [vmem:[%s5416 + $0x30] sm:$0xf]
    %v5430 = vld [vmem:[%s5416 + $0x34] sm:$0xf]
    %v5431 = vld [vmem:[%s5416 + $0x38] sm:$0xf]
    %v5432 = vld [vmem:[%s5416 + $0x3c] sm:$0xf]
    %v5434 = vrot.slane %v5399, 1
    %v5452 = vunpack.c.l.b16 %v5417
    %v5453 = vunpack.c.l.b16 %v5418
    %v5454 = vunpack.c.l.b16 %v5419
    %v5455 = vunpack.c.l.b16 %v5420
    %v5456 = vunpack.c.l.b16 %v5421
    %v5457 = vunpack.c.l.b16 %v5422
    %v5458 = vunpack.c.l.b16 %v5423
    %v5459 = vunpack.c.l.b16 %v5424
    %v5460 = vunpack.c.l.b16 %v5425
    %v5461 = vunpack.c.l.b16 %v5426
    %v5462 = vunpack.c.l.b16 %v5427
    %v5463 = vunpack.c.l.b16 %v5428
    %v5464 = vunpack.c.l.b16 %v5429
    %v5465 = vunpack.c.l.b16 %v5430
    %v5466 = vunpack.c.l.b16 %v5431
    %v5467 = vunpack.c.l.b16 %v5432
    %v5468 = vpack.c.b16 %v5453, %v5452
    %v5469 = vpack.c.b16 %v5455, %v5454
    %v5470 = vpack.c.b16 %v5457, %v5456
    %v5471 = vpack.c.b16 %v5459, %v5458
    %v5472 = vpack.c.b16 %v5461, %v5460
    %v5473 = vpack.c.b16 %v5463, %v5462
    %v5474 = vpack.c.b16 %v5465, %v5464
    %v5475 = vpack.c.b16 %v5467, %v5466
    %5484 = vmatprep.subr.bf16.mxu0 0
    %5485 = vmatpush1.bf16.msra.mxu0 %v5468
    %5486 = vmatprep.subr.bf16.mxu0 0
    %5487 = vmatpush1.bf16.msra.mxu0 %v5469
    %5488 = vmatprep.subr.bf16.mxu0 0
    %5489 = vmatpush1.bf16.msra.mxu0 %v5470
    %5490 = vmatprep.subr.bf16.mxu0 0
    %5491 = vmatpush1.bf16.msra.mxu0 %v5471
    %5492 = vmatprep.subr.bf16.mxu0 0
    %5493 = vmatpush1.bf16.msra.mxu0 %v5472
    %5494 = vmatprep.subr.bf16.mxu0 0
    %5495 = vmatpush1.bf16.msra.mxu0 %v5473
    %5496 = vmatprep.subr.bf16.mxu0 0
    %5497 = vmatpush1.bf16.msra.mxu0 %v5474
    %5498 = vmatprep.subr.bf16.mxu0 0
    %5499 = vmatpush1.bf16.msra.mxu0 %v5475
    %5500 = vmatprep.subr.bf16.mxu0 0
    %5501 = vmatpush1.bf16.msra.mxu0 0
    %5502 = vmatprep.subr.bf16.mxu0 0
    %5503 = vmatpush1.bf16.msra.mxu0 0
    %5504 = vmatprep.subr.bf16.mxu0 0
    %5505 = vmatpush1.bf16.msra.mxu0 0
    %5506 = vmatprep.subr.bf16.mxu0 0
    %5507 = vmatpush1.bf16.msra.mxu0 0
    %5508 = vmatprep.subr.bf16.mxu0 0
    %5509 = vmatpush1.bf16.msra.mxu0 0
    %5510 = vmatprep.subr.bf16.mxu0 0
    %5511 = vmatpush1.bf16.msra.mxu0 0
    %5512 = vmatprep.subr.bf16.mxu0 0
    %5513 = vmatpush1.bf16.msra.mxu0 0
    %5514 = vmatprep.subr.bf16.mxu0 0
    %5515 = vmatpush1.bf16.msra.mxu0 0
    %5516 = vmatprep.mubr.bf16.mxu0 0
    %5517 = vmatmul.mubr.bf16.gmra.mrb[0].mxu0 %v5434
    %v5518 = vpop.f32.mrb[0].mxu0
    %v5519 = vadd.f32 0.0, %v5518
    %v5520 = vpop.f32.mrb[0].mxu0
    %v5521 = vpop.f32.mrb[0].mxu0
    %v5522 = vpop.f32.mrb[0].mxu0
    %5523 = vdwg.mxu0
    %v5540 = vunpack.c.l.b16 %v5400
    %v5541 = vunpack.c.l.b16 %v5401
    %v5542 = vunpack.c.l.b16 %v5402
    %v5543 = vunpack.c.l.b16 %v5403
    %v5544 = vunpack.c.l.b16 %v5404
    %v5545 = vunpack.c.l.b16 %v5405
    %v5546 = vunpack.c.l.b16 %v5406
    %v5547 = vunpack.c.l.b16 %v5407
    %v5548 = vunpack.c.l.b16 %v5408
    %v5549 = vunpack.c.l.b16 %v5409
    %v5550 = vunpack.c.l.b16 %v5410
    %v5551 = vunpack.c.l.b16 %v5411
    %v5552 = vunpack.c.l.b16 %v5412
    %v5553 = vunpack.c.l.b16 %v5413
    %v5554 = vunpack.c.l.b16 %v5414
    %v5555 = vunpack.c.l.b16 %v5415
    %v5556 = vpack.c.b16 %v5541, %v5540
    %v5557 = vpack.c.b16 %v5543, %v5542
    %v5558 = vpack.c.b16 %v5545, %v5544
    %v5559 = vpack.c.b16 %v5547, %v5546
    %v5560 = vpack.c.b16 %v5549, %v5548
    %v5561 = vpack.c.b16 %v5551, %v5550
    %v5562 = vpack.c.b16 %v5553, %v5552
    %v5563 = vpack.c.b16 %v5555, %v5554
    %5572 = vmatprep.subr.bf16.mxu0 0
    %5573 = vmatpush1.bf16.msra.mxu0 %v5556
    %5574 = vmatprep.subr.bf16.mxu0 0
    %5575 = vmatpush1.bf16.msra.mxu0 %v5557
    %5576 = vmatprep.subr.bf16.mxu0 0
    %5577 = vmatpush1.bf16.msra.mxu0 %v5558
    %5578 = vmatprep.subr.bf16.mxu0 0
    %5579 = vmatpush1.bf16.msra.mxu0 %v5559
    %5580 = vmatprep.subr.bf16.mxu0 0
    %5581 = vmatpush1.bf16.msra.mxu0 %v5560
    %5582 = vmatprep.subr.bf16.mxu0 0
    %5583 = vmatpush1.bf16.msra.mxu0 %v5561
    %5584 = vmatprep.subr.bf16.mxu0 0
    %5585 = vmatpush1.bf16.msra.mxu0 %v5562
    %5586 = vmatprep.subr.bf16.mxu0 0
    %5587 = vmatpush1.bf16.msra.mxu0 %v5563
    %5588 = vmatprep.subr.bf16.mxu0 0
    %5589 = vmatpush1.bf16.msra.mxu0 0
    %5590 = vmatprep.subr.bf16.mxu0 0
    %5591 = vmatpush1.bf16.msra.mxu0 0
    %5592 = vmatprep.subr.bf16.mxu0 0
    %5593 = vmatpush1.bf16.msra.mxu0 0
    %5594 = vmatprep.subr.bf16.mxu0 0
    %5595 = vmatpush1.bf16.msra.mxu0 0
    %5596 = vmatprep.subr.bf16.mxu0 0
    %5597 = vmatpush1.bf16.msra.mxu0 0
    %5598 = vmatprep.subr.bf16.mxu0 0
    %5599 = vmatpush1.bf16.msra.mxu0 0
    %5600 = vmatprep.subr.bf16.mxu0 0
    %5601 = vmatpush1.bf16.msra.mxu0 0
    %5602 = vmatprep.subr.bf16.mxu0 0
    %5603 = vmatpush1.bf16.msra.mxu0 0
    %5604 = vmatprep.mubr.bf16.mxu0 0
    %5605 = vmatmul.mubr.bf16.gmra.mrb[0].mxu0 %v5399
    %v5606 = vpop.f32.mrb[0].mxu0
    %v5607 = vadd.f32 %v5519, %v5606
    %v5608 = vpop.f32.mrb[0].mxu0
    %v5609 = vpop.f32.mrb[0].mxu0
    %v5610 = vpop.f32.mrb[0].mxu0
    %5611 = vdwg.mxu0
    %s5612 = scalar_lea.vmem %s5, 128
    %v5613 = vld [vmem:[%s5612] sm:$0xf]
    %v5614 = vld [vmem:[%s5612 + $0x4] sm:$0xf]
    %v5615 = vld [vmem:[%s5612 + $0x8] sm:$0xf]
    %v5616 = vld [vmem:[%s5612 + $0xc] sm:$0xf]
    %v5617 = vld [vmem:[%s5612 + $0x10] sm:$0xf]
    %v5618 = vld [vmem:[%s5612 + $0x14] sm:$0xf]
    %v5619 = vld [vmem:[%s5612 + $0x18] sm:$0xf]
    %v5620 = vld [vmem:[%s5612 + $0x1c] sm:$0xf]
    %v5621 = vld [vmem:[%s5612 + $0x20] sm:$0xf]
    %v5622 = vld [vmem:[%s5612 + $0x24] sm:$0xf]
    %v5623 = vld [vmem:[%s5612 + $0x28] sm:$0xf]
    %v5624 = vld [vmem:[%s5612 + $0x2c] sm:$0xf]
    %v5625 = vld [vmem:[%s5612 + $0x30] sm:$0xf]
    %v5626 = vld [vmem:[%s5612 + $0x34] sm:$0xf]
    %v5627 = vld [vmem:[%s5612 + $0x38] sm:$0xf]
    %v5628 = vld [vmem:[%s5612 + $0x3c] sm:$0xf]
    %v5629 = vrot.slane %v5399, 2
    %v5647 = vunpack.c.l.b16 %v5613
    %v5648 = vunpack.c.l.b16 %v5614
    %v5649 = vunpack.c.l.b16 %v5615
    %v5650 = vunpack.c.l.b16 %v5616
    %v5651 = vunpack.c.l.b16 %v5617
    %v5652 = vunpack.c.l.b16 %v5618
    %v5653 = vunpack.c.l.b16 %v5619
    %v5654 = vunpack.c.l.b16 %v5620
    %v5655 = vunpack.c.l.b16 %v5621
    %v5656 = vunpack.c.l.b16 %v5622
    %v5657 = vunpack.c.l.b16 %v5623
    %v5658 = vunpack.c.l.b16 %v5624
    %v5659 = vunpack.c.l.b16 %v5625
    %v5660 = vunpack.c.l.b16 %v5626
    %v5661 = vunpack.c.l.b16 %v5627
    %v5662 = vunpack.c.l.b16 %v5628
    %v5663 = vpack.c.b16 %v5648, %v5647
    %v5664 = vpack.c.b16 %v5650, %v5649
    %v5665 = vpack.c.b16 %v5652, %v5651
    %v5666 = vpack.c.b16 %v5654, %v5653
    %v5667 = vpack.c.b16 %v5656, %v5655
    %v5668 = vpack.c.b16 %v5658, %v5657
    %v5669 = vpack.c.b16 %v5660, %v5659
    %v5670 = vpack.c.b16 %v5662, %v5661
    %5679 = vmatprep.subr.bf16.mxu0 0
    %5680 = vmatpush1.bf16.msra.mxu0 %v5663
    %5681 = vmatprep.subr.bf16.mxu0 0
    %5682 = vmatpush1.bf16.msra.mxu0 %v5664
    %5683 = vmatprep.subr.bf16.mxu0 0
    %5684 = vmatpush1.bf16.msra.mxu0 %v5665
    %5685 = vmatprep.subr.bf16.mxu0 0
    %5686 = vmatpush1.bf16.msra.mxu0 %v5666
    %5687 = vmatprep.subr.bf16.mxu0 0
    %5688 = vmatpush1.bf16.msra.mxu0 %v5667
    %5689 = vmatprep.subr.bf16.mxu0 0
    %5690 = vmatpush1.bf16.msra.mxu0 %v5668
    %5691 = vmatprep.subr.bf16.mxu0 0
    %5692 = vmatpush1.bf16.msra.mxu0 %v5669
    %5693 = vmatprep.subr.bf16.mxu0 0
    %5694 = vmatpush1.bf16.msra.mxu0 %v5670
    %5695 = vmatprep.subr.bf16.mxu0 0
    %5696 = vmatpush1.bf16.msra.mxu0 0
    %5697 = vmatprep.subr.bf16.mxu0 0
    %5698 = vmatpush1.bf16.msra.mxu0 0
    %5699 = vmatprep.subr.bf16.mxu0 0
    %5700 = vmatpush1.bf16.msra.mxu0 0
    %5701 = vmatprep.subr.bf16.mxu0 0
    %5702 = vmatpush1.bf16.msra.mxu0 0
    %5703 = vmatprep.subr.bf16.mxu0 0
    %5704 = vmatpush1.bf16.msra.mxu0 0
    %5705 = vmatprep.subr.bf16.mxu0 0
    %5706 = vmatpush1.bf16.msra.mxu0 0
    %5707 = vmatprep.subr.bf16.mxu0 0
    %5708 = vmatpush1.bf16.msra.mxu0 0
    %5709 = vmatprep.subr.bf16.mxu0 0
    %5710 = vmatpush1.bf16.msra.mxu0 0
    %5711 = vmatprep.mubr.bf16.mxu0 0
    %5712 = vmatmul.mubr.bf16.gmra.mrb[0].mxu0 %v5629
    %v5713 = vpop.f32.mrb[0].mxu0
    %v5714 = vadd.f32 0.0, %v5713
    %v5715 = vpop.f32.mrb[0].mxu0
    %v5716 = vpop.f32.mrb[0].mxu0
    %v5717 = vpop.f32.mrb[0].mxu0
    %5718 = vdwg.mxu0
    %v5719 = vadd.f32 %v5607, %v5714
    %s5720 = scalar_lea.vmem %s5, 192
    %v5721 = vld [vmem:[%s5720] sm:$0xf]
    %v5722 = vld [vmem:[%s5720 + $0x4] sm:$0xf]
    %v5723 = vld [vmem:[%s5720 + $0x8] sm:$0xf]
    %v5724 = vld [vmem:[%s5720 + $0xc] sm:$0xf]
    %v5725 = vld [vmem:[%s5720 + $0x10] sm:$0xf]
    %v5726 = vld [vmem:[%s5720 + $0x14] sm:$0xf]
    %v5727 = vld [vmem:[%s5720 + $0x18] sm:$0xf]
    %v5728 = vld [vmem:[%s5720 + $0x1c] sm:$0xf]
    %v5729 = vld [vmem:[%s5720 + $0x20] sm:$0xf]
    %v5730 = vld [vmem:[%s5720 + $0x24] sm:$0xf]
    %v5731 = vld [vmem:[%s5720 + $0x28] sm:$0xf]
    %v5732 = vld [vmem:[%s5720 + $0x2c] sm:$0xf]
    %v5733 = vld [vmem:[%s5720 + $0x30] sm:$0xf]
    %v5734 = vld [vmem:[%s5720 + $0x34] sm:$0xf]
    %v5735 = vld [vmem:[%s5720 + $0x38] sm:$0xf]
    %v5736 = vld [vmem:[%s5720 + $0x3c] sm:$0xf]
    %v5737 = vrot.slane %v5399, 3
    %v5755 = vunpack.c.l.b16 %v5721
    %v5756 = vunpack.c.l.b16 %v5722
    %v5757 = vunpack.c.l.b16 %v5723
    %v5758 = vunpack.c.l.b16 %v5724
    %v5759 = vunpack.c.l.b16 %v5725
    %v5760 = vunpack.c.l.b16 %v5726
    %v5761 = vunpack.c.l.b16 %v5727
    %v5762 = vunpack.c.l.b16 %v5728
    %v5763 = vunpack.c.l.b16 %v5729
    %v5764 = vunpack.c.l.b16 %v5730
    %v5765 = vunpack.c.l.b16 %v5731
    %v5766 = vunpack.c.l.b16 %v5732
    %v5767 = vunpack.c.l.b16 %v5733
    %v5768 = vunpack.c.l.b16 %v5734
    %v5769 = vunpack.c.l.b16 %v5735
    %v5770 = vunpack.c.l.b16 %v5736
    %v5771 = vpack.c.b16 %v5756, %v5755
    %v5772 = vpack.c.b16 %v5758, %v5757
    %v5773 = vpack.c.b16 %v5760, %v5759
    %v5774 = vpack.c.b16 %v5762, %v5761
    %v5775 = vpack.c.b16 %v5764, %v5763
    %v5776 = vpack.c.b16 %v5766, %v5765
    %v5777 = vpack.c.b16 %v5768, %v5767
    %v5778 = vpack.c.b16 %v5770, %v5769
    %5787 = vmatprep.subr.bf16.mxu0 0
    %5788 = vmatpush1.bf16.msra.mxu0 %v5771
    %5789 = vmatprep.subr.bf16.mxu0 0
    %5790 = vmatpush1.bf16.msra.mxu0 %v5772
    %5791 = vmatprep.subr.bf16.mxu0 0
    %5792 = vmatpush1.bf16.msra.mxu0 %v5773
    %5793 = vmatprep.subr.bf16.mxu0 0
    %5794 = vmatpush1.bf16.msra.mxu0 %v5774
    %5795 = vmatprep.subr.bf16.mxu0 0
    %5796 = vmatpush1.bf16.msra.mxu0 %v5775
    %5797 = vmatprep.subr.bf16.mxu0 0
    %5798 = vmatpush1.bf16.msra.mxu0 %v5776
    %5799 = vmatprep.subr.bf16.mxu0 0
    %5800 = vmatpush1.bf16.msra.mxu0 %v5777
    %5801 = vmatprep.subr.bf16.mxu0 0
    %5802 = vmatpush1.bf16.msra.mxu0 %v5778
    %5803 = vmatprep.subr.bf16.mxu0 0
    %5804 = vmatpush1.bf16.msra.mxu0 0
    %5805 = vmatprep.subr.bf16.mxu0 0
    %5806 = vmatpush1.bf16.msra.mxu0 0
    %5807 = vmatprep.subr.bf16.mxu0 0
    %5808 = vmatpush1.bf16.msra.mxu0 0
    %5809 = vmatprep.subr.bf16.mxu0 0
    %5810 = vmatpush1.bf16.msra.mxu0 0
    %5811 = vmatprep.subr.bf16.mxu0 0
    %5812 = vmatpush1.bf16.msra.mxu0 0
    %5813 = vmatprep.subr.bf16.mxu0 0
    %5814 = vmatpush1.bf16.msra.mxu0 0
    %5815 = vmatprep.subr.bf16.mxu0 0
    %5816 = vmatpush1.bf16.msra.mxu0 0
    %5817 = vmatprep.subr.bf16.mxu0 0
    %5818 = vmatpush1.bf16.msra.mxu0 0
    %5819 = vmatprep.mubr.bf16.mxu0 0
    %5820 = vmatmul.mubr.bf16.gmra.mrb[0].mxu0 %v5737
    %v5821 = vpop.f32.mrb[0].mxu0
    %v5822 = vadd.f32 0.0, %v5821
    %v5823 = vpop.f32.mrb[0].mxu0
    %v5824 = vpop.f32.mrb[0].mxu0
    %v5825 = vpop.f32.mrb[0].mxu0
    %5826 = vdwg.mxu0
    %v5827 = vadd.f32 %v5719, %v5822
    %v5828 = vpack.c.bf16 %v5398, %v5398
    %s5829 = scalar_lea.vmem %s5, 256
    %v5830 = vld [vmem:[%s5829] sm:$0xf]
    %v5831 = vld [vmem:[%s5829 + $0x4] sm:$0xf]
    %v5832 = vld [vmem:[%s5829 + $0x8] sm:$0xf]
    %v5833 = vld [vmem:[%s5829 + $0xc] sm:$0xf]
    %v5834 = vld [vmem:[%s5829 + $0x10] sm:$0xf]
    %v5835 = vld [vmem:[%s5829 + $0x14] sm:$0xf]
    %v5836 = vld [vmem:[%s5829 + $0x18] sm:$0xf]
    %v5837 = vld [vmem:[%s5829 + $0x1c] sm:$0xf]
    %v5838 = vld [vmem:[%s5829 + $0x20] sm:$0xf]
    %v5839 = vld [vmem:[%s5829 + $0x24] sm:$0xf]
    %v5840 = vld [vmem:[%s5829 + $0x28] sm:$0xf]
    %v5841 = vld [vmem:[%s5829 + $0x2c] sm:$0xf]
    %v5842 = vld [vmem:[%s5829 + $0x30] sm:$0xf]
    %v5843 = vld [vmem:[%s5829 + $0x34] sm:$0xf]
    %v5844 = vld [vmem:[%s5829 + $0x38] sm:$0xf]
    %v5845 = vld [vmem:[%s5829 + $0x3c] sm:$0xf]
    %v5862 = vunpack.c.l.b16 %v5830
    %v5863 = vunpack.c.l.b16 %v5831
    %v5864 = vunpack.c.l.b16 %v5832
    %v5865 = vunpack.c.l.b16 %v5833
    %v5866 = vunpack.c.l.b16 %v5834
    %v5867 = vunpack.c.l.b16 %v5835
    %v5868 = vunpack.c.l.b16 %v5836
    %v5869 = vunpack.c.l.b16 %v5837
    %v5870 = vunpack.c.l.b16 %v5838
    %v5871 = vunpack.c.l.b16 %v5839
    %v5872 = vunpack.c.l.b16 %v5840
    %v5873 = vunpack.c.l.b16 %v5841
    %v5874 = vunpack.c.l.b16 %v5842
    %v5875 = vunpack.c.l.b16 %v5843
    %v5876 = vunpack.c.l.b16 %v5844
    %v5877 = vunpack.c.l.b16 %v5845
    %v5878 = vpack.c.b16 %v5863, %v5862
    %v5879 = vpack.c.b16 %v5865, %v5864
    %v5880 = vpack.c.b16 %v5867, %v5866
    %v5881 = vpack.c.b16 %v5869, %v5868
    %v5882 = vpack.c.b16 %v5871, %v5870
    %v5883 = vpack.c.b16 %v5873, %v5872
    %v5884 = vpack.c.b16 %v5875, %v5874
    %v5885 = vpack.c.b16 %v5877, %v5876
    %5894 = vmatprep.subr.bf16.mxu0 0
    %5895 = vmatpush1.bf16.msra.mxu0 %v5878
    %5896 = vmatprep.subr.bf16.mxu0 0
    %5897 = vmatpush1.bf16.msra.mxu0 %v5879
    %5898 = vmatprep.subr.bf16.mxu0 0
    %5899 = vmatpush1.bf16.msra.mxu0 %v5880
    %5900 = vmatprep.subr.bf16.mxu0 0
    %5901 = vmatpush1.bf16.msra.mxu0 %v5881
    %5902 = vmatprep.subr.bf16.mxu0 0
    %5903 = vmatpush1.bf16.msra.mxu0 %v5882
    %5904 = vmatprep.subr.bf16.mxu0 0
    %5905 = vmatpush1.bf16.msra.mxu0 %v5883
    %5906 = vmatprep.subr.bf16.mxu0 0
    %5907 = vmatpush1.bf16.msra.mxu0 %v5884
    %5908 = vmatprep.subr.bf16.mxu0 0
    %5909 = vmatpush1.bf16.msra.mxu0 %v5885
    %5910 = vmatprep.subr.bf16.mxu0 0
    %5911 = vmatpush1.bf16.msra.mxu0 0
    %5912 = vmatprep.subr.bf16.mxu0 0
    %5913 = vmatpush1.bf16.msra.mxu0 0
    %5914 = vmatprep.subr.bf16.mxu0 0
    %5915 = vmatpush1.bf16.msra.mxu0 0
    %5916 = vmatprep.subr.bf16.mxu0 0
    %5917 = vmatpush1.bf16.msra.mxu0 0
    %5918 = vmatprep.subr.bf16.mxu0 0
    %5919 = vmatpush1.bf16.msra.mxu0 0
    %5920 = vmatprep.subr.bf16.mxu0 0
    %5921 = vmatpush1.bf16.msra.mxu0 0
    %5922 = vmatprep.subr.bf16.mxu0 0
    %5923 = vmatpush1.bf16.msra.mxu0 0
    %5924 = vmatprep.subr.bf16.mxu0 0
    %5925 = vmatpush1.bf16.msra.mxu0 0
    %5926 = vmatprep.mubr.bf16.mxu0 0
    %5927 = vmatmul.mubr.bf16.gmra.mrb[0].mxu0 %v5828
    %v5928 = vpop.f32.mrb[0].mxu0
    %v5929 = vadd.f32 0.0, %v5928
    %v5930 = vpop.f32.mrb[0].mxu0
    %v5931 = vpop.f32.mrb[0].mxu0
    %v5932 = vpop.f32.mrb[0].mxu0
    %5933 = vdwg.mxu0
    %v5934 = vadd.f32 %v5827, %v5929
    %s5935 = scalar_lea.vmem %s5, 320
    %v5936 = vld [vmem:[%s5935] sm:$0xf]
    %v5937 = vld [vmem:[%s5935 + $0x4] sm:$0xf]
    %v5938 = vld [vmem:[%s5935 + $0x8] sm:$0xf]
    %v5939 = vld [vmem:[%s5935 + $0xc] sm:$0xf]
    %v5940 = vld [vmem:[%s5935 + $0x10] sm:$0xf]
    %v5941 = vld [vmem:[%s5935 + $0x14] sm:$0xf]
    %v5942 = vld [vmem:[%s5935 + $0x18] sm:$0xf]
    %v5943 = vld [vmem:[%s5935 + $0x1c] sm:$0xf]
    %v5944 = vld [vmem:[%s5935 + $0x20] sm:$0xf]
    %v5945 = vld [vmem:[%s5935 + $0x24] sm:$0xf]
    %v5946 = vld [vmem:[%s5935 + $0x28] sm:$0xf]
    %v5947 = vld [vmem:[%s5935 + $0x2c] sm:$0xf]
    %v5948 = vld [vmem:[%s5935 + $0x30] sm:$0xf]
    %v5949 = vld [vmem:[%s5935 + $0x34] sm:$0xf]
    %v5950 = vld [vmem:[%s5935 + $0x38] sm:$0xf]
    %v5951 = vld [vmem:[%s5935 + $0x3c] sm:$0xf]
    %v5953 = vrot.slane %v5828, 1
    %v5971 = vunpack.c.l.b16 %v5936
    %v5972 = vunpack.c.l.b16 %v5937
    %v5973 = vunpack.c.l.b16 %v5938
    %v5974 = vunpack.c.l.b16 %v5939
    %v5975 = vunpack.c.l.b16 %v5940
    %v5976 = vunpack.c.l.b16 %v5941
    %v5977 = vunpack.c.l.b16 %v5942
    %v5978 = vunpack.c.l.b16 %v5943
    %v5979 = vunpack.c.l.b16 %v5944
    %v5980 = vunpack.c.l.b16 %v5945
    %v5981 = vunpack.c.l.b16 %v5946
    %v5982 = vunpack.c.l.b16 %v5947
    %v5983 = vunpack.c.l.b16 %v5948
    %v5984 = vunpack.c.l.b16 %v5949
    %v5985 = vunpack.c.l.b16 %v5950
    %v5986 = vunpack.c.l.b16 %v5951
    %v5987 = vpack.c.b16 %v5972, %v5971
    %v5988 = vpack.c.b16 %v5974, %v5973
    %v5989 = vpack.c.b16 %v5976, %v5975
    %v5990 = vpack.c.b16 %v5978, %v5977
    %v5991 = vpack.c.b16 %v5980, %v5979
    %v5992 = vpack.c.b16 %v5982, %v5981
    %v5993 = vpack.c.b16 %v5984, %v5983
    %v5994 = vpack.c.b16 %v5986, %v5985
    %6003 = vmatprep.subr.bf16.mxu0 0
    %6004 = vmatpush1.bf16.msra.mxu0 %v5987
    %6005 = vmatprep.subr.bf16.mxu0 0
    %6006 = vmatpush1.bf16.msra.mxu0 %v5988
    %6007 = vmatprep.subr.bf16.mxu0 0
    %6008 = vmatpush1.bf16.msra.mxu0 %v5989
    %6009 = vmatprep.subr.bf16.mxu0 0
    %6010 = vmatpush1.bf16.msra.mxu0 %v5990
    %6011 = vmatprep.subr.bf16.mxu0 0
    %6012 = vmatpush1.bf16.msra.mxu0 %v5991
    %6013 = vmatprep.subr.bf16.mxu0 0
    %6014 = vmatpush1.bf16.msra.mxu0 %v5992
    %6015 = vmatprep.subr.bf16.mxu0 0
    %6016 = vmatpush1.bf16.msra.mxu0 %v5993
    %6017 = vmatprep.subr.bf16.mxu0 0
    %6018 = vmatpush1.bf16.msra.mxu0 %v5994
    %6019 = vmatprep.subr.bf16.mxu0 0
    %6020 = vmatpush1.bf16.msra.mxu0 0
    %6021 = vmatprep.subr.bf16.mxu0 0
    %6022 = vmatpush1.bf16.msra.mxu0 0
    %6023 = vmatprep.subr.bf16.mxu0 0
    %6024 = vmatpush1.bf16.msra.mxu0 0
    %6025 = vmatprep.subr.bf16.mxu0 0
    %6026 = vmatpush1.bf16.msra.mxu0 0
    %6027 = vmatprep.subr.bf16.mxu0 0
    %6028 = vmatpush1.bf16.msra.mxu0 0
    %6029 = vmatprep.subr.bf16.mxu0 0
    %6030 = vmatpush1.bf16.msra.mxu0 0
    %6031 = vmatprep.subr.bf16.mxu0 0
    %6032 = vmatpush1.bf16.msra.mxu0 0
    %6033 = vmatprep.subr.bf16.mxu0 0
    %6034 = vmatpush1.bf16.msra.mxu0 0
    %6035 = vmatprep.mubr.bf16.mxu0 0
    %6036 = vmatmul.mubr.bf16.gmra.mrb[0].mxu0 %v5953
    %v6037 = vpop.f32.mrb[0].mxu0
    %v6038 = vadd.f32 0.0, %v6037
    %v6039 = vpop.f32.mrb[0].mxu0
    %v6040 = vpop.f32.mrb[0].mxu0
    %v6041 = vpop.f32.mrb[0].mxu0
    %6042 = vdwg.mxu0
    %v6043 = vadd.f32 %v5934, %v6038
    %s6044 = scalar_lea.vmem %s5, 384
    %v6045 = vld [vmem:[%s6044] sm:$0xf]
    %v6046 = vld [vmem:[%s6044 + $0x4] sm:$0xf]
    %v6047 = vld [vmem:[%s6044 + $0x8] sm:$0xf]
    %v6048 = vld [vmem:[%s6044 + $0xc] sm:$0xf]
    %v6049 = vld [vmem:[%s6044 + $0x10] sm:$0xf]
    %v6050 = vld [vmem:[%s6044 + $0x14] sm:$0xf]
    %v6051 = vld [vmem:[%s6044 + $0x18] sm:$0xf]
    %v6052 = vld [vmem:[%s6044 + $0x1c] sm:$0xf]
    %v6053 = vld [vmem:[%s6044 + $0x20] sm:$0xf]
    %v6054 = vld [vmem:[%s6044 + $0x24] sm:$0xf]
    %v6055 = vld [vmem:[%s6044 + $0x28] sm:$0xf]
    %v6056 = vld [vmem:[%s6044 + $0x2c] sm:$0xf]
    %v6057 = vld [vmem:[%s6044 + $0x30] sm:$0xf]
    %v6058 = vld [vmem:[%s6044 + $0x34] sm:$0xf]
    %v6059 = vld [vmem:[%s6044 + $0x38] sm:$0xf]
    %v6060 = vld [vmem:[%s6044 + $0x3c] sm:$0xf]
    %v6061 = vrot.slane %v5828, 2
    %v6079 = vunpack.c.l.b16 %v6045
    %v6080 = vunpack.c.l.b16 %v6046
    %v6081 = vunpack.c.l.b16 %v6047
    %v6082 = vunpack.c.l.b16 %v6048
    %v6083 = vunpack.c.l.b16 %v6049
    %v6084 = vunpack.c.l.b16 %v6050
    %v6085 = vunpack.c.l.b16 %v6051
    %v6086 = vunpack.c.l.b16 %v6052
    %v6087 = vunpack.c.l.b16 %v6053
    %v6088 = vunpack.c.l.b16 %v6054
    %v6089 = vunpack.c.l.b16 %v6055
    %v6090 = vunpack.c.l.b16 %v6056
    %v6091 = vunpack.c.l.b16 %v6057
    %v6092 = vunpack.c.l.b16 %v6058
    %v6093 = vunpack.c.l.b16 %v6059
    %v6094 = vunpack.c.l.b16 %v6060
    %v6095 = vpack.c.b16 %v6080, %v6079
    %v6096 = vpack.c.b16 %v6082, %v6081
    %v6097 = vpack.c.b16 %v6084, %v6083
    %v6098 = vpack.c.b16 %v6086, %v6085
    %v6099 = vpack.c.b16 %v6088, %v6087
    %v6100 = vpack.c.b16 %v6090, %v6089
    %v6101 = vpack.c.b16 %v6092, %v6091
    %v6102 = vpack.c.b16 %v6094, %v6093
    %6111 = vmatprep.subr.bf16.mxu0 0
    %6112 = vmatpush1.bf16.msra.mxu0 %v6095
    %6113 = vmatprep.subr.bf16.mxu0 0
    %6114 = vmatpush1.bf16.msra.mxu0 %v6096
    %6115 = vmatprep.subr.bf16.mxu0 0
    %6116 = vmatpush1.bf16.msra.mxu0 %v6097
    %6117 = vmatprep.subr.bf16.mxu0 0
    %6118 = vmatpush1.bf16.msra.mxu0 %v6098
    %6119 = vmatprep.subr.bf16.mxu0 0
    %6120 = vmatpush1.bf16.msra.mxu0 %v6099
    %6121 = vmatprep.subr.bf16.mxu0 0
    %6122 = vmatpush1.bf16.msra.mxu0 %v6100
    %6123 = vmatprep.subr.bf16.mxu0 0
    %6124 = vmatpush1.bf16.msra.mxu0 %v6101
    %6125 = vmatprep.subr.bf16.mxu0 0
    %6126 = vmatpush1.bf16.msra.mxu0 %v6102
    %6127 = vmatprep.subr.bf16.mxu0 0
    %6128 = vmatpush1.bf16.msra.mxu0 0
    %6129 = vmatprep.subr.bf16.mxu0 0
    %6130 = vmatpush1.bf16.msra.mxu0 0
    %6131 = vmatprep.subr.bf16.mxu0 0
    %6132 = vmatpush1.bf16.msra.mxu0 0
    %6133 = vmatprep.subr.bf16.mxu0 0
    %6134 = vmatpush1.bf16.msra.mxu0 0
    %6135 = vmatprep.subr.bf16.mxu0 0
    %6136 = vmatpush1.bf16.msra.mxu0 0
    %6137 = vmatprep.subr.bf16.mxu0 0
    %6138 = vmatpush1.bf16.msra.mxu0 0
    %6139 = vmatprep.subr.bf16.mxu0 0
    %6140 = vmatpush1.bf16.msra.mxu0 0
    %6141 = vmatprep.subr.bf16.mxu0 0
    %6142 = vmatpush1.bf16.msra.mxu0 0
    %6143 = vmatprep.mubr.bf16.mxu0 0
    %6144 = vmatmul.mubr.bf16.gmra.mrb[0].mxu0 %v6061
    %v6145 = vpop.f32.mrb[0].mxu0
    %v6146 = vadd.f32 0.0, %v6145
    %v6147 = vpop.f32.mrb[0].mxu0
    %v6148 = vpop.f32.mrb[0].mxu0
    %v6149 = vpop.f32.mrb[0].mxu0
    %6150 = vdwg.mxu0
    %v6151 = vadd.f32 %v6043, %v6146
    %s6152 = scalar_lea.vmem %s5, 448
    %v6153 = vld [vmem:[%s6152] sm:$0xf]
    %v6154 = vld [vmem:[%s6152 + $0x4] sm:$0xf]
    %v6155 = vld [vmem:[%s6152 + $0x8] sm:$0xf]
    %v6156 = vld [vmem:[%s6152 + $0xc] sm:$0xf]
    %v6157 = vld [vmem:[%s6152 + $0x10] sm:$0xf]
    %v6158 = vld [vmem:[%s6152 + $0x14] sm:$0xf]
    %v6159 = vld [vmem:[%s6152 + $0x18] sm:$0xf]
    %v6160 = vld [vmem:[%s6152 + $0x1c] sm:$0xf]
    %v6161 = vld [vmem:[%s6152 + $0x20] sm:$0xf]
    %v6162 = vld [vmem:[%s6152 + $0x24] sm:$0xf]
    %v6163 = vld [vmem:[%s6152 + $0x28] sm:$0xf]
    %v6164 = vld [vmem:[%s6152 + $0x2c] sm:$0xf]
    %v6165 = vld [vmem:[%s6152 + $0x30] sm:$0xf]
    %v6166 = vld [vmem:[%s6152 + $0x34] sm:$0xf]
    %v6167 = vld [vmem:[%s6152 + $0x38] sm:$0xf]
    %v6168 = vld [vmem:[%s6152 + $0x3c] sm:$0xf]
    %v6169 = vrot.slane %v5828, 3
    %v6187 = vunpack.c.l.b16 %v6153
    %v6188 = vunpack.c.l.b16 %v6154
    %v6189 = vunpack.c.l.b16 %v6155
    %v6190 = vunpack.c.l.b16 %v6156
    %v6191 = vunpack.c.l.b16 %v6157
    %v6192 = vunpack.c.l.b16 %v6158
    %v6193 = vunpack.c.l.b16 %v6159
    %v6194 = vunpack.c.l.b16 %v6160
    %v6195 = vunpack.c.l.b16 %v6161
    %v6196 = vunpack.c.l.b16 %v6162
    %v6197 = vunpack.c.l.b16 %v6163
    %v6198 = vunpack.c.l.b16 %v6164
    %v6199 = vunpack.c.l.b16 %v6165
    %v6200 = vunpack.c.l.b16 %v6166
    %v6201 = vunpack.c.l.b16 %v6167
    %v6202 = vunpack.c.l.b16 %v6168
    %v6203 = vpack.c.b16 %v6188, %v6187
    %v6204 = vpack.c.b16 %v6190, %v6189
    %v6205 = vpack.c.b16 %v6192, %v6191
    %v6206 = vpack.c.b16 %v6194, %v6193
    %v6207 = vpack.c.b16 %v6196, %v6195
    %v6208 = vpack.c.b16 %v6198, %v6197
    %v6209 = vpack.c.b16 %v6200, %v6199
    %v6210 = vpack.c.b16 %v6202, %v6201
    %6219 = vmatprep.subr.bf16.mxu0 0
    %6220 = vmatpush1.bf16.msra.mxu0 %v6203
    %6221 = vmatprep.subr.bf16.mxu0 0
    %6222 = vmatpush1.bf16.msra.mxu0 %v6204
    %6223 = vmatprep.subr.bf16.mxu0 0
    %6224 = vmatpush1.bf16.msra.mxu0 %v6205
    %6225 = vmatprep.subr.bf16.mxu0 0
    %6226 = vmatpush1.bf16.msra.mxu0 %v6206
    %6227 = vmatprep.subr.bf16.mxu0 0
    %6228 = vmatpush1.bf16.msra.mxu0 %v6207
    %6229 = vmatprep.subr.bf16.mxu0 0
    %6230 = vmatpush1.bf16.msra.mxu0 %v6208
    %6231 = vmatprep.subr.bf16.mxu0 0
    %6232 = vmatpush1.bf16.msra.mxu0 %v6209
    %6233 = vmatprep.subr.bf16.mxu0 0
    %6234 = vmatpush1.bf16.msra.mxu0 %v6210
    %6235 = vmatprep.subr.bf16.mxu0 0
    %6236 = vmatpush1.bf16.msra.mxu0 0
    %6237 = vmatprep.subr.bf16.mxu0 0
    %6238 = vmatpush1.bf16.msra.mxu0 0
    %6239 = vmatprep.subr.bf16.mxu0 0
    %6240 = vmatpush1.bf16.msra.mxu0 0
    %6241 = vmatprep.subr.bf16.mxu0 0
    %6242 = vmatpush1.bf16.msra.mxu0 0
    %6243 = vmatprep.subr.bf16.mxu0 0
    %6244 = vmatpush1.bf16.msra.mxu0 0
    %6245 = vmatprep.subr.bf16.mxu0 0
    %6246 = vmatpush1.bf16.msra.mxu0 0
    %6247 = vmatprep.subr.bf16.mxu0 0
    %6248 = vmatpush1.bf16.msra.mxu0 0
    %6249 = vmatprep.subr.bf16.mxu0 0
    %6250 = vmatpush1.bf16.msra.mxu0 0
    %6251 = vmatprep.mubr.bf16.mxu0 0
    %6252 = vmatmul.mubr.bf16.gmra.mrb[0].mxu0 %v6169
    %v6253 = vpop.f32.mrb[0].mxu0
    %v6254 = vadd.f32 0.0, %v6253
    %v6255 = vpop.f32.mrb[0].mxu0
    %v6256 = vpop.f32.mrb[0].mxu0
    %v6257 = vpop.f32.mrb[0].mxu0
    %6258 = vdwg.mxu0
    %v6259 = vadd.f32 %v6151, %v6254
    %v6260 = vld [vmem:[%s6] sm:$0x1]
    %v6262 = vlaneseq
    %v6263 = vshrl.u32 %v6262, 7
    %v6264 = vsub.s32 0, %v6263
    %v6265 = vrot.slane %v6260, %v6264
    %v6267 = vadd.f32 %v6259, %v6265
    %v6268 = vpack.c.bf16 %v6267, %v6267
    %v6269 = vld [vmem:[%s7] sm:$0xff]
    %v6270 = vld [vmem:[%s7 + $0x8] sm:$0xff]
    %v6271 = vld [vmem:[%s7 + $0x10] sm:$0xff]
    %v6272 = vld [vmem:[%s7 + $0x18] sm:$0xff]
    %v6273 = vld [vmem:[%s7 + $0x20] sm:$0xff]
    %v6274 = vld [vmem:[%s7 + $0x28] sm:$0xff]
    %v6275 = vld [vmem:[%s7 + $0x30] sm:$0xff]
    %v6276 = vld [vmem:[%s7 + $0x38] sm:$0xff]
    %v6277 = vld [vmem:[%s7 + $0x40] sm:$0xff]
    %v6278 = vld [vmem:[%s7 + $0x48] sm:$0xff]
    %v6279 = vld [vmem:[%s7 + $0x50] sm:$0xff]
    %v6280 = vld [vmem:[%s7 + $0x58] sm:$0xff]
    %v6281 = vld [vmem:[%s7 + $0x60] sm:$0xff]
    %v6282 = vld [vmem:[%s7 + $0x68] sm:$0xff]
    %v6283 = vld [vmem:[%s7 + $0x70] sm:$0xff]
    %v6284 = vld [vmem:[%s7 + $0x78] sm:$0xff]
    %v6285 = vld [vmem:[%s8] sm:$0x3]
    %v6287 = vlaneseq
    %v6288 = vshrl.u32 %v6287, 7
    %v6289 = vsub.s32 0, %v6288
    %v6290 = vrot.slane %v6285, %v6289
    %v6291 = vlaneseq
    %v6292 = vshrl.u32 %v6291, 7
    %v6293 = vsub.s32 1, %v6292
    %v6294 = vrot.slane %v6285, %v6293
    %v6313 = vunpack.c.l.b16 %v6269
    %v6314 = vunpack.c.h.b16 %v6269
    %v6315 = vunpack.c.l.b16 %v6270
    %v6316 = vunpack.c.h.b16 %v6270
    %v6317 = vunpack.c.l.b16 %v6271
    %v6318 = vunpack.c.h.b16 %v6271
    %v6319 = vunpack.c.l.b16 %v6272
    %v6320 = vunpack.c.h.b16 %v6272
    %v6321 = vunpack.c.l.b16 %v6273
    %v6322 = vunpack.c.h.b16 %v6273
    %v6323 = vunpack.c.l.b16 %v6274
    %v6324 = vunpack.c.h.b16 %v6274
    %v6325 = vunpack.c.l.b16 %v6275
    %v6326 = vunpack.c.h.b16 %v6275
    %v6327 = vunpack.c.l.b16 %v6276
    %v6328 = vunpack.c.h.b16 %v6276
    %v6329 = vunpack.c.l.b16 %v6277
    %v6330 = vunpack.c.h.b16 %v6277
    %v6331 = vunpack.c.l.b16 %v6278
    %v6332 = vunpack.c.h.b16 %v6278
    %v6333 = vunpack.c.l.b16 %v6279
    %v6334 = vunpack.c.h.b16 %v6279
    %v6335 = vunpack.c.l.b16 %v6280
    %v6336 = vunpack.c.h.b16 %v6280
    %v6337 = vunpack.c.l.b16 %v6281
    %v6338 = vunpack.c.h.b16 %v6281
    %v6339 = vunpack.c.l.b16 %v6282
    %v6340 = vunpack.c.h.b16 %v6282
    %v6341 = vunpack.c.l.b16 %v6283
    %v6342 = vunpack.c.h.b16 %v6283
    %v6343 = vunpack.c.l.b16 %v6284
    %v6344 = vunpack.c.h.b16 %v6284
    %v6345 = vpack.c.b16 %v6315, %v6313
    %v6346 = vpack.c.b16 %v6316, %v6314
    %v6347 = vpack.c.b16 %v6319, %v6317
    %v6348 = vpack.c.b16 %v6320, %v6318
    %v6349 = vpack.c.b16 %v6323, %v6321
    %v6350 = vpack.c.b16 %v6324, %v6322
    %v6351 = vpack.c.b16 %v6327, %v6325
    %v6352 = vpack.c.b16 %v6328, %v6326
    %v6353 = vpack.c.b16 %v6331, %v6329
    %v6354 = vpack.c.b16 %v6332, %v6330
    %v6355 = vpack.c.b16 %v6335, %v6333
    %v6356 = vpack.c.b16 %v6336, %v6334
    %v6357 = vpack.c.b16 %v6339, %v6337
    %v6358 = vpack.c.b16 %v6340, %v6338
    %v6359 = vpack.c.b16 %v6343, %v6341
    %v6360 = vpack.c.b16 %v6344, %v6342
    %6377 = vmatprep.subr.bf16.mxu0 %v6346
    %6378 = vmatpush1.bf16.msra.mxu0 %v6345
    %6379 = vmatprep.subr.bf16.mxu0 %v6348
    %6380 = vmatpush1.bf16.msra.mxu0 %v6347
    %6381 = vmatprep.subr.bf16.mxu0 %v6350
    %6382 = vmatpush1.bf16.msra.mxu0 %v6349
    %6383 = vmatprep.subr.bf16.mxu0 %v6352
    %6384 = vmatpush1.bf16.msra.mxu0 %v6351
    %6385 = vmatprep.subr.bf16.mxu0 %v6354
    %6386 = vmatpush1.bf16.msra.mxu0 %v6353
    %6387 = vmatprep.subr.bf16.mxu0 %v6356
    %6388 = vmatpush1.bf16.msra.mxu0 %v6355
    %6389 = vmatprep.subr.bf16.mxu0 %v6358
    %6390 = vmatpush1.bf16.msra.mxu0 %v6357
    %6391 = vmatprep.subr.bf16.mxu0 %v6360
    %6392 = vmatpush1.bf16.msra.mxu0 %v6359
    %6393 = vmatprep.subr.bf16.mxu0 0
    %6394 = vmatpush1.bf16.msra.mxu0 0
    %6395 = vmatprep.subr.bf16.mxu0 0
    %6396 = vmatpush1.bf16.msra.mxu0 0
    %6397 = vmatprep.subr.bf16.mxu0 0
    %6398 = vmatpush1.bf16.msra.mxu0 0
    %6399 = vmatprep.subr.bf16.mxu0 0
    %6400 = vmatpush1.bf16.msra.mxu0 0
    %6401 = vmatprep.subr.bf16.mxu0 0
    %6402 = vmatpush1.bf16.msra.mxu0 0
    %6403 = vmatprep.subr.bf16.mxu0 0
    %6404 = vmatpush1.bf16.msra.mxu0 0
    %6405 = vmatprep.subr.bf16.mxu0 0
    %6406 = vmatpush1.bf16.msra.mxu0 0
    %6407 = vmatprep.subr.bf16.mxu0 0
    %6408 = vmatpush1.bf16.msra.mxu0 0
    %6409 = vmatprep.mubr.bf16.mxu0 0
    %6410 = vmatmul.mubr.bf16.gmra.mrb[0].mxu0 %v6268
    %v6411 = vpop.f32.mrb[0].mxu0
    %v6412 = vadd.f32 %v6290, %v6411
    %v6413 = vpop.f32.mrb[0].mxu0
    %v6414 = vadd.f32 %v6294, %v6413
    %v6415 = vpop.f32.mrb[0].mxu0
    %v6416 = vpop.f32.mrb[0].mxu0
    %6417 = vdwg.mxu0
    %vm6418 = vcmp.gt.f32.partialorder %v6412, 0.0
    %vm6419 = vcmp.gt.f32.partialorder %v6414, 0.0
    %v6420 = vmul.f32 %v6412, 0.01
    %v6421 = vmul.f32 %v6414, 0.01
    %v6422 = vsel %vm6418, %v6412, %v6420
    %v6423 = vsel %vm6419, %v6414, %v6421
    %v6424 = vpack.c.bf16 %v6422, %v6422
    %v6425 = vpack.c.bf16 %v6423, %v6423
    %v6426 = vld [vmem:[%s9] sm:$0xf]
    %v6427 = vld [vmem:[%s9 + $0x4] sm:$0xf]
    %v6428 = vld [vmem:[%s9 + $0x8] sm:$0xf]
    %v6429 = vld [vmem:[%s9 + $0xc] sm:$0xf]
    %v6430 = vld [vmem:[%s9 + $0x10] sm:$0xf]
    %v6431 = vld [vmem:[%s9 + $0x14] sm:$0xf]
    %v6432 = vld [vmem:[%s9 + $0x18] sm:$0xf]
    %v6433 = vld [vmem:[%s9 + $0x1c] sm:$0xf]
    %v6434 = vld [vmem:[%s9 + $0x20] sm:$0xf]
    %v6435 = vld [vmem:[%s9 + $0x24] sm:$0xf]
    %v6436 = vld [vmem:[%s9 + $0x28] sm:$0xf]
    %v6437 = vld [vmem:[%s9 + $0x2c] sm:$0xf]
    %v6438 = vld [vmem:[%s9 + $0x30] sm:$0xf]
    %v6439 = vld [vmem:[%s9 + $0x34] sm:$0xf]
    %v6440 = vld [vmem:[%s9 + $0x38] sm:$0xf]
    %v6441 = vld [vmem:[%s9 + $0x3c] sm:$0xf]
    %v6442 = vld [vmem:[%s9 + $0x40] sm:$0xf]
    %v6443 = vld [vmem:[%s9 + $0x44] sm:$0xf]
    %v6444 = vld [vmem:[%s9 + $0x48] sm:$0xf]
    %v6445 = vld [vmem:[%s9 + $0x4c] sm:$0xf]
    %v6446 = vld [vmem:[%s9 + $0x50] sm:$0xf]
    %v6447 = vld [vmem:[%s9 + $0x54] sm:$0xf]
    %v6448 = vld [vmem:[%s9 + $0x58] sm:$0xf]
    %v6449 = vld [vmem:[%s9 + $0x5c] sm:$0xf]
    %v6450 = vld [vmem:[%s9 + $0x60] sm:$0xf]
    %v6451 = vld [vmem:[%s9 + $0x64] sm:$0xf]
    %v6452 = vld [vmem:[%s9 + $0x68] sm:$0xf]
    %v6453 = vld [vmem:[%s9 + $0x6c] sm:$0xf]
    %v6454 = vld [vmem:[%s9 + $0x70] sm:$0xf]
    %v6455 = vld [vmem:[%s9 + $0x74] sm:$0xf]
    %v6456 = vld [vmem:[%s9 + $0x78] sm:$0xf]
    %v6457 = vld [vmem:[%s9 + $0x7c] sm:$0xf]
    %v6458 = vld [vmem:[%s10] sm:$0x1]
    %v6460 = vlaneseq
    %v6461 = vshrl.u32 %v6460, 7
    %v6462 = vsub.s32 0, %v6461
    %v6463 = vrot.slane %v6458, %v6462
    %v6497 = vunpack.c.l.b16 %v6426
    %v6498 = vunpack.c.l.b16 %v6427
    %v6499 = vunpack.c.l.b16 %v6428
    %v6500 = vunpack.c.l.b16 %v6429
    %v6501 = vunpack.c.l.b16 %v6430
    %v6502 = vunpack.c.l.b16 %v6431
    %v6503 = vunpack.c.l.b16 %v6432
    %v6504 = vunpack.c.l.b16 %v6433
    %v6505 = vunpack.c.l.b16 %v6434
    %v6506 = vunpack.c.l.b16 %v6435
    %v6507 = vunpack.c.l.b16 %v6436
    %v6508 = vunpack.c.l.b16 %v6437
    %v6509 = vunpack.c.l.b16 %v6438
    %v6510 = vunpack.c.l.b16 %v6439
    %v6511 = vunpack.c.l.b16 %v6440
    %v6512 = vunpack.c.l.b16 %v6441
    %v6513 = vunpack.c.l.b16 %v6442
    %v6514 = vunpack.c.l.b16 %v6443
    %v6515 = vunpack.c.l.b16 %v6444
    %v6516 = vunpack.c.l.b16 %v6445
    %v6517 = vunpack.c.l.b16 %v6446
    %v6518 = vunpack.c.l.b16 %v6447
    %v6519 = vunpack.c.l.b16 %v6448
    %v6520 = vunpack.c.l.b16 %v6449
    %v6521 = vunpack.c.l.b16 %v6450
    %v6522 = vunpack.c.l.b16 %v6451
    %v6523 = vunpack.c.l.b16 %v6452
    %v6524 = vunpack.c.l.b16 %v6453
    %v6525 = vunpack.c.l.b16 %v6454
    %v6526 = vunpack.c.l.b16 %v6455
    %v6527 = vunpack.c.l.b16 %v6456
    %v6528 = vunpack.c.l.b16 %v6457
    %v6529 = vpack.c.b16 %v6498, %v6497
    %v6530 = vpack.c.b16 %v6500, %v6499
    %v6531 = vpack.c.b16 %v6502, %v6501
    %v6532 = vpack.c.b16 %v6504, %v6503
    %v6533 = vpack.c.b16 %v6506, %v6505
    %v6534 = vpack.c.b16 %v6508, %v6507
    %v6535 = vpack.c.b16 %v6510, %v6509
    %v6536 = vpack.c.b16 %v6512, %v6511
    %v6537 = vpack.c.b16 %v6514, %v6513
    %v6538 = vpack.c.b16 %v6516, %v6515
    %v6539 = vpack.c.b16 %v6518, %v6517
    %v6540 = vpack.c.b16 %v6520, %v6519
    %v6541 = vpack.c.b16 %v6522, %v6521
    %v6542 = vpack.c.b16 %v6524, %v6523
    %v6543 = vpack.c.b16 %v6526, %v6525
    %v6544 = vpack.c.b16 %v6528, %v6527
    %6561 = vmatprep.subr.bf16.mxu0 0
    %6562 = vmatpush1.bf16.msra.mxu0 %v6529
    %6563 = vmatprep.subr.bf16.mxu0 0
    %6564 = vmatpush1.bf16.msra.mxu0 %v6530
    %6565 = vmatprep.subr.bf16.mxu0 0
    %6566 = vmatpush1.bf16.msra.mxu0 %v6531
    %6567 = vmatprep.subr.bf16.mxu0 0
    %6568 = vmatpush1.bf16.msra.mxu0 %v6532
    %6569 = vmatprep.subr.bf16.mxu0 0
    %6570 = vmatpush1.bf16.msra.mxu0 %v6533
    %6571 = vmatprep.subr.bf16.mxu0 0
    %6572 = vmatpush1.bf16.msra.mxu0 %v6534
    %6573 = vmatprep.subr.bf16.mxu0 0
    %6574 = vmatpush1.bf16.msra.mxu0 %v6535
    %6575 = vmatprep.subr.bf16.mxu0 0
    %6576 = vmatpush1.bf16.msra.mxu0 %v6536
    %6577 = vmatprep.subr.bf16.mxu0 0
    %6578 = vmatpush1.bf16.msra.mxu0 %v6537
    %6579 = vmatprep.subr.bf16.mxu0 0
    %6580 = vmatpush1.bf16.msra.mxu0 %v6538
    %6581 = vmatprep.subr.bf16.mxu0 0
    %6582 = vmatpush1.bf16.msra.mxu0 %v6539
    %6583 = vmatprep.subr.bf16.mxu0 0
    %6584 = vmatpush1.bf16.msra.mxu0 %v6540
    %6585 = vmatprep.subr.bf16.mxu0 0
    %6586 = vmatpush1.bf16.msra.mxu0 %v6541
    %6587 = vmatprep.subr.bf16.mxu0 0
    %6588 = vmatpush1.bf16.msra.mxu0 %v6542
    %6589 = vmatprep.subr.bf16.mxu0 0
    %6590 = vmatpush1.bf16.msra.mxu0 %v6543
    %6591 = vmatprep.subr.bf16.mxu0 0
    %6592 = vmatpush1.bf16.msra.mxu0 %v6544
    %6593 = vmatprep.mubr.bf16.mxu0 %v6425
    %6594 = vmatmul.mubr.bf16.gmra.mrb[0].mxu0 %v6424
    %v6595 = vpop.f32.mrb[0].mxu0
    %v6596 = vadd.f32 %v6463, %v6595
    %v6597 = vpop.f32.mrb[0].mxu0
    %v6598 = vpop.f32.mrb[0].mxu0
    %v6599 = vpop.f32.mrb[0].mxu0
    %6600 = vdwg.mxu0
    %vm6601 = vcmp.gt.f32.partialorder %v6596, 0.0
    %v6602 = vmul.f32 %v6596, 0.01
    %v6603 = vsel %vm6601, %v6596, %v6602
    %v6604 = vpack.c.bf16 %v6603, %v6603
    %v6605 = vld [vmem:[%s11] sm:$0xf]
    %v6606 = vld [vmem:[%s11 + $0x4] sm:$0xf]
    %v6607 = vld [vmem:[%s11 + $0x8] sm:$0xf]
    %v6608 = vld [vmem:[%s11 + $0xc] sm:$0xf]
    %v6609 = vld [vmem:[%s11 + $0x10] sm:$0xf]
    %v6610 = vld [vmem:[%s11 + $0x14] sm:$0xf]
    %v6611 = vld [vmem:[%s11 + $0x18] sm:$0xf]
    %v6612 = vld [vmem:[%s11 + $0x1c] sm:$0xf]
    %v6613 = vld [vmem:[%s11 + $0x20] sm:$0xf]
    %v6614 = vld [vmem:[%s11 + $0x24] sm:$0xf]
    %v6615 = vld [vmem:[%s11 + $0x28] sm:$0xf]
    %v6616 = vld [vmem:[%s11 + $0x2c] sm:$0xf]
    %v6617 = vld [vmem:[%s11 + $0x30] sm:$0xf]
    %v6618 = vld [vmem:[%s11 + $0x34] sm:$0xf]
    %v6619 = vld [vmem:[%s11 + $0x38] sm:$0xf]
    %v6620 = vld [vmem:[%s11 + $0x3c] sm:$0xf]
    %v6621 = vld [vmem:[%s12] sm:$0x1]
    %v6623 = vlaneseq
    %v6624 = vshrl.u32 %v6623, 7
    %v6625 = vsub.s32 0, %v6624
    %v6626 = vrot.slane %v6621, %v6625
    %v6644 = vunpack.c.l.b16 %v6605
    %v6645 = vunpack.c.l.b16 %v6606
    %v6646 = vunpack.c.l.b16 %v6607
    %v6647 = vunpack.c.l.b16 %v6608
    %v6648 = vunpack.c.l.b16 %v6609
    %v6649 = vunpack.c.l.b16 %v6610
    %v6650 = vunpack.c.l.b16 %v6611
    %v6651 = vunpack.c.l.b16 %v6612
    %v6652 = vunpack.c.l.b16 %v6613
    %v6653 = vunpack.c.l.b16 %v6614
    %v6654 = vunpack.c.l.b16 %v6615
    %v6655 = vunpack.c.l.b16 %v6616
    %v6656 = vunpack.c.l.b16 %v6617
    %v6657 = vunpack.c.l.b16 %v6618
    %v6658 = vunpack.c.l.b16 %v6619
    %v6659 = vunpack.c.l.b16 %v6620
    %v6660 = vpack.c.b16 %v6645, %v6644
    %v6661 = vpack.c.b16 %v6647, %v6646
    %v6662 = vpack.c.b16 %v6649, %v6648
    %v6663 = vpack.c.b16 %v6651, %v6650
    %v6664 = vpack.c.b16 %v6653, %v6652
    %v6665 = vpack.c.b16 %v6655, %v6654
    %v6666 = vpack.c.b16 %v6657, %v6656
    %v6667 = vpack.c.b16 %v6659, %v6658
    %6676 = vmatprep.subr.bf16.mxu0 0
    %6677 = vmatpush1.bf16.msra.mxu0 %v6660
    %6678 = vmatprep.subr.bf16.mxu0 0
    %6679 = vmatpush1.bf16.msra.mxu0 %v6661
    %6680 = vmatprep.subr.bf16.mxu0 0
    %6681 = vmatpush1.bf16.msra.mxu0 %v6662
    %6682 = vmatprep.subr.bf16.mxu0 0
    %6683 = vmatpush1.bf16.msra.mxu0 %v6663
    %6684 = vmatprep.subr.bf16.mxu0 0
    %6685 = vmatpush1.bf16.msra.mxu0 %v6664
    %6686 = vmatprep.subr.bf16.mxu0 0
    %6687 = vmatpush1.bf16.msra.mxu0 %v6665
    %6688 = vmatprep.subr.bf16.mxu0 0
    %6689 = vmatpush1.bf16.msra.mxu0 %v6666
    %6690 = vmatprep.subr.bf16.mxu0 0
    %6691 = vmatpush1.bf16.msra.mxu0 %v6667
    %6692 = vmatprep.subr.bf16.mxu0 0
    %6693 = vmatpush1.bf16.msra.mxu0 0
    %6694 = vmatprep.subr.bf16.mxu0 0
    %6695 = vmatpush1.bf16.msra.mxu0 0
    %6696 = vmatprep.subr.bf16.mxu0 0
    %6697 = vmatpush1.bf16.msra.mxu0 0
    %6698 = vmatprep.subr.bf16.mxu0 0
    %6699 = vmatpush1.bf16.msra.mxu0 0
    %6700 = vmatprep.subr.bf16.mxu0 0
    %6701 = vmatpush1.bf16.msra.mxu0 0
    %6702 = vmatprep.subr.bf16.mxu0 0
    %6703 = vmatpush1.bf16.msra.mxu0 0
    %6704 = vmatprep.subr.bf16.mxu0 0
    %6705 = vmatpush1.bf16.msra.mxu0 0
    %6706 = vmatprep.subr.bf16.mxu0 0
    %6707 = vmatpush1.bf16.msra.mxu0 0
    %6708 = vmatprep.mubr.bf16.mxu0 0
    %6709 = vmatmul.mubr.bf16.gmra.mrb[0].mxu0 %v6604
    %v6710 = vpop.f32.mrb[0].mxu0
    %v6711 = vadd.f32 %v6626, %v6710
    %v6712 = vpop.f32.mrb[0].mxu0
    %v6713 = vpop.f32.mrb[0].mxu0
    %v6714 = vpop.f32.mrb[0].mxu0
    %6715 = vdwg.mxu0
    %v6716 = vld [vmem:[%s13] sm:$0xff]
    %v6717 = vld [vmem:[%s13 + $0x8] sm:$0xff]
    %v6718 = vld [vmem:[%s13 + $0x10] sm:$0xff]
    %v6719 = vld [vmem:[%s13 + $0x18] sm:$0xff]
    %v6720 = vld [vmem:[%s13 + $0x20] sm:$0xff]
    %v6721 = vld [vmem:[%s13 + $0x28] sm:$0xff]
    %v6722 = vld [vmem:[%s13 + $0x30] sm:$0xff]
    %v6723 = vld [vmem:[%s13 + $0x38] sm:$0xff]
    %v6724 = vld [vmem:[%s13 + $0x40] sm:$0xff]
    %v6725 = vld [vmem:[%s13 + $0x48] sm:$0xff]
    %v6726 = vld [vmem:[%s13 + $0x50] sm:$0xff]
    %v6727 = vld [vmem:[%s13 + $0x58] sm:$0xff]
    %v6728 = vld [vmem:[%s13 + $0x60] sm:$0xff]
    %v6729 = vld [vmem:[%s13 + $0x68] sm:$0xff]
    %v6730 = vld [vmem:[%s13 + $0x70] sm:$0xff]
    %v6731 = vld [vmem:[%s13 + $0x78] sm:$0xff]
    %v6732 = vld [vmem:[%s14] sm:$0x3]
    %v6734 = vlaneseq
    %v6735 = vshrl.u32 %v6734, 7
    %v6736 = vsub.s32 0, %v6735
    %v6737 = vrot.slane %v6732, %v6736
    %v6738 = vlaneseq
    %v6739 = vshrl.u32 %v6738, 7
    %v6740 = vsub.s32 1, %v6739
    %v6741 = vrot.slane %v6732, %v6740
    %v6760 = vunpack.c.l.b16 %v6716
    %v6761 = vunpack.c.h.b16 %v6716
    %v6762 = vunpack.c.l.b16 %v6717
    %v6763 = vunpack.c.h.b16 %v6717
    %v6764 = vunpack.c.l.b16 %v6718
    %v6765 = vunpack.c.h.b16 %v6718
    %v6766 = vunpack.c.l.b16 %v6719
    %v6767 = vunpack.c.h.b16 %v6719
    %v6768 = vunpack.c.l.b16 %v6720
    %v6769 = vunpack.c.h.b16 %v6720
    %v6770 = vunpack.c.l.b16 %v6721
    %v6771 = vunpack.c.h.b16 %v6721
    %v6772 = vunpack.c.l.b16 %v6722
    %v6773 = vunpack.c.h.b16 %v6722
    %v6774 = vunpack.c.l.b16 %v6723
    %v6775 = vunpack.c.h.b16 %v6723
    %v6776 = vunpack.c.l.b16 %v6724
    %v6777 = vunpack.c.h.b16 %v6724
    %v6778 = vunpack.c.l.b16 %v6725
    %v6779 = vunpack.c.h.b16 %v6725
    %v6780 = vunpack.c.l.b16 %v6726
    %v6781 = vunpack.c.h.b16 %v6726
    %v6782 = vunpack.c.l.b16 %v6727
    %v6783 = vunpack.c.h.b16 %v6727
    %v6784 = vunpack.c.l.b16 %v6728
    %v6785 = vunpack.c.h.b16 %v6728
    %v6786 = vunpack.c.l.b16 %v6729
    %v6787 = vunpack.c.h.b16 %v6729
    %v6788 = vunpack.c.l.b16 %v6730
    %v6789 = vunpack.c.h.b16 %v6730
    %v6790 = vunpack.c.l.b16 %v6731
    %v6791 = vunpack.c.h.b16 %v6731
    %v6792 = vpack.c.b16 %v6762, %v6760
    %v6793 = vpack.c.b16 %v6763, %v6761
    %v6794 = vpack.c.b16 %v6766, %v6764
    %v6795 = vpack.c.b16 %v6767, %v6765
    %v6796 = vpack.c.b16 %v6770, %v6768
    %v6797 = vpack.c.b16 %v6771, %v6769
    %v6798 = vpack.c.b16 %v6774, %v6772
    %v6799 = vpack.c.b16 %v6775, %v6773
    %v6800 = vpack.c.b16 %v6778, %v6776
    %v6801 = vpack.c.b16 %v6779, %v6777
    %v6802 = vpack.c.b16 %v6782, %v6780
    %v6803 = vpack.c.b16 %v6783, %v6781
    %v6804 = vpack.c.b16 %v6786, %v6784
    %v6805 = vpack.c.b16 %v6787, %v6785
    %v6806 = vpack.c.b16 %v6790, %v6788
    %v6807 = vpack.c.b16 %v6791, %v6789
    %6824 = vmatprep.subr.bf16.mxu0 %v6793
    %6825 = vmatpush1.bf16.msra.mxu0 %v6792
    %6826 = vmatprep.subr.bf16.mxu0 %v6795
    %6827 = vmatpush1.bf16.msra.mxu0 %v6794
    %6828 = vmatprep.subr.bf16.mxu0 %v6797
    %6829 = vmatpush1.bf16.msra.mxu0 %v6796
    %6830 = vmatprep.subr.bf16.mxu0 %v6799
    %6831 = vmatpush1.bf16.msra.mxu0 %v6798
    %6832 = vmatprep.subr.bf16.mxu0 %v6801
    %6833 = vmatpush1.bf16.msra.mxu0 %v6800
    %6834 = vmatprep.subr.bf16.mxu0 %v6803
    %6835 = vmatpush1.bf16.msra.mxu0 %v6802
    %6836 = vmatprep.subr.bf16.mxu0 %v6805
    %6837 = vmatpush1.bf16.msra.mxu0 %v6804
    %6838 = vmatprep.subr.bf16.mxu0 %v6807
    %6839 = vmatpush1.bf16.msra.mxu0 %v6806
    %6840 = vmatprep.subr.bf16.mxu0 0
    %6841 = vmatpush1.bf16.msra.mxu0 0
    %6842 = vmatprep.subr.bf16.mxu0 0
    %6843 = vmatpush1.bf16.msra.mxu0 0
    %6844 = vmatprep.subr.bf16.mxu0 0
    %6845 = vmatpush1.bf16.msra.mxu0 0
    %6846 = vmatprep.subr.bf16.mxu0 0
    %6847 = vmatpush1.bf16.msra.mxu0 0
    %6848 = vmatprep.subr.bf16.mxu0 0
    %6849 = vmatpush1.bf16.msra.mxu0 0
    %6850 = vmatprep.subr.bf16.mxu0 0
    %6851 = vmatpush1.bf16.msra.mxu0 0
    %6852 = vmatprep.subr.bf16.mxu0 0
    %6853 = vmatpush1.bf16.msra.mxu0 0
    %6854 = vmatprep.subr.bf16.mxu0 0
    %6855 = vmatpush1.bf16.msra.mxu0 0
    %6856 = vmatprep.mubr.bf16.mxu0 0
    %6857 = vmatmul.mubr.bf16.gmra.mrb[0].mxu0 %v6268
    %v6858 = vpop.f32.mrb[0].mxu0
    %v6859 = vadd.f32 %v6737, %v6858
    %v6860 = vpop.f32.mrb[0].mxu0
    %v6861 = vadd.f32 %v6741, %v6860
    %v6862 = vpop.f32.mrb[0].mxu0
    %v6863 = vpop.f32.mrb[0].mxu0
    %6864 = vdwg.mxu0
    %vm6865 = vcmp.gt.f32.partialorder %v6859, 0.0
    %vm6866 = vcmp.gt.f32.partialorder %v6861, 0.0
    %v6867 = vmul.f32 %v6859, 0.01
    %v6868 = vmul.f32 %v6861, 0.01
    %v6869 = vsel %vm6865, %v6859, %v6867
    %v6870 = vsel %vm6866, %v6861, %v6868
    %v6871 = vpack.c.bf16 %v6869, %v6869
    %v6872 = vpack.c.bf16 %v6870, %v6870
    %v6873 = vld [vmem:[%s15] sm:$0xf]
    %v6874 = vld [vmem:[%s15 + $0x4] sm:$0xf]
    %v6875 = vld [vmem:[%s15 + $0x8] sm:$0xf]
    %v6876 = vld [vmem:[%s15 + $0xc] sm:$0xf]
    %v6877 = vld [vmem:[%s15 + $0x10] sm:$0xf]
    %v6878 = vld [vmem:[%s15 + $0x14] sm:$0xf]
    %v6879 = vld [vmem:[%s15 + $0x18] sm:$0xf]
    %v6880 = vld [vmem:[%s15 + $0x1c] sm:$0xf]
    %v6881 = vld [vmem:[%s15 + $0x20] sm:$0xf]
    %v6882 = vld [vmem:[%s15 + $0x24] sm:$0xf]
    %v6883 = vld [vmem:[%s15 + $0x28] sm:$0xf]
    %v6884 = vld [vmem:[%s15 + $0x2c] sm:$0xf]
    %v6885 = vld [vmem:[%s15 + $0x30] sm:$0xf]
    %v6886 = vld [vmem:[%s15 + $0x34] sm:$0xf]
    %v6887 = vld [vmem:[%s15 + $0x38] sm:$0xf]
    %v6888 = vld [vmem:[%s15 + $0x3c] sm:$0xf]
    %v6889 = vld [vmem:[%s15 + $0x40] sm:$0xf]
    %v6890 = vld [vmem:[%s15 + $0x44] sm:$0xf]
    %v6891 = vld [vmem:[%s15 + $0x48] sm:$0xf]
    %v6892 = vld [vmem:[%s15 + $0x4c] sm:$0xf]
    %v6893 = vld [vmem:[%s15 + $0x50] sm:$0xf]
    %v6894 = vld [vmem:[%s15 + $0x54] sm:$0xf]
    %v6895 = vld [vmem:[%s15 + $0x58] sm:$0xf]
    %v6896 = vld [vmem:[%s15 + $0x5c] sm:$0xf]
    %v6897 = vld [vmem:[%s15 + $0x60] sm:$0xf]
    %v6898 = vld [vmem:[%s15 + $0x64] sm:$0xf]
    %v6899 = vld [vmem:[%s15 + $0x68] sm:$0xf]
    %v6900 = vld [vmem:[%s15 + $0x6c] sm:$0xf]
    %v6901 = vld [vmem:[%s15 + $0x70] sm:$0xf]
    %v6902 = vld [vmem:[%s15 + $0x74] sm:$0xf]
    %v6903 = vld [vmem:[%s15 + $0x78] sm:$0xf]
    %v6904 = vld [vmem:[%s15 + $0x7c] sm:$0xf]
    %v6905 = vld [vmem:[%s16] sm:$0x1]
    %v6907 = vlaneseq
    %v6908 = vshrl.u32 %v6907, 7
    %v6909 = vsub.s32 0, %v6908
    %v6910 = vrot.slane %v6905, %v6909
    %v6944 = vunpack.c.l.b16 %v6873
    %v6945 = vunpack.c.l.b16 %v6874
    %v6946 = vunpack.c.l.b16 %v6875
    %v6947 = vunpack.c.l.b16 %v6876
    %v6948 = vunpack.c.l.b16 %v6877
    %v6949 = vunpack.c.l.b16 %v6878
    %v6950 = vunpack.c.l.b16 %v6879
    %v6951 = vunpack.c.l.b16 %v6880
    %v6952 = vunpack.c.l.b16 %v6881
    %v6953 = vunpack.c.l.b16 %v6882
    %v6954 = vunpack.c.l.b16 %v6883
    %v6955 = vunpack.c.l.b16 %v6884
    %v6956 = vunpack.c.l.b16 %v6885
    %v6957 = vunpack.c.l.b16 %v6886
    %v6958 = vunpack.c.l.b16 %v6887
    %v6959 = vunpack.c.l.b16 %v6888
    %v6960 = vunpack.c.l.b16 %v6889
    %v6961 = vunpack.c.l.b16 %v6890
    %v6962 = vunpack.c.l.b16 %v6891
    %v6963 = vunpack.c.l.b16 %v6892
    %v6964 = vunpack.c.l.b16 %v6893
    %v6965 = vunpack.c.l.b16 %v6894
    %v6966 = vunpack.c.l.b16 %v6895
    %v6967 = vunpack.c.l.b16 %v6896
    %v6968 = vunpack.c.l.b16 %v6897
    %v6969 = vunpack.c.l.b16 %v6898
    %v6970 = vunpack.c.l.b16 %v6899
    %v6971 = vunpack.c.l.b16 %v6900
    %v6972 = vunpack.c.l.b16 %v6901
    %v6973 = vunpack.c.l.b16 %v6902
    %v6974 = vunpack.c.l.b16 %v6903
    %v6975 = vunpack.c.l.b16 %v6904
    %v6976 = vpack.c.b16 %v6945, %v6944
    %v6977 = vpack.c.b16 %v6947, %v6946
    %v6978 = vpack.c.b16 %v6949, %v6948
    %v6979 = vpack.c.b16 %v6951, %v6950
    %v6980 = vpack.c.b16 %v6953, %v6952
    %v6981 = vpack.c.b16 %v6955, %v6954
    %v6982 = vpack.c.b16 %v6957, %v6956
    %v6983 = vpack.c.b16 %v6959, %v6958
    %v6984 = vpack.c.b16 %v6961, %v6960
    %v6985 = vpack.c.b16 %v6963, %v6962
    %v6986 = vpack.c.b16 %v6965, %v6964
    %v6987 = vpack.c.b16 %v6967, %v6966
    %v6988 = vpack.c.b16 %v6969, %v6968
    %v6989 = vpack.c.b16 %v6971, %v6970
    %v6990 = vpack.c.b16 %v6973, %v6972
    %v6991 = vpack.c.b16 %v6975, %v6974
    %7008 = vmatprep.subr.bf16.mxu0 0
    %7009 = vmatpush1.bf16.msra.mxu0 %v6976
    %7010 = vmatprep.subr.bf16.mxu0 0
    %7011 = vmatpush1.bf16.msra.mxu0 %v6977
    %7012 = vmatprep.subr.bf16.mxu0 0
    %7013 = vmatpush1.bf16.msra.mxu0 %v6978
    %7014 = vmatprep.subr.bf16.mxu0 0
    %7015 = vmatpush1.bf16.msra.mxu0 %v6979
    %7016 = vmatprep.subr.bf16.mxu0 0
    %7017 = vmatpush1.bf16.msra.mxu0 %v6980
    %7018 = vmatprep.subr.bf16.mxu0 0
    %7019 = vmatpush1.bf16.msra.mxu0 %v6981
    %7020 = vmatprep.subr.bf16.mxu0 0
    %7021 = vmatpush1.bf16.msra.mxu0 %v6982
    %7022 = vmatprep.subr.bf16.mxu0 0
    %7023 = vmatpush1.bf16.msra.mxu0 %v6983
    %7024 = vmatprep.subr.bf16.mxu0 0
    %7025 = vmatpush1.bf16.msra.mxu0 %v6984
    %7026 = vmatprep.subr.bf16.mxu0 0
    %7027 = vmatpush1.bf16.msra.mxu0 %v6985
    %7028 = vmatprep.subr.bf16.mxu0 0
    %7029 = vmatpush1.bf16.msra.mxu0 %v6986
    %7030 = vmatprep.subr.bf16.mxu0 0
    %7031 = vmatpush1.bf16.msra.mxu0 %v6987
    %7032 = vmatprep.subr.bf16.mxu0 0
    %7033 = vmatpush1.bf16.msra.mxu0 %v6988
    %7034 = vmatprep.subr.bf16.mxu0 0
    %7035 = vmatpush1.bf16.msra.mxu0 %v6989
    %7036 = vmatprep.subr.bf16.mxu0 0
    %7037 = vmatpush1.bf16.msra.mxu0 %v6990
    %7038 = vmatprep.subr.bf16.mxu0 0
    %7039 = vmatpush1.bf16.msra.mxu0 %v6991
    %7040 = vmatprep.mubr.bf16.mxu0 %v6872
    %7041 = vmatmul.mubr.bf16.gmra.mrb[0].mxu0 %v6871
    %v7042 = vpop.f32.mrb[0].mxu0
    %v7043 = vadd.f32 %v6910, %v7042
    %v7044 = vpop.f32.mrb[0].mxu0
    %v7045 = vpop.f32.mrb[0].mxu0
    %v7046 = vpop.f32.mrb[0].mxu0
    %7047 = vdwg.mxu0
    %vm7048 = vcmp.gt.f32.partialorder %v7043, 0.0
    %v7049 = vmul.f32 %v7043, 0.01
    %v7050 = vsel %vm7048, %v7043, %v7049
    %v7051 = vpack.c.bf16 %v7050, %v7050
    %v7052 = vld [vmem:[%s17] sm:$0xf]
    %v7053 = vld [vmem:[%s17 + $0x4] sm:$0xf]
    %v7054 = vld [vmem:[%s17 + $0x8] sm:$0xf]
    %v7055 = vld [vmem:[%s17 + $0xc] sm:$0xf]
    %v7056 = vld [vmem:[%s17 + $0x10] sm:$0xf]
    %v7057 = vld [vmem:[%s17 + $0x14] sm:$0xf]
    %v7058 = vld [vmem:[%s17 + $0x18] sm:$0xf]
    %v7059 = vld [vmem:[%s17 + $0x1c] sm:$0xf]
    %v7060 = vld [vmem:[%s17 + $0x20] sm:$0xf]
    %v7061 = vld [vmem:[%s17 + $0x24] sm:$0xf]
    %v7062 = vld [vmem:[%s17 + $0x28] sm:$0xf]
    %v7063 = vld [vmem:[%s17 + $0x2c] sm:$0xf]
    %v7064 = vld [vmem:[%s17 + $0x30] sm:$0xf]
    %v7065 = vld [vmem:[%s17 + $0x34] sm:$0xf]
    %v7066 = vld [vmem:[%s17 + $0x38] sm:$0xf]
    %v7067 = vld [vmem:[%s17 + $0x3c] sm:$0xf]
    %v7068 = vld [vmem:[%s18] sm:$0x1]
    %v7070 = vlaneseq
    %v7071 = vshrl.u32 %v7070, 7
    %v7072 = vsub.s32 0, %v7071
    %v7073 = vrot.slane %v7068, %v7072
    %v7091 = vunpack.c.l.b16 %v7052
    %v7092 = vunpack.c.l.b16 %v7053
    %v7093 = vunpack.c.l.b16 %v7054
    %v7094 = vunpack.c.l.b16 %v7055
    %v7095 = vunpack.c.l.b16 %v7056
    %v7096 = vunpack.c.l.b16 %v7057
    %v7097 = vunpack.c.l.b16 %v7058
    %v7098 = vunpack.c.l.b16 %v7059
    %v7099 = vunpack.c.l.b16 %v7060
    %v7100 = vunpack.c.l.b16 %v7061
    %v7101 = vunpack.c.l.b16 %v7062
    %v7102 = vunpack.c.l.b16 %v7063
    %v7103 = vunpack.c.l.b16 %v7064
    %v7104 = vunpack.c.l.b16 %v7065
    %v7105 = vunpack.c.l.b16 %v7066
    %v7106 = vunpack.c.l.b16 %v7067
    %v7107 = vpack.c.b16 %v7092, %v7091
    %v7108 = vpack.c.b16 %v7094, %v7093
    %v7109 = vpack.c.b16 %v7096, %v7095
    %v7110 = vpack.c.b16 %v7098, %v7097
    %v7111 = vpack.c.b16 %v7100, %v7099
    %v7112 = vpack.c.b16 %v7102, %v7101
    %v7113 = vpack.c.b16 %v7104, %v7103
    %v7114 = vpack.c.b16 %v7106, %v7105
    %7123 = vmatprep.subr.bf16.mxu0 0
    %7124 = vmatpush1.bf16.msra.mxu0 %v7107
    %7125 = vmatprep.subr.bf16.mxu0 0
    %7126 = vmatpush1.bf16.msra.mxu0 %v7108
    %7127 = vmatprep.subr.bf16.mxu0 0
    %7128 = vmatpush1.bf16.msra.mxu0 %v7109
    %7129 = vmatprep.subr.bf16.mxu0 0
    %7130 = vmatpush1.bf16.msra.mxu0 %v7110
    %7131 = vmatprep.subr.bf16.mxu0 0
    %7132 = vmatpush1.bf16.msra.mxu0 %v7111
    %7133 = vmatprep.subr.bf16.mxu0 0
    %7134 = vmatpush1.bf16.msra.mxu0 %v7112
    %7135 = vmatprep.subr.bf16.mxu0 0
    %7136 = vmatpush1.bf16.msra.mxu0 %v7113
    %7137 = vmatprep.subr.bf16.mxu0 0
    %7138 = vmatpush1.bf16.msra.mxu0 %v7114
    %7139 = vmatprep.subr.bf16.mxu0 0
    %7140 = vmatpush1.bf16.msra.mxu0 0
    %7141 = vmatprep.subr.bf16.mxu0 0
    %7142 = vmatpush1.bf16.msra.mxu0 0
    %7143 = vmatprep.subr.bf16.mxu0 0
    %7144 = vmatpush1.bf16.msra.mxu0 0
    %7145 = vmatprep.subr.bf16.mxu0 0
    %7146 = vmatpush1.bf16.msra.mxu0 0
    %7147 = vmatprep.subr.bf16.mxu0 0
    %7148 = vmatpush1.bf16.msra.mxu0 0
    %7149 = vmatprep.subr.bf16.mxu0 0
    %7150 = vmatpush1.bf16.msra.mxu0 0
    %7151 = vmatprep.subr.bf16.mxu0 0
    %7152 = vmatpush1.bf16.msra.mxu0 0
    %7153 = vmatprep.subr.bf16.mxu0 0
    %7154 = vmatpush1.bf16.msra.mxu0 0
    %7155 = vmatprep.mubr.bf16.mxu0 0
    %7156 = vmatmul.mubr.bf16.gmra.mrb[0].mxu0 %v7051
    %v7157 = vpop.f32.mrb[0].mxu0
    %v7158 = vadd.f32 %v7073, %v7157
    %v7159 = vpop.f32.mrb[0].mxu0
    %v7160 = vpop.f32.mrb[0].mxu0
    %v7161 = vpop.f32.mrb[0].mxu0
    %7162 = vdwg.mxu0
    %v7163 = vlaneseq
    %v7164 = vand.u32 %v7163, 127
    %vm7165 = vcmp.lt.s32.totalorder %v7164, 1
    %v7166 = vsel %vm7165, 1, 0
    %vm7167 = vcmp.eq.s32.totalorder %v7166, 1
    %v7168 = vsel %vm7167, %v6711, 0.0
    %vm7169 = vcmask 1041408
    %v7170 = vsel %vm7169, %v7168, 0.0
    %7171 = vadd.xlane.f32.xlu0 %v7170
    %v7172 = vpop.xlane.xlu0 %7171
    %vm7173 = vcmp.lt.s32.totalorder %v7164, 6
    %v7174 = vsel %vm7173, 1, 0
    %vm7175 = vcmp.eq.s32.totalorder %v7174, 1
    %v7176 = vsel %vm7175, %v7158, 0.0
    %v7177 = vsel %vm7169, %v7176, 0.0
    %7178 = vadd.xlane.f32.xlu0 %v7177
    %v7179 = vpop.xlane.xlu0 %7178
    %v7180 = vadd.f32 %v7172, %v7158
    %v7181 = vmul.f32 %v7179, 0.16666667
    %v7182 = vsub.f32 %v7180, %v7181
    %7183 = vst [vmem:[#allocation2] sm:$0x3] %v7182
    // Predicated region
    $region78: #{dqn_forward.3} parent=1 // pred_check
      _
    $region79: #{dqn_forward.3} parent=1 // pred_check_branch
      %7185 = sbr.rel (0) target = $region81
    $region80: #{dqn_forward.3} parent=1 // pred_region
      %s7187 = ssub.s32 32, 32
      %7188 = vsyncadd [#allocation3], %s7187
      %s7190 = sshll.u32 [#allocation2], 4
      %s7191 = int_to_ptr.vmem [resolvable:$true] %s7190
      %7193 = dma.vmem_to_hbm [thread:$0]  %s7191, 32, %s19, [#allocation3]
    $region81: #{dqn_forward.3} parent=1 // pred_fallthru
      _
    // Predicated region
    $region82: #{dqn_forward.3} parent=1 // pred_check
      _
    $region83: #{dqn_forward.3} parent=1 // pred_check_branch
      %7195 = sbr.rel (0) target = $region85
    $region84: #{dqn_forward.3} parent=1 // pred_region
      %7196 = dma.done [#allocation3], 32
    $region85: #{dqn_forward.3} parent=1 // pred_fallthru
      _
    %7197 = vsyncpa [#allocation3], 1

</llo_original>
